<compile_context>
chip_gen: v7x
topology: tpu7x:2x2x1
jax: 0.10.0
libtpu: 0.0.40
codegen_flags: <defaults>
</compile_context>

<pallas_src>
import functools

import jax
import jax.numpy as jnp
from jax.experimental import pallas as pl
from jax.experimental.pallas import tpu as pltpu


# ------------------------------------------------------------ kernel math ---
def _sigmoid_k(x, approx):
    # exp rides the EUP; with approx=True the reciprocal also rides the EUP
    # (vrcp) instead of burning VALU divide slots on (C, HW) tensors.
    return pl.reciprocal(1.0 + jnp.exp(-x), approx=approx)


def _silu_k(x, approx):
    return x * _sigmoid_k(x, approx)


def _shift_px(x, offset, hw):
    # out[..., p] = x[..., p + offset]  (wraparound; caller masks invalid lanes)
    if offset == 0:
        return x
    return pltpu.roll(x, shift=(-offset) % hw, axis=1)


def _maxpool5_flat(x, hmask, wmask, W, hw):
    # nn.MaxPool2d(kernel_size=5, stride=1, padding=2); torch pads with -inf.
    # Separable: 5-wide running max along W, then 5-tall along H.
    # hmask/wmask are (1, HW) booleans broadcast over channel sublanes.
    neg = jnp.float32(-jnp.inf)
    m = x
    for o in (-2, -1, 1, 2):
        m = jnp.maximum(m, jnp.where(wmask[o], _shift_px(x, o, hw), neg))
    out = m
    for o in (-2, -1, 1, 2):
        out = jnp.maximum(out, jnp.where(hmask[o], _shift_px(m, o * W, hw), neg))
    return out


def _cbam_flat(x, idx, ca1_ref, ca2_ref, sa_ref, sub0, hmask, wmask, W, hw,
               approx):
    # CBAM(c_, ratio=c_): channel-attention hidden dim == 1, no biases;
    # spatial attention = 7x7 conv over [mean_c, max_c] with zero padding.
    C = x.shape[0]

    # ---- channel attention (global avg/max over the lane axis) -------------
    w1c = ca1_ref[idx]                                      # (C, 1) fc1 weight
    w2c = ca2_ref[idx]                                      # (C, 1) fc2 weight
    avg = jnp.sum(x, axis=1, keepdims=True) * (1.0 / hw)    # (C, 1)
    mx = jnp.max(x, axis=1, keepdims=True)                  # (C, 1)
    # [review #7] keep h as a (1,1) array (no scalar extraction).
    h = (jnp.maximum(jnp.sum(avg * w1c, axis=0, keepdims=True), 0.0) +
         jnp.maximum(jnp.sum(mx * w1c, axis=0, keepdims=True), 0.0))
    x = x * _sigmoid_k(w2c * h, approx)                     # lane-broadcast scale

    # ---- spatial attention ---------------------------------------------------
    # [review #2] stack [mean_c, max_c] into one (2, HW) map: one roll + one
    # masked select per W-shift covers both SA channels; one 2-sublane reduce
    # at the end.
    avg_s = jnp.sum(x, axis=0, keepdims=True) * (1.0 / C)   # (1, HW)
    max_s = jnp.max(x, axis=0, keepdims=True)                # (1, HW)
    s_maps = jnp.where(sub0, avg_s, max_s)                   # (2, HW)

    sw = []
    for j in range(7):                                       # 7 W-shifted copies
        o = j - 3
        t = _shift_px(s_maps, o, hw)
        if o != 0:
            t = jnp.where(wmask[o], t, 0.0)
        sw.append(t)

    conv2 = None                                             # (2, HW) accumulator
    for i in range(7):                                       # kernel row
        q = i - 3
        inner = None
        for j in range(7):                                   # kernel col
            wa = sa_ref[idx, i * 7 + j]                      # avg-channel tap (SMEM)
            wm = sa_ref[idx, 49 + i * 7 + j]                 # max-channel tap (SMEM)
            wcol = jnp.where(sub0, wa, wm)                   # (2, 1) weight column
            t = wcol * sw[j]
            inner = t if inner is None else inner + t
        contrib = _shift_px(inner, q * W, hw)
        if q != 0:
            contrib = jnp.where(hmask[q], contrib, 0.0)
        conv2 = contrib if conv2 is None else conv2 + contrib
    conv = jnp.sum(conv2, axis=0, keepdims=True)             # (1, HW)

    return x * _sigmoid_k(conv, approx)                      # sublane-broadcast scale


# ----------------------------------------------------------------- kernel ---
def sppf_cbam_kernel(x_ref, hpos_ref, wpos_ref, w1_ref, b1_ref, ca1_ref,
                     ca2_ref, sa_ref, w2_ref, b2_ref, o_ref, cat_ref,
                     *, H, W, approx):
    hw = H * W
    Cm = w1_ref.shape[0]
    mm_dtype = w1_ref.dtype                                  # bf16 or f32 operands

    # [review #1] (1, HW) boundary masks, hoisted once and shared by every
    # pool / CBAM stage; broadcast over channel sublanes inside jnp.where.
    h_idx = hpos_ref[...]                                    # (1, HW) int32
    w_idx = wpos_ref[...]                                    # (1, HW) int32
    offs = [o for o in range(-3, 4) if o != 0]
    hmask = {o: (h_idx + o >= 0) & (h_idx + o < H) for o in offs}
    wmask = {o: (w_idx + o >= 0) & (w_idx + o < W) for o in offs}
    sub0 = jax.lax.broadcasted_iota(jnp.int32, (2, 1), 0) == 0   # SA row selector

    # cv1: BN-folded 1x1 conv (MXU matmul, f32 accumulate) + SiLU
    x = x_ref[0].astype(mm_dtype)                            # (C1, HW)
    x0 = _silu_k(jnp.dot(w1_ref[...], x, preferred_element_type=jnp.float32)
                 + b1_ref[...], approx)                      # (Cm, HW) f32

    cbam = functools.partial(_cbam_flat, ca1_ref=ca1_ref, ca2_ref=ca2_ref,
                             sa_ref=sa_ref, sub0=sub0, hmask=hmask,
                             wmask=wmask, W=W, hw=hw, approx=approx)

    # SPPF with CBAM after every stage; each stage parks its result in a
    # row-band of the concat scratch so cv2 runs as ONE K=4*Cm dot. [review #5]
    x0 = cbam(x0, 0)
    cat_ref[pl.ds(0 * Cm, Cm), :] = x0
    y1 = cbam(_maxpool5_flat(x0, hmask, wmask, W, hw), 1)
    cat_ref[pl.ds(1 * Cm, Cm), :] = y1
    y2 = cbam(_maxpool5_flat(y1, hmask, wmask, W, hw), 2)
    cat_ref[pl.ds(2 * Cm, Cm), :] = y2
    y3 = cbam(_maxpool5_flat(y2, hmask, wmask, W, hw), 3)
    cat_ref[pl.ds(3 * Cm, Cm), :] = y3

    # cv2: single fused matmul over the concatenated channels + bias + SiLU
    z = jnp.dot(w2_ref[...], cat_ref[...].astype(mm_dtype),
                preferred_element_type=jnp.float32)
    o_ref[0] = _silu_k(z + b2_ref[...], approx)              # (C2, HW), lane-dense


# ---------------------------------------------------------------- wrapper ---
def sppf_cbam_pallas(x_nchw, p, *, matmul_dtype=jnp.bfloat16, approx_sigmoid=True):
    x = x_nchw.astype(jnp.float32)
    N, C1, H, W = x.shape
    hw = H * W
    Cm = p['w1'].shape[0]
    C2 = p['w2'].shape[0]

    x2 = x.reshape(N, C1, hw)                                # free NCHW-native reshape
    lane = jnp.arange(hw, dtype=jnp.int32)
    hpos = (lane // W).reshape(1, hw)                        # row index of each lane
    wpos = (lane % W).reshape(1, hw)                         # col index of each lane

    # [review #4] only the matmul operands are narrowed; biases / CBAM weights
    # and all element-wise math stay f32.
    w1 = p['w1'].astype(matmul_dtype)
    w2 = p['w2'].astype(matmul_dtype)

    kernel = functools.partial(sppf_cbam_kernel, H=H, W=W, approx=approx_sigmoid)
    out = pl.pallas_call(
        kernel,
        out_shape=jax.ShapeDtypeStruct((N, C2, hw), jnp.float32),
        grid=(N,),
        in_specs=[
            pl.BlockSpec((1, C1, hw), lambda n: (n, 0, 0)),      # activations
            pl.BlockSpec((1, hw), lambda n: (0, 0)),             # hpos
            pl.BlockSpec((1, hw), lambda n: (0, 0)),             # wpos
            pl.BlockSpec((Cm, C1), lambda n: (0, 0)),            # w1 (BN-folded)
            pl.BlockSpec((Cm, 1), lambda n: (0, 0)),             # b1
            pl.BlockSpec((4, Cm, 1), lambda n: (0, 0, 0)),       # CBAM fc1 weights
            pl.BlockSpec((4, Cm, 1), lambda n: (0, 0, 0)),       # CBAM fc2 weights
            pl.BlockSpec(memory_space=pltpu.MemorySpace.SMEM),   # 7x7 SA weights (4,98)
            pl.BlockSpec((C2, 4 * Cm), lambda n: (0, 0)),        # w2 (BN-folded, flat)
            pl.BlockSpec((C2, 1), lambda n: (0, 0)),             # b2
        ],
        out_specs=pl.BlockSpec((1, C2, hw), lambda n: (n, 0, 0)),
        scratch_shapes=[pltpu.VMEM((4 * Cm, hw), jnp.float32)],  # concat staging
        compiler_params=pltpu.CompilerParams(
            # Batch items independent; on v7x pair with a per-core split if N==1.
            dimension_semantics=("parallel",),
            vmem_limit_bytes=32 * 1024 * 1024,       # fits v7x's 64-MiB VMEM w/ headroom
        ),
    )(x2, hpos, wpos, w1, p['b1'], p['ca1'], p['ca2'], p['sa'], w2, p['b2'])

    return out.reshape(N, C2, H, W)                          # free reshape back to NCHW


# ------------------------------------------------- deterministic parameters -
def make_params(key, c1, c2):
    c_ = c1 // 2
    keys = jax.random.split(key, 5)

    def fold_conv_bn(k, cin, cout):
        k1, k2, k3, k4, k5 = jax.random.split(k, 5)
        w = 0.3 * jax.random.normal(k1, (cout, cin), jnp.float32)    # 1x1 conv, no bias
        gamma = 1.0 + 0.1 * jax.random.normal(k2, (cout,), jnp.float32)
        beta = 0.1 * jax.random.normal(k3, (cout,), jnp.float32)
        mean = 0.1 * jax.random.normal(k4, (cout,), jnp.float32)
        var = 0.5 + jax.random.uniform(k5, (cout,), jnp.float32)
        s = gamma / jnp.sqrt(var + 1e-3)                             # BN eps = 0.001
        return w * s[:, None], (beta - mean * s)[:, None]

    w1, b1 = fold_conv_bn(keys[0], c1, c_)                           # (c_, c1), (c_, 1)
    w2, b2 = fold_conv_bn(keys[1], 4 * c_, c2)                       # (c2, 4c_), (c2, 1)
    ca1 = 0.3 * jax.random.normal(keys[2], (4, c_, 1), jnp.float32)  # fc1: (1, c_, 1, 1)
    ca2 = 0.3 * jax.random.normal(keys[3], (4, c_, 1), jnp.float32)  # fc2: (c_, 1, 1, 1)
    sa = 0.1 * jax.random.normal(keys[4], (4, 2 * 7 * 7), jnp.float32)  # (1,2,7,7) flat
    return dict(w1=w1, b1=b1, w2=w2, b2=b2, ca1=ca1, ca2=ca2, sa=sa)


# ----------------------------------------------------- pure-JAX reference ---
def ref_forward(x_nchw, p):
    x = jnp.transpose(x_nchw, (0, 2, 3, 1)).astype(jnp.float32)      # NHWC
    hi = jax.lax.Precision.HIGHEST

    def silu(v):
        return v * jax.nn.sigmoid(v)

    def cbr(x, w, b):                                 # w: (cout, cin), b: (cout, 1)
        y = jnp.einsum('nhwc,dc->nhwd', x, w, precision=hi)
        return silu(y + b[:, 0][None, None, None, :])

    def maxpool(x):
        return jax.lax.reduce_window(x, -jnp.inf, jax.lax.max,
                                     (1, 5, 5, 1), (1, 1, 1, 1),
                                     ((0, 0), (2, 2), (2, 2), (0, 0)))

    def cbam(x, i):
        w1 = p['ca1'][i, :, 0]
        w2 = p['ca2'][i, :, 0]
        avg = jnp.mean(x, axis=(1, 2))
        mx = jnp.max(x, axis=(1, 2))
        h = (jnp.maximum(jnp.sum(avg * w1, axis=1, keepdims=True), 0.0) +
             jnp.maximum(jnp.sum(mx * w1, axis=1, keepdims=True), 0.0))
        ca = jax.nn.sigmoid(w2[None, :] * h)
        x = x * ca[:, None, None, :]
        smap = jnp.stack([jnp.mean(x, axis=3), jnp.max(x, axis=3)], axis=-1)
        wk = jnp.transpose(p['sa'][i].reshape(2, 7, 7), (1, 2, 0))[:, :, :, None]
        conv = jax.lax.conv_general_dilated(
            smap, wk, (1, 1), ((3, 3), (3, 3)),
            dimension_numbers=('NHWC', 'HWIO', 'NHWC'), precision=hi)
        return x * jax.nn.sigmoid(conv)

    x0 = cbam(cbr(x, p['w1'], p['b1']), 0)
    y1 = cbam(maxpool(x0), 1)
    y2 = cbam(maxpool(y1), 2)
    y3 = cbam(maxpool(y2), 3)
    cat = jnp.concatenate([x0, y1, y2, y3], axis=-1)
    out = cbr(cat, p['w2'], p['b2'])
    return jnp.transpose(out, (0, 3, 1, 2))


# -------------------------------------------------------------------- main --
if __name__ == "__main__":
    key = jax.random.PRNGKey(0)
    kx, kp = jax.random.split(key)
    N, C1, H, W = 2, 16, 16, 16
    C2 = 16

    x = jax.random.normal(kx, (N, C1, H, W), jnp.float32)    # PyTorch NCHW input
    params = make_params(kp, C1, C2)
    ref = jax.block_until_ready(ref_forward(x, params))

    # 1) Exact-math configuration (f32 matmul operands, exact-divide sigmoid):
    #    tight structural correctness check against the f32 reference.
    out_exact = jax.block_until_ready(
        sppf_cbam_pallas(x, params, matmul_dtype=jnp.float32, approx_sigmoid=False))
    assert out_exact.shape == (N, C2, H, W)
    if not bool(jnp.isfinite(out_exact).all()):
        raise RuntimeError("non-finite output (exact path)")
    err = float(jnp.max(jnp.abs(out_exact - ref)))
    if err > 2e-3:
        raise RuntimeError(f"exact path mismatch vs reference: max abs err = {err}")

    # 2) Production configuration (review items 3+4): bf16 MXU operands +
    #    EUP approximate-reciprocal sigmoids.  Structure is already validated
    #    above; this loose check only covers the intentional numerics change.
    out_fast = jax.block_until_ready(sppf_cbam_pallas(x, params))
    if not bool(jnp.isfinite(out_fast).all()):
        raise RuntimeError("non-finite output (fast path)")
    err_fast = float(jnp.max(jnp.abs(out_fast - ref)))
    if err_fast > 0.15:
        raise RuntimeError(f"fast path mismatch vs reference: max abs err = {err_fast}")

    print("KERNEL_OK")
</pallas_src>

<mosaic_0001>
module attributes {stable_mosaic.version = 11 : i64} {
  func.func @sppf_cbam_kernel(%arg0: i32, %arg1: memref<1x16x256xf32, #tpu.memory_space<vmem>>, %arg2: memref<1x256xi32, #tpu.memory_space<vmem>>, %arg3: memref<1x256xi32, #tpu.memory_space<vmem>>, %arg4: memref<8x16xf32, #tpu.memory_space<vmem>>, %arg5: memref<8x1xf32, #tpu.memory_space<vmem>>, %arg6: memref<4x8x1xf32, #tpu.memory_space<vmem>>, %arg7: memref<4x8x1xf32, #tpu.memory_space<vmem>>, %arg8: memref<4x98xf32, #tpu.memory_space<smem>>, %arg9: memref<16x32xf32, #tpu.memory_space<vmem>>, %arg10: memref<16x1xf32, #tpu.memory_space<vmem>>, %arg11: memref<1x16x256xf32, #tpu.memory_space<vmem>>, %arg12: memref<32x256xf32, #tpu.memory_space<vmem>>) attributes {dimension_semantics = [#tpu.dimension_semantics<parallel>], iteration_bounds = array<i64: 2>, scalar_prefetch = 0 : i64, scratch_operands = 1 : i64, tpu.core_type = #tpu.core_type<tc>, window_params = [{transform_indices = @transform_0, window_bounds = array<i64: 1, 16, 256>}, {pipeline_mode = #tpu.pipeline_mode<synchronous>, transform_indices = @transform_1, window_bounds = array<i64: 1, 256>}, {pipeline_mode = #tpu.pipeline_mode<synchronous>, transform_indices = @transform_2, window_bounds = array<i64: 1, 256>}, {pipeline_mode = #tpu.pipeline_mode<synchronous>, transform_indices = @transform_3, window_bounds = array<i64: 8, 16>}, {pipeline_mode = #tpu.pipeline_mode<synchronous>, transform_indices = @transform_4, window_bounds = array<i64: 8, 1>}, {pipeline_mode = #tpu.pipeline_mode<synchronous>, transform_indices = @transform_5, window_bounds = array<i64: 4, 8, 1>}, {pipeline_mode = #tpu.pipeline_mode<synchronous>, transform_indices = @transform_6, window_bounds = array<i64: 4, 8, 1>}, {transform_indices = @transform_7, window_bounds = array<i64: 4, 98>}, {pipeline_mode = #tpu.pipeline_mode<synchronous>, transform_indices = @transform_8, window_bounds = array<i64: 16, 32>}, {pipeline_mode = #tpu.pipeline_mode<synchronous>, transform_indices = @transform_9, window_bounds = array<i64: 16, 1>}, {transform_indices = @transform_10, window_bounds = array<i64: 1, 16, 256>}]} {
    %c0 = arith.constant 0 : index
    %c0_0 = arith.constant 0 : index
    %0 = vector.load %arg2[%c0, %c0_0] : memref<1x256xi32, #tpu.memory_space<vmem>>, vector<1x256xi32>
    %c0_1 = arith.constant 0 : index
    %c0_2 = arith.constant 0 : index
    %1 = vector.load %arg3[%c0_1, %c0_2] : memref<1x256xi32, #tpu.memory_space<vmem>>, vector<1x256xi32>
    %c-3_i32 = arith.constant -3 : i32
    %2 = vector.broadcast %c-3_i32 : i32 to vector<1x256xi32>
    %3 = arith.addi %0, %2 : vector<1x256xi32>
    %c0_i32 = arith.constant 0 : i32
    %4 = vector.broadcast %c0_i32 : i32 to vector<1x256xi32>
    %5 = arith.cmpi sge, %3, %4 : vector<1x256xi32>
    %c-3_i32_3 = arith.constant -3 : i32
    %6 = vector.broadcast %c-3_i32_3 : i32 to vector<1x256xi32>
    %7 = arith.addi %0, %6 : vector<1x256xi32>
    %c16_i32 = arith.constant 16 : i32
    %8 = vector.broadcast %c16_i32 : i32 to vector<1x256xi32>
    %9 = arith.cmpi slt, %7, %8 : vector<1x256xi32>
    %10 = arith.andi %5, %9 : vector<1x256xi1>
    %c-2_i32 = arith.constant -2 : i32
    %11 = vector.broadcast %c-2_i32 : i32 to vector<1x256xi32>
    %12 = arith.addi %0, %11 : vector<1x256xi32>
    %c0_i32_4 = arith.constant 0 : i32
    %13 = vector.broadcast %c0_i32_4 : i32 to vector<1x256xi32>
    %14 = arith.cmpi sge, %12, %13 : vector<1x256xi32>
    %c-2_i32_5 = arith.constant -2 : i32
    %15 = vector.broadcast %c-2_i32_5 : i32 to vector<1x256xi32>
    %16 = arith.addi %0, %15 : vector<1x256xi32>
    %c16_i32_6 = arith.constant 16 : i32
    %17 = vector.broadcast %c16_i32_6 : i32 to vector<1x256xi32>
    %18 = arith.cmpi slt, %16, %17 : vector<1x256xi32>
    %19 = arith.andi %14, %18 : vector<1x256xi1>
    %c-1_i32 = arith.constant -1 : i32
    %20 = vector.broadcast %c-1_i32 : i32 to vector<1x256xi32>
    %21 = arith.addi %0, %20 : vector<1x256xi32>
    %c0_i32_7 = arith.constant 0 : i32
    %22 = vector.broadcast %c0_i32_7 : i32 to vector<1x256xi32>
    %23 = arith.cmpi sge, %21, %22 : vector<1x256xi32>
    %c-1_i32_8 = arith.constant -1 : i32
    %24 = vector.broadcast %c-1_i32_8 : i32 to vector<1x256xi32>
    %25 = arith.addi %0, %24 : vector<1x256xi32>
    %c16_i32_9 = arith.constant 16 : i32
    %26 = vector.broadcast %c16_i32_9 : i32 to vector<1x256xi32>
    %27 = arith.cmpi slt, %25, %26 : vector<1x256xi32>
    %28 = arith.andi %23, %27 : vector<1x256xi1>
    %c1_i32 = arith.constant 1 : i32
    %29 = vector.broadcast %c1_i32 : i32 to vector<1x256xi32>
    %30 = arith.addi %0, %29 : vector<1x256xi32>
    %c0_i32_10 = arith.constant 0 : i32
    %31 = vector.broadcast %c0_i32_10 : i32 to vector<1x256xi32>
    %32 = arith.cmpi sge, %30, %31 : vector<1x256xi32>
    %c1_i32_11 = arith.constant 1 : i32
    %33 = vector.broadcast %c1_i32_11 : i32 to vector<1x256xi32>
    %34 = arith.addi %0, %33 : vector<1x256xi32>
    %c16_i32_12 = arith.constant 16 : i32
    %35 = vector.broadcast %c16_i32_12 : i32 to vector<1x256xi32>
    %36 = arith.cmpi slt, %34, %35 : vector<1x256xi32>
    %37 = arith.andi %32, %36 : vector<1x256xi1>
    %c2_i32 = arith.constant 2 : i32
    %38 = vector.broadcast %c2_i32 : i32 to vector<1x256xi32>
    %39 = arith.addi %0, %38 : vector<1x256xi32>
    %c0_i32_13 = arith.constant 0 : i32
    %40 = vector.broadcast %c0_i32_13 : i32 to vector<1x256xi32>
    %41 = arith.cmpi sge, %39, %40 : vector<1x256xi32>
    %c2_i32_14 = arith.constant 2 : i32
    %42 = vector.broadcast %c2_i32_14 : i32 to vector<1x256xi32>
    %43 = arith.addi %0, %42 : vector<1x256xi32>
    %c16_i32_15 = arith.constant 16 : i32
    %44 = vector.broadcast %c16_i32_15 : i32 to vector<1x256xi32>
    %45 = arith.cmpi slt, %43, %44 : vector<1x256xi32>
    %46 = arith.andi %41, %45 : vector<1x256xi1>
    %c3_i32 = arith.constant 3 : i32
    %47 = vector.broadcast %c3_i32 : i32 to vector<1x256xi32>
    %48 = arith.addi %0, %47 : vector<1x256xi32>
    %c0_i32_16 = arith.constant 0 : i32
    %49 = vector.broadcast %c0_i32_16 : i32 to vector<1x256xi32>
    %50 = arith.cmpi sge, %48, %49 : vector<1x256xi32>
    %c3_i32_17 = arith.constant 3 : i32
    %51 = vector.broadcast %c3_i32_17 : i32 to vector<1x256xi32>
    %52 = arith.addi %0, %51 : vector<1x256xi32>
    %c16_i32_18 = arith.constant 16 : i32
    %53 = vector.broadcast %c16_i32_18 : i32 to vector<1x256xi32>
    %54 = arith.cmpi slt, %52, %53 : vector<1x256xi32>
    %55 = arith.andi %50, %54 : vector<1x256xi1>
    %c-3_i32_19 = arith.constant -3 : i32
    %56 = vector.broadcast %c-3_i32_19 : i32 to vector<1x256xi32>
    %57 = arith.addi %1, %56 : vector<1x256xi32>
    %c0_i32_20 = arith.constant 0 : i32
    %58 = vector.broadcast %c0_i32_20 : i32 to vector<1x256xi32>
    %59 = arith.cmpi sge, %57, %58 : vector<1x256xi32>
    %c-3_i32_21 = arith.constant -3 : i32
    %60 = vector.broadcast %c-3_i32_21 : i32 to vector<1x256xi32>
    %61 = arith.addi %1, %60 : vector<1x256xi32>
    %c16_i32_22 = arith.constant 16 : i32
    %62 = vector.broadcast %c16_i32_22 : i32 to vector<1x256xi32>
    %63 = arith.cmpi slt, %61, %62 : vector<1x256xi32>
    %64 = arith.andi %59, %63 : vector<1x256xi1>
    %c-2_i32_23 = arith.constant -2 : i32
    %65 = vector.broadcast %c-2_i32_23 : i32 to vector<1x256xi32>
    %66 = arith.addi %1, %65 : vector<1x256xi32>
    %c0_i32_24 = arith.constant 0 : i32
    %67 = vector.broadcast %c0_i32_24 : i32 to vector<1x256xi32>
    %68 = arith.cmpi sge, %66, %67 : vector<1x256xi32>
    %c-2_i32_25 = arith.constant -2 : i32
    %69 = vector.broadcast %c-2_i32_25 : i32 to vector<1x256xi32>
    %70 = arith.addi %1, %69 : vector<1x256xi32>
    %c16_i32_26 = arith.constant 16 : i32
    %71 = vector.broadcast %c16_i32_26 : i32 to vector<1x256xi32>
    %72 = arith.cmpi slt, %70, %71 : vector<1x256xi32>
    %73 = arith.andi %68, %72 : vector<1x256xi1>
    %c-1_i32_27 = arith.constant -1 : i32
    %74 = vector.broadcast %c-1_i32_27 : i32 to vector<1x256xi32>
    %75 = arith.addi %1, %74 : vector<1x256xi32>
    %c0_i32_28 = arith.constant 0 : i32
    %76 = vector.broadcast %c0_i32_28 : i32 to vector<1x256xi32>
    %77 = arith.cmpi sge, %75, %76 : vector<1x256xi32>
    %c-1_i32_29 = arith.constant -1 : i32
    %78 = vector.broadcast %c-1_i32_29 : i32 to vector<1x256xi32>
    %79 = arith.addi %1, %78 : vector<1x256xi32>
    %c16_i32_30 = arith.constant 16 : i32
    %80 = vector.broadcast %c16_i32_30 : i32 to vector<1x256xi32>
    %81 = arith.cmpi slt, %79, %80 : vector<1x256xi32>
    %82 = arith.andi %77, %81 : vector<1x256xi1>
    %c1_i32_31 = arith.constant 1 : i32
    %83 = vector.broadcast %c1_i32_31 : i32 to vector<1x256xi32>
    %84 = arith.addi %1, %83 : vector<1x256xi32>
    %c0_i32_32 = arith.constant 0 : i32
    %85 = vector.broadcast %c0_i32_32 : i32 to vector<1x256xi32>
    %86 = arith.cmpi sge, %84, %85 : vector<1x256xi32>
    %c1_i32_33 = arith.constant 1 : i32
    %87 = vector.broadcast %c1_i32_33 : i32 to vector<1x256xi32>
    %88 = arith.addi %1, %87 : vector<1x256xi32>
    %c16_i32_34 = arith.constant 16 : i32
    %89 = vector.broadcast %c16_i32_34 : i32 to vector<1x256xi32>
    %90 = arith.cmpi slt, %88, %89 : vector<1x256xi32>
    %91 = arith.andi %86, %90 : vector<1x256xi1>
    %c2_i32_35 = arith.constant 2 : i32
    %92 = vector.broadcast %c2_i32_35 : i32 to vector<1x256xi32>
    %93 = arith.addi %1, %92 : vector<1x256xi32>
    %c0_i32_36 = arith.constant 0 : i32
    %94 = vector.broadcast %c0_i32_36 : i32 to vector<1x256xi32>
    %95 = arith.cmpi sge, %93, %94 : vector<1x256xi32>
    %c2_i32_37 = arith.constant 2 : i32
    %96 = vector.broadcast %c2_i32_37 : i32 to vector<1x256xi32>
    %97 = arith.addi %1, %96 : vector<1x256xi32>
    %c16_i32_38 = arith.constant 16 : i32
    %98 = vector.broadcast %c16_i32_38 : i32 to vector<1x256xi32>
    %99 = arith.cmpi slt, %97, %98 : vector<1x256xi32>
    %100 = arith.andi %95, %99 : vector<1x256xi1>
    %c3_i32_39 = arith.constant 3 : i32
    %101 = vector.broadcast %c3_i32_39 : i32 to vector<1x256xi32>
    %102 = arith.addi %1, %101 : vector<1x256xi32>
    %c0_i32_40 = arith.constant 0 : i32
    %103 = vector.broadcast %c0_i32_40 : i32 to vector<1x256xi32>
    %104 = arith.cmpi sge, %102, %103 : vector<1x256xi32>
    %c3_i32_41 = arith.constant 3 : i32
    %105 = vector.broadcast %c3_i32_41 : i32 to vector<1x256xi32>
    %106 = arith.addi %1, %105 : vector<1x256xi32>
    %c16_i32_42 = arith.constant 16 : i32
    %107 = vector.broadcast %c16_i32_42 : i32 to vector<1x256xi32>
    %108 = arith.cmpi slt, %106, %107 : vector<1x256xi32>
    %109 = arith.andi %104, %108 : vector<1x256xi1>
    %110 = tpu.iota {dimensions = array<i32: 0>} : vector<2x1xi32>
    %c0_i32_43 = arith.constant 0 : i32
    %111 = vector.broadcast %c0_i32_43 : i32 to vector<2x1xi32>
    %112 = arith.cmpi eq, %110, %111 : vector<2x1xi32>
    %c0_44 = arith.constant 0 : index
    %c0_45 = arith.constant 0 : index
    %c0_46 = arith.constant 0 : index
    %113 = vector.load %arg1[%c0_44, %c0_45, %c0_46] : memref<1x16x256xf32, #tpu.memory_space<vmem>>, vector<1x16x256xf32>
    %114 = vector.shape_cast %113 : vector<1x16x256xf32> to vector<16x256xf32>
    %c0_47 = arith.constant 0 : index
    %c0_48 = arith.constant 0 : index
    %115 = vector.load %arg4[%c0_47, %c0_48] : memref<8x16xf32, #tpu.memory_space<vmem>>, vector<8x16xf32>
    %cst = arith.constant dense<0.000000e+00> : vector<8x256xf32>
    %116 = tpu.matmul %115, %114, %cst {dimension_numbers = #tpu.dot_dimension_numbers<[1], [0], [0], [1], [0, 0, 1, 1], [], []>} : vector<8x16xf32>, vector<16x256xf32>, vector<8x256xf32> -> vector<8x256xf32>
    %c0_49 = arith.constant 0 : index
    %c0_50 = arith.constant 0 : index
    %117 = vector.load %arg5[%c0_49, %c0_50] : memref<8x1xf32, #tpu.memory_space<vmem>>, vector<8x1xf32>
    %118 = vector.broadcast %117 : vector<8x1xf32> to vector<8x256xf32>
    %119 = arith.addf %116, %118 : vector<8x256xf32>
    %cst_51 = arith.constant 0.000000e+00 : f32
    %120 = vector.broadcast %cst_51 : f32 to vector<8x256xf32>
    %121 = arith.subf %120, %119 : vector<8x256xf32>
    %122 = math.exp %121 : vector<8x256xf32>
    %cst_52 = arith.constant 1.000000e+00 : f32
    %123 = vector.broadcast %cst_52 : f32 to vector<8x256xf32>
    %124 = arith.addf %123, %122 : vector<8x256xf32>
    %125 = tpu.reciprocal %124 : vector<8x256xf32> -> vector<8x256xf32>
    %126 = arith.mulf %119, %125 : vector<8x256xf32>
    %c0_53 = arith.constant 0 : index
    %c0_54 = arith.constant 0 : index
    %c0_55 = arith.constant 0 : index
    %127 = vector.load %arg6[%c0_53, %c0_54, %c0_55] : memref<4x8x1xf32, #tpu.memory_space<vmem>>, vector<1x8x1xf32>
    %128 = vector.shape_cast %127 : vector<1x8x1xf32> to vector<8x1xf32>
    %c0_56 = arith.constant 0 : index
    %c0_57 = arith.constant 0 : index
    %c0_58 = arith.constant 0 : index
    %129 = vector.load %arg7[%c0_56, %c0_57, %c0_58] : memref<4x8x1xf32, #tpu.memory_space<vmem>>, vector<1x8x1xf32>
    %130 = vector.shape_cast %129 : vector<1x8x1xf32> to vector<8x1xf32>
    %cst_59 = arith.constant dense<0.000000e+00> : vector<8xf32>
    %131 = vector.multi_reduction <add>, %126, %cst_59 [1] : vector<8x256xf32> to vector<8xf32>
    %132 = vector.shape_cast %131 : vector<8xf32> to vector<8x1xf32>
    %cst_60 = arith.constant 3.906250e-03 : f32
    %133 = vector.broadcast %cst_60 : f32 to vector<8x1xf32>
    %134 = arith.mulf %132, %133 : vector<8x1xf32>
    %cst_61 = arith.constant dense<0xFF800000> : vector<8xf32>
    %135 = vector.multi_reduction <maximumf>, %126, %cst_61 [1] : vector<8x256xf32> to vector<8xf32>
    %136 = vector.shape_cast %135 : vector<8xf32> to vector<8x1xf32>
    %137 = arith.mulf %134, %128 : vector<8x1xf32>
    %cst_62 = arith.constant dense<0.000000e+00> : vector<1xf32>
    %138 = vector.multi_reduction <add>, %137, %cst_62 [0] : vector<8x1xf32> to vector<1xf32>
    %139 = vector.shape_cast %138 : vector<1xf32> to vector<1x1xf32>
    %cst_63 = arith.constant 0.000000e+00 : f32
    %140 = vector.broadcast %cst_63 : f32 to vector<1x1xf32>
    %141 = arith.maximumf %139, %140 : vector<1x1xf32>
    %142 = arith.mulf %136, %128 : vector<8x1xf32>
    %cst_64 = arith.constant dense<0.000000e+00> : vector<1xf32>
    %143 = vector.multi_reduction <add>, %142, %cst_64 [0] : vector<8x1xf32> to vector<1xf32>
    %144 = vector.shape_cast %143 : vector<1xf32> to vector<1x1xf32>
    %cst_65 = arith.constant 0.000000e+00 : f32
    %145 = vector.broadcast %cst_65 : f32 to vector<1x1xf32>
    %146 = arith.maximumf %144, %145 : vector<1x1xf32>
    %147 = arith.addf %141, %146 : vector<1x1xf32>
    %148 = vector.broadcast %147 : vector<1x1xf32> to vector<8x1xf32>
    %149 = arith.mulf %130, %148 : vector<8x1xf32>
    %cst_66 = arith.constant 0.000000e+00 : f32
    %150 = vector.broadcast %cst_66 : f32 to vector<8x1xf32>
    %151 = arith.subf %150, %149 : vector<8x1xf32>
    %152 = math.exp %151 : vector<8x1xf32>
    %cst_67 = arith.constant 1.000000e+00 : f32
    %153 = vector.broadcast %cst_67 : f32 to vector<8x1xf32>
    %154 = arith.addf %153, %152 : vector<8x1xf32>
    %155 = tpu.reciprocal %154 : vector<8x1xf32> -> vector<8x1xf32>
    %156 = vector.broadcast %155 : vector<8x1xf32> to vector<8x256xf32>
    %157 = arith.mulf %126, %156 : vector<8x256xf32>
    %cst_68 = arith.constant dense<0.000000e+00> : vector<256xf32>
    %158 = vector.multi_reduction <add>, %157, %cst_68 [0] : vector<8x256xf32> to vector<256xf32>
    %159 = vector.shape_cast %158 : vector<256xf32> to vector<1x256xf32>
    %cst_69 = arith.constant 1.250000e-01 : f32
    %160 = vector.broadcast %cst_69 : f32 to vector<1x256xf32>
    %161 = arith.mulf %159, %160 : vector<1x256xf32>
    %cst_70 = arith.constant dense<0xFF800000> : vector<256xf32>
    %162 = vector.multi_reduction <maximumf>, %157, %cst_70 [0] : vector<8x256xf32> to vector<256xf32>
    %163 = vector.shape_cast %162 : vector<256xf32> to vector<1x256xf32>
    %164 = vector.shape_cast %112 : vector<2x1xi1> to vector<2x1xi1>
    %165 = vector.broadcast %164 : vector<2x1xi1> to vector<2x256xi1>
    %166 = vector.shape_cast %161 : vector<1x256xf32> to vector<1x256xf32>
    %167 = vector.broadcast %166 : vector<1x256xf32> to vector<2x256xf32>
    %168 = vector.shape_cast %163 : vector<1x256xf32> to vector<1x256xf32>
    %169 = vector.broadcast %168 : vector<1x256xf32> to vector<2x256xf32>
    %170 = arith.select %165, %167, %169 : vector<2x256xi1>, vector<2x256xf32>
    %c3_i32_71 = arith.constant 3 : i32
    %171 = tpu.dynamic_rotate %170 by %c3_i32_71 dim 1 : vector<2x256xf32>, i32 -> vector<2x256xf32>
    %cst_72 = arith.constant 0.000000e+00 : f32
    %172 = vector.shape_cast %64 : vector<1x256xi1> to vector<1x256xi1>
    %173 = vector.broadcast %172 : vector<1x256xi1> to vector<2x256xi1>
    %174 = vector.broadcast %cst_72 : f32 to vector<2x256xf32>
    %175 = arith.select %173, %171, %174 : vector<2x256xi1>, vector<2x256xf32>
    %c2_i32_73 = arith.constant 2 : i32
    %176 = tpu.dynamic_rotate %170 by %c2_i32_73 dim 1 : vector<2x256xf32>, i32 -> vector<2x256xf32>
    %cst_74 = arith.constant 0.000000e+00 : f32
    %177 = vector.shape_cast %73 : vector<1x256xi1> to vector<1x256xi1>
    %178 = vector.broadcast %177 : vector<1x256xi1> to vector<2x256xi1>
    %179 = vector.broadcast %cst_74 : f32 to vector<2x256xf32>
    %180 = arith.select %178, %176, %179 : vector<2x256xi1>, vector<2x256xf32>
    %c1_i32_75 = arith.constant 1 : i32
    %181 = tpu.dynamic_rotate %170 by %c1_i32_75 dim 1 : vector<2x256xf32>, i32 -> vector<2x256xf32>
    %cst_76 = arith.constant 0.000000e+00 : f32
    %182 = vector.shape_cast %82 : vector<1x256xi1> to vector<1x256xi1>
    %183 = vector.broadcast %182 : vector<1x256xi1> to vector<2x256xi1>
    %184 = vector.broadcast %cst_76 : f32 to vector<2x256xf32>
    %185 = arith.select %183, %181, %184 : vector<2x256xi1>, vector<2x256xf32>
    %c255_i32 = arith.constant 255 : i32
    %186 = tpu.dynamic_rotate %170 by %c255_i32 dim 1 : vector<2x256xf32>, i32 -> vector<2x256xf32>
    %cst_77 = arith.constant 0.000000e+00 : f32
    %187 = vector.shape_cast %91 : vector<1x256xi1> to vector<1x256xi1>
    %188 = vector.broadcast %187 : vector<1x256xi1> to vector<2x256xi1>
    %189 = vector.broadcast %cst_77 : f32 to vector<2x256xf32>
    %190 = arith.select %188, %186, %189 : vector<2x256xi1>, vector<2x256xf32>
    %c254_i32 = arith.constant 254 : i32
    %191 = tpu.dynamic_rotate %170 by %c254_i32 dim 1 : vector<2x256xf32>, i32 -> vector<2x256xf32>
    %cst_78 = arith.constant 0.000000e+00 : f32
    %192 = vector.shape_cast %100 : vector<1x256xi1> to vector<1x256xi1>
    %193 = vector.broadcast %192 : vector<1x256xi1> to vector<2x256xi1>
    %194 = vector.broadcast %cst_78 : f32 to vector<2x256xf32>
    %195 = arith.select %193, %191, %194 : vector<2x256xi1>, vector<2x256xf32>
    %c253_i32 = arith.constant 253 : i32
    %196 = tpu.dynamic_rotate %170 by %c253_i32 dim 1 : vector<2x256xf32>, i32 -> vector<2x256xf32>
    %cst_79 = arith.constant 0.000000e+00 : f32
    %197 = vector.shape_cast %109 : vector<1x256xi1> to vector<1x256xi1>
    %198 = vector.broadcast %197 : vector<1x256xi1> to vector<2x256xi1>
    %199 = vector.broadcast %cst_79 : f32 to vector<2x256xf32>
    %200 = arith.select %198, %196, %199 : vector<2x256xi1>, vector<2x256xf32>
    %c0_80 = arith.constant 0 : index
    %c0_81 = arith.constant 0 : index
    %201 = memref.load %arg8[%c0_80, %c0_81] : memref<4x98xf32, #tpu.memory_space<smem>>
    %c0_82 = arith.constant 0 : index
    %c49 = arith.constant 49 : index
    %202 = memref.load %arg8[%c0_82, %c49] : memref<4x98xf32, #tpu.memory_space<smem>>
    %203 = vector.broadcast %201 : f32 to vector<2x1xf32>
    %204 = vector.broadcast %202 : f32 to vector<2x1xf32>
    %205 = arith.select %112, %203, %204 : vector<2x1xi1>, vector<2x1xf32>
    %206 = vector.broadcast %205 : vector<2x1xf32> to vector<2x256xf32>
    %207 = arith.mulf %206, %175 : vector<2x256xf32>
    %c0_83 = arith.constant 0 : index
    %c1 = arith.constant 1 : index
    %208 = memref.load %arg8[%c0_83, %c1] : memref<4x98xf32, #tpu.memory_space<smem>>
    %c0_84 = arith.constant 0 : index
    %c50 = arith.constant 50 : index
    %209 = memref.load %arg8[%c0_84, %c50] : memref<4x98xf32, #tpu.memory_space<smem>>
    %210 = vector.broadcast %208 : f32 to vector<2x1xf32>
    %211 = vector.broadcast %209 : f32 to vector<2x1xf32>
    %212 = arith.select %112, %210, %211 : vector<2x1xi1>, vector<2x1xf32>
    %213 = vector.broadcast %212 : vector<2x1xf32> to vector<2x256xf32>
    %214 = arith.mulf %213, %180 : vector<2x256xf32>
    %215 = arith.addf %207, %214 : vector<2x256xf32>
    %c0_85 = arith.constant 0 : index
    %c2 = arith.constant 2 : index
    %216 = memref.load %arg8[%c0_85, %c2] : memref<4x98xf32, #tpu.memory_space<smem>>
    %c0_86 = arith.constant 0 : index
    %c51 = arith.constant 51 : index
    %217 = memref.load %arg8[%c0_86, %c51] : memref<4x98xf32, #tpu.memory_space<smem>>
    %218 = vector.broadcast %216 : f32 to vector<2x1xf32>
    %219 = vector.broadcast %217 : f32 to vector<2x1xf32>
    %220 = arith.select %112, %218, %219 : vector<2x1xi1>, vector<2x1xf32>
    %221 = vector.broadcast %220 : vector<2x1xf32> to vector<2x256xf32>
    %222 = arith.mulf %221, %185 : vector<2x256xf32>
    %223 = arith.addf %215, %222 : vector<2x256xf32>
    %c0_87 = arith.constant 0 : index
    %c3 = arith.constant 3 : index
    %224 = memref.load %arg8[%c0_87, %c3] : memref<4x98xf32, #tpu.memory_space<smem>>
    %c0_88 = arith.constant 0 : index
    %c52 = arith.constant 52 : index
    %225 = memref.load %arg8[%c0_88, %c52] : memref<4x98xf32, #tpu.memory_space<smem>>
    %226 = vector.broadcast %224 : f32 to vector<2x1xf32>
    %227 = vector.broadcast %225 : f32 to vector<2x1xf32>
    %228 = arith.select %112, %226, %227 : vector<2x1xi1>, vector<2x1xf32>
    %229 = vector.broadcast %228 : vector<2x1xf32> to vector<2x256xf32>
    %230 = arith.mulf %229, %170 : vector<2x256xf32>
    %231 = arith.addf %223, %230 : vector<2x256xf32>
    %c0_89 = arith.constant 0 : index
    %c4 = arith.constant 4 : index
    %232 = memref.load %arg8[%c0_89, %c4] : memref<4x98xf32, #tpu.memory_space<smem>>
    %c0_90 = arith.constant 0 : index
    %c53 = arith.constant 53 : index
    %233 = memref.load %arg8[%c0_90, %c53] : memref<4x98xf32, #tpu.memory_space<smem>>
    %234 = vector.broadcast %232 : f32 to vector<2x1xf32>
    %235 = vector.broadcast %233 : f32 to vector<2x1xf32>
    %236 = arith.select %112, %234, %235 : vector<2x1xi1>, vector<2x1xf32>
    %237 = vector.broadcast %236 : vector<2x1xf32> to vector<2x256xf32>
    %238 = arith.mulf %237, %190 : vector<2x256xf32>
    %239 = arith.addf %231, %238 : vector<2x256xf32>
    %c0_91 = arith.constant 0 : index
    %c5 = arith.constant 5 : index
    %240 = memref.load %arg8[%c0_91, %c5] : memref<4x98xf32, #tpu.memory_space<smem>>
    %c0_92 = arith.constant 0 : index
    %c54 = arith.constant 54 : index
    %241 = memref.load %arg8[%c0_92, %c54] : memref<4x98xf32, #tpu.memory_space<smem>>
    %242 = vector.broadcast %240 : f32 to vector<2x1xf32>
    %243 = vector.broadcast %241 : f32 to vector<2x1xf32>
    %244 = arith.select %112, %242, %243 : vector<2x1xi1>, vector<2x1xf32>
    %245 = vector.broadcast %244 : vector<2x1xf32> to vector<2x256xf32>
    %246 = arith.mulf %245, %195 : vector<2x256xf32>
    %247 = arith.addf %239, %246 : vector<2x256xf32>
    %c0_93 = arith.constant 0 : index
    %c6 = arith.constant 6 : index
    %248 = memref.load %arg8[%c0_93, %c6] : memref<4x98xf32, #tpu.memory_space<smem>>
    %c0_94 = arith.constant 0 : index
    %c55 = arith.constant 55 : index
    %249 = memref.load %arg8[%c0_94, %c55] : memref<4x98xf32, #tpu.memory_space<smem>>
    %250 = vector.broadcast %248 : f32 to vector<2x1xf32>
    %251 = vector.broadcast %249 : f32 to vector<2x1xf32>
    %252 = arith.select %112, %250, %251 : vector<2x1xi1>, vector<2x1xf32>
    %253 = vector.broadcast %252 : vector<2x1xf32> to vector<2x256xf32>
    %254 = arith.mulf %253, %200 : vector<2x256xf32>
    %255 = arith.addf %247, %254 : vector<2x256xf32>
    %c48_i32 = arith.constant 48 : i32
    %256 = tpu.dynamic_rotate %255 by %c48_i32 dim 1 : vector<2x256xf32>, i32 -> vector<2x256xf32>
    %cst_95 = arith.constant 0.000000e+00 : f32
    %257 = vector.shape_cast %10 : vector<1x256xi1> to vector<1x256xi1>
    %258 = vector.broadcast %257 : vector<1x256xi1> to vector<2x256xi1>
    %259 = vector.broadcast %cst_95 : f32 to vector<2x256xf32>
    %260 = arith.select %258, %256, %259 : vector<2x256xi1>, vector<2x256xf32>
    %c0_96 = arith.constant 0 : index
    %c7 = arith.constant 7 : index
    %261 = memref.load %arg8[%c0_96, %c7] : memref<4x98xf32, #tpu.memory_space<smem>>
    %c0_97 = arith.constant 0 : index
    %c56 = arith.constant 56 : index
    %262 = memref.load %arg8[%c0_97, %c56] : memref<4x98xf32, #tpu.memory_space<smem>>
    %263 = vector.broadcast %261 : f32 to vector<2x1xf32>
    %264 = vector.broadcast %262 : f32 to vector<2x1xf32>
    %265 = arith.select %112, %263, %264 : vector<2x1xi1>, vector<2x1xf32>
    %266 = vector.broadcast %265 : vector<2x1xf32> to vector<2x256xf32>
    %267 = arith.mulf %266, %175 : vector<2x256xf32>
    %c0_98 = arith.constant 0 : index
    %c8 = arith.constant 8 : index
    %268 = memref.load %arg8[%c0_98, %c8] : memref<4x98xf32, #tpu.memory_space<smem>>
    %c0_99 = arith.constant 0 : index
    %c57 = arith.constant 57 : index
    %269 = memref.load %arg8[%c0_99, %c57] : memref<4x98xf32, #tpu.memory_space<smem>>
    %270 = vector.broadcast %268 : f32 to vector<2x1xf32>
    %271 = vector.broadcast %269 : f32 to vector<2x1xf32>
    %272 = arith.select %112, %270, %271 : vector<2x1xi1>, vector<2x1xf32>
    %273 = vector.broadcast %272 : vector<2x1xf32> to vector<2x256xf32>
    %274 = arith.mulf %273, %180 : vector<2x256xf32>
    %275 = arith.addf %267, %274 : vector<2x256xf32>
    %c0_100 = arith.constant 0 : index
    %c9 = arith.constant 9 : index
    %276 = memref.load %arg8[%c0_100, %c9] : memref<4x98xf32, #tpu.memory_space<smem>>
    %c0_101 = arith.constant 0 : index
    %c58 = arith.constant 58 : index
    %277 = memref.load %arg8[%c0_101, %c58] : memref<4x98xf32, #tpu.memory_space<smem>>
    %278 = vector.broadcast %276 : f32 to vector<2x1xf32>
    %279 = vector.broadcast %277 : f32 to vector<2x1xf32>
    %280 = arith.select %112, %278, %279 : vector<2x1xi1>, vector<2x1xf32>
    %281 = vector.broadcast %280 : vector<2x1xf32> to vector<2x256xf32>
    %282 = arith.mulf %281, %185 : vector<2x256xf32>
    %283 = arith.addf %275, %282 : vector<2x256xf32>
    %c0_102 = arith.constant 0 : index
    %c10 = arith.constant 10 : index
    %284 = memref.load %arg8[%c0_102, %c10] : memref<4x98xf32, #tpu.memory_space<smem>>
    %c0_103 = arith.constant 0 : index
    %c59 = arith.constant 59 : index
    %285 = memref.load %arg8[%c0_103, %c59] : memref<4x98xf32, #tpu.memory_space<smem>>
    %286 = vector.broadcast %284 : f32 to vector<2x1xf32>
    %287 = vector.broadcast %285 : f32 to vector<2x1xf32>
    %288 = arith.select %112, %286, %287 : vector<2x1xi1>, vector<2x1xf32>
    %289 = vector.broadcast %288 : vector<2x1xf32> to vector<2x256xf32>
    %290 = arith.mulf %289, %170 : vector<2x256xf32>
    %291 = arith.addf %283, %290 : vector<2x256xf32>
    %c0_104 = arith.constant 0 : index
    %c11 = arith.constant 11 : index
    %292 = memref.load %arg8[%c0_104, %c11] : memref<4x98xf32, #tpu.memory_space<smem>>
    %c0_105 = arith.constant 0 : index
    %c60 = arith.constant 60 : index
    %293 = memref.load %arg8[%c0_105, %c60] : memref<4x98xf32, #tpu.memory_space<smem>>
    %294 = vector.broadcast %292 : f32 to vector<2x1xf32>
    %295 = vector.broadcast %293 : f32 to vector<2x1xf32>
    %296 = arith.select %112, %294, %295 : vector<2x1xi1>, vector<2x1xf32>
    %297 = vector.broadcast %296 : vector<2x1xf32> to vector<2x256xf32>
    %298 = arith.mulf %297, %190 : vector<2x256xf32>
    %299 = arith.addf %291, %298 : vector<2x256xf32>
    %c0_106 = arith.constant 0 : index
    %c12 = arith.constant 12 : index
    %300 = memref.load %arg8[%c0_106, %c12] : memref<4x98xf32, #tpu.memory_space<smem>>
    %c0_107 = arith.constant 0 : index
    %c61 = arith.constant 61 : index
    %301 = memref.load %arg8[%c0_107, %c61] : memref<4x98xf32, #tpu.memory_space<smem>>
    %302 = vector.broadcast %300 : f32 to vector<2x1xf32>
    %303 = vector.broadcast %301 : f32 to vector<2x1xf32>
    %304 = arith.select %112, %302, %303 : vector<2x1xi1>, vector<2x1xf32>
    %305 = vector.broadcast %304 : vector<2x1xf32> to vector<2x256xf32>
    %306 = arith.mulf %305, %195 : vector<2x256xf32>
    %307 = arith.addf %299, %306 : vector<2x256xf32>
    %c0_108 = arith.constant 0 : index
    %c13 = arith.constant 13 : index
    %308 = memref.load %arg8[%c0_108, %c13] : memref<4x98xf32, #tpu.memory_space<smem>>
    %c0_109 = arith.constant 0 : index
    %c62 = arith.constant 62 : index
    %309 = memref.load %arg8[%c0_109, %c62] : memref<4x98xf32, #tpu.memory_space<smem>>
    %310 = vector.broadcast %308 : f32 to vector<2x1xf32>
    %311 = vector.broadcast %309 : f32 to vector<2x1xf32>
    %312 = arith.select %112, %310, %311 : vector<2x1xi1>, vector<2x1xf32>
    %313 = vector.broadcast %312 : vector<2x1xf32> to vector<2x256xf32>
    %314 = arith.mulf %313, %200 : vector<2x256xf32>
    %315 = arith.addf %307, %314 : vector<2x256xf32>
    %c32_i32 = arith.constant 32 : i32
    %316 = tpu.dynamic_rotate %315 by %c32_i32 dim 1 : vector<2x256xf32>, i32 -> vector<2x256xf32>
    %cst_110 = arith.constant 0.000000e+00 : f32
    %317 = vector.shape_cast %19 : vector<1x256xi1> to vector<1x256xi1>
    %318 = vector.broadcast %317 : vector<1x256xi1> to vector<2x256xi1>
    %319 = vector.broadcast %cst_110 : f32 to vector<2x256xf32>
    %320 = arith.select %318, %316, %319 : vector<2x256xi1>, vector<2x256xf32>
    %321 = arith.addf %260, %320 : vector<2x256xf32>
    %c0_111 = arith.constant 0 : index
    %c14 = arith.constant 14 : index
    %322 = memref.load %arg8[%c0_111, %c14] : memref<4x98xf32, #tpu.memory_space<smem>>
    %c0_112 = arith.constant 0 : index
    %c63 = arith.constant 63 : index
    %323 = memref.load %arg8[%c0_112, %c63] : memref<4x98xf32, #tpu.memory_space<smem>>
    %324 = vector.broadcast %322 : f32 to vector<2x1xf32>
    %325 = vector.broadcast %323 : f32 to vector<2x1xf32>
    %326 = arith.select %112, %324, %325 : vector<2x1xi1>, vector<2x1xf32>
    %327 = vector.broadcast %326 : vector<2x1xf32> to vector<2x256xf32>
    %328 = arith.mulf %327, %175 : vector<2x256xf32>
    %c0_113 = arith.constant 0 : index
    %c15 = arith.constant 15 : index
    %329 = memref.load %arg8[%c0_113, %c15] : memref<4x98xf32, #tpu.memory_space<smem>>
    %c0_114 = arith.constant 0 : index
    %c64 = arith.constant 64 : index
    %330 = memref.load %arg8[%c0_114, %c64] : memref<4x98xf32, #tpu.memory_space<smem>>
    %331 = vector.broadcast %329 : f32 to vector<2x1xf32>
    %332 = vector.broadcast %330 : f32 to vector<2x1xf32>
    %333 = arith.select %112, %331, %332 : vector<2x1xi1>, vector<2x1xf32>
    %334 = vector.broadcast %333 : vector<2x1xf32> to vector<2x256xf32>
    %335 = arith.mulf %334, %180 : vector<2x256xf32>
    %336 = arith.addf %328, %335 : vector<2x256xf32>
    %c0_115 = arith.constant 0 : index
    %c16 = arith.constant 16 : index
    %337 = memref.load %arg8[%c0_115, %c16] : memref<4x98xf32, #tpu.memory_space<smem>>
    %c0_116 = arith.constant 0 : index
    %c65 = arith.constant 65 : index
    %338 = memref.load %arg8[%c0_116, %c65] : memref<4x98xf32, #tpu.memory_space<smem>>
    %339 = vector.broadcast %337 : f32 to vector<2x1xf32>
    %340 = vector.broadcast %338 : f32 to vector<2x1xf32>
    %341 = arith.select %112, %339, %340 : vector<2x1xi1>, vector<2x1xf32>
    %342 = vector.broadcast %341 : vector<2x1xf32> to vector<2x256xf32>
    %343 = arith.mulf %342, %185 : vector<2x256xf32>
    %344 = arith.addf %336, %343 : vector<2x256xf32>
    %c0_117 = arith.constant 0 : index
    %c17 = arith.constant 17 : index
    %345 = memref.load %arg8[%c0_117, %c17] : memref<4x98xf32, #tpu.memory_space<smem>>
    %c0_118 = arith.constant 0 : index
    %c66 = arith.constant 66 : index
    %346 = memref.load %arg8[%c0_118, %c66] : memref<4x98xf32, #tpu.memory_space<smem>>
    %347 = vector.broadcast %345 : f32 to vector<2x1xf32>
    %348 = vector.broadcast %346 : f32 to vector<2x1xf32>
    %349 = arith.select %112, %347, %348 : vector<2x1xi1>, vector<2x1xf32>
    %350 = vector.broadcast %349 : vector<2x1xf32> to vector<2x256xf32>
    %351 = arith.mulf %350, %170 : vector<2x256xf32>
    %352 = arith.addf %344, %351 : vector<2x256xf32>
    %c0_119 = arith.constant 0 : index
    %c18 = arith.constant 18 : index
    %353 = memref.load %arg8[%c0_119, %c18] : memref<4x98xf32, #tpu.memory_space<smem>>
    %c0_120 = arith.constant 0 : index
    %c67 = arith.constant 67 : index
    %354 = memref.load %arg8[%c0_120, %c67] : memref<4x98xf32, #tpu.memory_space<smem>>
    %355 = vector.broadcast %353 : f32 to vector<2x1xf32>
    %356 = vector.broadcast %354 : f32 to vector<2x1xf32>
    %357 = arith.select %112, %355, %356 : vector<2x1xi1>, vector<2x1xf32>
    %358 = vector.broadcast %357 : vector<2x1xf32> to vector<2x256xf32>
    %359 = arith.mulf %358, %190 : vector<2x256xf32>
    %360 = arith.addf %352, %359 : vector<2x256xf32>
    %c0_121 = arith.constant 0 : index
    %c19 = arith.constant 19 : index
    %361 = memref.load %arg8[%c0_121, %c19] : memref<4x98xf32, #tpu.memory_space<smem>>
    %c0_122 = arith.constant 0 : index
    %c68 = arith.constant 68 : index
    %362 = memref.load %arg8[%c0_122, %c68] : memref<4x98xf32, #tpu.memory_space<smem>>
    %363 = vector.broadcast %361 : f32 to vector<2x1xf32>
    %364 = vector.broadcast %362 : f32 to vector<2x1xf32>
    %365 = arith.select %112, %363, %364 : vector<2x1xi1>, vector<2x1xf32>
    %366 = vector.broadcast %365 : vector<2x1xf32> to vector<2x256xf32>
    %367 = arith.mulf %366, %195 : vector<2x256xf32>
    %368 = arith.addf %360, %367 : vector<2x256xf32>
    %c0_123 = arith.constant 0 : index
    %c20 = arith.constant 20 : index
    %369 = memref.load %arg8[%c0_123, %c20] : memref<4x98xf32, #tpu.memory_space<smem>>
    %c0_124 = arith.constant 0 : index
    %c69 = arith.constant 69 : index
    %370 = memref.load %arg8[%c0_124, %c69] : memref<4x98xf32, #tpu.memory_space<smem>>
    %371 = vector.broadcast %369 : f32 to vector<2x1xf32>
    %372 = vector.broadcast %370 : f32 to vector<2x1xf32>
    %373 = arith.select %112, %371, %372 : vector<2x1xi1>, vector<2x1xf32>
    %374 = vector.broadcast %373 : vector<2x1xf32> to vector<2x256xf32>
    %375 = arith.mulf %374, %200 : vector<2x256xf32>
    %376 = arith.addf %368, %375 : vector<2x256xf32>
    %c16_i32_125 = arith.constant 16 : i32
    %377 = tpu.dynamic_rotate %376 by %c16_i32_125 dim 1 : vector<2x256xf32>, i32 -> vector<2x256xf32>
    %cst_126 = arith.constant 0.000000e+00 : f32
    %378 = vector.shape_cast %28 : vector<1x256xi1> to vector<1x256xi1>
    %379 = vector.broadcast %378 : vector<1x256xi1> to vector<2x256xi1>
    %380 = vector.broadcast %cst_126 : f32 to vector<2x256xf32>
    %381 = arith.select %379, %377, %380 : vector<2x256xi1>, vector<2x256xf32>
    %382 = arith.addf %321, %381 : vector<2x256xf32>
    %c0_127 = arith.constant 0 : index
    %c21 = arith.constant 21 : index
    %383 = memref.load %arg8[%c0_127, %c21] : memref<4x98xf32, #tpu.memory_space<smem>>
    %c0_128 = arith.constant 0 : index
    %c70 = arith.constant 70 : index
    %384 = memref.load %arg8[%c0_128, %c70] : memref<4x98xf32, #tpu.memory_space<smem>>
    %385 = vector.broadcast %383 : f32 to vector<2x1xf32>
    %386 = vector.broadcast %384 : f32 to vector<2x1xf32>
    %387 = arith.select %112, %385, %386 : vector<2x1xi1>, vector<2x1xf32>
    %388 = vector.broadcast %387 : vector<2x1xf32> to vector<2x256xf32>
    %389 = arith.mulf %388, %175 : vector<2x256xf32>
    %c0_129 = arith.constant 0 : index
    %c22 = arith.constant 22 : index
    %390 = memref.load %arg8[%c0_129, %c22] : memref<4x98xf32, #tpu.memory_space<smem>>
    %c0_130 = arith.constant 0 : index
    %c71 = arith.constant 71 : index
    %391 = memref.load %arg8[%c0_130, %c71] : memref<4x98xf32, #tpu.memory_space<smem>>
    %392 = vector.broadcast %390 : f32 to vector<2x1xf32>
    %393 = vector.broadcast %391 : f32 to vector<2x1xf32>
    %394 = arith.select %112, %392, %393 : vector<2x1xi1>, vector<2x1xf32>
    %395 = vector.broadcast %394 : vector<2x1xf32> to vector<2x256xf32>
    %396 = arith.mulf %395, %180 : vector<2x256xf32>
    %397 = arith.addf %389, %396 : vector<2x256xf32>
    %c0_131 = arith.constant 0 : index
    %c23 = arith.constant 23 : index
    %398 = memref.load %arg8[%c0_131, %c23] : memref<4x98xf32, #tpu.memory_space<smem>>
    %c0_132 = arith.constant 0 : index
    %c72 = arith.constant 72 : index
    %399 = memref.load %arg8[%c0_132, %c72] : memref<4x98xf32, #tpu.memory_space<smem>>
    %400 = vector.broadcast %398 : f32 to vector<2x1xf32>
    %401 = vector.broadcast %399 : f32 to vector<2x1xf32>
    %402 = arith.select %112, %400, %401 : vector<2x1xi1>, vector<2x1xf32>
    %403 = vector.broadcast %402 : vector<2x1xf32> to vector<2x256xf32>
    %404 = arith.mulf %403, %185 : vector<2x256xf32>
    %405 = arith.addf %397, %404 : vector<2x256xf32>
    %c0_133 = arith.constant 0 : index
    %c24 = arith.constant 24 : index
    %406 = memref.load %arg8[%c0_133, %c24] : memref<4x98xf32, #tpu.memory_space<smem>>
    %c0_134 = arith.constant 0 : index
    %c73 = arith.constant 73 : index
    %407 = memref.load %arg8[%c0_134, %c73] : memref<4x98xf32, #tpu.memory_space<smem>>
    %408 = vector.broadcast %406 : f32 to vector<2x1xf32>
    %409 = vector.broadcast %407 : f32 to vector<2x1xf32>
    %410 = arith.select %112, %408, %409 : vector<2x1xi1>, vector<2x1xf32>
    %411 = vector.broadcast %410 : vector<2x1xf32> to vector<2x256xf32>
    %412 = arith.mulf %411, %170 : vector<2x256xf32>
    %413 = arith.addf %405, %412 : vector<2x256xf32>
    %c0_135 = arith.constant 0 : index
    %c25 = arith.constant 25 : index
    %414 = memref.load %arg8[%c0_135, %c25] : memref<4x98xf32, #tpu.memory_space<smem>>
    %c0_136 = arith.constant 0 : index
    %c74 = arith.constant 74 : index
    %415 = memref.load %arg8[%c0_136, %c74] : memref<4x98xf32, #tpu.memory_space<smem>>
    %416 = vector.broadcast %414 : f32 to vector<2x1xf32>
    %417 = vector.broadcast %415 : f32 to vector<2x1xf32>
    %418 = arith.select %112, %416, %417 : vector<2x1xi1>, vector<2x1xf32>
    %419 = vector.broadcast %418 : vector<2x1xf32> to vector<2x256xf32>
    %420 = arith.mulf %419, %190 : vector<2x256xf32>
    %421 = arith.addf %413, %420 : vector<2x256xf32>
    %c0_137 = arith.constant 0 : index
    %c26 = arith.constant 26 : index
    %422 = memref.load %arg8[%c0_137, %c26] : memref<4x98xf32, #tpu.memory_space<smem>>
    %c0_138 = arith.constant 0 : index
    %c75 = arith.constant 75 : index
    %423 = memref.load %arg8[%c0_138, %c75] : memref<4x98xf32, #tpu.memory_space<smem>>
    %424 = vector.broadcast %422 : f32 to vector<2x1xf32>
    %425 = vector.broadcast %423 : f32 to vector<2x1xf32>
    %426 = arith.select %112, %424, %425 : vector<2x1xi1>, vector<2x1xf32>
    %427 = vector.broadcast %426 : vector<2x1xf32> to vector<2x256xf32>
    %428 = arith.mulf %427, %195 : vector<2x256xf32>
    %429 = arith.addf %421, %428 : vector<2x256xf32>
    %c0_139 = arith.constant 0 : index
    %c27 = arith.constant 27 : index
    %430 = memref.load %arg8[%c0_139, %c27] : memref<4x98xf32, #tpu.memory_space<smem>>
    %c0_140 = arith.constant 0 : index
    %c76 = arith.constant 76 : index
    %431 = memref.load %arg8[%c0_140, %c76] : memref<4x98xf32, #tpu.memory_space<smem>>
    %432 = vector.broadcast %430 : f32 to vector<2x1xf32>
    %433 = vector.broadcast %431 : f32 to vector<2x1xf32>
    %434 = arith.select %112, %432, %433 : vector<2x1xi1>, vector<2x1xf32>
    %435 = vector.broadcast %434 : vector<2x1xf32> to vector<2x256xf32>
    %436 = arith.mulf %435, %200 : vector<2x256xf32>
    %437 = arith.addf %429, %436 : vector<2x256xf32>
    %438 = arith.addf %382, %437 : vector<2x256xf32>
    %c0_141 = arith.constant 0 : index
    %c28 = arith.constant 28 : index
    %439 = memref.load %arg8[%c0_141, %c28] : memref<4x98xf32, #tpu.memory_space<smem>>
    %c0_142 = arith.constant 0 : index
    %c77 = arith.constant 77 : index
    %440 = memref.load %arg8[%c0_142, %c77] : memref<4x98xf32, #tpu.memory_space<smem>>
    %441 = vector.broadcast %439 : f32 to vector<2x1xf32>
    %442 = vector.broadcast %440 : f32 to vector<2x1xf32>
    %443 = arith.select %112, %441, %442 : vector<2x1xi1>, vector<2x1xf32>
    %444 = vector.broadcast %443 : vector<2x1xf32> to vector<2x256xf32>
    %445 = arith.mulf %444, %175 : vector<2x256xf32>
    %c0_143 = arith.constant 0 : index
    %c29 = arith.constant 29 : index
    %446 = memref.load %arg8[%c0_143, %c29] : memref<4x98xf32, #tpu.memory_space<smem>>
    %c0_144 = arith.constant 0 : index
    %c78 = arith.constant 78 : index
    %447 = memref.load %arg8[%c0_144, %c78] : memref<4x98xf32, #tpu.memory_space<smem>>
    %448 = vector.broadcast %446 : f32 to vector<2x1xf32>
    %449 = vector.broadcast %447 : f32 to vector<2x1xf32>
    %450 = arith.select %112, %448, %449 : vector<2x1xi1>, vector<2x1xf32>
    %451 = vector.broadcast %450 : vector<2x1xf32> to vector<2x256xf32>
    %452 = arith.mulf %451, %180 : vector<2x256xf32>
    %453 = arith.addf %445, %452 : vector<2x256xf32>
    %c0_145 = arith.constant 0 : index
    %c30 = arith.constant 30 : index
    %454 = memref.load %arg8[%c0_145, %c30] : memref<4x98xf32, #tpu.memory_space<smem>>
    %c0_146 = arith.constant 0 : index
    %c79 = arith.constant 79 : index
    %455 = memref.load %arg8[%c0_146, %c79] : memref<4x98xf32, #tpu.memory_space<smem>>
    %456 = vector.broadcast %454 : f32 to vector<2x1xf32>
    %457 = vector.broadcast %455 : f32 to vector<2x1xf32>
    %458 = arith.select %112, %456, %457 : vector<2x1xi1>, vector<2x1xf32>
    %459 = vector.broadcast %458 : vector<2x1xf32> to vector<2x256xf32>
    %460 = arith.mulf %459, %185 : vector<2x256xf32>
    %461 = arith.addf %453, %460 : vector<2x256xf32>
    %c0_147 = arith.constant 0 : index
    %c31 = arith.constant 31 : index
    %462 = memref.load %arg8[%c0_147, %c31] : memref<4x98xf32, #tpu.memory_space<smem>>
    %c0_148 = arith.constant 0 : index
    %c80 = arith.constant 80 : index
    %463 = memref.load %arg8[%c0_148, %c80] : memref<4x98xf32, #tpu.memory_space<smem>>
    %464 = vector.broadcast %462 : f32 to vector<2x1xf32>
    %465 = vector.broadcast %463 : f32 to vector<2x1xf32>
    %466 = arith.select %112, %464, %465 : vector<2x1xi1>, vector<2x1xf32>
    %467 = vector.broadcast %466 : vector<2x1xf32> to vector<2x256xf32>
    %468 = arith.mulf %467, %170 : vector<2x256xf32>
    %469 = arith.addf %461, %468 : vector<2x256xf32>
    %c0_149 = arith.constant 0 : index
    %c32 = arith.constant 32 : index
    %470 = memref.load %arg8[%c0_149, %c32] : memref<4x98xf32, #tpu.memory_space<smem>>
    %c0_150 = arith.constant 0 : index
    %c81 = arith.constant 81 : index
    %471 = memref.load %arg8[%c0_150, %c81] : memref<4x98xf32, #tpu.memory_space<smem>>
    %472 = vector.broadcast %470 : f32 to vector<2x1xf32>
    %473 = vector.broadcast %471 : f32 to vector<2x1xf32>
    %474 = arith.select %112, %472, %473 : vector<2x1xi1>, vector<2x1xf32>
    %475 = vector.broadcast %474 : vector<2x1xf32> to vector<2x256xf32>
    %476 = arith.mulf %475, %190 : vector<2x256xf32>
    %477 = arith.addf %469, %476 : vector<2x256xf32>
    %c0_151 = arith.constant 0 : index
    %c33 = arith.constant 33 : index
    %478 = memref.load %arg8[%c0_151, %c33] : memref<4x98xf32, #tpu.memory_space<smem>>
    %c0_152 = arith.constant 0 : index
    %c82 = arith.constant 82 : index
    %479 = memref.load %arg8[%c0_152, %c82] : memref<4x98xf32, #tpu.memory_space<smem>>
    %480 = vector.broadcast %478 : f32 to vector<2x1xf32>
    %481 = vector.broadcast %479 : f32 to vector<2x1xf32>
    %482 = arith.select %112, %480, %481 : vector<2x1xi1>, vector<2x1xf32>
    %483 = vector.broadcast %482 : vector<2x1xf32> to vector<2x256xf32>
    %484 = arith.mulf %483, %195 : vector<2x256xf32>
    %485 = arith.addf %477, %484 : vector<2x256xf32>
    %c0_153 = arith.constant 0 : index
    %c34 = arith.constant 34 : index
    %486 = memref.load %arg8[%c0_153, %c34] : memref<4x98xf32, #tpu.memory_space<smem>>
    %c0_154 = arith.constant 0 : index
    %c83 = arith.constant 83 : index
    %487 = memref.load %arg8[%c0_154, %c83] : memref<4x98xf32, #tpu.memory_space<smem>>
    %488 = vector.broadcast %486 : f32 to vector<2x1xf32>
    %489 = vector.broadcast %487 : f32 to vector<2x1xf32>
    %490 = arith.select %112, %488, %489 : vector<2x1xi1>, vector<2x1xf32>
    %491 = vector.broadcast %490 : vector<2x1xf32> to vector<2x256xf32>
    %492 = arith.mulf %491, %200 : vector<2x256xf32>
    %493 = arith.addf %485, %492 : vector<2x256xf32>
    %c240_i32 = arith.constant 240 : i32
    %494 = tpu.dynamic_rotate %493 by %c240_i32 dim 1 : vector<2x256xf32>, i32 -> vector<2x256xf32>
    %cst_155 = arith.constant 0.000000e+00 : f32
    %495 = vector.shape_cast %37 : vector<1x256xi1> to vector<1x256xi1>
    %496 = vector.broadcast %495 : vector<1x256xi1> to vector<2x256xi1>
    %497 = vector.broadcast %cst_155 : f32 to vector<2x256xf32>
    %498 = arith.select %496, %494, %497 : vector<2x256xi1>, vector<2x256xf32>
    %499 = arith.addf %438, %498 : vector<2x256xf32>
    %c0_156 = arith.constant 0 : index
    %c35 = arith.constant 35 : index
    %500 = memref.load %arg8[%c0_156, %c35] : memref<4x98xf32, #tpu.memory_space<smem>>
    %c0_157 = arith.constant 0 : index
    %c84 = arith.constant 84 : index
    %501 = memref.load %arg8[%c0_157, %c84] : memref<4x98xf32, #tpu.memory_space<smem>>
    %502 = vector.broadcast %500 : f32 to vector<2x1xf32>
    %503 = vector.broadcast %501 : f32 to vector<2x1xf32>
    %504 = arith.select %112, %502, %503 : vector<2x1xi1>, vector<2x1xf32>
    %505 = vector.broadcast %504 : vector<2x1xf32> to vector<2x256xf32>
    %506 = arith.mulf %505, %175 : vector<2x256xf32>
    %c0_158 = arith.constant 0 : index
    %c36 = arith.constant 36 : index
    %507 = memref.load %arg8[%c0_158, %c36] : memref<4x98xf32, #tpu.memory_space<smem>>
    %c0_159 = arith.constant 0 : index
    %c85 = arith.constant 85 : index
    %508 = memref.load %arg8[%c0_159, %c85] : memref<4x98xf32, #tpu.memory_space<smem>>
    %509 = vector.broadcast %507 : f32 to vector<2x1xf32>
    %510 = vector.broadcast %508 : f32 to vector<2x1xf32>
    %511 = arith.select %112, %509, %510 : vector<2x1xi1>, vector<2x1xf32>
    %512 = vector.broadcast %511 : vector<2x1xf32> to vector<2x256xf32>
    %513 = arith.mulf %512, %180 : vector<2x256xf32>
    %514 = arith.addf %506, %513 : vector<2x256xf32>
    %c0_160 = arith.constant 0 : index
    %c37 = arith.constant 37 : index
    %515 = memref.load %arg8[%c0_160, %c37] : memref<4x98xf32, #tpu.memory_space<smem>>
    %c0_161 = arith.constant 0 : index
    %c86 = arith.constant 86 : index
    %516 = memref.load %arg8[%c0_161, %c86] : memref<4x98xf32, #tpu.memory_space<smem>>
    %517 = vector.broadcast %515 : f32 to vector<2x1xf32>
    %518 = vector.broadcast %516 : f32 to vector<2x1xf32>
    %519 = arith.select %112, %517, %518 : vector<2x1xi1>, vector<2x1xf32>
    %520 = vector.broadcast %519 : vector<2x1xf32> to vector<2x256xf32>
    %521 = arith.mulf %520, %185 : vector<2x256xf32>
    %522 = arith.addf %514, %521 : vector<2x256xf32>
    %c0_162 = arith.constant 0 : index
    %c38 = arith.constant 38 : index
    %523 = memref.load %arg8[%c0_162, %c38] : memref<4x98xf32, #tpu.memory_space<smem>>
    %c0_163 = arith.constant 0 : index
    %c87 = arith.constant 87 : index
    %524 = memref.load %arg8[%c0_163, %c87] : memref<4x98xf32, #tpu.memory_space<smem>>
    %525 = vector.broadcast %523 : f32 to vector<2x1xf32>
    %526 = vector.broadcast %524 : f32 to vector<2x1xf32>
    %527 = arith.select %112, %525, %526 : vector<2x1xi1>, vector<2x1xf32>
    %528 = vector.broadcast %527 : vector<2x1xf32> to vector<2x256xf32>
    %529 = arith.mulf %528, %170 : vector<2x256xf32>
    %530 = arith.addf %522, %529 : vector<2x256xf32>
    %c0_164 = arith.constant 0 : index
    %c39 = arith.constant 39 : index
    %531 = memref.load %arg8[%c0_164, %c39] : memref<4x98xf32, #tpu.memory_space<smem>>
    %c0_165 = arith.constant 0 : index
    %c88 = arith.constant 88 : index
    %532 = memref.load %arg8[%c0_165, %c88] : memref<4x98xf32, #tpu.memory_space<smem>>
    %533 = vector.broadcast %531 : f32 to vector<2x1xf32>
    %534 = vector.broadcast %532 : f32 to vector<2x1xf32>
    %535 = arith.select %112, %533, %534 : vector<2x1xi1>, vector<2x1xf32>
    %536 = vector.broadcast %535 : vector<2x1xf32> to vector<2x256xf32>
    %537 = arith.mulf %536, %190 : vector<2x256xf32>
    %538 = arith.addf %530, %537 : vector<2x256xf32>
    %c0_166 = arith.constant 0 : index
    %c40 = arith.constant 40 : index
    %539 = memref.load %arg8[%c0_166, %c40] : memref<4x98xf32, #tpu.memory_space<smem>>
    %c0_167 = arith.constant 0 : index
    %c89 = arith.constant 89 : index
    %540 = memref.load %arg8[%c0_167, %c89] : memref<4x98xf32, #tpu.memory_space<smem>>
    %541 = vector.broadcast %539 : f32 to vector<2x1xf32>
    %542 = vector.broadcast %540 : f32 to vector<2x1xf32>
    %543 = arith.select %112, %541, %542 : vector<2x1xi1>, vector<2x1xf32>
    %544 = vector.broadcast %543 : vector<2x1xf32> to vector<2x256xf32>
    %545 = arith.mulf %544, %195 : vector<2x256xf32>
    %546 = arith.addf %538, %545 : vector<2x256xf32>
    %c0_168 = arith.constant 0 : index
    %c41 = arith.constant 41 : index
    %547 = memref.load %arg8[%c0_168, %c41] : memref<4x98xf32, #tpu.memory_space<smem>>
    %c0_169 = arith.constant 0 : index
    %c90 = arith.constant 90 : index
    %548 = memref.load %arg8[%c0_169, %c90] : memref<4x98xf32, #tpu.memory_space<smem>>
    %549 = vector.broadcast %547 : f32 to vector<2x1xf32>
    %550 = vector.broadcast %548 : f32 to vector<2x1xf32>
    %551 = arith.select %112, %549, %550 : vector<2x1xi1>, vector<2x1xf32>
    %552 = vector.broadcast %551 : vector<2x1xf32> to vector<2x256xf32>
    %553 = arith.mulf %552, %200 : vector<2x256xf32>
    %554 = arith.addf %546, %553 : vector<2x256xf32>
    %c224_i32 = arith.constant 224 : i32
    %555 = tpu.dynamic_rotate %554 by %c224_i32 dim 1 : vector<2x256xf32>, i32 -> vector<2x256xf32>
    %cst_170 = arith.constant 0.000000e+00 : f32
    %556 = vector.shape_cast %46 : vector<1x256xi1> to vector<1x256xi1>
    %557 = vector.broadcast %556 : vector<1x256xi1> to vector<2x256xi1>
    %558 = vector.broadcast %cst_170 : f32 to vector<2x256xf32>
    %559 = arith.select %557, %555, %558 : vector<2x256xi1>, vector<2x256xf32>
    %560 = arith.addf %499, %559 : vector<2x256xf32>
    %c0_171 = arith.constant 0 : index
    %c42 = arith.constant 42 : index
    %561 = memref.load %arg8[%c0_171, %c42] : memref<4x98xf32, #tpu.memory_space<smem>>
    %c0_172 = arith.constant 0 : index
    %c91 = arith.constant 91 : index
    %562 = memref.load %arg8[%c0_172, %c91] : memref<4x98xf32, #tpu.memory_space<smem>>
    %563 = vector.broadcast %561 : f32 to vector<2x1xf32>
    %564 = vector.broadcast %562 : f32 to vector<2x1xf32>
    %565 = arith.select %112, %563, %564 : vector<2x1xi1>, vector<2x1xf32>
    %566 = vector.broadcast %565 : vector<2x1xf32> to vector<2x256xf32>
    %567 = arith.mulf %566, %175 : vector<2x256xf32>
    %c0_173 = arith.constant 0 : index
    %c43 = arith.constant 43 : index
    %568 = memref.load %arg8[%c0_173, %c43] : memref<4x98xf32, #tpu.memory_space<smem>>
    %c0_174 = arith.constant 0 : index
    %c92 = arith.constant 92 : index
    %569 = memref.load %arg8[%c0_174, %c92] : memref<4x98xf32, #tpu.memory_space<smem>>
    %570 = vector.broadcast %568 : f32 to vector<2x1xf32>
    %571 = vector.broadcast %569 : f32 to vector<2x1xf32>
    %572 = arith.select %112, %570, %571 : vector<2x1xi1>, vector<2x1xf32>
    %573 = vector.broadcast %572 : vector<2x1xf32> to vector<2x256xf32>
    %574 = arith.mulf %573, %180 : vector<2x256xf32>
    %575 = arith.addf %567, %574 : vector<2x256xf32>
    %c0_175 = arith.constant 0 : index
    %c44 = arith.constant 44 : index
    %576 = memref.load %arg8[%c0_175, %c44] : memref<4x98xf32, #tpu.memory_space<smem>>
    %c0_176 = arith.constant 0 : index
    %c93 = arith.constant 93 : index
    %577 = memref.load %arg8[%c0_176, %c93] : memref<4x98xf32, #tpu.memory_space<smem>>
    %578 = vector.broadcast %576 : f32 to vector<2x1xf32>
    %579 = vector.broadcast %577 : f32 to vector<2x1xf32>
    %580 = arith.select %112, %578, %579 : vector<2x1xi1>, vector<2x1xf32>
    %581 = vector.broadcast %580 : vector<2x1xf32> to vector<2x256xf32>
    %582 = arith.mulf %581, %185 : vector<2x256xf32>
    %583 = arith.addf %575, %582 : vector<2x256xf32>
    %c0_177 = arith.constant 0 : index
    %c45 = arith.constant 45 : index
    %584 = memref.load %arg8[%c0_177, %c45] : memref<4x98xf32, #tpu.memory_space<smem>>
    %c0_178 = arith.constant 0 : index
    %c94 = arith.constant 94 : index
    %585 = memref.load %arg8[%c0_178, %c94] : memref<4x98xf32, #tpu.memory_space<smem>>
    %586 = vector.broadcast %584 : f32 to vector<2x1xf32>
    %587 = vector.broadcast %585 : f32 to vector<2x1xf32>
    %588 = arith.select %112, %586, %587 : vector<2x1xi1>, vector<2x1xf32>
    %589 = vector.broadcast %588 : vector<2x1xf32> to vector<2x256xf32>
    %590 = arith.mulf %589, %170 : vector<2x256xf32>
    %591 = arith.addf %583, %590 : vector<2x256xf32>
    %c0_179 = arith.constant 0 : index
    %c46 = arith.constant 46 : index
    %592 = memref.load %arg8[%c0_179, %c46] : memref<4x98xf32, #tpu.memory_space<smem>>
    %c0_180 = arith.constant 0 : index
    %c95 = arith.constant 95 : index
    %593 = memref.load %arg8[%c0_180, %c95] : memref<4x98xf32, #tpu.memory_space<smem>>
    %594 = vector.broadcast %592 : f32 to vector<2x1xf32>
    %595 = vector.broadcast %593 : f32 to vector<2x1xf32>
    %596 = arith.select %112, %594, %595 : vector<2x1xi1>, vector<2x1xf32>
    %597 = vector.broadcast %596 : vector<2x1xf32> to vector<2x256xf32>
    %598 = arith.mulf %597, %190 : vector<2x256xf32>
    %599 = arith.addf %591, %598 : vector<2x256xf32>
    %c0_181 = arith.constant 0 : index
    %c47 = arith.constant 47 : index
    %600 = memref.load %arg8[%c0_181, %c47] : memref<4x98xf32, #tpu.memory_space<smem>>
    %c0_182 = arith.constant 0 : index
    %c96 = arith.constant 96 : index
    %601 = memref.load %arg8[%c0_182, %c96] : memref<4x98xf32, #tpu.memory_space<smem>>
    %602 = vector.broadcast %600 : f32 to vector<2x1xf32>
    %603 = vector.broadcast %601 : f32 to vector<2x1xf32>
    %604 = arith.select %112, %602, %603 : vector<2x1xi1>, vector<2x1xf32>
    %605 = vector.broadcast %604 : vector<2x1xf32> to vector<2x256xf32>
    %606 = arith.mulf %605, %195 : vector<2x256xf32>
    %607 = arith.addf %599, %606 : vector<2x256xf32>
    %c0_183 = arith.constant 0 : index
    %c48 = arith.constant 48 : index
    %608 = memref.load %arg8[%c0_183, %c48] : memref<4x98xf32, #tpu.memory_space<smem>>
    %c0_184 = arith.constant 0 : index
    %c97 = arith.constant 97 : index
    %609 = memref.load %arg8[%c0_184, %c97] : memref<4x98xf32, #tpu.memory_space<smem>>
    %610 = vector.broadcast %608 : f32 to vector<2x1xf32>
    %611 = vector.broadcast %609 : f32 to vector<2x1xf32>
    %612 = arith.select %112, %610, %611 : vector<2x1xi1>, vector<2x1xf32>
    %613 = vector.broadcast %612 : vector<2x1xf32> to vector<2x256xf32>
    %614 = arith.mulf %613, %200 : vector<2x256xf32>
    %615 = arith.addf %607, %614 : vector<2x256xf32>
    %c208_i32 = arith.constant 208 : i32
    %616 = tpu.dynamic_rotate %615 by %c208_i32 dim 1 : vector<2x256xf32>, i32 -> vector<2x256xf32>
    %cst_185 = arith.constant 0.000000e+00 : f32
    %617 = vector.shape_cast %55 : vector<1x256xi1> to vector<1x256xi1>
    %618 = vector.broadcast %617 : vector<1x256xi1> to vector<2x256xi1>
    %619 = vector.broadcast %cst_185 : f32 to vector<2x256xf32>
    %620 = arith.select %618, %616, %619 : vector<2x256xi1>, vector<2x256xf32>
    %621 = arith.addf %560, %620 : vector<2x256xf32>
    %cst_186 = arith.constant dense<0.000000e+00> : vector<256xf32>
    %622 = vector.multi_reduction <add>, %621, %cst_186 [0] : vector<2x256xf32> to vector<256xf32>
    %623 = vector.shape_cast %622 : vector<256xf32> to vector<1x256xf32>
    %cst_187 = arith.constant 0.000000e+00 : f32
    %624 = vector.broadcast %cst_187 : f32 to vector<1x256xf32>
    %625 = arith.subf %624, %623 : vector<1x256xf32>
    %626 = math.exp %625 : vector<1x256xf32>
    %cst_188 = arith.constant 1.000000e+00 : f32
    %627 = vector.broadcast %cst_188 : f32 to vector<1x256xf32>
    %628 = arith.addf %627, %626 : vector<1x256xf32>
    %629 = tpu.reciprocal %628 : vector<1x256xf32> -> vector<1x256xf32>
    %630 = vector.broadcast %629 : vector<1x256xf32> to vector<8x256xf32>
    %631 = arith.mulf %157, %630 : vector<8x256xf32>
    %c0_189 = arith.constant 0 : index
    %c0_190 = arith.constant 0 : index
    %632 = vector.load %arg12[%c0_189, %c0_190] : memref<32x256xf32, #tpu.memory_space<vmem>>, vector<8x256xf32>
    tpu.vector_store %arg12[%c0_189, %c0_190], %631 {strides = array<i32>} : memref<32x256xf32, #tpu.memory_space<vmem>>, vector<8x256xf32>,
    %c2_i32_191 = arith.constant 2 : i32
    %633 = tpu.dynamic_rotate %631 by %c2_i32_191 dim 1 : vector<8x256xf32>, i32 -> vector<8x256xf32>
    %cst_192 = arith.constant 0xFF800000 : f32
    %634 = vector.shape_cast %73 : vector<1x256xi1> to vector<1x256xi1>
    %635 = vector.broadcast %634 : vector<1x256xi1> to vector<8x256xi1>
    %636 = vector.broadcast %cst_192 : f32 to vector<8x256xf32>
    %637 = arith.select %635, %633, %636 : vector<8x256xi1>, vector<8x256xf32>
    %638 = arith.maximumf %631, %637 : vector<8x256xf32>
    %c1_i32_193 = arith.constant 1 : i32
    %639 = tpu.dynamic_rotate %631 by %c1_i32_193 dim 1 : vector<8x256xf32>, i32 -> vector<8x256xf32>
    %cst_194 = arith.constant 0xFF800000 : f32
    %640 = vector.shape_cast %82 : vector<1x256xi1> to vector<1x256xi1>
    %641 = vector.broadcast %640 : vector<1x256xi1> to vector<8x256xi1>
    %642 = vector.broadcast %cst_194 : f32 to vector<8x256xf32>
    %643 = arith.select %641, %639, %642 : vector<8x256xi1>, vector<8x256xf32>
    %644 = arith.maximumf %638, %643 : vector<8x256xf32>
    %c255_i32_195 = arith.constant 255 : i32
    %645 = tpu.dynamic_rotate %631 by %c255_i32_195 dim 1 : vector<8x256xf32>, i32 -> vector<8x256xf32>
    %cst_196 = arith.constant 0xFF800000 : f32
    %646 = vector.shape_cast %91 : vector<1x256xi1> to vector<1x256xi1>
    %647 = vector.broadcast %646 : vector<1x256xi1> to vector<8x256xi1>
    %648 = vector.broadcast %cst_196 : f32 to vector<8x256xf32>
    %649 = arith.select %647, %645, %648 : vector<8x256xi1>, vector<8x256xf32>
    %650 = arith.maximumf %644, %649 : vector<8x256xf32>
    %c254_i32_197 = arith.constant 254 : i32
    %651 = tpu.dynamic_rotate %631 by %c254_i32_197 dim 1 : vector<8x256xf32>, i32 -> vector<8x256xf32>
    %cst_198 = arith.constant 0xFF800000 : f32
    %652 = vector.shape_cast %100 : vector<1x256xi1> to vector<1x256xi1>
    %653 = vector.broadcast %652 : vector<1x256xi1> to vector<8x256xi1>
    %654 = vector.broadcast %cst_198 : f32 to vector<8x256xf32>
    %655 = arith.select %653, %651, %654 : vector<8x256xi1>, vector<8x256xf32>
    %656 = arith.maximumf %650, %655 : vector<8x256xf32>
    %c32_i32_199 = arith.constant 32 : i32
    %657 = tpu.dynamic_rotate %656 by %c32_i32_199 dim 1 : vector<8x256xf32>, i32 -> vector<8x256xf32>
    %cst_200 = arith.constant 0xFF800000 : f32
    %658 = vector.shape_cast %19 : vector<1x256xi1> to vector<1x256xi1>
    %659 = vector.broadcast %658 : vector<1x256xi1> to vector<8x256xi1>
    %660 = vector.broadcast %cst_200 : f32 to vector<8x256xf32>
    %661 = arith.select %659, %657, %660 : vector<8x256xi1>, vector<8x256xf32>
    %662 = arith.maximumf %656, %661 : vector<8x256xf32>
    %c16_i32_201 = arith.constant 16 : i32
    %663 = tpu.dynamic_rotate %656 by %c16_i32_201 dim 1 : vector<8x256xf32>, i32 -> vector<8x256xf32>
    %cst_202 = arith.constant 0xFF800000 : f32
    %664 = vector.shape_cast %28 : vector<1x256xi1> to vector<1x256xi1>
    %665 = vector.broadcast %664 : vector<1x256xi1> to vector<8x256xi1>
    %666 = vector.broadcast %cst_202 : f32 to vector<8x256xf32>
    %667 = arith.select %665, %663, %666 : vector<8x256xi1>, vector<8x256xf32>
    %668 = arith.maximumf %662, %667 : vector<8x256xf32>
    %c240_i32_203 = arith.constant 240 : i32
    %669 = tpu.dynamic_rotate %656 by %c240_i32_203 dim 1 : vector<8x256xf32>, i32 -> vector<8x256xf32>
    %cst_204 = arith.constant 0xFF800000 : f32
    %670 = vector.shape_cast %37 : vector<1x256xi1> to vector<1x256xi1>
    %671 = vector.broadcast %670 : vector<1x256xi1> to vector<8x256xi1>
    %672 = vector.broadcast %cst_204 : f32 to vector<8x256xf32>
    %673 = arith.select %671, %669, %672 : vector<8x256xi1>, vector<8x256xf32>
    %674 = arith.maximumf %668, %673 : vector<8x256xf32>
    %c224_i32_205 = arith.constant 224 : i32
    %675 = tpu.dynamic_rotate %656 by %c224_i32_205 dim 1 : vector<8x256xf32>, i32 -> vector<8x256xf32>
    %cst_206 = arith.constant 0xFF800000 : f32
    %676 = vector.shape_cast %46 : vector<1x256xi1> to vector<1x256xi1>
    %677 = vector.broadcast %676 : vector<1x256xi1> to vector<8x256xi1>
    %678 = vector.broadcast %cst_206 : f32 to vector<8x256xf32>
    %679 = arith.select %677, %675, %678 : vector<8x256xi1>, vector<8x256xf32>
    %680 = arith.maximumf %674, %679 : vector<8x256xf32>
    %c1_207 = arith.constant 1 : index
    %c0_208 = arith.constant 0 : index
    %c0_209 = arith.constant 0 : index
    %681 = vector.load %arg6[%c1_207, %c0_208, %c0_209] : memref<4x8x1xf32, #tpu.memory_space<vmem>>, vector<1x8x1xf32>
    %682 = vector.shape_cast %681 : vector<1x8x1xf32> to vector<8x1xf32>
    %c1_210 = arith.constant 1 : index
    %c0_211 = arith.constant 0 : index
    %c0_212 = arith.constant 0 : index
    %683 = vector.load %arg7[%c1_210, %c0_211, %c0_212] : memref<4x8x1xf32, #tpu.memory_space<vmem>>, vector<1x8x1xf32>
    %684 = vector.shape_cast %683 : vector<1x8x1xf32> to vector<8x1xf32>
    %cst_213 = arith.constant dense<0.000000e+00> : vector<8xf32>
    %685 = vector.multi_reduction <add>, %680, %cst_213 [1] : vector<8x256xf32> to vector<8xf32>
    %686 = vector.shape_cast %685 : vector<8xf32> to vector<8x1xf32>
    %cst_214 = arith.constant 3.906250e-03 : f32
    %687 = vector.broadcast %cst_214 : f32 to vector<8x1xf32>
    %688 = arith.mulf %686, %687 : vector<8x1xf32>
    %cst_215 = arith.constant dense<0xFF800000> : vector<8xf32>
    %689 = vector.multi_reduction <maximumf>, %680, %cst_215 [1] : vector<8x256xf32> to vector<8xf32>
    %690 = vector.shape_cast %689 : vector<8xf32> to vector<8x1xf32>
    %691 = arith.mulf %688, %682 : vector<8x1xf32>
    %cst_216 = arith.constant dense<0.000000e+00> : vector<1xf32>
    %692 = vector.multi_reduction <add>, %691, %cst_216 [0] : vector<8x1xf32> to vector<1xf32>
    %693 = vector.shape_cast %692 : vector<1xf32> to vector<1x1xf32>
    %cst_217 = arith.constant 0.000000e+00 : f32
    %694 = vector.broadcast %cst_217 : f32 to vector<1x1xf32>
    %695 = arith.maximumf %693, %694 : vector<1x1xf32>
    %696 = arith.mulf %690, %682 : vector<8x1xf32>
    %cst_218 = arith.constant dense<0.000000e+00> : vector<1xf32>
    %697 = vector.multi_reduction <add>, %696, %cst_218 [0] : vector<8x1xf32> to vector<1xf32>
    %698 = vector.shape_cast %697 : vector<1xf32> to vector<1x1xf32>
    %cst_219 = arith.constant 0.000000e+00 : f32
    %699 = vector.broadcast %cst_219 : f32 to vector<1x1xf32>
    %700 = arith.maximumf %698, %699 : vector<1x1xf32>
    %701 = arith.addf %695, %700 : vector<1x1xf32>
    %702 = vector.broadcast %701 : vector<1x1xf32> to vector<8x1xf32>
    %703 = arith.mulf %684, %702 : vector<8x1xf32>
    %cst_220 = arith.constant 0.000000e+00 : f32
    %704 = vector.broadcast %cst_220 : f32 to vector<8x1xf32>
    %705 = arith.subf %704, %703 : vector<8x1xf32>
    %706 = math.exp %705 : vector<8x1xf32>
    %cst_221 = arith.constant 1.000000e+00 : f32
    %707 = vector.broadcast %cst_221 : f32 to vector<8x1xf32>
    %708 = arith.addf %707, %706 : vector<8x1xf32>
    %709 = tpu.reciprocal %708 : vector<8x1xf32> -> vector<8x1xf32>
    %710 = vector.broadcast %709 : vector<8x1xf32> to vector<8x256xf32>
    %711 = arith.mulf %680, %710 : vector<8x256xf32>
    %cst_222 = arith.constant dense<0.000000e+00> : vector<256xf32>
    %712 = vector.multi_reduction <add>, %711, %cst_222 [0] : vector<8x256xf32> to vector<256xf32>
    %713 = vector.shape_cast %712 : vector<256xf32> to vector<1x256xf32>
    %cst_223 = arith.constant 1.250000e-01 : f32
    %714 = vector.broadcast %cst_223 : f32 to vector<1x256xf32>
    %715 = arith.mulf %713, %714 : vector<1x256xf32>
    %cst_224 = arith.constant dense<0xFF800000> : vector<256xf32>
    %716 = vector.multi_reduction <maximumf>, %711, %cst_224 [0] : vector<8x256xf32> to vector<256xf32>
    %717 = vector.shape_cast %716 : vector<256xf32> to vector<1x256xf32>
    %718 = vector.shape_cast %112 : vector<2x1xi1> to vector<2x1xi1>
    %719 = vector.broadcast %718 : vector<2x1xi1> to vector<2x256xi1>
    %720 = vector.shape_cast %715 : vector<1x256xf32> to vector<1x256xf32>
    %721 = vector.broadcast %720 : vector<1x256xf32> to vector<2x256xf32>
    %722 = vector.shape_cast %717 : vector<1x256xf32> to vector<1x256xf32>
    %723 = vector.broadcast %722 : vector<1x256xf32> to vector<2x256xf32>
    %724 = arith.select %719, %721, %723 : vector<2x256xi1>, vector<2x256xf32>
    %c3_i32_225 = arith.constant 3 : i32
    %725 = tpu.dynamic_rotate %724 by %c3_i32_225 dim 1 : vector<2x256xf32>, i32 -> vector<2x256xf32>
    %cst_226 = arith.constant 0.000000e+00 : f32
    %726 = vector.shape_cast %64 : vector<1x256xi1> to vector<1x256xi1>
    %727 = vector.broadcast %726 : vector<1x256xi1> to vector<2x256xi1>
    %728 = vector.broadcast %cst_226 : f32 to vector<2x256xf32>
    %729 = arith.select %727, %725, %728 : vector<2x256xi1>, vector<2x256xf32>
    %c2_i32_227 = arith.constant 2 : i32
    %730 = tpu.dynamic_rotate %724 by %c2_i32_227 dim 1 : vector<2x256xf32>, i32 -> vector<2x256xf32>
    %cst_228 = arith.constant 0.000000e+00 : f32
    %731 = vector.shape_cast %73 : vector<1x256xi1> to vector<1x256xi1>
    %732 = vector.broadcast %731 : vector<1x256xi1> to vector<2x256xi1>
    %733 = vector.broadcast %cst_228 : f32 to vector<2x256xf32>
    %734 = arith.select %732, %730, %733 : vector<2x256xi1>, vector<2x256xf32>
    %c1_i32_229 = arith.constant 1 : i32
    %735 = tpu.dynamic_rotate %724 by %c1_i32_229 dim 1 : vector<2x256xf32>, i32 -> vector<2x256xf32>
    %cst_230 = arith.constant 0.000000e+00 : f32
    %736 = vector.shape_cast %82 : vector<1x256xi1> to vector<1x256xi1>
    %737 = vector.broadcast %736 : vector<1x256xi1> to vector<2x256xi1>
    %738 = vector.broadcast %cst_230 : f32 to vector<2x256xf32>
    %739 = arith.select %737, %735, %738 : vector<2x256xi1>, vector<2x256xf32>
    %c255_i32_231 = arith.constant 255 : i32
    %740 = tpu.dynamic_rotate %724 by %c255_i32_231 dim 1 : vector<2x256xf32>, i32 -> vector<2x256xf32>
    %cst_232 = arith.constant 0.000000e+00 : f32
    %741 = vector.shape_cast %91 : vector<1x256xi1> to vector<1x256xi1>
    %742 = vector.broadcast %741 : vector<1x256xi1> to vector<2x256xi1>
    %743 = vector.broadcast %cst_232 : f32 to vector<2x256xf32>
    %744 = arith.select %742, %740, %743 : vector<2x256xi1>, vector<2x256xf32>
    %c254_i32_233 = arith.constant 254 : i32
    %745 = tpu.dynamic_rotate %724 by %c254_i32_233 dim 1 : vector<2x256xf32>, i32 -> vector<2x256xf32>
    %cst_234 = arith.constant 0.000000e+00 : f32
    %746 = vector.shape_cast %100 : vector<1x256xi1> to vector<1x256xi1>
    %747 = vector.broadcast %746 : vector<1x256xi1> to vector<2x256xi1>
    %748 = vector.broadcast %cst_234 : f32 to vector<2x256xf32>
    %749 = arith.select %747, %745, %748 : vector<2x256xi1>, vector<2x256xf32>
    %c253_i32_235 = arith.constant 253 : i32
    %750 = tpu.dynamic_rotate %724 by %c253_i32_235 dim 1 : vector<2x256xf32>, i32 -> vector<2x256xf32>
    %cst_236 = arith.constant 0.000000e+00 : f32
    %751 = vector.shape_cast %109 : vector<1x256xi1> to vector<1x256xi1>
    %752 = vector.broadcast %751 : vector<1x256xi1> to vector<2x256xi1>
    %753 = vector.broadcast %cst_236 : f32 to vector<2x256xf32>
    %754 = arith.select %752, %750, %753 : vector<2x256xi1>, vector<2x256xf32>
    %c1_237 = arith.constant 1 : index
    %c0_238 = arith.constant 0 : index
    %755 = memref.load %arg8[%c1_237, %c0_238] : memref<4x98xf32, #tpu.memory_space<smem>>
    %c1_239 = arith.constant 1 : index
    %c49_240 = arith.constant 49 : index
    %756 = memref.load %arg8[%c1_239, %c49_240] : memref<4x98xf32, #tpu.memory_space<smem>>
    %757 = vector.broadcast %755 : f32 to vector<2x1xf32>
    %758 = vector.broadcast %756 : f32 to vector<2x1xf32>
    %759 = arith.select %112, %757, %758 : vector<2x1xi1>, vector<2x1xf32>
    %760 = vector.broadcast %759 : vector<2x1xf32> to vector<2x256xf32>
    %761 = arith.mulf %760, %729 : vector<2x256xf32>
    %c1_241 = arith.constant 1 : index
    %c1_242 = arith.constant 1 : index
    %762 = memref.load %arg8[%c1_241, %c1_242] : memref<4x98xf32, #tpu.memory_space<smem>>
    %c1_243 = arith.constant 1 : index
    %c50_244 = arith.constant 50 : index
    %763 = memref.load %arg8[%c1_243, %c50_244] : memref<4x98xf32, #tpu.memory_space<smem>>
    %764 = vector.broadcast %762 : f32 to vector<2x1xf32>
    %765 = vector.broadcast %763 : f32 to vector<2x1xf32>
    %766 = arith.select %112, %764, %765 : vector<2x1xi1>, vector<2x1xf32>
    %767 = vector.broadcast %766 : vector<2x1xf32> to vector<2x256xf32>
    %768 = arith.mulf %767, %734 : vector<2x256xf32>
    %769 = arith.addf %761, %768 : vector<2x256xf32>
    %c1_245 = arith.constant 1 : index
    %c2_246 = arith.constant 2 : index
    %770 = memref.load %arg8[%c1_245, %c2_246] : memref<4x98xf32, #tpu.memory_space<smem>>
    %c1_247 = arith.constant 1 : index
    %c51_248 = arith.constant 51 : index
    %771 = memref.load %arg8[%c1_247, %c51_248] : memref<4x98xf32, #tpu.memory_space<smem>>
    %772 = vector.broadcast %770 : f32 to vector<2x1xf32>
    %773 = vector.broadcast %771 : f32 to vector<2x1xf32>
    %774 = arith.select %112, %772, %773 : vector<2x1xi1>, vector<2x1xf32>
    %775 = vector.broadcast %774 : vector<2x1xf32> to vector<2x256xf32>
    %776 = arith.mulf %775, %739 : vector<2x256xf32>
    %777 = arith.addf %769, %776 : vector<2x256xf32>
    %c1_249 = arith.constant 1 : index
    %c3_250 = arith.constant 3 : index
    %778 = memref.load %arg8[%c1_249, %c3_250] : memref<4x98xf32, #tpu.memory_space<smem>>
    %c1_251 = arith.constant 1 : index
    %c52_252 = arith.constant 52 : index
    %779 = memref.load %arg8[%c1_251, %c52_252] : memref<4x98xf32, #tpu.memory_space<smem>>
    %780 = vector.broadcast %778 : f32 to vector<2x1xf32>
    %781 = vector.broadcast %779 : f32 to vector<2x1xf32>
    %782 = arith.select %112, %780, %781 : vector<2x1xi1>, vector<2x1xf32>
    %783 = vector.broadcast %782 : vector<2x1xf32> to vector<2x256xf32>
    %784 = arith.mulf %783, %724 : vector<2x256xf32>
    %785 = arith.addf %777, %784 : vector<2x256xf32>
    %c1_253 = arith.constant 1 : index
    %c4_254 = arith.constant 4 : index
    %786 = memref.load %arg8[%c1_253, %c4_254] : memref<4x98xf32, #tpu.memory_space<smem>>
    %c1_255 = arith.constant 1 : index
    %c53_256 = arith.constant 53 : index
    %787 = memref.load %arg8[%c1_255, %c53_256] : memref<4x98xf32, #tpu.memory_space<smem>>
    %788 = vector.broadcast %786 : f32 to vector<2x1xf32>
    %789 = vector.broadcast %787 : f32 to vector<2x1xf32>
    %790 = arith.select %112, %788, %789 : vector<2x1xi1>, vector<2x1xf32>
    %791 = vector.broadcast %790 : vector<2x1xf32> to vector<2x256xf32>
    %792 = arith.mulf %791, %744 : vector<2x256xf32>
    %793 = arith.addf %785, %792 : vector<2x256xf32>
    %c1_257 = arith.constant 1 : index
    %c5_258 = arith.constant 5 : index
    %794 = memref.load %arg8[%c1_257, %c5_258] : memref<4x98xf32, #tpu.memory_space<smem>>
    %c1_259 = arith.constant 1 : index
    %c54_260 = arith.constant 54 : index
    %795 = memref.load %arg8[%c1_259, %c54_260] : memref<4x98xf32, #tpu.memory_space<smem>>
    %796 = vector.broadcast %794 : f32 to vector<2x1xf32>
    %797 = vector.broadcast %795 : f32 to vector<2x1xf32>
    %798 = arith.select %112, %796, %797 : vector<2x1xi1>, vector<2x1xf32>
    %799 = vector.broadcast %798 : vector<2x1xf32> to vector<2x256xf32>
    %800 = arith.mulf %799, %749 : vector<2x256xf32>
    %801 = arith.addf %793, %800 : vector<2x256xf32>
    %c1_261 = arith.constant 1 : index
    %c6_262 = arith.constant 6 : index
    %802 = memref.load %arg8[%c1_261, %c6_262] : memref<4x98xf32, #tpu.memory_space<smem>>
    %c1_263 = arith.constant 1 : index
    %c55_264 = arith.constant 55 : index
    %803 = memref.load %arg8[%c1_263, %c55_264] : memref<4x98xf32, #tpu.memory_space<smem>>
    %804 = vector.broadcast %802 : f32 to vector<2x1xf32>
    %805 = vector.broadcast %803 : f32 to vector<2x1xf32>
    %806 = arith.select %112, %804, %805 : vector<2x1xi1>, vector<2x1xf32>
    %807 = vector.broadcast %806 : vector<2x1xf32> to vector<2x256xf32>
    %808 = arith.mulf %807, %754 : vector<2x256xf32>
    %809 = arith.addf %801, %808 : vector<2x256xf32>
    %c48_i32_265 = arith.constant 48 : i32
    %810 = tpu.dynamic_rotate %809 by %c48_i32_265 dim 1 : vector<2x256xf32>, i32 -> vector<2x256xf32>
    %cst_266 = arith.constant 0.000000e+00 : f32
    %811 = vector.shape_cast %10 : vector<1x256xi1> to vector<1x256xi1>
    %812 = vector.broadcast %811 : vector<1x256xi1> to vector<2x256xi1>
    %813 = vector.broadcast %cst_266 : f32 to vector<2x256xf32>
    %814 = arith.select %812, %810, %813 : vector<2x256xi1>, vector<2x256xf32>
    %c1_267 = arith.constant 1 : index
    %c7_268 = arith.constant 7 : index
    %815 = memref.load %arg8[%c1_267, %c7_268] : memref<4x98xf32, #tpu.memory_space<smem>>
    %c1_269 = arith.constant 1 : index
    %c56_270 = arith.constant 56 : index
    %816 = memref.load %arg8[%c1_269, %c56_270] : memref<4x98xf32, #tpu.memory_space<smem>>
    %817 = vector.broadcast %815 : f32 to vector<2x1xf32>
    %818 = vector.broadcast %816 : f32 to vector<2x1xf32>
    %819 = arith.select %112, %817, %818 : vector<2x1xi1>, vector<2x1xf32>
    %820 = vector.broadcast %819 : vector<2x1xf32> to vector<2x256xf32>
    %821 = arith.mulf %820, %729 : vector<2x256xf32>
    %c1_271 = arith.constant 1 : index
    %c8_272 = arith.constant 8 : index
    %822 = memref.load %arg8[%c1_271, %c8_272] : memref<4x98xf32, #tpu.memory_space<smem>>
    %c1_273 = arith.constant 1 : index
    %c57_274 = arith.constant 57 : index
    %823 = memref.load %arg8[%c1_273, %c57_274] : memref<4x98xf32, #tpu.memory_space<smem>>
    %824 = vector.broadcast %822 : f32 to vector<2x1xf32>
    %825 = vector.broadcast %823 : f32 to vector<2x1xf32>
    %826 = arith.select %112, %824, %825 : vector<2x1xi1>, vector<2x1xf32>
    %827 = vector.broadcast %826 : vector<2x1xf32> to vector<2x256xf32>
    %828 = arith.mulf %827, %734 : vector<2x256xf32>
    %829 = arith.addf %821, %828 : vector<2x256xf32>
    %c1_275 = arith.constant 1 : index
    %c9_276 = arith.constant 9 : index
    %830 = memref.load %arg8[%c1_275, %c9_276] : memref<4x98xf32, #tpu.memory_space<smem>>
    %c1_277 = arith.constant 1 : index
    %c58_278 = arith.constant 58 : index
    %831 = memref.load %arg8[%c1_277, %c58_278] : memref<4x98xf32, #tpu.memory_space<smem>>
    %832 = vector.broadcast %830 : f32 to vector<2x1xf32>
    %833 = vector.broadcast %831 : f32 to vector<2x1xf32>
    %834 = arith.select %112, %832, %833 : vector<2x1xi1>, vector<2x1xf32>
    %835 = vector.broadcast %834 : vector<2x1xf32> to vector<2x256xf32>
    %836 = arith.mulf %835, %739 : vector<2x256xf32>
    %837 = arith.addf %829, %836 : vector<2x256xf32>
    %c1_279 = arith.constant 1 : index
    %c10_280 = arith.constant 10 : index
    %838 = memref.load %arg8[%c1_279, %c10_280] : memref<4x98xf32, #tpu.memory_space<smem>>
    %c1_281 = arith.constant 1 : index
    %c59_282 = arith.constant 59 : index
    %839 = memref.load %arg8[%c1_281, %c59_282] : memref<4x98xf32, #tpu.memory_space<smem>>
    %840 = vector.broadcast %838 : f32 to vector<2x1xf32>
    %841 = vector.broadcast %839 : f32 to vector<2x1xf32>
    %842 = arith.select %112, %840, %841 : vector<2x1xi1>, vector<2x1xf32>
    %843 = vector.broadcast %842 : vector<2x1xf32> to vector<2x256xf32>
    %844 = arith.mulf %843, %724 : vector<2x256xf32>
    %845 = arith.addf %837, %844 : vector<2x256xf32>
    %c1_283 = arith.constant 1 : index
    %c11_284 = arith.constant 11 : index
    %846 = memref.load %arg8[%c1_283, %c11_284] : memref<4x98xf32, #tpu.memory_space<smem>>
    %c1_285 = arith.constant 1 : index
    %c60_286 = arith.constant 60 : index
    %847 = memref.load %arg8[%c1_285, %c60_286] : memref<4x98xf32, #tpu.memory_space<smem>>
    %848 = vector.broadcast %846 : f32 to vector<2x1xf32>
    %849 = vector.broadcast %847 : f32 to vector<2x1xf32>
    %850 = arith.select %112, %848, %849 : vector<2x1xi1>, vector<2x1xf32>
    %851 = vector.broadcast %850 : vector<2x1xf32> to vector<2x256xf32>
    %852 = arith.mulf %851, %744 : vector<2x256xf32>
    %853 = arith.addf %845, %852 : vector<2x256xf32>
    %c1_287 = arith.constant 1 : index
    %c12_288 = arith.constant 12 : index
    %854 = memref.load %arg8[%c1_287, %c12_288] : memref<4x98xf32, #tpu.memory_space<smem>>
    %c1_289 = arith.constant 1 : index
    %c61_290 = arith.constant 61 : index
    %855 = memref.load %arg8[%c1_289, %c61_290] : memref<4x98xf32, #tpu.memory_space<smem>>
    %856 = vector.broadcast %854 : f32 to vector<2x1xf32>
    %857 = vector.broadcast %855 : f32 to vector<2x1xf32>
    %858 = arith.select %112, %856, %857 : vector<2x1xi1>, vector<2x1xf32>
    %859 = vector.broadcast %858 : vector<2x1xf32> to vector<2x256xf32>
    %860 = arith.mulf %859, %749 : vector<2x256xf32>
    %861 = arith.addf %853, %860 : vector<2x256xf32>
    %c1_291 = arith.constant 1 : index
    %c13_292 = arith.constant 13 : index
    %862 = memref.load %arg8[%c1_291, %c13_292] : memref<4x98xf32, #tpu.memory_space<smem>>
    %c1_293 = arith.constant 1 : index
    %c62_294 = arith.constant 62 : index
    %863 = memref.load %arg8[%c1_293, %c62_294] : memref<4x98xf32, #tpu.memory_space<smem>>
    %864 = vector.broadcast %862 : f32 to vector<2x1xf32>
    %865 = vector.broadcast %863 : f32 to vector<2x1xf32>
    %866 = arith.select %112, %864, %865 : vector<2x1xi1>, vector<2x1xf32>
    %867 = vector.broadcast %866 : vector<2x1xf32> to vector<2x256xf32>
    %868 = arith.mulf %867, %754 : vector<2x256xf32>
    %869 = arith.addf %861, %868 : vector<2x256xf32>
    %c32_i32_295 = arith.constant 32 : i32
    %870 = tpu.dynamic_rotate %869 by %c32_i32_295 dim 1 : vector<2x256xf32>, i32 -> vector<2x256xf32>
    %cst_296 = arith.constant 0.000000e+00 : f32
    %871 = vector.shape_cast %19 : vector<1x256xi1> to vector<1x256xi1>
    %872 = vector.broadcast %871 : vector<1x256xi1> to vector<2x256xi1>
    %873 = vector.broadcast %cst_296 : f32 to vector<2x256xf32>
    %874 = arith.select %872, %870, %873 : vector<2x256xi1>, vector<2x256xf32>
    %875 = arith.addf %814, %874 : vector<2x256xf32>
    %c1_297 = arith.constant 1 : index
    %c14_298 = arith.constant 14 : index
    %876 = memref.load %arg8[%c1_297, %c14_298] : memref<4x98xf32, #tpu.memory_space<smem>>
    %c1_299 = arith.constant 1 : index
    %c63_300 = arith.constant 63 : index
    %877 = memref.load %arg8[%c1_299, %c63_300] : memref<4x98xf32, #tpu.memory_space<smem>>
    %878 = vector.broadcast %876 : f32 to vector<2x1xf32>
    %879 = vector.broadcast %877 : f32 to vector<2x1xf32>
    %880 = arith.select %112, %878, %879 : vector<2x1xi1>, vector<2x1xf32>
    %881 = vector.broadcast %880 : vector<2x1xf32> to vector<2x256xf32>
    %882 = arith.mulf %881, %729 : vector<2x256xf32>
    %c1_301 = arith.constant 1 : index
    %c15_302 = arith.constant 15 : index
    %883 = memref.load %arg8[%c1_301, %c15_302] : memref<4x98xf32, #tpu.memory_space<smem>>
    %c1_303 = arith.constant 1 : index
    %c64_304 = arith.constant 64 : index
    %884 = memref.load %arg8[%c1_303, %c64_304] : memref<4x98xf32, #tpu.memory_space<smem>>
    %885 = vector.broadcast %883 : f32 to vector<2x1xf32>
    %886 = vector.broadcast %884 : f32 to vector<2x1xf32>
    %887 = arith.select %112, %885, %886 : vector<2x1xi1>, vector<2x1xf32>
    %888 = vector.broadcast %887 : vector<2x1xf32> to vector<2x256xf32>
    %889 = arith.mulf %888, %734 : vector<2x256xf32>
    %890 = arith.addf %882, %889 : vector<2x256xf32>
    %c1_305 = arith.constant 1 : index
    %c16_306 = arith.constant 16 : index
    %891 = memref.load %arg8[%c1_305, %c16_306] : memref<4x98xf32, #tpu.memory_space<smem>>
    %c1_307 = arith.constant 1 : index
    %c65_308 = arith.constant 65 : index
    %892 = memref.load %arg8[%c1_307, %c65_308] : memref<4x98xf32, #tpu.memory_space<smem>>
    %893 = vector.broadcast %891 : f32 to vector<2x1xf32>
    %894 = vector.broadcast %892 : f32 to vector<2x1xf32>
    %895 = arith.select %112, %893, %894 : vector<2x1xi1>, vector<2x1xf32>
    %896 = vector.broadcast %895 : vector<2x1xf32> to vector<2x256xf32>
    %897 = arith.mulf %896, %739 : vector<2x256xf32>
    %898 = arith.addf %890, %897 : vector<2x256xf32>
    %c1_309 = arith.constant 1 : index
    %c17_310 = arith.constant 17 : index
    %899 = memref.load %arg8[%c1_309, %c17_310] : memref<4x98xf32, #tpu.memory_space<smem>>
    %c1_311 = arith.constant 1 : index
    %c66_312 = arith.constant 66 : index
    %900 = memref.load %arg8[%c1_311, %c66_312] : memref<4x98xf32, #tpu.memory_space<smem>>
    %901 = vector.broadcast %899 : f32 to vector<2x1xf32>
    %902 = vector.broadcast %900 : f32 to vector<2x1xf32>
    %903 = arith.select %112, %901, %902 : vector<2x1xi1>, vector<2x1xf32>
    %904 = vector.broadcast %903 : vector<2x1xf32> to vector<2x256xf32>
    %905 = arith.mulf %904, %724 : vector<2x256xf32>
    %906 = arith.addf %898, %905 : vector<2x256xf32>
    %c1_313 = arith.constant 1 : index
    %c18_314 = arith.constant 18 : index
    %907 = memref.load %arg8[%c1_313, %c18_314] : memref<4x98xf32, #tpu.memory_space<smem>>
    %c1_315 = arith.constant 1 : index
    %c67_316 = arith.constant 67 : index
    %908 = memref.load %arg8[%c1_315, %c67_316] : memref<4x98xf32, #tpu.memory_space<smem>>
    %909 = vector.broadcast %907 : f32 to vector<2x1xf32>
    %910 = vector.broadcast %908 : f32 to vector<2x1xf32>
    %911 = arith.select %112, %909, %910 : vector<2x1xi1>, vector<2x1xf32>
    %912 = vector.broadcast %911 : vector<2x1xf32> to vector<2x256xf32>
    %913 = arith.mulf %912, %744 : vector<2x256xf32>
    %914 = arith.addf %906, %913 : vector<2x256xf32>
    %c1_317 = arith.constant 1 : index
    %c19_318 = arith.constant 19 : index
    %915 = memref.load %arg8[%c1_317, %c19_318] : memref<4x98xf32, #tpu.memory_space<smem>>
    %c1_319 = arith.constant 1 : index
    %c68_320 = arith.constant 68 : index
    %916 = memref.load %arg8[%c1_319, %c68_320] : memref<4x98xf32, #tpu.memory_space<smem>>
    %917 = vector.broadcast %915 : f32 to vector<2x1xf32>
    %918 = vector.broadcast %916 : f32 to vector<2x1xf32>
    %919 = arith.select %112, %917, %918 : vector<2x1xi1>, vector<2x1xf32>
    %920 = vector.broadcast %919 : vector<2x1xf32> to vector<2x256xf32>
    %921 = arith.mulf %920, %749 : vector<2x256xf32>
    %922 = arith.addf %914, %921 : vector<2x256xf32>
    %c1_321 = arith.constant 1 : index
    %c20_322 = arith.constant 20 : index
    %923 = memref.load %arg8[%c1_321, %c20_322] : memref<4x98xf32, #tpu.memory_space<smem>>
    %c1_323 = arith.constant 1 : index
    %c69_324 = arith.constant 69 : index
    %924 = memref.load %arg8[%c1_323, %c69_324] : memref<4x98xf32, #tpu.memory_space<smem>>
    %925 = vector.broadcast %923 : f32 to vector<2x1xf32>
    %926 = vector.broadcast %924 : f32 to vector<2x1xf32>
    %927 = arith.select %112, %925, %926 : vector<2x1xi1>, vector<2x1xf32>
    %928 = vector.broadcast %927 : vector<2x1xf32> to vector<2x256xf32>
    %929 = arith.mulf %928, %754 : vector<2x256xf32>
    %930 = arith.addf %922, %929 : vector<2x256xf32>
    %c16_i32_325 = arith.constant 16 : i32
    %931 = tpu.dynamic_rotate %930 by %c16_i32_325 dim 1 : vector<2x256xf32>, i32 -> vector<2x256xf32>
    %cst_326 = arith.constant 0.000000e+00 : f32
    %932 = vector.shape_cast %28 : vector<1x256xi1> to vector<1x256xi1>
    %933 = vector.broadcast %932 : vector<1x256xi1> to vector<2x256xi1>
    %934 = vector.broadcast %cst_326 : f32 to vector<2x256xf32>
    %935 = arith.select %933, %931, %934 : vector<2x256xi1>, vector<2x256xf32>
    %936 = arith.addf %875, %935 : vector<2x256xf32>
    %c1_327 = arith.constant 1 : index
    %c21_328 = arith.constant 21 : index
    %937 = memref.load %arg8[%c1_327, %c21_328] : memref<4x98xf32, #tpu.memory_space<smem>>
    %c1_329 = arith.constant 1 : index
    %c70_330 = arith.constant 70 : index
    %938 = memref.load %arg8[%c1_329, %c70_330] : memref<4x98xf32, #tpu.memory_space<smem>>
    %939 = vector.broadcast %937 : f32 to vector<2x1xf32>
    %940 = vector.broadcast %938 : f32 to vector<2x1xf32>
    %941 = arith.select %112, %939, %940 : vector<2x1xi1>, vector<2x1xf32>
    %942 = vector.broadcast %941 : vector<2x1xf32> to vector<2x256xf32>
    %943 = arith.mulf %942, %729 : vector<2x256xf32>
    %c1_331 = arith.constant 1 : index
    %c22_332 = arith.constant 22 : index
    %944 = memref.load %arg8[%c1_331, %c22_332] : memref<4x98xf32, #tpu.memory_space<smem>>
    %c1_333 = arith.constant 1 : index
    %c71_334 = arith.constant 71 : index
    %945 = memref.load %arg8[%c1_333, %c71_334] : memref<4x98xf32, #tpu.memory_space<smem>>
    %946 = vector.broadcast %944 : f32 to vector<2x1xf32>
    %947 = vector.broadcast %945 : f32 to vector<2x1xf32>
    %948 = arith.select %112, %946, %947 : vector<2x1xi1>, vector<2x1xf32>
    %949 = vector.broadcast %948 : vector<2x1xf32> to vector<2x256xf32>
    %950 = arith.mulf %949, %734 : vector<2x256xf32>
    %951 = arith.addf %943, %950 : vector<2x256xf32>
    %c1_335 = arith.constant 1 : index
    %c23_336 = arith.constant 23 : index
    %952 = memref.load %arg8[%c1_335, %c23_336] : memref<4x98xf32, #tpu.memory_space<smem>>
    %c1_337 = arith.constant 1 : index
    %c72_338 = arith.constant 72 : index
    %953 = memref.load %arg8[%c1_337, %c72_338] : memref<4x98xf32, #tpu.memory_space<smem>>
    %954 = vector.broadcast %952 : f32 to vector<2x1xf32>
    %955 = vector.broadcast %953 : f32 to vector<2x1xf32>
    %956 = arith.select %112, %954, %955 : vector<2x1xi1>, vector<2x1xf32>
    %957 = vector.broadcast %956 : vector<2x1xf32> to vector<2x256xf32>
    %958 = arith.mulf %957, %739 : vector<2x256xf32>
    %959 = arith.addf %951, %958 : vector<2x256xf32>
    %c1_339 = arith.constant 1 : index
    %c24_340 = arith.constant 24 : index
    %960 = memref.load %arg8[%c1_339, %c24_340] : memref<4x98xf32, #tpu.memory_space<smem>>
    %c1_341 = arith.constant 1 : index
    %c73_342 = arith.constant 73 : index
    %961 = memref.load %arg8[%c1_341, %c73_342] : memref<4x98xf32, #tpu.memory_space<smem>>
    %962 = vector.broadcast %960 : f32 to vector<2x1xf32>
    %963 = vector.broadcast %961 : f32 to vector<2x1xf32>
    %964 = arith.select %112, %962, %963 : vector<2x1xi1>, vector<2x1xf32>
    %965 = vector.broadcast %964 : vector<2x1xf32> to vector<2x256xf32>
    %966 = arith.mulf %965, %724 : vector<2x256xf32>
    %967 = arith.addf %959, %966 : vector<2x256xf32>
    %c1_343 = arith.constant 1 : index
    %c25_344 = arith.constant 25 : index
    %968 = memref.load %arg8[%c1_343, %c25_344] : memref<4x98xf32, #tpu.memory_space<smem>>
    %c1_345 = arith.constant 1 : index
    %c74_346 = arith.constant 74 : index
    %969 = memref.load %arg8[%c1_345, %c74_346] : memref<4x98xf32, #tpu.memory_space<smem>>
    %970 = vector.broadcast %968 : f32 to vector<2x1xf32>
    %971 = vector.broadcast %969 : f32 to vector<2x1xf32>
    %972 = arith.select %112, %970, %971 : vector<2x1xi1>, vector<2x1xf32>
    %973 = vector.broadcast %972 : vector<2x1xf32> to vector<2x256xf32>
    %974 = arith.mulf %973, %744 : vector<2x256xf32>
    %975 = arith.addf %967, %974 : vector<2x256xf32>
    %c1_347 = arith.constant 1 : index
    %c26_348 = arith.constant 26 : index
    %976 = memref.load %arg8[%c1_347, %c26_348] : memref<4x98xf32, #tpu.memory_space<smem>>
    %c1_349 = arith.constant 1 : index
    %c75_350 = arith.constant 75 : index
    %977 = memref.load %arg8[%c1_349, %c75_350] : memref<4x98xf32, #tpu.memory_space<smem>>
    %978 = vector.broadcast %976 : f32 to vector<2x1xf32>
    %979 = vector.broadcast %977 : f32 to vector<2x1xf32>
    %980 = arith.select %112, %978, %979 : vector<2x1xi1>, vector<2x1xf32>
    %981 = vector.broadcast %980 : vector<2x1xf32> to vector<2x256xf32>
    %982 = arith.mulf %981, %749 : vector<2x256xf32>
    %983 = arith.addf %975, %982 : vector<2x256xf32>
    %c1_351 = arith.constant 1 : index
    %c27_352 = arith.constant 27 : index
    %984 = memref.load %arg8[%c1_351, %c27_352] : memref<4x98xf32, #tpu.memory_space<smem>>
    %c1_353 = arith.constant 1 : index
    %c76_354 = arith.constant 76 : index
    %985 = memref.load %arg8[%c1_353, %c76_354] : memref<4x98xf32, #tpu.memory_space<smem>>
    %986 = vector.broadcast %984 : f32 to vector<2x1xf32>
    %987 = vector.broadcast %985 : f32 to vector<2x1xf32>
    %988 = arith.select %112, %986, %987 : vector<2x1xi1>, vector<2x1xf32>
    %989 = vector.broadcast %988 : vector<2x1xf32> to vector<2x256xf32>
    %990 = arith.mulf %989, %754 : vector<2x256xf32>
    %991 = arith.addf %983, %990 : vector<2x256xf32>
    %992 = arith.addf %936, %991 : vector<2x256xf32>
    %c1_355 = arith.constant 1 : index
    %c28_356 = arith.constant 28 : index
    %993 = memref.load %arg8[%c1_355, %c28_356] : memref<4x98xf32, #tpu.memory_space<smem>>
    %c1_357 = arith.constant 1 : index
    %c77_358 = arith.constant 77 : index
    %994 = memref.load %arg8[%c1_357, %c77_358] : memref<4x98xf32, #tpu.memory_space<smem>>
    %995 = vector.broadcast %993 : f32 to vector<2x1xf32>
    %996 = vector.broadcast %994 : f32 to vector<2x1xf32>
    %997 = arith.select %112, %995, %996 : vector<2x1xi1>, vector<2x1xf32>
    %998 = vector.broadcast %997 : vector<2x1xf32> to vector<2x256xf32>
    %999 = arith.mulf %998, %729 : vector<2x256xf32>
    %c1_359 = arith.constant 1 : index
    %c29_360 = arith.constant 29 : index
    %1000 = memref.load %arg8[%c1_359, %c29_360] : memref<4x98xf32, #tpu.memory_space<smem>>
    %c1_361 = arith.constant 1 : index
    %c78_362 = arith.constant 78 : index
    %1001 = memref.load %arg8[%c1_361, %c78_362] : memref<4x98xf32, #tpu.memory_space<smem>>
    %1002 = vector.broadcast %1000 : f32 to vector<2x1xf32>
    %1003 = vector.broadcast %1001 : f32 to vector<2x1xf32>
    %1004 = arith.select %112, %1002, %1003 : vector<2x1xi1>, vector<2x1xf32>
    %1005 = vector.broadcast %1004 : vector<2x1xf32> to vector<2x256xf32>
    %1006 = arith.mulf %1005, %734 : vector<2x256xf32>
    %1007 = arith.addf %999, %1006 : vector<2x256xf32>
    %c1_363 = arith.constant 1 : index
    %c30_364 = arith.constant 30 : index
    %1008 = memref.load %arg8[%c1_363, %c30_364] : memref<4x98xf32, #tpu.memory_space<smem>>
    %c1_365 = arith.constant 1 : index
    %c79_366 = arith.constant 79 : index
    %1009 = memref.load %arg8[%c1_365, %c79_366] : memref<4x98xf32, #tpu.memory_space<smem>>
    %1010 = vector.broadcast %1008 : f32 to vector<2x1xf32>
    %1011 = vector.broadcast %1009 : f32 to vector<2x1xf32>
    %1012 = arith.select %112, %1010, %1011 : vector<2x1xi1>, vector<2x1xf32>
    %1013 = vector.broadcast %1012 : vector<2x1xf32> to vector<2x256xf32>
    %1014 = arith.mulf %1013, %739 : vector<2x256xf32>
    %1015 = arith.addf %1007, %1014 : vector<2x256xf32>
    %c1_367 = arith.constant 1 : index
    %c31_368 = arith.constant 31 : index
    %1016 = memref.load %arg8[%c1_367, %c31_368] : memref<4x98xf32, #tpu.memory_space<smem>>
    %c1_369 = arith.constant 1 : index
    %c80_370 = arith.constant 80 : index
    %1017 = memref.load %arg8[%c1_369, %c80_370] : memref<4x98xf32, #tpu.memory_space<smem>>
    %1018 = vector.broadcast %1016 : f32 to vector<2x1xf32>
    %1019 = vector.broadcast %1017 : f32 to vector<2x1xf32>
    %1020 = arith.select %112, %1018, %1019 : vector<2x1xi1>, vector<2x1xf32>
    %1021 = vector.broadcast %1020 : vector<2x1xf32> to vector<2x256xf32>
    %1022 = arith.mulf %1021, %724 : vector<2x256xf32>
    %1023 = arith.addf %1015, %1022 : vector<2x256xf32>
    %c1_371 = arith.constant 1 : index
    %c32_372 = arith.constant 32 : index
    %1024 = memref.load %arg8[%c1_371, %c32_372] : memref<4x98xf32, #tpu.memory_space<smem>>
    %c1_373 = arith.constant 1 : index
    %c81_374 = arith.constant 81 : index
    %1025 = memref.load %arg8[%c1_373, %c81_374] : memref<4x98xf32, #tpu.memory_space<smem>>
    %1026 = vector.broadcast %1024 : f32 to vector<2x1xf32>
    %1027 = vector.broadcast %1025 : f32 to vector<2x1xf32>
    %1028 = arith.select %112, %1026, %1027 : vector<2x1xi1>, vector<2x1xf32>
    %1029 = vector.broadcast %1028 : vector<2x1xf32> to vector<2x256xf32>
    %1030 = arith.mulf %1029, %744 : vector<2x256xf32>
    %1031 = arith.addf %1023, %1030 : vector<2x256xf32>
    %c1_375 = arith.constant 1 : index
    %c33_376 = arith.constant 33 : index
    %1032 = memref.load %arg8[%c1_375, %c33_376] : memref<4x98xf32, #tpu.memory_space<smem>>
    %c1_377 = arith.constant 1 : index
    %c82_378 = arith.constant 82 : index
    %1033 = memref.load %arg8[%c1_377, %c82_378] : memref<4x98xf32, #tpu.memory_space<smem>>
    %1034 = vector.broadcast %1032 : f32 to vector<2x1xf32>
    %1035 = vector.broadcast %1033 : f32 to vector<2x1xf32>
    %1036 = arith.select %112, %1034, %1035 : vector<2x1xi1>, vector<2x1xf32>
    %1037 = vector.broadcast %1036 : vector<2x1xf32> to vector<2x256xf32>
    %1038 = arith.mulf %1037, %749 : vector<2x256xf32>
    %1039 = arith.addf %1031, %1038 : vector<2x256xf32>
    %c1_379 = arith.constant 1 : index
    %c34_380 = arith.constant 34 : index
    %1040 = memref.load %arg8[%c1_379, %c34_380] : memref<4x98xf32, #tpu.memory_space<smem>>
    %c1_381 = arith.constant 1 : index
    %c83_382 = arith.constant 83 : index
    %1041 = memref.load %arg8[%c1_381, %c83_382] : memref<4x98xf32, #tpu.memory_space<smem>>
    %1042 = vector.broadcast %1040 : f32 to vector<2x1xf32>
    %1043 = vector.broadcast %1041 : f32 to vector<2x1xf32>
    %1044 = arith.select %112, %1042, %1043 : vector<2x1xi1>, vector<2x1xf32>
    %1045 = vector.broadcast %1044 : vector<2x1xf32> to vector<2x256xf32>
    %1046 = arith.mulf %1045, %754 : vector<2x256xf32>
    %1047 = arith.addf %1039, %1046 : vector<2x256xf32>
    %c240_i32_383 = arith.constant 240 : i32
    %1048 = tpu.dynamic_rotate %1047 by %c240_i32_383 dim 1 : vector<2x256xf32>, i32 -> vector<2x256xf32>
    %cst_384 = arith.constant 0.000000e+00 : f32
    %1049 = vector.shape_cast %37 : vector<1x256xi1> to vector<1x256xi1>
    %1050 = vector.broadcast %1049 : vector<1x256xi1> to vector<2x256xi1>
    %1051 = vector.broadcast %cst_384 : f32 to vector<2x256xf32>
    %1052 = arith.select %1050, %1048, %1051 : vector<2x256xi1>, vector<2x256xf32>
    %1053 = arith.addf %992, %1052 : vector<2x256xf32>
    %c1_385 = arith.constant 1 : index
    %c35_386 = arith.constant 35 : index
    %1054 = memref.load %arg8[%c1_385, %c35_386] : memref<4x98xf32, #tpu.memory_space<smem>>
    %c1_387 = arith.constant 1 : index
    %c84_388 = arith.constant 84 : index
    %1055 = memref.load %arg8[%c1_387, %c84_388] : memref<4x98xf32, #tpu.memory_space<smem>>
    %1056 = vector.broadcast %1054 : f32 to vector<2x1xf32>
    %1057 = vector.broadcast %1055 : f32 to vector<2x1xf32>
    %1058 = arith.select %112, %1056, %1057 : vector<2x1xi1>, vector<2x1xf32>
    %1059 = vector.broadcast %1058 : vector<2x1xf32> to vector<2x256xf32>
    %1060 = arith.mulf %1059, %729 : vector<2x256xf32>
    %c1_389 = arith.constant 1 : index
    %c36_390 = arith.constant 36 : index
    %1061 = memref.load %arg8[%c1_389, %c36_390] : memref<4x98xf32, #tpu.memory_space<smem>>
    %c1_391 = arith.constant 1 : index
    %c85_392 = arith.constant 85 : index
    %1062 = memref.load %arg8[%c1_391, %c85_392] : memref<4x98xf32, #tpu.memory_space<smem>>
    %1063 = vector.broadcast %1061 : f32 to vector<2x1xf32>
    %1064 = vector.broadcast %1062 : f32 to vector<2x1xf32>
    %1065 = arith.select %112, %1063, %1064 : vector<2x1xi1>, vector<2x1xf32>
    %1066 = vector.broadcast %1065 : vector<2x1xf32> to vector<2x256xf32>
    %1067 = arith.mulf %1066, %734 : vector<2x256xf32>
    %1068 = arith.addf %1060, %1067 : vector<2x256xf32>
    %c1_393 = arith.constant 1 : index
    %c37_394 = arith.constant 37 : index
    %1069 = memref.load %arg8[%c1_393, %c37_394] : memref<4x98xf32, #tpu.memory_space<smem>>
    %c1_395 = arith.constant 1 : index
    %c86_396 = arith.constant 86 : index
    %1070 = memref.load %arg8[%c1_395, %c86_396] : memref<4x98xf32, #tpu.memory_space<smem>>
    %1071 = vector.broadcast %1069 : f32 to vector<2x1xf32>
    %1072 = vector.broadcast %1070 : f32 to vector<2x1xf32>
    %1073 = arith.select %112, %1071, %1072 : vector<2x1xi1>, vector<2x1xf32>
    %1074 = vector.broadcast %1073 : vector<2x1xf32> to vector<2x256xf32>
    %1075 = arith.mulf %1074, %739 : vector<2x256xf32>
    %1076 = arith.addf %1068, %1075 : vector<2x256xf32>
    %c1_397 = arith.constant 1 : index
    %c38_398 = arith.constant 38 : index
    %1077 = memref.load %arg8[%c1_397, %c38_398] : memref<4x98xf32, #tpu.memory_space<smem>>
    %c1_399 = arith.constant 1 : index
    %c87_400 = arith.constant 87 : index
    %1078 = memref.load %arg8[%c1_399, %c87_400] : memref<4x98xf32, #tpu.memory_space<smem>>
    %1079 = vector.broadcast %1077 : f32 to vector<2x1xf32>
    %1080 = vector.broadcast %1078 : f32 to vector<2x1xf32>
    %1081 = arith.select %112, %1079, %1080 : vector<2x1xi1>, vector<2x1xf32>
    %1082 = vector.broadcast %1081 : vector<2x1xf32> to vector<2x256xf32>
    %1083 = arith.mulf %1082, %724 : vector<2x256xf32>
    %1084 = arith.addf %1076, %1083 : vector<2x256xf32>
    %c1_401 = arith.constant 1 : index
    %c39_402 = arith.constant 39 : index
    %1085 = memref.load %arg8[%c1_401, %c39_402] : memref<4x98xf32, #tpu.memory_space<smem>>
    %c1_403 = arith.constant 1 : index
    %c88_404 = arith.constant 88 : index
    %1086 = memref.load %arg8[%c1_403, %c88_404] : memref<4x98xf32, #tpu.memory_space<smem>>
    %1087 = vector.broadcast %1085 : f32 to vector<2x1xf32>
    %1088 = vector.broadcast %1086 : f32 to vector<2x1xf32>
    %1089 = arith.select %112, %1087, %1088 : vector<2x1xi1>, vector<2x1xf32>
    %1090 = vector.broadcast %1089 : vector<2x1xf32> to vector<2x256xf32>
    %1091 = arith.mulf %1090, %744 : vector<2x256xf32>
    %1092 = arith.addf %1084, %1091 : vector<2x256xf32>
    %c1_405 = arith.constant 1 : index
    %c40_406 = arith.constant 40 : index
    %1093 = memref.load %arg8[%c1_405, %c40_406] : memref<4x98xf32, #tpu.memory_space<smem>>
    %c1_407 = arith.constant 1 : index
    %c89_408 = arith.constant 89 : index
    %1094 = memref.load %arg8[%c1_407, %c89_408] : memref<4x98xf32, #tpu.memory_space<smem>>
    %1095 = vector.broadcast %1093 : f32 to vector<2x1xf32>
    %1096 = vector.broadcast %1094 : f32 to vector<2x1xf32>
    %1097 = arith.select %112, %1095, %1096 : vector<2x1xi1>, vector<2x1xf32>
    %1098 = vector.broadcast %1097 : vector<2x1xf32> to vector<2x256xf32>
    %1099 = arith.mulf %1098, %749 : vector<2x256xf32>
    %1100 = arith.addf %1092, %1099 : vector<2x256xf32>
    %c1_409 = arith.constant 1 : index
    %c41_410 = arith.constant 41 : index
    %1101 = memref.load %arg8[%c1_409, %c41_410] : memref<4x98xf32, #tpu.memory_space<smem>>
    %c1_411 = arith.constant 1 : index
    %c90_412 = arith.constant 90 : index
    %1102 = memref.load %arg8[%c1_411, %c90_412] : memref<4x98xf32, #tpu.memory_space<smem>>
    %1103 = vector.broadcast %1101 : f32 to vector<2x1xf32>
    %1104 = vector.broadcast %1102 : f32 to vector<2x1xf32>
    %1105 = arith.select %112, %1103, %1104 : vector<2x1xi1>, vector<2x1xf32>
    %1106 = vector.broadcast %1105 : vector<2x1xf32> to vector<2x256xf32>
    %1107 = arith.mulf %1106, %754 : vector<2x256xf32>
    %1108 = arith.addf %1100, %1107 : vector<2x256xf32>
    %c224_i32_413 = arith.constant 224 : i32
    %1109 = tpu.dynamic_rotate %1108 by %c224_i32_413 dim 1 : vector<2x256xf32>, i32 -> vector<2x256xf32>
    %cst_414 = arith.constant 0.000000e+00 : f32
    %1110 = vector.shape_cast %46 : vector<1x256xi1> to vector<1x256xi1>
    %1111 = vector.broadcast %1110 : vector<1x256xi1> to vector<2x256xi1>
    %1112 = vector.broadcast %cst_414 : f32 to vector<2x256xf32>
    %1113 = arith.select %1111, %1109, %1112 : vector<2x256xi1>, vector<2x256xf32>
    %1114 = arith.addf %1053, %1113 : vector<2x256xf32>
    %c1_415 = arith.constant 1 : index
    %c42_416 = arith.constant 42 : index
    %1115 = memref.load %arg8[%c1_415, %c42_416] : memref<4x98xf32, #tpu.memory_space<smem>>
    %c1_417 = arith.constant 1 : index
    %c91_418 = arith.constant 91 : index
    %1116 = memref.load %arg8[%c1_417, %c91_418] : memref<4x98xf32, #tpu.memory_space<smem>>
    %1117 = vector.broadcast %1115 : f32 to vector<2x1xf32>
    %1118 = vector.broadcast %1116 : f32 to vector<2x1xf32>
    %1119 = arith.select %112, %1117, %1118 : vector<2x1xi1>, vector<2x1xf32>
    %1120 = vector.broadcast %1119 : vector<2x1xf32> to vector<2x256xf32>
    %1121 = arith.mulf %1120, %729 : vector<2x256xf32>
    %c1_419 = arith.constant 1 : index
    %c43_420 = arith.constant 43 : index
    %1122 = memref.load %arg8[%c1_419, %c43_420] : memref<4x98xf32, #tpu.memory_space<smem>>
    %c1_421 = arith.constant 1 : index
    %c92_422 = arith.constant 92 : index
    %1123 = memref.load %arg8[%c1_421, %c92_422] : memref<4x98xf32, #tpu.memory_space<smem>>
    %1124 = vector.broadcast %1122 : f32 to vector<2x1xf32>
    %1125 = vector.broadcast %1123 : f32 to vector<2x1xf32>
    %1126 = arith.select %112, %1124, %1125 : vector<2x1xi1>, vector<2x1xf32>
    %1127 = vector.broadcast %1126 : vector<2x1xf32> to vector<2x256xf32>
    %1128 = arith.mulf %1127, %734 : vector<2x256xf32>
    %1129 = arith.addf %1121, %1128 : vector<2x256xf32>
    %c1_423 = arith.constant 1 : index
    %c44_424 = arith.constant 44 : index
    %1130 = memref.load %arg8[%c1_423, %c44_424] : memref<4x98xf32, #tpu.memory_space<smem>>
    %c1_425 = arith.constant 1 : index
    %c93_426 = arith.constant 93 : index
    %1131 = memref.load %arg8[%c1_425, %c93_426] : memref<4x98xf32, #tpu.memory_space<smem>>
    %1132 = vector.broadcast %1130 : f32 to vector<2x1xf32>
    %1133 = vector.broadcast %1131 : f32 to vector<2x1xf32>
    %1134 = arith.select %112, %1132, %1133 : vector<2x1xi1>, vector<2x1xf32>
    %1135 = vector.broadcast %1134 : vector<2x1xf32> to vector<2x256xf32>
    %1136 = arith.mulf %1135, %739 : vector<2x256xf32>
    %1137 = arith.addf %1129, %1136 : vector<2x256xf32>
    %c1_427 = arith.constant 1 : index
    %c45_428 = arith.constant 45 : index
    %1138 = memref.load %arg8[%c1_427, %c45_428] : memref<4x98xf32, #tpu.memory_space<smem>>
    %c1_429 = arith.constant 1 : index
    %c94_430 = arith.constant 94 : index
    %1139 = memref.load %arg8[%c1_429, %c94_430] : memref<4x98xf32, #tpu.memory_space<smem>>
    %1140 = vector.broadcast %1138 : f32 to vector<2x1xf32>
    %1141 = vector.broadcast %1139 : f32 to vector<2x1xf32>
    %1142 = arith.select %112, %1140, %1141 : vector<2x1xi1>, vector<2x1xf32>
    %1143 = vector.broadcast %1142 : vector<2x1xf32> to vector<2x256xf32>
    %1144 = arith.mulf %1143, %724 : vector<2x256xf32>
    %1145 = arith.addf %1137, %1144 : vector<2x256xf32>
    %c1_431 = arith.constant 1 : index
    %c46_432 = arith.constant 46 : index
    %1146 = memref.load %arg8[%c1_431, %c46_432] : memref<4x98xf32, #tpu.memory_space<smem>>
    %c1_433 = arith.constant 1 : index
    %c95_434 = arith.constant 95 : index
    %1147 = memref.load %arg8[%c1_433, %c95_434] : memref<4x98xf32, #tpu.memory_space<smem>>
    %1148 = vector.broadcast %1146 : f32 to vector<2x1xf32>
    %1149 = vector.broadcast %1147 : f32 to vector<2x1xf32>
    %1150 = arith.select %112, %1148, %1149 : vector<2x1xi1>, vector<2x1xf32>
    %1151 = vector.broadcast %1150 : vector<2x1xf32> to vector<2x256xf32>
    %1152 = arith.mulf %1151, %744 : vector<2x256xf32>
    %1153 = arith.addf %1145, %1152 : vector<2x256xf32>
    %c1_435 = arith.constant 1 : index
    %c47_436 = arith.constant 47 : index
    %1154 = memref.load %arg8[%c1_435, %c47_436] : memref<4x98xf32, #tpu.memory_space<smem>>
    %c1_437 = arith.constant 1 : index
    %c96_438 = arith.constant 96 : index
    %1155 = memref.load %arg8[%c1_437, %c96_438] : memref<4x98xf32, #tpu.memory_space<smem>>
    %1156 = vector.broadcast %1154 : f32 to vector<2x1xf32>
    %1157 = vector.broadcast %1155 : f32 to vector<2x1xf32>
    %1158 = arith.select %112, %1156, %1157 : vector<2x1xi1>, vector<2x1xf32>
    %1159 = vector.broadcast %1158 : vector<2x1xf32> to vector<2x256xf32>
    %1160 = arith.mulf %1159, %749 : vector<2x256xf32>
    %1161 = arith.addf %1153, %1160 : vector<2x256xf32>
    %c1_439 = arith.constant 1 : index
    %c48_440 = arith.constant 48 : index
    %1162 = memref.load %arg8[%c1_439, %c48_440] : memref<4x98xf32, #tpu.memory_space<smem>>
    %c1_441 = arith.constant 1 : index
    %c97_442 = arith.constant 97 : index
    %1163 = memref.load %arg8[%c1_441, %c97_442] : memref<4x98xf32, #tpu.memory_space<smem>>
    %1164 = vector.broadcast %1162 : f32 to vector<2x1xf32>
    %1165 = vector.broadcast %1163 : f32 to vector<2x1xf32>
    %1166 = arith.select %112, %1164, %1165 : vector<2x1xi1>, vector<2x1xf32>
    %1167 = vector.broadcast %1166 : vector<2x1xf32> to vector<2x256xf32>
    %1168 = arith.mulf %1167, %754 : vector<2x256xf32>
    %1169 = arith.addf %1161, %1168 : vector<2x256xf32>
    %c208_i32_443 = arith.constant 208 : i32
    %1170 = tpu.dynamic_rotate %1169 by %c208_i32_443 dim 1 : vector<2x256xf32>, i32 -> vector<2x256xf32>
    %cst_444 = arith.constant 0.000000e+00 : f32
    %1171 = vector.shape_cast %55 : vector<1x256xi1> to vector<1x256xi1>
    %1172 = vector.broadcast %1171 : vector<1x256xi1> to vector<2x256xi1>
    %1173 = vector.broadcast %cst_444 : f32 to vector<2x256xf32>
    %1174 = arith.select %1172, %1170, %1173 : vector<2x256xi1>, vector<2x256xf32>
    %1175 = arith.addf %1114, %1174 : vector<2x256xf32>
    %cst_445 = arith.constant dense<0.000000e+00> : vector<256xf32>
    %1176 = vector.multi_reduction <add>, %1175, %cst_445 [0] : vector<2x256xf32> to vector<256xf32>
    %1177 = vector.shape_cast %1176 : vector<256xf32> to vector<1x256xf32>
    %cst_446 = arith.constant 0.000000e+00 : f32
    %1178 = vector.broadcast %cst_446 : f32 to vector<1x256xf32>
    %1179 = arith.subf %1178, %1177 : vector<1x256xf32>
    %1180 = math.exp %1179 : vector<1x256xf32>
    %cst_447 = arith.constant 1.000000e+00 : f32
    %1181 = vector.broadcast %cst_447 : f32 to vector<1x256xf32>
    %1182 = arith.addf %1181, %1180 : vector<1x256xf32>
    %1183 = tpu.reciprocal %1182 : vector<1x256xf32> -> vector<1x256xf32>
    %1184 = vector.broadcast %1183 : vector<1x256xf32> to vector<8x256xf32>
    %1185 = arith.mulf %711, %1184 : vector<8x256xf32>
    %c8_448 = arith.constant 8 : index
    %c0_449 = arith.constant 0 : index
    %1186 = vector.load %arg12[%c8_448, %c0_449] : memref<32x256xf32, #tpu.memory_space<vmem>>, vector<8x256xf32>
    tpu.vector_store %arg12[%c8_448, %c0_449], %1185 {strides = array<i32>} : memref<32x256xf32, #tpu.memory_space<vmem>>, vector<8x256xf32>,
    %c2_i32_450 = arith.constant 2 : i32
    %1187 = tpu.dynamic_rotate %1185 by %c2_i32_450 dim 1 : vector<8x256xf32>, i32 -> vector<8x256xf32>
    %cst_451 = arith.constant 0xFF800000 : f32
    %1188 = vector.shape_cast %73 : vector<1x256xi1> to vector<1x256xi1>
    %1189 = vector.broadcast %1188 : vector<1x256xi1> to vector<8x256xi1>
    %1190 = vector.broadcast %cst_451 : f32 to vector<8x256xf32>
    %1191 = arith.select %1189, %1187, %1190 : vector<8x256xi1>, vector<8x256xf32>
    %1192 = arith.maximumf %1185, %1191 : vector<8x256xf32>
    %c1_i32_452 = arith.constant 1 : i32
    %1193 = tpu.dynamic_rotate %1185 by %c1_i32_452 dim 1 : vector<8x256xf32>, i32 -> vector<8x256xf32>
    %cst_453 = arith.constant 0xFF800000 : f32
    %1194 = vector.shape_cast %82 : vector<1x256xi1> to vector<1x256xi1>
    %1195 = vector.broadcast %1194 : vector<1x256xi1> to vector<8x256xi1>
    %1196 = vector.broadcast %cst_453 : f32 to vector<8x256xf32>
    %1197 = arith.select %1195, %1193, %1196 : vector<8x256xi1>, vector<8x256xf32>
    %1198 = arith.maximumf %1192, %1197 : vector<8x256xf32>
    %c255_i32_454 = arith.constant 255 : i32
    %1199 = tpu.dynamic_rotate %1185 by %c255_i32_454 dim 1 : vector<8x256xf32>, i32 -> vector<8x256xf32>
    %cst_455 = arith.constant 0xFF800000 : f32
    %1200 = vector.shape_cast %91 : vector<1x256xi1> to vector<1x256xi1>
    %1201 = vector.broadcast %1200 : vector<1x256xi1> to vector<8x256xi1>
    %1202 = vector.broadcast %cst_455 : f32 to vector<8x256xf32>
    %1203 = arith.select %1201, %1199, %1202 : vector<8x256xi1>, vector<8x256xf32>
    %1204 = arith.maximumf %1198, %1203 : vector<8x256xf32>
    %c254_i32_456 = arith.constant 254 : i32
    %1205 = tpu.dynamic_rotate %1185 by %c254_i32_456 dim 1 : vector<8x256xf32>, i32 -> vector<8x256xf32>
    %cst_457 = arith.constant 0xFF800000 : f32
    %1206 = vector.shape_cast %100 : vector<1x256xi1> to vector<1x256xi1>
    %1207 = vector.broadcast %1206 : vector<1x256xi1> to vector<8x256xi1>
    %1208 = vector.broadcast %cst_457 : f32 to vector<8x256xf32>
    %1209 = arith.select %1207, %1205, %1208 : vector<8x256xi1>, vector<8x256xf32>
    %1210 = arith.maximumf %1204, %1209 : vector<8x256xf32>
    %c32_i32_458 = arith.constant 32 : i32
    %1211 = tpu.dynamic_rotate %1210 by %c32_i32_458 dim 1 : vector<8x256xf32>, i32 -> vector<8x256xf32>
    %cst_459 = arith.constant 0xFF800000 : f32
    %1212 = vector.shape_cast %19 : vector<1x256xi1> to vector<1x256xi1>
    %1213 = vector.broadcast %1212 : vector<1x256xi1> to vector<8x256xi1>
    %1214 = vector.broadcast %cst_459 : f32 to vector<8x256xf32>
    %1215 = arith.select %1213, %1211, %1214 : vector<8x256xi1>, vector<8x256xf32>
    %1216 = arith.maximumf %1210, %1215 : vector<8x256xf32>
    %c16_i32_460 = arith.constant 16 : i32
    %1217 = tpu.dynamic_rotate %1210 by %c16_i32_460 dim 1 : vector<8x256xf32>, i32 -> vector<8x256xf32>
    %cst_461 = arith.constant 0xFF800000 : f32
    %1218 = vector.shape_cast %28 : vector<1x256xi1> to vector<1x256xi1>
    %1219 = vector.broadcast %1218 : vector<1x256xi1> to vector<8x256xi1>
    %1220 = vector.broadcast %cst_461 : f32 to vector<8x256xf32>
    %1221 = arith.select %1219, %1217, %1220 : vector<8x256xi1>, vector<8x256xf32>
    %1222 = arith.maximumf %1216, %1221 : vector<8x256xf32>
    %c240_i32_462 = arith.constant 240 : i32
    %1223 = tpu.dynamic_rotate %1210 by %c240_i32_462 dim 1 : vector<8x256xf32>, i32 -> vector<8x256xf32>
    %cst_463 = arith.constant 0xFF800000 : f32
    %1224 = vector.shape_cast %37 : vector<1x256xi1> to vector<1x256xi1>
    %1225 = vector.broadcast %1224 : vector<1x256xi1> to vector<8x256xi1>
    %1226 = vector.broadcast %cst_463 : f32 to vector<8x256xf32>
    %1227 = arith.select %1225, %1223, %1226 : vector<8x256xi1>, vector<8x256xf32>
    %1228 = arith.maximumf %1222, %1227 : vector<8x256xf32>
    %c224_i32_464 = arith.constant 224 : i32
    %1229 = tpu.dynamic_rotate %1210 by %c224_i32_464 dim 1 : vector<8x256xf32>, i32 -> vector<8x256xf32>
    %cst_465 = arith.constant 0xFF800000 : f32
    %1230 = vector.shape_cast %46 : vector<1x256xi1> to vector<1x256xi1>
    %1231 = vector.broadcast %1230 : vector<1x256xi1> to vector<8x256xi1>
    %1232 = vector.broadcast %cst_465 : f32 to vector<8x256xf32>
    %1233 = arith.select %1231, %1229, %1232 : vector<8x256xi1>, vector<8x256xf32>
    %1234 = arith.maximumf %1228, %1233 : vector<8x256xf32>
    %c2_466 = arith.constant 2 : index
    %c0_467 = arith.constant 0 : index
    %c0_468 = arith.constant 0 : index
    %1235 = vector.load %arg6[%c2_466, %c0_467, %c0_468] : memref<4x8x1xf32, #tpu.memory_space<vmem>>, vector<1x8x1xf32>
    %1236 = vector.shape_cast %1235 : vector<1x8x1xf32> to vector<8x1xf32>
    %c2_469 = arith.constant 2 : index
    %c0_470 = arith.constant 0 : index
    %c0_471 = arith.constant 0 : index
    %1237 = vector.load %arg7[%c2_469, %c0_470, %c0_471] : memref<4x8x1xf32, #tpu.memory_space<vmem>>, vector<1x8x1xf32>
    %1238 = vector.shape_cast %1237 : vector<1x8x1xf32> to vector<8x1xf32>
    %cst_472 = arith.constant dense<0.000000e+00> : vector<8xf32>
    %1239 = vector.multi_reduction <add>, %1234, %cst_472 [1] : vector<8x256xf32> to vector<8xf32>
    %1240 = vector.shape_cast %1239 : vector<8xf32> to vector<8x1xf32>
    %cst_473 = arith.constant 3.906250e-03 : f32
    %1241 = vector.broadcast %cst_473 : f32 to vector<8x1xf32>
    %1242 = arith.mulf %1240, %1241 : vector<8x1xf32>
    %cst_474 = arith.constant dense<0xFF800000> : vector<8xf32>
    %1243 = vector.multi_reduction <maximumf>, %1234, %cst_474 [1] : vector<8x256xf32> to vector<8xf32>
    %1244 = vector.shape_cast %1243 : vector<8xf32> to vector<8x1xf32>
    %1245 = arith.mulf %1242, %1236 : vector<8x1xf32>
    %cst_475 = arith.constant dense<0.000000e+00> : vector<1xf32>
    %1246 = vector.multi_reduction <add>, %1245, %cst_475 [0] : vector<8x1xf32> to vector<1xf32>
    %1247 = vector.shape_cast %1246 : vector<1xf32> to vector<1x1xf32>
    %cst_476 = arith.constant 0.000000e+00 : f32
    %1248 = vector.broadcast %cst_476 : f32 to vector<1x1xf32>
    %1249 = arith.maximumf %1247, %1248 : vector<1x1xf32>
    %1250 = arith.mulf %1244, %1236 : vector<8x1xf32>
    %cst_477 = arith.constant dense<0.000000e+00> : vector<1xf32>
    %1251 = vector.multi_reduction <add>, %1250, %cst_477 [0] : vector<8x1xf32> to vector<1xf32>
    %1252 = vector.shape_cast %1251 : vector<1xf32> to vector<1x1xf32>
    %cst_478 = arith.constant 0.000000e+00 : f32
    %1253 = vector.broadcast %cst_478 : f32 to vector<1x1xf32>
    %1254 = arith.maximumf %1252, %1253 : vector<1x1xf32>
    %1255 = arith.addf %1249, %1254 : vector<1x1xf32>
    %1256 = vector.broadcast %1255 : vector<1x1xf32> to vector<8x1xf32>
    %1257 = arith.mulf %1238, %1256 : vector<8x1xf32>
    %cst_479 = arith.constant 0.000000e+00 : f32
    %1258 = vector.broadcast %cst_479 : f32 to vector<8x1xf32>
    %1259 = arith.subf %1258, %1257 : vector<8x1xf32>
    %1260 = math.exp %1259 : vector<8x1xf32>
    %cst_480 = arith.constant 1.000000e+00 : f32
    %1261 = vector.broadcast %cst_480 : f32 to vector<8x1xf32>
    %1262 = arith.addf %1261, %1260 : vector<8x1xf32>
    %1263 = tpu.reciprocal %1262 : vector<8x1xf32> -> vector<8x1xf32>
    %1264 = vector.broadcast %1263 : vector<8x1xf32> to vector<8x256xf32>
    %1265 = arith.mulf %1234, %1264 : vector<8x256xf32>
    %cst_481 = arith.constant dense<0.000000e+00> : vector<256xf32>
    %1266 = vector.multi_reduction <add>, %1265, %cst_481 [0] : vector<8x256xf32> to vector<256xf32>
    %1267 = vector.shape_cast %1266 : vector<256xf32> to vector<1x256xf32>
    %cst_482 = arith.constant 1.250000e-01 : f32
    %1268 = vector.broadcast %cst_482 : f32 to vector<1x256xf32>
    %1269 = arith.mulf %1267, %1268 : vector<1x256xf32>
    %cst_483 = arith.constant dense<0xFF800000> : vector<256xf32>
    %1270 = vector.multi_reduction <maximumf>, %1265, %cst_483 [0] : vector<8x256xf32> to vector<256xf32>
    %1271 = vector.shape_cast %1270 : vector<256xf32> to vector<1x256xf32>
    %1272 = vector.shape_cast %112 : vector<2x1xi1> to vector<2x1xi1>
    %1273 = vector.broadcast %1272 : vector<2x1xi1> to vector<2x256xi1>
    %1274 = vector.shape_cast %1269 : vector<1x256xf32> to vector<1x256xf32>
    %1275 = vector.broadcast %1274 : vector<1x256xf32> to vector<2x256xf32>
    %1276 = vector.shape_cast %1271 : vector<1x256xf32> to vector<1x256xf32>
    %1277 = vector.broadcast %1276 : vector<1x256xf32> to vector<2x256xf32>
    %1278 = arith.select %1273, %1275, %1277 : vector<2x256xi1>, vector<2x256xf32>
    %c3_i32_484 = arith.constant 3 : i32
    %1279 = tpu.dynamic_rotate %1278 by %c3_i32_484 dim 1 : vector<2x256xf32>, i32 -> vector<2x256xf32>
    %cst_485 = arith.constant 0.000000e+00 : f32
    %1280 = vector.shape_cast %64 : vector<1x256xi1> to vector<1x256xi1>
    %1281 = vector.broadcast %1280 : vector<1x256xi1> to vector<2x256xi1>
    %1282 = vector.broadcast %cst_485 : f32 to vector<2x256xf32>
    %1283 = arith.select %1281, %1279, %1282 : vector<2x256xi1>, vector<2x256xf32>
    %c2_i32_486 = arith.constant 2 : i32
    %1284 = tpu.dynamic_rotate %1278 by %c2_i32_486 dim 1 : vector<2x256xf32>, i32 -> vector<2x256xf32>
    %cst_487 = arith.constant 0.000000e+00 : f32
    %1285 = vector.shape_cast %73 : vector<1x256xi1> to vector<1x256xi1>
    %1286 = vector.broadcast %1285 : vector<1x256xi1> to vector<2x256xi1>
    %1287 = vector.broadcast %cst_487 : f32 to vector<2x256xf32>
    %1288 = arith.select %1286, %1284, %1287 : vector<2x256xi1>, vector<2x256xf32>
    %c1_i32_488 = arith.constant 1 : i32
    %1289 = tpu.dynamic_rotate %1278 by %c1_i32_488 dim 1 : vector<2x256xf32>, i32 -> vector<2x256xf32>
    %cst_489 = arith.constant 0.000000e+00 : f32
    %1290 = vector.shape_cast %82 : vector<1x256xi1> to vector<1x256xi1>
    %1291 = vector.broadcast %1290 : vector<1x256xi1> to vector<2x256xi1>
    %1292 = vector.broadcast %cst_489 : f32 to vector<2x256xf32>
    %1293 = arith.select %1291, %1289, %1292 : vector<2x256xi1>, vector<2x256xf32>
    %c255_i32_490 = arith.constant 255 : i32
    %1294 = tpu.dynamic_rotate %1278 by %c255_i32_490 dim 1 : vector<2x256xf32>, i32 -> vector<2x256xf32>
    %cst_491 = arith.constant 0.000000e+00 : f32
    %1295 = vector.shape_cast %91 : vector<1x256xi1> to vector<1x256xi1>
    %1296 = vector.broadcast %1295 : vector<1x256xi1> to vector<2x256xi1>
    %1297 = vector.broadcast %cst_491 : f32 to vector<2x256xf32>
    %1298 = arith.select %1296, %1294, %1297 : vector<2x256xi1>, vector<2x256xf32>
    %c254_i32_492 = arith.constant 254 : i32
    %1299 = tpu.dynamic_rotate %1278 by %c254_i32_492 dim 1 : vector<2x256xf32>, i32 -> vector<2x256xf32>
    %cst_493 = arith.constant 0.000000e+00 : f32
    %1300 = vector.shape_cast %100 : vector<1x256xi1> to vector<1x256xi1>
    %1301 = vector.broadcast %1300 : vector<1x256xi1> to vector<2x256xi1>
    %1302 = vector.broadcast %cst_493 : f32 to vector<2x256xf32>
    %1303 = arith.select %1301, %1299, %1302 : vector<2x256xi1>, vector<2x256xf32>
    %c253_i32_494 = arith.constant 253 : i32
    %1304 = tpu.dynamic_rotate %1278 by %c253_i32_494 dim 1 : vector<2x256xf32>, i32 -> vector<2x256xf32>
    %cst_495 = arith.constant 0.000000e+00 : f32
    %1305 = vector.shape_cast %109 : vector<1x256xi1> to vector<1x256xi1>
    %1306 = vector.broadcast %1305 : vector<1x256xi1> to vector<2x256xi1>
    %1307 = vector.broadcast %cst_495 : f32 to vector<2x256xf32>
    %1308 = arith.select %1306, %1304, %1307 : vector<2x256xi1>, vector<2x256xf32>
    %c2_496 = arith.constant 2 : index
    %c0_497 = arith.constant 0 : index
    %1309 = memref.load %arg8[%c2_496, %c0_497] : memref<4x98xf32, #tpu.memory_space<smem>>
    %c2_498 = arith.constant 2 : index
    %c49_499 = arith.constant 49 : index
    %1310 = memref.load %arg8[%c2_498, %c49_499] : memref<4x98xf32, #tpu.memory_space<smem>>
    %1311 = vector.broadcast %1309 : f32 to vector<2x1xf32>
    %1312 = vector.broadcast %1310 : f32 to vector<2x1xf32>
    %1313 = arith.select %112, %1311, %1312 : vector<2x1xi1>, vector<2x1xf32>
    %1314 = vector.broadcast %1313 : vector<2x1xf32> to vector<2x256xf32>
    %1315 = arith.mulf %1314, %1283 : vector<2x256xf32>
    %c2_500 = arith.constant 2 : index
    %c1_501 = arith.constant 1 : index
    %1316 = memref.load %arg8[%c2_500, %c1_501] : memref<4x98xf32, #tpu.memory_space<smem>>
    %c2_502 = arith.constant 2 : index
    %c50_503 = arith.constant 50 : index
    %1317 = memref.load %arg8[%c2_502, %c50_503] : memref<4x98xf32, #tpu.memory_space<smem>>
    %1318 = vector.broadcast %1316 : f32 to vector<2x1xf32>
    %1319 = vector.broadcast %1317 : f32 to vector<2x1xf32>
    %1320 = arith.select %112, %1318, %1319 : vector<2x1xi1>, vector<2x1xf32>
    %1321 = vector.broadcast %1320 : vector<2x1xf32> to vector<2x256xf32>
    %1322 = arith.mulf %1321, %1288 : vector<2x256xf32>
    %1323 = arith.addf %1315, %1322 : vector<2x256xf32>
    %c2_504 = arith.constant 2 : index
    %c2_505 = arith.constant 2 : index
    %1324 = memref.load %arg8[%c2_504, %c2_505] : memref<4x98xf32, #tpu.memory_space<smem>>
    %c2_506 = arith.constant 2 : index
    %c51_507 = arith.constant 51 : index
    %1325 = memref.load %arg8[%c2_506, %c51_507] : memref<4x98xf32, #tpu.memory_space<smem>>
    %1326 = vector.broadcast %1324 : f32 to vector<2x1xf32>
    %1327 = vector.broadcast %1325 : f32 to vector<2x1xf32>
    %1328 = arith.select %112, %1326, %1327 : vector<2x1xi1>, vector<2x1xf32>
    %1329 = vector.broadcast %1328 : vector<2x1xf32> to vector<2x256xf32>
    %1330 = arith.mulf %1329, %1293 : vector<2x256xf32>
    %1331 = arith.addf %1323, %1330 : vector<2x256xf32>
    %c2_508 = arith.constant 2 : index
    %c3_509 = arith.constant 3 : index
    %1332 = memref.load %arg8[%c2_508, %c3_509] : memref<4x98xf32, #tpu.memory_space<smem>>
    %c2_510 = arith.constant 2 : index
    %c52_511 = arith.constant 52 : index
    %1333 = memref.load %arg8[%c2_510, %c52_511] : memref<4x98xf32, #tpu.memory_space<smem>>
    %1334 = vector.broadcast %1332 : f32 to vector<2x1xf32>
    %1335 = vector.broadcast %1333 : f32 to vector<2x1xf32>
    %1336 = arith.select %112, %1334, %1335 : vector<2x1xi1>, vector<2x1xf32>
    %1337 = vector.broadcast %1336 : vector<2x1xf32> to vector<2x256xf32>
    %1338 = arith.mulf %1337, %1278 : vector<2x256xf32>
    %1339 = arith.addf %1331, %1338 : vector<2x256xf32>
    %c2_512 = arith.constant 2 : index
    %c4_513 = arith.constant 4 : index
    %1340 = memref.load %arg8[%c2_512, %c4_513] : memref<4x98xf32, #tpu.memory_space<smem>>
    %c2_514 = arith.constant 2 : index
    %c53_515 = arith.constant 53 : index
    %1341 = memref.load %arg8[%c2_514, %c53_515] : memref<4x98xf32, #tpu.memory_space<smem>>
    %1342 = vector.broadcast %1340 : f32 to vector<2x1xf32>
    %1343 = vector.broadcast %1341 : f32 to vector<2x1xf32>
    %1344 = arith.select %112, %1342, %1343 : vector<2x1xi1>, vector<2x1xf32>
    %1345 = vector.broadcast %1344 : vector<2x1xf32> to vector<2x256xf32>
    %1346 = arith.mulf %1345, %1298 : vector<2x256xf32>
    %1347 = arith.addf %1339, %1346 : vector<2x256xf32>
    %c2_516 = arith.constant 2 : index
    %c5_517 = arith.constant 5 : index
    %1348 = memref.load %arg8[%c2_516, %c5_517] : memref<4x98xf32, #tpu.memory_space<smem>>
    %c2_518 = arith.constant 2 : index
    %c54_519 = arith.constant 54 : index
    %1349 = memref.load %arg8[%c2_518, %c54_519] : memref<4x98xf32, #tpu.memory_space<smem>>
    %1350 = vector.broadcast %1348 : f32 to vector<2x1xf32>
    %1351 = vector.broadcast %1349 : f32 to vector<2x1xf32>
    %1352 = arith.select %112, %1350, %1351 : vector<2x1xi1>, vector<2x1xf32>
    %1353 = vector.broadcast %1352 : vector<2x1xf32> to vector<2x256xf32>
    %1354 = arith.mulf %1353, %1303 : vector<2x256xf32>
    %1355 = arith.addf %1347, %1354 : vector<2x256xf32>
    %c2_520 = arith.constant 2 : index
    %c6_521 = arith.constant 6 : index
    %1356 = memref.load %arg8[%c2_520, %c6_521] : memref<4x98xf32, #tpu.memory_space<smem>>
    %c2_522 = arith.constant 2 : index
    %c55_523 = arith.constant 55 : index
    %1357 = memref.load %arg8[%c2_522, %c55_523] : memref<4x98xf32, #tpu.memory_space<smem>>
    %1358 = vector.broadcast %1356 : f32 to vector<2x1xf32>
    %1359 = vector.broadcast %1357 : f32 to vector<2x1xf32>
    %1360 = arith.select %112, %1358, %1359 : vector<2x1xi1>, vector<2x1xf32>
    %1361 = vector.broadcast %1360 : vector<2x1xf32> to vector<2x256xf32>
    %1362 = arith.mulf %1361, %1308 : vector<2x256xf32>
    %1363 = arith.addf %1355, %1362 : vector<2x256xf32>
    %c48_i32_524 = arith.constant 48 : i32
    %1364 = tpu.dynamic_rotate %1363 by %c48_i32_524 dim 1 : vector<2x256xf32>, i32 -> vector<2x256xf32>
    %cst_525 = arith.constant 0.000000e+00 : f32
    %1365 = vector.shape_cast %10 : vector<1x256xi1> to vector<1x256xi1>
    %1366 = vector.broadcast %1365 : vector<1x256xi1> to vector<2x256xi1>
    %1367 = vector.broadcast %cst_525 : f32 to vector<2x256xf32>
    %1368 = arith.select %1366, %1364, %1367 : vector<2x256xi1>, vector<2x256xf32>
    %c2_526 = arith.constant 2 : index
    %c7_527 = arith.constant 7 : index
    %1369 = memref.load %arg8[%c2_526, %c7_527] : memref<4x98xf32, #tpu.memory_space<smem>>
    %c2_528 = arith.constant 2 : index
    %c56_529 = arith.constant 56 : index
    %1370 = memref.load %arg8[%c2_528, %c56_529] : memref<4x98xf32, #tpu.memory_space<smem>>
    %1371 = vector.broadcast %1369 : f32 to vector<2x1xf32>
    %1372 = vector.broadcast %1370 : f32 to vector<2x1xf32>
    %1373 = arith.select %112, %1371, %1372 : vector<2x1xi1>, vector<2x1xf32>
    %1374 = vector.broadcast %1373 : vector<2x1xf32> to vector<2x256xf32>
    %1375 = arith.mulf %1374, %1283 : vector<2x256xf32>
    %c2_530 = arith.constant 2 : index
    %c8_531 = arith.constant 8 : index
    %1376 = memref.load %arg8[%c2_530, %c8_531] : memref<4x98xf32, #tpu.memory_space<smem>>
    %c2_532 = arith.constant 2 : index
    %c57_533 = arith.constant 57 : index
    %1377 = memref.load %arg8[%c2_532, %c57_533] : memref<4x98xf32, #tpu.memory_space<smem>>
    %1378 = vector.broadcast %1376 : f32 to vector<2x1xf32>
    %1379 = vector.broadcast %1377 : f32 to vector<2x1xf32>
    %1380 = arith.select %112, %1378, %1379 : vector<2x1xi1>, vector<2x1xf32>
    %1381 = vector.broadcast %1380 : vector<2x1xf32> to vector<2x256xf32>
    %1382 = arith.mulf %1381, %1288 : vector<2x256xf32>
    %1383 = arith.addf %1375, %1382 : vector<2x256xf32>
    %c2_534 = arith.constant 2 : index
    %c9_535 = arith.constant 9 : index
    %1384 = memref.load %arg8[%c2_534, %c9_535] : memref<4x98xf32, #tpu.memory_space<smem>>
    %c2_536 = arith.constant 2 : index
    %c58_537 = arith.constant 58 : index
    %1385 = memref.load %arg8[%c2_536, %c58_537] : memref<4x98xf32, #tpu.memory_space<smem>>
    %1386 = vector.broadcast %1384 : f32 to vector<2x1xf32>
    %1387 = vector.broadcast %1385 : f32 to vector<2x1xf32>
    %1388 = arith.select %112, %1386, %1387 : vector<2x1xi1>, vector<2x1xf32>
    %1389 = vector.broadcast %1388 : vector<2x1xf32> to vector<2x256xf32>
    %1390 = arith.mulf %1389, %1293 : vector<2x256xf32>
    %1391 = arith.addf %1383, %1390 : vector<2x256xf32>
    %c2_538 = arith.constant 2 : index
    %c10_539 = arith.constant 10 : index
    %1392 = memref.load %arg8[%c2_538, %c10_539] : memref<4x98xf32, #tpu.memory_space<smem>>
    %c2_540 = arith.constant 2 : index
    %c59_541 = arith.constant 59 : index
    %1393 = memref.load %arg8[%c2_540, %c59_541] : memref<4x98xf32, #tpu.memory_space<smem>>
    %1394 = vector.broadcast %1392 : f32 to vector<2x1xf32>
    %1395 = vector.broadcast %1393 : f32 to vector<2x1xf32>
    %1396 = arith.select %112, %1394, %1395 : vector<2x1xi1>, vector<2x1xf32>
    %1397 = vector.broadcast %1396 : vector<2x1xf32> to vector<2x256xf32>
    %1398 = arith.mulf %1397, %1278 : vector<2x256xf32>
    %1399 = arith.addf %1391, %1398 : vector<2x256xf32>
    %c2_542 = arith.constant 2 : index
    %c11_543 = arith.constant 11 : index
    %1400 = memref.load %arg8[%c2_542, %c11_543] : memref<4x98xf32, #tpu.memory_space<smem>>
    %c2_544 = arith.constant 2 : index
    %c60_545 = arith.constant 60 : index
    %1401 = memref.load %arg8[%c2_544, %c60_545] : memref<4x98xf32, #tpu.memory_space<smem>>
    %1402 = vector.broadcast %1400 : f32 to vector<2x1xf32>
    %1403 = vector.broadcast %1401 : f32 to vector<2x1xf32>
    %1404 = arith.select %112, %1402, %1403 : vector<2x1xi1>, vector<2x1xf32>
    %1405 = vector.broadcast %1404 : vector<2x1xf32> to vector<2x256xf32>
    %1406 = arith.mulf %1405, %1298 : vector<2x256xf32>
    %1407 = arith.addf %1399, %1406 : vector<2x256xf32>
    %c2_546 = arith.constant 2 : index
    %c12_547 = arith.constant 12 : index
    %1408 = memref.load %arg8[%c2_546, %c12_547] : memref<4x98xf32, #tpu.memory_space<smem>>
    %c2_548 = arith.constant 2 : index
    %c61_549 = arith.constant 61 : index
    %1409 = memref.load %arg8[%c2_548, %c61_549] : memref<4x98xf32, #tpu.memory_space<smem>>
    %1410 = vector.broadcast %1408 : f32 to vector<2x1xf32>
    %1411 = vector.broadcast %1409 : f32 to vector<2x1xf32>
    %1412 = arith.select %112, %1410, %1411 : vector<2x1xi1>, vector<2x1xf32>
    %1413 = vector.broadcast %1412 : vector<2x1xf32> to vector<2x256xf32>
    %1414 = arith.mulf %1413, %1303 : vector<2x256xf32>
    %1415 = arith.addf %1407, %1414 : vector<2x256xf32>
    %c2_550 = arith.constant 2 : index
    %c13_551 = arith.constant 13 : index
    %1416 = memref.load %arg8[%c2_550, %c13_551] : memref<4x98xf32, #tpu.memory_space<smem>>
    %c2_552 = arith.constant 2 : index
    %c62_553 = arith.constant 62 : index
    %1417 = memref.load %arg8[%c2_552, %c62_553] : memref<4x98xf32, #tpu.memory_space<smem>>
    %1418 = vector.broadcast %1416 : f32 to vector<2x1xf32>
    %1419 = vector.broadcast %1417 : f32 to vector<2x1xf32>
    %1420 = arith.select %112, %1418, %1419 : vector<2x1xi1>, vector<2x1xf32>
    %1421 = vector.broadcast %1420 : vector<2x1xf32> to vector<2x256xf32>
    %1422 = arith.mulf %1421, %1308 : vector<2x256xf32>
    %1423 = arith.addf %1415, %1422 : vector<2x256xf32>
    %c32_i32_554 = arith.constant 32 : i32
    %1424 = tpu.dynamic_rotate %1423 by %c32_i32_554 dim 1 : vector<2x256xf32>, i32 -> vector<2x256xf32>
    %cst_555 = arith.constant 0.000000e+00 : f32
    %1425 = vector.shape_cast %19 : vector<1x256xi1> to vector<1x256xi1>
    %1426 = vector.broadcast %1425 : vector<1x256xi1> to vector<2x256xi1>
    %1427 = vector.broadcast %cst_555 : f32 to vector<2x256xf32>
    %1428 = arith.select %1426, %1424, %1427 : vector<2x256xi1>, vector<2x256xf32>
    %1429 = arith.addf %1368, %1428 : vector<2x256xf32>
    %c2_556 = arith.constant 2 : index
    %c14_557 = arith.constant 14 : index
    %1430 = memref.load %arg8[%c2_556, %c14_557] : memref<4x98xf32, #tpu.memory_space<smem>>
    %c2_558 = arith.constant 2 : index
    %c63_559 = arith.constant 63 : index
    %1431 = memref.load %arg8[%c2_558, %c63_559] : memref<4x98xf32, #tpu.memory_space<smem>>
    %1432 = vector.broadcast %1430 : f32 to vector<2x1xf32>
    %1433 = vector.broadcast %1431 : f32 to vector<2x1xf32>
    %1434 = arith.select %112, %1432, %1433 : vector<2x1xi1>, vector<2x1xf32>
    %1435 = vector.broadcast %1434 : vector<2x1xf32> to vector<2x256xf32>
    %1436 = arith.mulf %1435, %1283 : vector<2x256xf32>
    %c2_560 = arith.constant 2 : index
    %c15_561 = arith.constant 15 : index
    %1437 = memref.load %arg8[%c2_560, %c15_561] : memref<4x98xf32, #tpu.memory_space<smem>>
    %c2_562 = arith.constant 2 : index
    %c64_563 = arith.constant 64 : index
    %1438 = memref.load %arg8[%c2_562, %c64_563] : memref<4x98xf32, #tpu.memory_space<smem>>
    %1439 = vector.broadcast %1437 : f32 to vector<2x1xf32>
    %1440 = vector.broadcast %1438 : f32 to vector<2x1xf32>
    %1441 = arith.select %112, %1439, %1440 : vector<2x1xi1>, vector<2x1xf32>
    %1442 = vector.broadcast %1441 : vector<2x1xf32> to vector<2x256xf32>
    %1443 = arith.mulf %1442, %1288 : vector<2x256xf32>
    %1444 = arith.addf %1436, %1443 : vector<2x256xf32>
    %c2_564 = arith.constant 2 : index
    %c16_565 = arith.constant 16 : index
    %1445 = memref.load %arg8[%c2_564, %c16_565] : memref<4x98xf32, #tpu.memory_space<smem>>
    %c2_566 = arith.constant 2 : index
    %c65_567 = arith.constant 65 : index
    %1446 = memref.load %arg8[%c2_566, %c65_567] : memref<4x98xf32, #tpu.memory_space<smem>>
    %1447 = vector.broadcast %1445 : f32 to vector<2x1xf32>
    %1448 = vector.broadcast %1446 : f32 to vector<2x1xf32>
    %1449 = arith.select %112, %1447, %1448 : vector<2x1xi1>, vector<2x1xf32>
    %1450 = vector.broadcast %1449 : vector<2x1xf32> to vector<2x256xf32>
    %1451 = arith.mulf %1450, %1293 : vector<2x256xf32>
    %1452 = arith.addf %1444, %1451 : vector<2x256xf32>
    %c2_568 = arith.constant 2 : index
    %c17_569 = arith.constant 17 : index
    %1453 = memref.load %arg8[%c2_568, %c17_569] : memref<4x98xf32, #tpu.memory_space<smem>>
    %c2_570 = arith.constant 2 : index
    %c66_571 = arith.constant 66 : index
    %1454 = memref.load %arg8[%c2_570, %c66_571] : memref<4x98xf32, #tpu.memory_space<smem>>
    %1455 = vector.broadcast %1453 : f32 to vector<2x1xf32>
    %1456 = vector.broadcast %1454 : f32 to vector<2x1xf32>
    %1457 = arith.select %112, %1455, %1456 : vector<2x1xi1>, vector<2x1xf32>
    %1458 = vector.broadcast %1457 : vector<2x1xf32> to vector<2x256xf32>
    %1459 = arith.mulf %1458, %1278 : vector<2x256xf32>
    %1460 = arith.addf %1452, %1459 : vector<2x256xf32>
    %c2_572 = arith.constant 2 : index
    %c18_573 = arith.constant 18 : index
    %1461 = memref.load %arg8[%c2_572, %c18_573] : memref<4x98xf32, #tpu.memory_space<smem>>
    %c2_574 = arith.constant 2 : index
    %c67_575 = arith.constant 67 : index
    %1462 = memref.load %arg8[%c2_574, %c67_575] : memref<4x98xf32, #tpu.memory_space<smem>>
    %1463 = vector.broadcast %1461 : f32 to vector<2x1xf32>
    %1464 = vector.broadcast %1462 : f32 to vector<2x1xf32>
    %1465 = arith.select %112, %1463, %1464 : vector<2x1xi1>, vector<2x1xf32>
    %1466 = vector.broadcast %1465 : vector<2x1xf32> to vector<2x256xf32>
    %1467 = arith.mulf %1466, %1298 : vector<2x256xf32>
    %1468 = arith.addf %1460, %1467 : vector<2x256xf32>
    %c2_576 = arith.constant 2 : index
    %c19_577 = arith.constant 19 : index
    %1469 = memref.load %arg8[%c2_576, %c19_577] : memref<4x98xf32, #tpu.memory_space<smem>>
    %c2_578 = arith.constant 2 : index
    %c68_579 = arith.constant 68 : index
    %1470 = memref.load %arg8[%c2_578, %c68_579] : memref<4x98xf32, #tpu.memory_space<smem>>
    %1471 = vector.broadcast %1469 : f32 to vector<2x1xf32>
    %1472 = vector.broadcast %1470 : f32 to vector<2x1xf32>
    %1473 = arith.select %112, %1471, %1472 : vector<2x1xi1>, vector<2x1xf32>
    %1474 = vector.broadcast %1473 : vector<2x1xf32> to vector<2x256xf32>
    %1475 = arith.mulf %1474, %1303 : vector<2x256xf32>
    %1476 = arith.addf %1468, %1475 : vector<2x256xf32>
    %c2_580 = arith.constant 2 : index
    %c20_581 = arith.constant 20 : index
    %1477 = memref.load %arg8[%c2_580, %c20_581] : memref<4x98xf32, #tpu.memory_space<smem>>
    %c2_582 = arith.constant 2 : index
    %c69_583 = arith.constant 69 : index
    %1478 = memref.load %arg8[%c2_582, %c69_583] : memref<4x98xf32, #tpu.memory_space<smem>>
    %1479 = vector.broadcast %1477 : f32 to vector<2x1xf32>
    %1480 = vector.broadcast %1478 : f32 to vector<2x1xf32>
    %1481 = arith.select %112, %1479, %1480 : vector<2x1xi1>, vector<2x1xf32>
    %1482 = vector.broadcast %1481 : vector<2x1xf32> to vector<2x256xf32>
    %1483 = arith.mulf %1482, %1308 : vector<2x256xf32>
    %1484 = arith.addf %1476, %1483 : vector<2x256xf32>
    %c16_i32_584 = arith.constant 16 : i32
    %1485 = tpu.dynamic_rotate %1484 by %c16_i32_584 dim 1 : vector<2x256xf32>, i32 -> vector<2x256xf32>
    %cst_585 = arith.constant 0.000000e+00 : f32
    %1486 = vector.shape_cast %28 : vector<1x256xi1> to vector<1x256xi1>
    %1487 = vector.broadcast %1486 : vector<1x256xi1> to vector<2x256xi1>
    %1488 = vector.broadcast %cst_585 : f32 to vector<2x256xf32>
    %1489 = arith.select %1487, %1485, %1488 : vector<2x256xi1>, vector<2x256xf32>
    %1490 = arith.addf %1429, %1489 : vector<2x256xf32>
    %c2_586 = arith.constant 2 : index
    %c21_587 = arith.constant 21 : index
    %1491 = memref.load %arg8[%c2_586, %c21_587] : memref<4x98xf32, #tpu.memory_space<smem>>
    %c2_588 = arith.constant 2 : index
    %c70_589 = arith.constant 70 : index
    %1492 = memref.load %arg8[%c2_588, %c70_589] : memref<4x98xf32, #tpu.memory_space<smem>>
    %1493 = vector.broadcast %1491 : f32 to vector<2x1xf32>
    %1494 = vector.broadcast %1492 : f32 to vector<2x1xf32>
    %1495 = arith.select %112, %1493, %1494 : vector<2x1xi1>, vector<2x1xf32>
    %1496 = vector.broadcast %1495 : vector<2x1xf32> to vector<2x256xf32>
    %1497 = arith.mulf %1496, %1283 : vector<2x256xf32>
    %c2_590 = arith.constant 2 : index
    %c22_591 = arith.constant 22 : index
    %1498 = memref.load %arg8[%c2_590, %c22_591] : memref<4x98xf32, #tpu.memory_space<smem>>
    %c2_592 = arith.constant 2 : index
    %c71_593 = arith.constant 71 : index
    %1499 = memref.load %arg8[%c2_592, %c71_593] : memref<4x98xf32, #tpu.memory_space<smem>>
    %1500 = vector.broadcast %1498 : f32 to vector<2x1xf32>
    %1501 = vector.broadcast %1499 : f32 to vector<2x1xf32>
    %1502 = arith.select %112, %1500, %1501 : vector<2x1xi1>, vector<2x1xf32>
    %1503 = vector.broadcast %1502 : vector<2x1xf32> to vector<2x256xf32>
    %1504 = arith.mulf %1503, %1288 : vector<2x256xf32>
    %1505 = arith.addf %1497, %1504 : vector<2x256xf32>
    %c2_594 = arith.constant 2 : index
    %c23_595 = arith.constant 23 : index
    %1506 = memref.load %arg8[%c2_594, %c23_595] : memref<4x98xf32, #tpu.memory_space<smem>>
    %c2_596 = arith.constant 2 : index
    %c72_597 = arith.constant 72 : index
    %1507 = memref.load %arg8[%c2_596, %c72_597] : memref<4x98xf32, #tpu.memory_space<smem>>
    %1508 = vector.broadcast %1506 : f32 to vector<2x1xf32>
    %1509 = vector.broadcast %1507 : f32 to vector<2x1xf32>
    %1510 = arith.select %112, %1508, %1509 : vector<2x1xi1>, vector<2x1xf32>
    %1511 = vector.broadcast %1510 : vector<2x1xf32> to vector<2x256xf32>
    %1512 = arith.mulf %1511, %1293 : vector<2x256xf32>
    %1513 = arith.addf %1505, %1512 : vector<2x256xf32>
    %c2_598 = arith.constant 2 : index
    %c24_599 = arith.constant 24 : index
    %1514 = memref.load %arg8[%c2_598, %c24_599] : memref<4x98xf32, #tpu.memory_space<smem>>
    %c2_600 = arith.constant 2 : index
    %c73_601 = arith.constant 73 : index
    %1515 = memref.load %arg8[%c2_600, %c73_601] : memref<4x98xf32, #tpu.memory_space<smem>>
    %1516 = vector.broadcast %1514 : f32 to vector<2x1xf32>
    %1517 = vector.broadcast %1515 : f32 to vector<2x1xf32>
    %1518 = arith.select %112, %1516, %1517 : vector<2x1xi1>, vector<2x1xf32>
    %1519 = vector.broadcast %1518 : vector<2x1xf32> to vector<2x256xf32>
    %1520 = arith.mulf %1519, %1278 : vector<2x256xf32>
    %1521 = arith.addf %1513, %1520 : vector<2x256xf32>
    %c2_602 = arith.constant 2 : index
    %c25_603 = arith.constant 25 : index
    %1522 = memref.load %arg8[%c2_602, %c25_603] : memref<4x98xf32, #tpu.memory_space<smem>>
    %c2_604 = arith.constant 2 : index
    %c74_605 = arith.constant 74 : index
    %1523 = memref.load %arg8[%c2_604, %c74_605] : memref<4x98xf32, #tpu.memory_space<smem>>
    %1524 = vector.broadcast %1522 : f32 to vector<2x1xf32>
    %1525 = vector.broadcast %1523 : f32 to vector<2x1xf32>
    %1526 = arith.select %112, %1524, %1525 : vector<2x1xi1>, vector<2x1xf32>
    %1527 = vector.broadcast %1526 : vector<2x1xf32> to vector<2x256xf32>
    %1528 = arith.mulf %1527, %1298 : vector<2x256xf32>
    %1529 = arith.addf %1521, %1528 : vector<2x256xf32>
    %c2_606 = arith.constant 2 : index
    %c26_607 = arith.constant 26 : index
    %1530 = memref.load %arg8[%c2_606, %c26_607] : memref<4x98xf32, #tpu.memory_space<smem>>
    %c2_608 = arith.constant 2 : index
    %c75_609 = arith.constant 75 : index
    %1531 = memref.load %arg8[%c2_608, %c75_609] : memref<4x98xf32, #tpu.memory_space<smem>>
    %1532 = vector.broadcast %1530 : f32 to vector<2x1xf32>
    %1533 = vector.broadcast %1531 : f32 to vector<2x1xf32>
    %1534 = arith.select %112, %1532, %1533 : vector<2x1xi1>, vector<2x1xf32>
    %1535 = vector.broadcast %1534 : vector<2x1xf32> to vector<2x256xf32>
    %1536 = arith.mulf %1535, %1303 : vector<2x256xf32>
    %1537 = arith.addf %1529, %1536 : vector<2x256xf32>
    %c2_610 = arith.constant 2 : index
    %c27_611 = arith.constant 27 : index
    %1538 = memref.load %arg8[%c2_610, %c27_611] : memref<4x98xf32, #tpu.memory_space<smem>>
    %c2_612 = arith.constant 2 : index
    %c76_613 = arith.constant 76 : index
    %1539 = memref.load %arg8[%c2_612, %c76_613] : memref<4x98xf32, #tpu.memory_space<smem>>
    %1540 = vector.broadcast %1538 : f32 to vector<2x1xf32>
    %1541 = vector.broadcast %1539 : f32 to vector<2x1xf32>
    %1542 = arith.select %112, %1540, %1541 : vector<2x1xi1>, vector<2x1xf32>
    %1543 = vector.broadcast %1542 : vector<2x1xf32> to vector<2x256xf32>
    %1544 = arith.mulf %1543, %1308 : vector<2x256xf32>
    %1545 = arith.addf %1537, %1544 : vector<2x256xf32>
    %1546 = arith.addf %1490, %1545 : vector<2x256xf32>
    %c2_614 = arith.constant 2 : index
    %c28_615 = arith.constant 28 : index
    %1547 = memref.load %arg8[%c2_614, %c28_615] : memref<4x98xf32, #tpu.memory_space<smem>>
    %c2_616 = arith.constant 2 : index
    %c77_617 = arith.constant 77 : index
    %1548 = memref.load %arg8[%c2_616, %c77_617] : memref<4x98xf32, #tpu.memory_space<smem>>
    %1549 = vector.broadcast %1547 : f32 to vector<2x1xf32>
    %1550 = vector.broadcast %1548 : f32 to vector<2x1xf32>
    %1551 = arith.select %112, %1549, %1550 : vector<2x1xi1>, vector<2x1xf32>
    %1552 = vector.broadcast %1551 : vector<2x1xf32> to vector<2x256xf32>
    %1553 = arith.mulf %1552, %1283 : vector<2x256xf32>
    %c2_618 = arith.constant 2 : index
    %c29_619 = arith.constant 29 : index
    %1554 = memref.load %arg8[%c2_618, %c29_619] : memref<4x98xf32, #tpu.memory_space<smem>>
    %c2_620 = arith.constant 2 : index
    %c78_621 = arith.constant 78 : index
    %1555 = memref.load %arg8[%c2_620, %c78_621] : memref<4x98xf32, #tpu.memory_space<smem>>
    %1556 = vector.broadcast %1554 : f32 to vector<2x1xf32>
    %1557 = vector.broadcast %1555 : f32 to vector<2x1xf32>
    %1558 = arith.select %112, %1556, %1557 : vector<2x1xi1>, vector<2x1xf32>
    %1559 = vector.broadcast %1558 : vector<2x1xf32> to vector<2x256xf32>
    %1560 = arith.mulf %1559, %1288 : vector<2x256xf32>
    %1561 = arith.addf %1553, %1560 : vector<2x256xf32>
    %c2_622 = arith.constant 2 : index
    %c30_623 = arith.constant 30 : index
    %1562 = memref.load %arg8[%c2_622, %c30_623] : memref<4x98xf32, #tpu.memory_space<smem>>
    %c2_624 = arith.constant 2 : index
    %c79_625 = arith.constant 79 : index
    %1563 = memref.load %arg8[%c2_624, %c79_625] : memref<4x98xf32, #tpu.memory_space<smem>>
    %1564 = vector.broadcast %1562 : f32 to vector<2x1xf32>
    %1565 = vector.broadcast %1563 : f32 to vector<2x1xf32>
    %1566 = arith.select %112, %1564, %1565 : vector<2x1xi1>, vector<2x1xf32>
    %1567 = vector.broadcast %1566 : vector<2x1xf32> to vector<2x256xf32>
    %1568 = arith.mulf %1567, %1293 : vector<2x256xf32>
    %1569 = arith.addf %1561, %1568 : vector<2x256xf32>
    %c2_626 = arith.constant 2 : index
    %c31_627 = arith.constant 31 : index
    %1570 = memref.load %arg8[%c2_626, %c31_627] : memref<4x98xf32, #tpu.memory_space<smem>>
    %c2_628 = arith.constant 2 : index
    %c80_629 = arith.constant 80 : index
    %1571 = memref.load %arg8[%c2_628, %c80_629] : memref<4x98xf32, #tpu.memory_space<smem>>
    %1572 = vector.broadcast %1570 : f32 to vector<2x1xf32>
    %1573 = vector.broadcast %1571 : f32 to vector<2x1xf32>
    %1574 = arith.select %112, %1572, %1573 : vector<2x1xi1>, vector<2x1xf32>
    %1575 = vector.broadcast %1574 : vector<2x1xf32> to vector<2x256xf32>
    %1576 = arith.mulf %1575, %1278 : vector<2x256xf32>
    %1577 = arith.addf %1569, %1576 : vector<2x256xf32>
    %c2_630 = arith.constant 2 : index
    %c32_631 = arith.constant 32 : index
    %1578 = memref.load %arg8[%c2_630, %c32_631] : memref<4x98xf32, #tpu.memory_space<smem>>
    %c2_632 = arith.constant 2 : index
    %c81_633 = arith.constant 81 : index
    %1579 = memref.load %arg8[%c2_632, %c81_633] : memref<4x98xf32, #tpu.memory_space<smem>>
    %1580 = vector.broadcast %1578 : f32 to vector<2x1xf32>
    %1581 = vector.broadcast %1579 : f32 to vector<2x1xf32>
    %1582 = arith.select %112, %1580, %1581 : vector<2x1xi1>, vector<2x1xf32>
    %1583 = vector.broadcast %1582 : vector<2x1xf32> to vector<2x256xf32>
    %1584 = arith.mulf %1583, %1298 : vector<2x256xf32>
    %1585 = arith.addf %1577, %1584 : vector<2x256xf32>
    %c2_634 = arith.constant 2 : index
    %c33_635 = arith.constant 33 : index
    %1586 = memref.load %arg8[%c2_634, %c33_635] : memref<4x98xf32, #tpu.memory_space<smem>>
    %c2_636 = arith.constant 2 : index
    %c82_637 = arith.constant 82 : index
    %1587 = memref.load %arg8[%c2_636, %c82_637] : memref<4x98xf32, #tpu.memory_space<smem>>
    %1588 = vector.broadcast %1586 : f32 to vector<2x1xf32>
    %1589 = vector.broadcast %1587 : f32 to vector<2x1xf32>
    %1590 = arith.select %112, %1588, %1589 : vector<2x1xi1>, vector<2x1xf32>
    %1591 = vector.broadcast %1590 : vector<2x1xf32> to vector<2x256xf32>
    %1592 = arith.mulf %1591, %1303 : vector<2x256xf32>
    %1593 = arith.addf %1585, %1592 : vector<2x256xf32>
    %c2_638 = arith.constant 2 : index
    %c34_639 = arith.constant 34 : index
    %1594 = memref.load %arg8[%c2_638, %c34_639] : memref<4x98xf32, #tpu.memory_space<smem>>
    %c2_640 = arith.constant 2 : index
    %c83_641 = arith.constant 83 : index
    %1595 = memref.load %arg8[%c2_640, %c83_641] : memref<4x98xf32, #tpu.memory_space<smem>>
    %1596 = vector.broadcast %1594 : f32 to vector<2x1xf32>
    %1597 = vector.broadcast %1595 : f32 to vector<2x1xf32>
    %1598 = arith.select %112, %1596, %1597 : vector<2x1xi1>, vector<2x1xf32>
    %1599 = vector.broadcast %1598 : vector<2x1xf32> to vector<2x256xf32>
    %1600 = arith.mulf %1599, %1308 : vector<2x256xf32>
    %1601 = arith.addf %1593, %1600 : vector<2x256xf32>
    %c240_i32_642 = arith.constant 240 : i32
    %1602 = tpu.dynamic_rotate %1601 by %c240_i32_642 dim 1 : vector<2x256xf32>, i32 -> vector<2x256xf32>
    %cst_643 = arith.constant 0.000000e+00 : f32
    %1603 = vector.shape_cast %37 : vector<1x256xi1> to vector<1x256xi1>
    %1604 = vector.broadcast %1603 : vector<1x256xi1> to vector<2x256xi1>
    %1605 = vector.broadcast %cst_643 : f32 to vector<2x256xf32>
    %1606 = arith.select %1604, %1602, %1605 : vector<2x256xi1>, vector<2x256xf32>
    %1607 = arith.addf %1546, %1606 : vector<2x256xf32>
    %c2_644 = arith.constant 2 : index
    %c35_645 = arith.constant 35 : index
    %1608 = memref.load %arg8[%c2_644, %c35_645] : memref<4x98xf32, #tpu.memory_space<smem>>
    %c2_646 = arith.constant 2 : index
    %c84_647 = arith.constant 84 : index
    %1609 = memref.load %arg8[%c2_646, %c84_647] : memref<4x98xf32, #tpu.memory_space<smem>>
    %1610 = vector.broadcast %1608 : f32 to vector<2x1xf32>
    %1611 = vector.broadcast %1609 : f32 to vector<2x1xf32>
    %1612 = arith.select %112, %1610, %1611 : vector<2x1xi1>, vector<2x1xf32>
    %1613 = vector.broadcast %1612 : vector<2x1xf32> to vector<2x256xf32>
    %1614 = arith.mulf %1613, %1283 : vector<2x256xf32>
    %c2_648 = arith.constant 2 : index
    %c36_649 = arith.constant 36 : index
    %1615 = memref.load %arg8[%c2_648, %c36_649] : memref<4x98xf32, #tpu.memory_space<smem>>
    %c2_650 = arith.constant 2 : index
    %c85_651 = arith.constant 85 : index
    %1616 = memref.load %arg8[%c2_650, %c85_651] : memref<4x98xf32, #tpu.memory_space<smem>>
    %1617 = vector.broadcast %1615 : f32 to vector<2x1xf32>
    %1618 = vector.broadcast %1616 : f32 to vector<2x1xf32>
    %1619 = arith.select %112, %1617, %1618 : vector<2x1xi1>, vector<2x1xf32>
    %1620 = vector.broadcast %1619 : vector<2x1xf32> to vector<2x256xf32>
    %1621 = arith.mulf %1620, %1288 : vector<2x256xf32>
    %1622 = arith.addf %1614, %1621 : vector<2x256xf32>
    %c2_652 = arith.constant 2 : index
    %c37_653 = arith.constant 37 : index
    %1623 = memref.load %arg8[%c2_652, %c37_653] : memref<4x98xf32, #tpu.memory_space<smem>>
    %c2_654 = arith.constant 2 : index
    %c86_655 = arith.constant 86 : index
    %1624 = memref.load %arg8[%c2_654, %c86_655] : memref<4x98xf32, #tpu.memory_space<smem>>
    %1625 = vector.broadcast %1623 : f32 to vector<2x1xf32>
    %1626 = vector.broadcast %1624 : f32 to vector<2x1xf32>
    %1627 = arith.select %112, %1625, %1626 : vector<2x1xi1>, vector<2x1xf32>
    %1628 = vector.broadcast %1627 : vector<2x1xf32> to vector<2x256xf32>
    %1629 = arith.mulf %1628, %1293 : vector<2x256xf32>
    %1630 = arith.addf %1622, %1629 : vector<2x256xf32>
    %c2_656 = arith.constant 2 : index
    %c38_657 = arith.constant 38 : index
    %1631 = memref.load %arg8[%c2_656, %c38_657] : memref<4x98xf32, #tpu.memory_space<smem>>
    %c2_658 = arith.constant 2 : index
    %c87_659 = arith.constant 87 : index
    %1632 = memref.load %arg8[%c2_658, %c87_659] : memref<4x98xf32, #tpu.memory_space<smem>>
    %1633 = vector.broadcast %1631 : f32 to vector<2x1xf32>
    %1634 = vector.broadcast %1632 : f32 to vector<2x1xf32>
    %1635 = arith.select %112, %1633, %1634 : vector<2x1xi1>, vector<2x1xf32>
    %1636 = vector.broadcast %1635 : vector<2x1xf32> to vector<2x256xf32>
    %1637 = arith.mulf %1636, %1278 : vector<2x256xf32>
    %1638 = arith.addf %1630, %1637 : vector<2x256xf32>
    %c2_660 = arith.constant 2 : index
    %c39_661 = arith.constant 39 : index
    %1639 = memref.load %arg8[%c2_660, %c39_661] : memref<4x98xf32, #tpu.memory_space<smem>>
    %c2_662 = arith.constant 2 : index
    %c88_663 = arith.constant 88 : index
    %1640 = memref.load %arg8[%c2_662, %c88_663] : memref<4x98xf32, #tpu.memory_space<smem>>
    %1641 = vector.broadcast %1639 : f32 to vector<2x1xf32>
    %1642 = vector.broadcast %1640 : f32 to vector<2x1xf32>
    %1643 = arith.select %112, %1641, %1642 : vector<2x1xi1>, vector<2x1xf32>
    %1644 = vector.broadcast %1643 : vector<2x1xf32> to vector<2x256xf32>
    %1645 = arith.mulf %1644, %1298 : vector<2x256xf32>
    %1646 = arith.addf %1638, %1645 : vector<2x256xf32>
    %c2_664 = arith.constant 2 : index
    %c40_665 = arith.constant 40 : index
    %1647 = memref.load %arg8[%c2_664, %c40_665] : memref<4x98xf32, #tpu.memory_space<smem>>
    %c2_666 = arith.constant 2 : index
    %c89_667 = arith.constant 89 : index
    %1648 = memref.load %arg8[%c2_666, %c89_667] : memref<4x98xf32, #tpu.memory_space<smem>>
    %1649 = vector.broadcast %1647 : f32 to vector<2x1xf32>
    %1650 = vector.broadcast %1648 : f32 to vector<2x1xf32>
    %1651 = arith.select %112, %1649, %1650 : vector<2x1xi1>, vector<2x1xf32>
    %1652 = vector.broadcast %1651 : vector<2x1xf32> to vector<2x256xf32>
    %1653 = arith.mulf %1652, %1303 : vector<2x256xf32>
    %1654 = arith.addf %1646, %1653 : vector<2x256xf32>
    %c2_668 = arith.constant 2 : index
    %c41_669 = arith.constant 41 : index
    %1655 = memref.load %arg8[%c2_668, %c41_669] : memref<4x98xf32, #tpu.memory_space<smem>>
    %c2_670 = arith.constant 2 : index
    %c90_671 = arith.constant 90 : index
    %1656 = memref.load %arg8[%c2_670, %c90_671] : memref<4x98xf32, #tpu.memory_space<smem>>
    %1657 = vector.broadcast %1655 : f32 to vector<2x1xf32>
    %1658 = vector.broadcast %1656 : f32 to vector<2x1xf32>
    %1659 = arith.select %112, %1657, %1658 : vector<2x1xi1>, vector<2x1xf32>
    %1660 = vector.broadcast %1659 : vector<2x1xf32> to vector<2x256xf32>
    %1661 = arith.mulf %1660, %1308 : vector<2x256xf32>
    %1662 = arith.addf %1654, %1661 : vector<2x256xf32>
    %c224_i32_672 = arith.constant 224 : i32
    %1663 = tpu.dynamic_rotate %1662 by %c224_i32_672 dim 1 : vector<2x256xf32>, i32 -> vector<2x256xf32>
    %cst_673 = arith.constant 0.000000e+00 : f32
    %1664 = vector.shape_cast %46 : vector<1x256xi1> to vector<1x256xi1>
    %1665 = vector.broadcast %1664 : vector<1x256xi1> to vector<2x256xi1>
    %1666 = vector.broadcast %cst_673 : f32 to vector<2x256xf32>
    %1667 = arith.select %1665, %1663, %1666 : vector<2x256xi1>, vector<2x256xf32>
    %1668 = arith.addf %1607, %1667 : vector<2x256xf32>
    %c2_674 = arith.constant 2 : index
    %c42_675 = arith.constant 42 : index
    %1669 = memref.load %arg8[%c2_674, %c42_675] : memref<4x98xf32, #tpu.memory_space<smem>>
    %c2_676 = arith.constant 2 : index
    %c91_677 = arith.constant 91 : index
    %1670 = memref.load %arg8[%c2_676, %c91_677] : memref<4x98xf32, #tpu.memory_space<smem>>
    %1671 = vector.broadcast %1669 : f32 to vector<2x1xf32>
    %1672 = vector.broadcast %1670 : f32 to vector<2x1xf32>
    %1673 = arith.select %112, %1671, %1672 : vector<2x1xi1>, vector<2x1xf32>
    %1674 = vector.broadcast %1673 : vector<2x1xf32> to vector<2x256xf32>
    %1675 = arith.mulf %1674, %1283 : vector<2x256xf32>
    %c2_678 = arith.constant 2 : index
    %c43_679 = arith.constant 43 : index
    %1676 = memref.load %arg8[%c2_678, %c43_679] : memref<4x98xf32, #tpu.memory_space<smem>>
    %c2_680 = arith.constant 2 : index
    %c92_681 = arith.constant 92 : index
    %1677 = memref.load %arg8[%c2_680, %c92_681] : memref<4x98xf32, #tpu.memory_space<smem>>
    %1678 = vector.broadcast %1676 : f32 to vector<2x1xf32>
    %1679 = vector.broadcast %1677 : f32 to vector<2x1xf32>
    %1680 = arith.select %112, %1678, %1679 : vector<2x1xi1>, vector<2x1xf32>
    %1681 = vector.broadcast %1680 : vector<2x1xf32> to vector<2x256xf32>
    %1682 = arith.mulf %1681, %1288 : vector<2x256xf32>
    %1683 = arith.addf %1675, %1682 : vector<2x256xf32>
    %c2_682 = arith.constant 2 : index
    %c44_683 = arith.constant 44 : index
    %1684 = memref.load %arg8[%c2_682, %c44_683] : memref<4x98xf32, #tpu.memory_space<smem>>
    %c2_684 = arith.constant 2 : index
    %c93_685 = arith.constant 93 : index
    %1685 = memref.load %arg8[%c2_684, %c93_685] : memref<4x98xf32, #tpu.memory_space<smem>>
    %1686 = vector.broadcast %1684 : f32 to vector<2x1xf32>
    %1687 = vector.broadcast %1685 : f32 to vector<2x1xf32>
    %1688 = arith.select %112, %1686, %1687 : vector<2x1xi1>, vector<2x1xf32>
    %1689 = vector.broadcast %1688 : vector<2x1xf32> to vector<2x256xf32>
    %1690 = arith.mulf %1689, %1293 : vector<2x256xf32>
    %1691 = arith.addf %1683, %1690 : vector<2x256xf32>
    %c2_686 = arith.constant 2 : index
    %c45_687 = arith.constant 45 : index
    %1692 = memref.load %arg8[%c2_686, %c45_687] : memref<4x98xf32, #tpu.memory_space<smem>>
    %c2_688 = arith.constant 2 : index
    %c94_689 = arith.constant 94 : index
    %1693 = memref.load %arg8[%c2_688, %c94_689] : memref<4x98xf32, #tpu.memory_space<smem>>
    %1694 = vector.broadcast %1692 : f32 to vector<2x1xf32>
    %1695 = vector.broadcast %1693 : f32 to vector<2x1xf32>
    %1696 = arith.select %112, %1694, %1695 : vector<2x1xi1>, vector<2x1xf32>
    %1697 = vector.broadcast %1696 : vector<2x1xf32> to vector<2x256xf32>
    %1698 = arith.mulf %1697, %1278 : vector<2x256xf32>
    %1699 = arith.addf %1691, %1698 : vector<2x256xf32>
    %c2_690 = arith.constant 2 : index
    %c46_691 = arith.constant 46 : index
    %1700 = memref.load %arg8[%c2_690, %c46_691] : memref<4x98xf32, #tpu.memory_space<smem>>
    %c2_692 = arith.constant 2 : index
    %c95_693 = arith.constant 95 : index
    %1701 = memref.load %arg8[%c2_692, %c95_693] : memref<4x98xf32, #tpu.memory_space<smem>>
    %1702 = vector.broadcast %1700 : f32 to vector<2x1xf32>
    %1703 = vector.broadcast %1701 : f32 to vector<2x1xf32>
    %1704 = arith.select %112, %1702, %1703 : vector<2x1xi1>, vector<2x1xf32>
    %1705 = vector.broadcast %1704 : vector<2x1xf32> to vector<2x256xf32>
    %1706 = arith.mulf %1705, %1298 : vector<2x256xf32>
    %1707 = arith.addf %1699, %1706 : vector<2x256xf32>
    %c2_694 = arith.constant 2 : index
    %c47_695 = arith.constant 47 : index
    %1708 = memref.load %arg8[%c2_694, %c47_695] : memref<4x98xf32, #tpu.memory_space<smem>>
    %c2_696 = arith.constant 2 : index
    %c96_697 = arith.constant 96 : index
    %1709 = memref.load %arg8[%c2_696, %c96_697] : memref<4x98xf32, #tpu.memory_space<smem>>
    %1710 = vector.broadcast %1708 : f32 to vector<2x1xf32>
    %1711 = vector.broadcast %1709 : f32 to vector<2x1xf32>
    %1712 = arith.select %112, %1710, %1711 : vector<2x1xi1>, vector<2x1xf32>
    %1713 = vector.broadcast %1712 : vector<2x1xf32> to vector<2x256xf32>
    %1714 = arith.mulf %1713, %1303 : vector<2x256xf32>
    %1715 = arith.addf %1707, %1714 : vector<2x256xf32>
    %c2_698 = arith.constant 2 : index
    %c48_699 = arith.constant 48 : index
    %1716 = memref.load %arg8[%c2_698, %c48_699] : memref<4x98xf32, #tpu.memory_space<smem>>
    %c2_700 = arith.constant 2 : index
    %c97_701 = arith.constant 97 : index
    %1717 = memref.load %arg8[%c2_700, %c97_701] : memref<4x98xf32, #tpu.memory_space<smem>>
    %1718 = vector.broadcast %1716 : f32 to vector<2x1xf32>
    %1719 = vector.broadcast %1717 : f32 to vector<2x1xf32>
    %1720 = arith.select %112, %1718, %1719 : vector<2x1xi1>, vector<2x1xf32>
    %1721 = vector.broadcast %1720 : vector<2x1xf32> to vector<2x256xf32>
    %1722 = arith.mulf %1721, %1308 : vector<2x256xf32>
    %1723 = arith.addf %1715, %1722 : vector<2x256xf32>
    %c208_i32_702 = arith.constant 208 : i32
    %1724 = tpu.dynamic_rotate %1723 by %c208_i32_702 dim 1 : vector<2x256xf32>, i32 -> vector<2x256xf32>
    %cst_703 = arith.constant 0.000000e+00 : f32
    %1725 = vector.shape_cast %55 : vector<1x256xi1> to vector<1x256xi1>
    %1726 = vector.broadcast %1725 : vector<1x256xi1> to vector<2x256xi1>
    %1727 = vector.broadcast %cst_703 : f32 to vector<2x256xf32>
    %1728 = arith.select %1726, %1724, %1727 : vector<2x256xi1>, vector<2x256xf32>
    %1729 = arith.addf %1668, %1728 : vector<2x256xf32>
    %cst_704 = arith.constant dense<0.000000e+00> : vector<256xf32>
    %1730 = vector.multi_reduction <add>, %1729, %cst_704 [0] : vector<2x256xf32> to vector<256xf32>
    %1731 = vector.shape_cast %1730 : vector<256xf32> to vector<1x256xf32>
    %cst_705 = arith.constant 0.000000e+00 : f32
    %1732 = vector.broadcast %cst_705 : f32 to vector<1x256xf32>
    %1733 = arith.subf %1732, %1731 : vector<1x256xf32>
    %1734 = math.exp %1733 : vector<1x256xf32>
    %cst_706 = arith.constant 1.000000e+00 : f32
    %1735 = vector.broadcast %cst_706 : f32 to vector<1x256xf32>
    %1736 = arith.addf %1735, %1734 : vector<1x256xf32>
    %1737 = tpu.reciprocal %1736 : vector<1x256xf32> -> vector<1x256xf32>
    %1738 = vector.broadcast %1737 : vector<1x256xf32> to vector<8x256xf32>
    %1739 = arith.mulf %1265, %1738 : vector<8x256xf32>
    %c16_707 = arith.constant 16 : index
    %c0_708 = arith.constant 0 : index
    %1740 = vector.load %arg12[%c16_707, %c0_708] : memref<32x256xf32, #tpu.memory_space<vmem>>, vector<8x256xf32>
    tpu.vector_store %arg12[%c16_707, %c0_708], %1739 {strides = array<i32>} : memref<32x256xf32, #tpu.memory_space<vmem>>, vector<8x256xf32>,
    %c2_i32_709 = arith.constant 2 : i32
    %1741 = tpu.dynamic_rotate %1739 by %c2_i32_709 dim 1 : vector<8x256xf32>, i32 -> vector<8x256xf32>
    %cst_710 = arith.constant 0xFF800000 : f32
    %1742 = vector.shape_cast %73 : vector<1x256xi1> to vector<1x256xi1>
    %1743 = vector.broadcast %1742 : vector<1x256xi1> to vector<8x256xi1>
    %1744 = vector.broadcast %cst_710 : f32 to vector<8x256xf32>
    %1745 = arith.select %1743, %1741, %1744 : vector<8x256xi1>, vector<8x256xf32>
    %1746 = arith.maximumf %1739, %1745 : vector<8x256xf32>
    %c1_i32_711 = arith.constant 1 : i32
    %1747 = tpu.dynamic_rotate %1739 by %c1_i32_711 dim 1 : vector<8x256xf32>, i32 -> vector<8x256xf32>
    %cst_712 = arith.constant 0xFF800000 : f32
    %1748 = vector.shape_cast %82 : vector<1x256xi1> to vector<1x256xi1>
    %1749 = vector.broadcast %1748 : vector<1x256xi1> to vector<8x256xi1>
    %1750 = vector.broadcast %cst_712 : f32 to vector<8x256xf32>
    %1751 = arith.select %1749, %1747, %1750 : vector<8x256xi1>, vector<8x256xf32>
    %1752 = arith.maximumf %1746, %1751 : vector<8x256xf32>
    %c255_i32_713 = arith.constant 255 : i32
    %1753 = tpu.dynamic_rotate %1739 by %c255_i32_713 dim 1 : vector<8x256xf32>, i32 -> vector<8x256xf32>
    %cst_714 = arith.constant 0xFF800000 : f32
    %1754 = vector.shape_cast %91 : vector<1x256xi1> to vector<1x256xi1>
    %1755 = vector.broadcast %1754 : vector<1x256xi1> to vector<8x256xi1>
    %1756 = vector.broadcast %cst_714 : f32 to vector<8x256xf32>
    %1757 = arith.select %1755, %1753, %1756 : vector<8x256xi1>, vector<8x256xf32>
    %1758 = arith.maximumf %1752, %1757 : vector<8x256xf32>
    %c254_i32_715 = arith.constant 254 : i32
    %1759 = tpu.dynamic_rotate %1739 by %c254_i32_715 dim 1 : vector<8x256xf32>, i32 -> vector<8x256xf32>
    %cst_716 = arith.constant 0xFF800000 : f32
    %1760 = vector.shape_cast %100 : vector<1x256xi1> to vector<1x256xi1>
    %1761 = vector.broadcast %1760 : vector<1x256xi1> to vector<8x256xi1>
    %1762 = vector.broadcast %cst_716 : f32 to vector<8x256xf32>
    %1763 = arith.select %1761, %1759, %1762 : vector<8x256xi1>, vector<8x256xf32>
    %1764 = arith.maximumf %1758, %1763 : vector<8x256xf32>
    %c32_i32_717 = arith.constant 32 : i32
    %1765 = tpu.dynamic_rotate %1764 by %c32_i32_717 dim 1 : vector<8x256xf32>, i32 -> vector<8x256xf32>
    %cst_718 = arith.constant 0xFF800000 : f32
    %1766 = vector.shape_cast %19 : vector<1x256xi1> to vector<1x256xi1>
    %1767 = vector.broadcast %1766 : vector<1x256xi1> to vector<8x256xi1>
    %1768 = vector.broadcast %cst_718 : f32 to vector<8x256xf32>
    %1769 = arith.select %1767, %1765, %1768 : vector<8x256xi1>, vector<8x256xf32>
    %1770 = arith.maximumf %1764, %1769 : vector<8x256xf32>
    %c16_i32_719 = arith.constant 16 : i32
    %1771 = tpu.dynamic_rotate %1764 by %c16_i32_719 dim 1 : vector<8x256xf32>, i32 -> vector<8x256xf32>
    %cst_720 = arith.constant 0xFF800000 : f32
    %1772 = vector.shape_cast %28 : vector<1x256xi1> to vector<1x256xi1>
    %1773 = vector.broadcast %1772 : vector<1x256xi1> to vector<8x256xi1>
    %1774 = vector.broadcast %cst_720 : f32 to vector<8x256xf32>
    %1775 = arith.select %1773, %1771, %1774 : vector<8x256xi1>, vector<8x256xf32>
    %1776 = arith.maximumf %1770, %1775 : vector<8x256xf32>
    %c240_i32_721 = arith.constant 240 : i32
    %1777 = tpu.dynamic_rotate %1764 by %c240_i32_721 dim 1 : vector<8x256xf32>, i32 -> vector<8x256xf32>
    %cst_722 = arith.constant 0xFF800000 : f32
    %1778 = vector.shape_cast %37 : vector<1x256xi1> to vector<1x256xi1>
    %1779 = vector.broadcast %1778 : vector<1x256xi1> to vector<8x256xi1>
    %1780 = vector.broadcast %cst_722 : f32 to vector<8x256xf32>
    %1781 = arith.select %1779, %1777, %1780 : vector<8x256xi1>, vector<8x256xf32>
    %1782 = arith.maximumf %1776, %1781 : vector<8x256xf32>
    %c224_i32_723 = arith.constant 224 : i32
    %1783 = tpu.dynamic_rotate %1764 by %c224_i32_723 dim 1 : vector<8x256xf32>, i32 -> vector<8x256xf32>
    %cst_724 = arith.constant 0xFF800000 : f32
    %1784 = vector.shape_cast %46 : vector<1x256xi1> to vector<1x256xi1>
    %1785 = vector.broadcast %1784 : vector<1x256xi1> to vector<8x256xi1>
    %1786 = vector.broadcast %cst_724 : f32 to vector<8x256xf32>
    %1787 = arith.select %1785, %1783, %1786 : vector<8x256xi1>, vector<8x256xf32>
    %1788 = arith.maximumf %1782, %1787 : vector<8x256xf32>
    %c3_725 = arith.constant 3 : index
    %c0_726 = arith.constant 0 : index
    %c0_727 = arith.constant 0 : index
    %1789 = vector.load %arg6[%c3_725, %c0_726, %c0_727] : memref<4x8x1xf32, #tpu.memory_space<vmem>>, vector<1x8x1xf32>
    %1790 = vector.shape_cast %1789 : vector<1x8x1xf32> to vector<8x1xf32>
    %c3_728 = arith.constant 3 : index
    %c0_729 = arith.constant 0 : index
    %c0_730 = arith.constant 0 : index
    %1791 = vector.load %arg7[%c3_728, %c0_729, %c0_730] : memref<4x8x1xf32, #tpu.memory_space<vmem>>, vector<1x8x1xf32>
    %1792 = vector.shape_cast %1791 : vector<1x8x1xf32> to vector<8x1xf32>
    %cst_731 = arith.constant dense<0.000000e+00> : vector<8xf32>
    %1793 = vector.multi_reduction <add>, %1788, %cst_731 [1] : vector<8x256xf32> to vector<8xf32>
    %1794 = vector.shape_cast %1793 : vector<8xf32> to vector<8x1xf32>
    %cst_732 = arith.constant 3.906250e-03 : f32
    %1795 = vector.broadcast %cst_732 : f32 to vector<8x1xf32>
    %1796 = arith.mulf %1794, %1795 : vector<8x1xf32>
    %cst_733 = arith.constant dense<0xFF800000> : vector<8xf32>
    %1797 = vector.multi_reduction <maximumf>, %1788, %cst_733 [1] : vector<8x256xf32> to vector<8xf32>
    %1798 = vector.shape_cast %1797 : vector<8xf32> to vector<8x1xf32>
    %1799 = arith.mulf %1796, %1790 : vector<8x1xf32>
    %cst_734 = arith.constant dense<0.000000e+00> : vector<1xf32>
    %1800 = vector.multi_reduction <add>, %1799, %cst_734 [0] : vector<8x1xf32> to vector<1xf32>
    %1801 = vector.shape_cast %1800 : vector<1xf32> to vector<1x1xf32>
    %cst_735 = arith.constant 0.000000e+00 : f32
    %1802 = vector.broadcast %cst_735 : f32 to vector<1x1xf32>
    %1803 = arith.maximumf %1801, %1802 : vector<1x1xf32>
    %1804 = arith.mulf %1798, %1790 : vector<8x1xf32>
    %cst_736 = arith.constant dense<0.000000e+00> : vector<1xf32>
    %1805 = vector.multi_reduction <add>, %1804, %cst_736 [0] : vector<8x1xf32> to vector<1xf32>
    %1806 = vector.shape_cast %1805 : vector<1xf32> to vector<1x1xf32>
    %cst_737 = arith.constant 0.000000e+00 : f32
    %1807 = vector.broadcast %cst_737 : f32 to vector<1x1xf32>
    %1808 = arith.maximumf %1806, %1807 : vector<1x1xf32>
    %1809 = arith.addf %1803, %1808 : vector<1x1xf32>
    %1810 = vector.broadcast %1809 : vector<1x1xf32> to vector<8x1xf32>
    %1811 = arith.mulf %1792, %1810 : vector<8x1xf32>
    %cst_738 = arith.constant 0.000000e+00 : f32
    %1812 = vector.broadcast %cst_738 : f32 to vector<8x1xf32>
    %1813 = arith.subf %1812, %1811 : vector<8x1xf32>
    %1814 = math.exp %1813 : vector<8x1xf32>
    %cst_739 = arith.constant 1.000000e+00 : f32
    %1815 = vector.broadcast %cst_739 : f32 to vector<8x1xf32>
    %1816 = arith.addf %1815, %1814 : vector<8x1xf32>
    %1817 = tpu.reciprocal %1816 : vector<8x1xf32> -> vector<8x1xf32>
    %1818 = vector.broadcast %1817 : vector<8x1xf32> to vector<8x256xf32>
    %1819 = arith.mulf %1788, %1818 : vector<8x256xf32>
    %cst_740 = arith.constant dense<0.000000e+00> : vector<256xf32>
    %1820 = vector.multi_reduction <add>, %1819, %cst_740 [0] : vector<8x256xf32> to vector<256xf32>
    %1821 = vector.shape_cast %1820 : vector<256xf32> to vector<1x256xf32>
    %cst_741 = arith.constant 1.250000e-01 : f32
    %1822 = vector.broadcast %cst_741 : f32 to vector<1x256xf32>
    %1823 = arith.mulf %1821, %1822 : vector<1x256xf32>
    %cst_742 = arith.constant dense<0xFF800000> : vector<256xf32>
    %1824 = vector.multi_reduction <maximumf>, %1819, %cst_742 [0] : vector<8x256xf32> to vector<256xf32>
    %1825 = vector.shape_cast %1824 : vector<256xf32> to vector<1x256xf32>
    %1826 = vector.shape_cast %112 : vector<2x1xi1> to vector<2x1xi1>
    %1827 = vector.broadcast %1826 : vector<2x1xi1> to vector<2x256xi1>
    %1828 = vector.shape_cast %1823 : vector<1x256xf32> to vector<1x256xf32>
    %1829 = vector.broadcast %1828 : vector<1x256xf32> to vector<2x256xf32>
    %1830 = vector.shape_cast %1825 : vector<1x256xf32> to vector<1x256xf32>
    %1831 = vector.broadcast %1830 : vector<1x256xf32> to vector<2x256xf32>
    %1832 = arith.select %1827, %1829, %1831 : vector<2x256xi1>, vector<2x256xf32>
    %c3_i32_743 = arith.constant 3 : i32
    %1833 = tpu.dynamic_rotate %1832 by %c3_i32_743 dim 1 : vector<2x256xf32>, i32 -> vector<2x256xf32>
    %cst_744 = arith.constant 0.000000e+00 : f32
    %1834 = vector.shape_cast %64 : vector<1x256xi1> to vector<1x256xi1>
    %1835 = vector.broadcast %1834 : vector<1x256xi1> to vector<2x256xi1>
    %1836 = vector.broadcast %cst_744 : f32 to vector<2x256xf32>
    %1837 = arith.select %1835, %1833, %1836 : vector<2x256xi1>, vector<2x256xf32>
    %c2_i32_745 = arith.constant 2 : i32
    %1838 = tpu.dynamic_rotate %1832 by %c2_i32_745 dim 1 : vector<2x256xf32>, i32 -> vector<2x256xf32>
    %cst_746 = arith.constant 0.000000e+00 : f32
    %1839 = vector.shape_cast %73 : vector<1x256xi1> to vector<1x256xi1>
    %1840 = vector.broadcast %1839 : vector<1x256xi1> to vector<2x256xi1>
    %1841 = vector.broadcast %cst_746 : f32 to vector<2x256xf32>
    %1842 = arith.select %1840, %1838, %1841 : vector<2x256xi1>, vector<2x256xf32>
    %c1_i32_747 = arith.constant 1 : i32
    %1843 = tpu.dynamic_rotate %1832 by %c1_i32_747 dim 1 : vector<2x256xf32>, i32 -> vector<2x256xf32>
    %cst_748 = arith.constant 0.000000e+00 : f32
    %1844 = vector.shape_cast %82 : vector<1x256xi1> to vector<1x256xi1>
    %1845 = vector.broadcast %1844 : vector<1x256xi1> to vector<2x256xi1>
    %1846 = vector.broadcast %cst_748 : f32 to vector<2x256xf32>
    %1847 = arith.select %1845, %1843, %1846 : vector<2x256xi1>, vector<2x256xf32>
    %c255_i32_749 = arith.constant 255 : i32
    %1848 = tpu.dynamic_rotate %1832 by %c255_i32_749 dim 1 : vector<2x256xf32>, i32 -> vector<2x256xf32>
    %cst_750 = arith.constant 0.000000e+00 : f32
    %1849 = vector.shape_cast %91 : vector<1x256xi1> to vector<1x256xi1>
    %1850 = vector.broadcast %1849 : vector<1x256xi1> to vector<2x256xi1>
    %1851 = vector.broadcast %cst_750 : f32 to vector<2x256xf32>
    %1852 = arith.select %1850, %1848, %1851 : vector<2x256xi1>, vector<2x256xf32>
    %c254_i32_751 = arith.constant 254 : i32
    %1853 = tpu.dynamic_rotate %1832 by %c254_i32_751 dim 1 : vector<2x256xf32>, i32 -> vector<2x256xf32>
    %cst_752 = arith.constant 0.000000e+00 : f32
    %1854 = vector.shape_cast %100 : vector<1x256xi1> to vector<1x256xi1>
    %1855 = vector.broadcast %1854 : vector<1x256xi1> to vector<2x256xi1>
    %1856 = vector.broadcast %cst_752 : f32 to vector<2x256xf32>
    %1857 = arith.select %1855, %1853, %1856 : vector<2x256xi1>, vector<2x256xf32>
    %c253_i32_753 = arith.constant 253 : i32
    %1858 = tpu.dynamic_rotate %1832 by %c253_i32_753 dim 1 : vector<2x256xf32>, i32 -> vector<2x256xf32>
    %cst_754 = arith.constant 0.000000e+00 : f32
    %1859 = vector.shape_cast %109 : vector<1x256xi1> to vector<1x256xi1>
    %1860 = vector.broadcast %1859 : vector<1x256xi1> to vector<2x256xi1>
    %1861 = vector.broadcast %cst_754 : f32 to vector<2x256xf32>
    %1862 = arith.select %1860, %1858, %1861 : vector<2x256xi1>, vector<2x256xf32>
    %c3_755 = arith.constant 3 : index
    %c0_756 = arith.constant 0 : index
    %1863 = memref.load %arg8[%c3_755, %c0_756] : memref<4x98xf32, #tpu.memory_space<smem>>
    %c3_757 = arith.constant 3 : index
    %c49_758 = arith.constant 49 : index
    %1864 = memref.load %arg8[%c3_757, %c49_758] : memref<4x98xf32, #tpu.memory_space<smem>>
    %1865 = vector.broadcast %1863 : f32 to vector<2x1xf32>
    %1866 = vector.broadcast %1864 : f32 to vector<2x1xf32>
    %1867 = arith.select %112, %1865, %1866 : vector<2x1xi1>, vector<2x1xf32>
    %1868 = vector.broadcast %1867 : vector<2x1xf32> to vector<2x256xf32>
    %1869 = arith.mulf %1868, %1837 : vector<2x256xf32>
    %c3_759 = arith.constant 3 : index
    %c1_760 = arith.constant 1 : index
    %1870 = memref.load %arg8[%c3_759, %c1_760] : memref<4x98xf32, #tpu.memory_space<smem>>
    %c3_761 = arith.constant 3 : index
    %c50_762 = arith.constant 50 : index
    %1871 = memref.load %arg8[%c3_761, %c50_762] : memref<4x98xf32, #tpu.memory_space<smem>>
    %1872 = vector.broadcast %1870 : f32 to vector<2x1xf32>
    %1873 = vector.broadcast %1871 : f32 to vector<2x1xf32>
    %1874 = arith.select %112, %1872, %1873 : vector<2x1xi1>, vector<2x1xf32>
    %1875 = vector.broadcast %1874 : vector<2x1xf32> to vector<2x256xf32>
    %1876 = arith.mulf %1875, %1842 : vector<2x256xf32>
    %1877 = arith.addf %1869, %1876 : vector<2x256xf32>
    %c3_763 = arith.constant 3 : index
    %c2_764 = arith.constant 2 : index
    %1878 = memref.load %arg8[%c3_763, %c2_764] : memref<4x98xf32, #tpu.memory_space<smem>>
    %c3_765 = arith.constant 3 : index
    %c51_766 = arith.constant 51 : index
    %1879 = memref.load %arg8[%c3_765, %c51_766] : memref<4x98xf32, #tpu.memory_space<smem>>
    %1880 = vector.broadcast %1878 : f32 to vector<2x1xf32>
    %1881 = vector.broadcast %1879 : f32 to vector<2x1xf32>
    %1882 = arith.select %112, %1880, %1881 : vector<2x1xi1>, vector<2x1xf32>
    %1883 = vector.broadcast %1882 : vector<2x1xf32> to vector<2x256xf32>
    %1884 = arith.mulf %1883, %1847 : vector<2x256xf32>
    %1885 = arith.addf %1877, %1884 : vector<2x256xf32>
    %c3_767 = arith.constant 3 : index
    %c3_768 = arith.constant 3 : index
    %1886 = memref.load %arg8[%c3_767, %c3_768] : memref<4x98xf32, #tpu.memory_space<smem>>
    %c3_769 = arith.constant 3 : index
    %c52_770 = arith.constant 52 : index
    %1887 = memref.load %arg8[%c3_769, %c52_770] : memref<4x98xf32, #tpu.memory_space<smem>>
    %1888 = vector.broadcast %1886 : f32 to vector<2x1xf32>
    %1889 = vector.broadcast %1887 : f32 to vector<2x1xf32>
    %1890 = arith.select %112, %1888, %1889 : vector<2x1xi1>, vector<2x1xf32>
    %1891 = vector.broadcast %1890 : vector<2x1xf32> to vector<2x256xf32>
    %1892 = arith.mulf %1891, %1832 : vector<2x256xf32>
    %1893 = arith.addf %1885, %1892 : vector<2x256xf32>
    %c3_771 = arith.constant 3 : index
    %c4_772 = arith.constant 4 : index
    %1894 = memref.load %arg8[%c3_771, %c4_772] : memref<4x98xf32, #tpu.memory_space<smem>>
    %c3_773 = arith.constant 3 : index
    %c53_774 = arith.constant 53 : index
    %1895 = memref.load %arg8[%c3_773, %c53_774] : memref<4x98xf32, #tpu.memory_space<smem>>
    %1896 = vector.broadcast %1894 : f32 to vector<2x1xf32>
    %1897 = vector.broadcast %1895 : f32 to vector<2x1xf32>
    %1898 = arith.select %112, %1896, %1897 : vector<2x1xi1>, vector<2x1xf32>
    %1899 = vector.broadcast %1898 : vector<2x1xf32> to vector<2x256xf32>
    %1900 = arith.mulf %1899, %1852 : vector<2x256xf32>
    %1901 = arith.addf %1893, %1900 : vector<2x256xf32>
    %c3_775 = arith.constant 3 : index
    %c5_776 = arith.constant 5 : index
    %1902 = memref.load %arg8[%c3_775, %c5_776] : memref<4x98xf32, #tpu.memory_space<smem>>
    %c3_777 = arith.constant 3 : index
    %c54_778 = arith.constant 54 : index
    %1903 = memref.load %arg8[%c3_777, %c54_778] : memref<4x98xf32, #tpu.memory_space<smem>>
    %1904 = vector.broadcast %1902 : f32 to vector<2x1xf32>
    %1905 = vector.broadcast %1903 : f32 to vector<2x1xf32>
    %1906 = arith.select %112, %1904, %1905 : vector<2x1xi1>, vector<2x1xf32>
    %1907 = vector.broadcast %1906 : vector<2x1xf32> to vector<2x256xf32>
    %1908 = arith.mulf %1907, %1857 : vector<2x256xf32>
    %1909 = arith.addf %1901, %1908 : vector<2x256xf32>
    %c3_779 = arith.constant 3 : index
    %c6_780 = arith.constant 6 : index
    %1910 = memref.load %arg8[%c3_779, %c6_780] : memref<4x98xf32, #tpu.memory_space<smem>>
    %c3_781 = arith.constant 3 : index
    %c55_782 = arith.constant 55 : index
    %1911 = memref.load %arg8[%c3_781, %c55_782] : memref<4x98xf32, #tpu.memory_space<smem>>
    %1912 = vector.broadcast %1910 : f32 to vector<2x1xf32>
    %1913 = vector.broadcast %1911 : f32 to vector<2x1xf32>
    %1914 = arith.select %112, %1912, %1913 : vector<2x1xi1>, vector<2x1xf32>
    %1915 = vector.broadcast %1914 : vector<2x1xf32> to vector<2x256xf32>
    %1916 = arith.mulf %1915, %1862 : vector<2x256xf32>
    %1917 = arith.addf %1909, %1916 : vector<2x256xf32>
    %c48_i32_783 = arith.constant 48 : i32
    %1918 = tpu.dynamic_rotate %1917 by %c48_i32_783 dim 1 : vector<2x256xf32>, i32 -> vector<2x256xf32>
    %cst_784 = arith.constant 0.000000e+00 : f32
    %1919 = vector.shape_cast %10 : vector<1x256xi1> to vector<1x256xi1>
    %1920 = vector.broadcast %1919 : vector<1x256xi1> to vector<2x256xi1>
    %1921 = vector.broadcast %cst_784 : f32 to vector<2x256xf32>
    %1922 = arith.select %1920, %1918, %1921 : vector<2x256xi1>, vector<2x256xf32>
    %c3_785 = arith.constant 3 : index
    %c7_786 = arith.constant 7 : index
    %1923 = memref.load %arg8[%c3_785, %c7_786] : memref<4x98xf32, #tpu.memory_space<smem>>
    %c3_787 = arith.constant 3 : index
    %c56_788 = arith.constant 56 : index
    %1924 = memref.load %arg8[%c3_787, %c56_788] : memref<4x98xf32, #tpu.memory_space<smem>>
    %1925 = vector.broadcast %1923 : f32 to vector<2x1xf32>
    %1926 = vector.broadcast %1924 : f32 to vector<2x1xf32>
    %1927 = arith.select %112, %1925, %1926 : vector<2x1xi1>, vector<2x1xf32>
    %1928 = vector.broadcast %1927 : vector<2x1xf32> to vector<2x256xf32>
    %1929 = arith.mulf %1928, %1837 : vector<2x256xf32>
    %c3_789 = arith.constant 3 : index
    %c8_790 = arith.constant 8 : index
    %1930 = memref.load %arg8[%c3_789, %c8_790] : memref<4x98xf32, #tpu.memory_space<smem>>
    %c3_791 = arith.constant 3 : index
    %c57_792 = arith.constant 57 : index
    %1931 = memref.load %arg8[%c3_791, %c57_792] : memref<4x98xf32, #tpu.memory_space<smem>>
    %1932 = vector.broadcast %1930 : f32 to vector<2x1xf32>
    %1933 = vector.broadcast %1931 : f32 to vector<2x1xf32>
    %1934 = arith.select %112, %1932, %1933 : vector<2x1xi1>, vector<2x1xf32>
    %1935 = vector.broadcast %1934 : vector<2x1xf32> to vector<2x256xf32>
    %1936 = arith.mulf %1935, %1842 : vector<2x256xf32>
    %1937 = arith.addf %1929, %1936 : vector<2x256xf32>
    %c3_793 = arith.constant 3 : index
    %c9_794 = arith.constant 9 : index
    %1938 = memref.load %arg8[%c3_793, %c9_794] : memref<4x98xf32, #tpu.memory_space<smem>>
    %c3_795 = arith.constant 3 : index
    %c58_796 = arith.constant 58 : index
    %1939 = memref.load %arg8[%c3_795, %c58_796] : memref<4x98xf32, #tpu.memory_space<smem>>
    %1940 = vector.broadcast %1938 : f32 to vector<2x1xf32>
    %1941 = vector.broadcast %1939 : f32 to vector<2x1xf32>
    %1942 = arith.select %112, %1940, %1941 : vector<2x1xi1>, vector<2x1xf32>
    %1943 = vector.broadcast %1942 : vector<2x1xf32> to vector<2x256xf32>
    %1944 = arith.mulf %1943, %1847 : vector<2x256xf32>
    %1945 = arith.addf %1937, %1944 : vector<2x256xf32>
    %c3_797 = arith.constant 3 : index
    %c10_798 = arith.constant 10 : index
    %1946 = memref.load %arg8[%c3_797, %c10_798] : memref<4x98xf32, #tpu.memory_space<smem>>
    %c3_799 = arith.constant 3 : index
    %c59_800 = arith.constant 59 : index
    %1947 = memref.load %arg8[%c3_799, %c59_800] : memref<4x98xf32, #tpu.memory_space<smem>>
    %1948 = vector.broadcast %1946 : f32 to vector<2x1xf32>
    %1949 = vector.broadcast %1947 : f32 to vector<2x1xf32>
    %1950 = arith.select %112, %1948, %1949 : vector<2x1xi1>, vector<2x1xf32>
    %1951 = vector.broadcast %1950 : vector<2x1xf32> to vector<2x256xf32>
    %1952 = arith.mulf %1951, %1832 : vector<2x256xf32>
    %1953 = arith.addf %1945, %1952 : vector<2x256xf32>
    %c3_801 = arith.constant 3 : index
    %c11_802 = arith.constant 11 : index
    %1954 = memref.load %arg8[%c3_801, %c11_802] : memref<4x98xf32, #tpu.memory_space<smem>>
    %c3_803 = arith.constant 3 : index
    %c60_804 = arith.constant 60 : index
    %1955 = memref.load %arg8[%c3_803, %c60_804] : memref<4x98xf32, #tpu.memory_space<smem>>
    %1956 = vector.broadcast %1954 : f32 to vector<2x1xf32>
    %1957 = vector.broadcast %1955 : f32 to vector<2x1xf32>
    %1958 = arith.select %112, %1956, %1957 : vector<2x1xi1>, vector<2x1xf32>
    %1959 = vector.broadcast %1958 : vector<2x1xf32> to vector<2x256xf32>
    %1960 = arith.mulf %1959, %1852 : vector<2x256xf32>
    %1961 = arith.addf %1953, %1960 : vector<2x256xf32>
    %c3_805 = arith.constant 3 : index
    %c12_806 = arith.constant 12 : index
    %1962 = memref.load %arg8[%c3_805, %c12_806] : memref<4x98xf32, #tpu.memory_space<smem>>
    %c3_807 = arith.constant 3 : index
    %c61_808 = arith.constant 61 : index
    %1963 = memref.load %arg8[%c3_807, %c61_808] : memref<4x98xf32, #tpu.memory_space<smem>>
    %1964 = vector.broadcast %1962 : f32 to vector<2x1xf32>
    %1965 = vector.broadcast %1963 : f32 to vector<2x1xf32>
    %1966 = arith.select %112, %1964, %1965 : vector<2x1xi1>, vector<2x1xf32>
    %1967 = vector.broadcast %1966 : vector<2x1xf32> to vector<2x256xf32>
    %1968 = arith.mulf %1967, %1857 : vector<2x256xf32>
    %1969 = arith.addf %1961, %1968 : vector<2x256xf32>
    %c3_809 = arith.constant 3 : index
    %c13_810 = arith.constant 13 : index
    %1970 = memref.load %arg8[%c3_809, %c13_810] : memref<4x98xf32, #tpu.memory_space<smem>>
    %c3_811 = arith.constant 3 : index
    %c62_812 = arith.constant 62 : index
    %1971 = memref.load %arg8[%c3_811, %c62_812] : memref<4x98xf32, #tpu.memory_space<smem>>
    %1972 = vector.broadcast %1970 : f32 to vector<2x1xf32>
    %1973 = vector.broadcast %1971 : f32 to vector<2x1xf32>
    %1974 = arith.select %112, %1972, %1973 : vector<2x1xi1>, vector<2x1xf32>
    %1975 = vector.broadcast %1974 : vector<2x1xf32> to vector<2x256xf32>
    %1976 = arith.mulf %1975, %1862 : vector<2x256xf32>
    %1977 = arith.addf %1969, %1976 : vector<2x256xf32>
    %c32_i32_813 = arith.constant 32 : i32
    %1978 = tpu.dynamic_rotate %1977 by %c32_i32_813 dim 1 : vector<2x256xf32>, i32 -> vector<2x256xf32>
    %cst_814 = arith.constant 0.000000e+00 : f32
    %1979 = vector.shape_cast %19 : vector<1x256xi1> to vector<1x256xi1>
    %1980 = vector.broadcast %1979 : vector<1x256xi1> to vector<2x256xi1>
    %1981 = vector.broadcast %cst_814 : f32 to vector<2x256xf32>
    %1982 = arith.select %1980, %1978, %1981 : vector<2x256xi1>, vector<2x256xf32>
    %1983 = arith.addf %1922, %1982 : vector<2x256xf32>
    %c3_815 = arith.constant 3 : index
    %c14_816 = arith.constant 14 : index
    %1984 = memref.load %arg8[%c3_815, %c14_816] : memref<4x98xf32, #tpu.memory_space<smem>>
    %c3_817 = arith.constant 3 : index
    %c63_818 = arith.constant 63 : index
    %1985 = memref.load %arg8[%c3_817, %c63_818] : memref<4x98xf32, #tpu.memory_space<smem>>
    %1986 = vector.broadcast %1984 : f32 to vector<2x1xf32>
    %1987 = vector.broadcast %1985 : f32 to vector<2x1xf32>
    %1988 = arith.select %112, %1986, %1987 : vector<2x1xi1>, vector<2x1xf32>
    %1989 = vector.broadcast %1988 : vector<2x1xf32> to vector<2x256xf32>
    %1990 = arith.mulf %1989, %1837 : vector<2x256xf32>
    %c3_819 = arith.constant 3 : index
    %c15_820 = arith.constant 15 : index
    %1991 = memref.load %arg8[%c3_819, %c15_820] : memref<4x98xf32, #tpu.memory_space<smem>>
    %c3_821 = arith.constant 3 : index
    %c64_822 = arith.constant 64 : index
    %1992 = memref.load %arg8[%c3_821, %c64_822] : memref<4x98xf32, #tpu.memory_space<smem>>
    %1993 = vector.broadcast %1991 : f32 to vector<2x1xf32>
    %1994 = vector.broadcast %1992 : f32 to vector<2x1xf32>
    %1995 = arith.select %112, %1993, %1994 : vector<2x1xi1>, vector<2x1xf32>
    %1996 = vector.broadcast %1995 : vector<2x1xf32> to vector<2x256xf32>
    %1997 = arith.mulf %1996, %1842 : vector<2x256xf32>
    %1998 = arith.addf %1990, %1997 : vector<2x256xf32>
    %c3_823 = arith.constant 3 : index
    %c16_824 = arith.constant 16 : index
    %1999 = memref.load %arg8[%c3_823, %c16_824] : memref<4x98xf32, #tpu.memory_space<smem>>
    %c3_825 = arith.constant 3 : index
    %c65_826 = arith.constant 65 : index
    %2000 = memref.load %arg8[%c3_825, %c65_826] : memref<4x98xf32, #tpu.memory_space<smem>>
    %2001 = vector.broadcast %1999 : f32 to vector<2x1xf32>
    %2002 = vector.broadcast %2000 : f32 to vector<2x1xf32>
    %2003 = arith.select %112, %2001, %2002 : vector<2x1xi1>, vector<2x1xf32>
    %2004 = vector.broadcast %2003 : vector<2x1xf32> to vector<2x256xf32>
    %2005 = arith.mulf %2004, %1847 : vector<2x256xf32>
    %2006 = arith.addf %1998, %2005 : vector<2x256xf32>
    %c3_827 = arith.constant 3 : index
    %c17_828 = arith.constant 17 : index
    %2007 = memref.load %arg8[%c3_827, %c17_828] : memref<4x98xf32, #tpu.memory_space<smem>>
    %c3_829 = arith.constant 3 : index
    %c66_830 = arith.constant 66 : index
    %2008 = memref.load %arg8[%c3_829, %c66_830] : memref<4x98xf32, #tpu.memory_space<smem>>
    %2009 = vector.broadcast %2007 : f32 to vector<2x1xf32>
    %2010 = vector.broadcast %2008 : f32 to vector<2x1xf32>
    %2011 = arith.select %112, %2009, %2010 : vector<2x1xi1>, vector<2x1xf32>
    %2012 = vector.broadcast %2011 : vector<2x1xf32> to vector<2x256xf32>
    %2013 = arith.mulf %2012, %1832 : vector<2x256xf32>
    %2014 = arith.addf %2006, %2013 : vector<2x256xf32>
    %c3_831 = arith.constant 3 : index
    %c18_832 = arith.constant 18 : index
    %2015 = memref.load %arg8[%c3_831, %c18_832] : memref<4x98xf32, #tpu.memory_space<smem>>
    %c3_833 = arith.constant 3 : index
    %c67_834 = arith.constant 67 : index
    %2016 = memref.load %arg8[%c3_833, %c67_834] : memref<4x98xf32, #tpu.memory_space<smem>>
    %2017 = vector.broadcast %2015 : f32 to vector<2x1xf32>
    %2018 = vector.broadcast %2016 : f32 to vector<2x1xf32>
    %2019 = arith.select %112, %2017, %2018 : vector<2x1xi1>, vector<2x1xf32>
    %2020 = vector.broadcast %2019 : vector<2x1xf32> to vector<2x256xf32>
    %2021 = arith.mulf %2020, %1852 : vector<2x256xf32>
    %2022 = arith.addf %2014, %2021 : vector<2x256xf32>
    %c3_835 = arith.constant 3 : index
    %c19_836 = arith.constant 19 : index
    %2023 = memref.load %arg8[%c3_835, %c19_836] : memref<4x98xf32, #tpu.memory_space<smem>>
    %c3_837 = arith.constant 3 : index
    %c68_838 = arith.constant 68 : index
    %2024 = memref.load %arg8[%c3_837, %c68_838] : memref<4x98xf32, #tpu.memory_space<smem>>
    %2025 = vector.broadcast %2023 : f32 to vector<2x1xf32>
    %2026 = vector.broadcast %2024 : f32 to vector<2x1xf32>
    %2027 = arith.select %112, %2025, %2026 : vector<2x1xi1>, vector<2x1xf32>
    %2028 = vector.broadcast %2027 : vector<2x1xf32> to vector<2x256xf32>
    %2029 = arith.mulf %2028, %1857 : vector<2x256xf32>
    %2030 = arith.addf %2022, %2029 : vector<2x256xf32>
    %c3_839 = arith.constant 3 : index
    %c20_840 = arith.constant 20 : index
    %2031 = memref.load %arg8[%c3_839, %c20_840] : memref<4x98xf32, #tpu.memory_space<smem>>
    %c3_841 = arith.constant 3 : index
    %c69_842 = arith.constant 69 : index
    %2032 = memref.load %arg8[%c3_841, %c69_842] : memref<4x98xf32, #tpu.memory_space<smem>>
    %2033 = vector.broadcast %2031 : f32 to vector<2x1xf32>
    %2034 = vector.broadcast %2032 : f32 to vector<2x1xf32>
    %2035 = arith.select %112, %2033, %2034 : vector<2x1xi1>, vector<2x1xf32>
    %2036 = vector.broadcast %2035 : vector<2x1xf32> to vector<2x256xf32>
    %2037 = arith.mulf %2036, %1862 : vector<2x256xf32>
    %2038 = arith.addf %2030, %2037 : vector<2x256xf32>
    %c16_i32_843 = arith.constant 16 : i32
    %2039 = tpu.dynamic_rotate %2038 by %c16_i32_843 dim 1 : vector<2x256xf32>, i32 -> vector<2x256xf32>
    %cst_844 = arith.constant 0.000000e+00 : f32
    %2040 = vector.shape_cast %28 : vector<1x256xi1> to vector<1x256xi1>
    %2041 = vector.broadcast %2040 : vector<1x256xi1> to vector<2x256xi1>
    %2042 = vector.broadcast %cst_844 : f32 to vector<2x256xf32>
    %2043 = arith.select %2041, %2039, %2042 : vector<2x256xi1>, vector<2x256xf32>
    %2044 = arith.addf %1983, %2043 : vector<2x256xf32>
    %c3_845 = arith.constant 3 : index
    %c21_846 = arith.constant 21 : index
    %2045 = memref.load %arg8[%c3_845, %c21_846] : memref<4x98xf32, #tpu.memory_space<smem>>
    %c3_847 = arith.constant 3 : index
    %c70_848 = arith.constant 70 : index
    %2046 = memref.load %arg8[%c3_847, %c70_848] : memref<4x98xf32, #tpu.memory_space<smem>>
    %2047 = vector.broadcast %2045 : f32 to vector<2x1xf32>
    %2048 = vector.broadcast %2046 : f32 to vector<2x1xf32>
    %2049 = arith.select %112, %2047, %2048 : vector<2x1xi1>, vector<2x1xf32>
    %2050 = vector.broadcast %2049 : vector<2x1xf32> to vector<2x256xf32>
    %2051 = arith.mulf %2050, %1837 : vector<2x256xf32>
    %c3_849 = arith.constant 3 : index
    %c22_850 = arith.constant 22 : index
    %2052 = memref.load %arg8[%c3_849, %c22_850] : memref<4x98xf32, #tpu.memory_space<smem>>
    %c3_851 = arith.constant 3 : index
    %c71_852 = arith.constant 71 : index
    %2053 = memref.load %arg8[%c3_851, %c71_852] : memref<4x98xf32, #tpu.memory_space<smem>>
    %2054 = vector.broadcast %2052 : f32 to vector<2x1xf32>
    %2055 = vector.broadcast %2053 : f32 to vector<2x1xf32>
    %2056 = arith.select %112, %2054, %2055 : vector<2x1xi1>, vector<2x1xf32>
    %2057 = vector.broadcast %2056 : vector<2x1xf32> to vector<2x256xf32>
    %2058 = arith.mulf %2057, %1842 : vector<2x256xf32>
    %2059 = arith.addf %2051, %2058 : vector<2x256xf32>
    %c3_853 = arith.constant 3 : index
    %c23_854 = arith.constant 23 : index
    %2060 = memref.load %arg8[%c3_853, %c23_854] : memref<4x98xf32, #tpu.memory_space<smem>>
    %c3_855 = arith.constant 3 : index
    %c72_856 = arith.constant 72 : index
    %2061 = memref.load %arg8[%c3_855, %c72_856] : memref<4x98xf32, #tpu.memory_space<smem>>
    %2062 = vector.broadcast %2060 : f32 to vector<2x1xf32>
    %2063 = vector.broadcast %2061 : f32 to vector<2x1xf32>
    %2064 = arith.select %112, %2062, %2063 : vector<2x1xi1>, vector<2x1xf32>
    %2065 = vector.broadcast %2064 : vector<2x1xf32> to vector<2x256xf32>
    %2066 = arith.mulf %2065, %1847 : vector<2x256xf32>
    %2067 = arith.addf %2059, %2066 : vector<2x256xf32>
    %c3_857 = arith.constant 3 : index
    %c24_858 = arith.constant 24 : index
    %2068 = memref.load %arg8[%c3_857, %c24_858] : memref<4x98xf32, #tpu.memory_space<smem>>
    %c3_859 = arith.constant 3 : index
    %c73_860 = arith.constant 73 : index
    %2069 = memref.load %arg8[%c3_859, %c73_860] : memref<4x98xf32, #tpu.memory_space<smem>>
    %2070 = vector.broadcast %2068 : f32 to vector<2x1xf32>
    %2071 = vector.broadcast %2069 : f32 to vector<2x1xf32>
    %2072 = arith.select %112, %2070, %2071 : vector<2x1xi1>, vector<2x1xf32>
    %2073 = vector.broadcast %2072 : vector<2x1xf32> to vector<2x256xf32>
    %2074 = arith.mulf %2073, %1832 : vector<2x256xf32>
    %2075 = arith.addf %2067, %2074 : vector<2x256xf32>
    %c3_861 = arith.constant 3 : index
    %c25_862 = arith.constant 25 : index
    %2076 = memref.load %arg8[%c3_861, %c25_862] : memref<4x98xf32, #tpu.memory_space<smem>>
    %c3_863 = arith.constant 3 : index
    %c74_864 = arith.constant 74 : index
    %2077 = memref.load %arg8[%c3_863, %c74_864] : memref<4x98xf32, #tpu.memory_space<smem>>
    %2078 = vector.broadcast %2076 : f32 to vector<2x1xf32>
    %2079 = vector.broadcast %2077 : f32 to vector<2x1xf32>
    %2080 = arith.select %112, %2078, %2079 : vector<2x1xi1>, vector<2x1xf32>
    %2081 = vector.broadcast %2080 : vector<2x1xf32> to vector<2x256xf32>
    %2082 = arith.mulf %2081, %1852 : vector<2x256xf32>
    %2083 = arith.addf %2075, %2082 : vector<2x256xf32>
    %c3_865 = arith.constant 3 : index
    %c26_866 = arith.constant 26 : index
    %2084 = memref.load %arg8[%c3_865, %c26_866] : memref<4x98xf32, #tpu.memory_space<smem>>
    %c3_867 = arith.constant 3 : index
    %c75_868 = arith.constant 75 : index
    %2085 = memref.load %arg8[%c3_867, %c75_868] : memref<4x98xf32, #tpu.memory_space<smem>>
    %2086 = vector.broadcast %2084 : f32 to vector<2x1xf32>
    %2087 = vector.broadcast %2085 : f32 to vector<2x1xf32>
    %2088 = arith.select %112, %2086, %2087 : vector<2x1xi1>, vector<2x1xf32>
    %2089 = vector.broadcast %2088 : vector<2x1xf32> to vector<2x256xf32>
    %2090 = arith.mulf %2089, %1857 : vector<2x256xf32>
    %2091 = arith.addf %2083, %2090 : vector<2x256xf32>
    %c3_869 = arith.constant 3 : index
    %c27_870 = arith.constant 27 : index
    %2092 = memref.load %arg8[%c3_869, %c27_870] : memref<4x98xf32, #tpu.memory_space<smem>>
    %c3_871 = arith.constant 3 : index
    %c76_872 = arith.constant 76 : index
    %2093 = memref.load %arg8[%c3_871, %c76_872] : memref<4x98xf32, #tpu.memory_space<smem>>
    %2094 = vector.broadcast %2092 : f32 to vector<2x1xf32>
    %2095 = vector.broadcast %2093 : f32 to vector<2x1xf32>
    %2096 = arith.select %112, %2094, %2095 : vector<2x1xi1>, vector<2x1xf32>
    %2097 = vector.broadcast %2096 : vector<2x1xf32> to vector<2x256xf32>
    %2098 = arith.mulf %2097, %1862 : vector<2x256xf32>
    %2099 = arith.addf %2091, %2098 : vector<2x256xf32>
    %2100 = arith.addf %2044, %2099 : vector<2x256xf32>
    %c3_873 = arith.constant 3 : index
    %c28_874 = arith.constant 28 : index
    %2101 = memref.load %arg8[%c3_873, %c28_874] : memref<4x98xf32, #tpu.memory_space<smem>>
    %c3_875 = arith.constant 3 : index
    %c77_876 = arith.constant 77 : index
    %2102 = memref.load %arg8[%c3_875, %c77_876] : memref<4x98xf32, #tpu.memory_space<smem>>
    %2103 = vector.broadcast %2101 : f32 to vector<2x1xf32>
    %2104 = vector.broadcast %2102 : f32 to vector<2x1xf32>
    %2105 = arith.select %112, %2103, %2104 : vector<2x1xi1>, vector<2x1xf32>
    %2106 = vector.broadcast %2105 : vector<2x1xf32> to vector<2x256xf32>
    %2107 = arith.mulf %2106, %1837 : vector<2x256xf32>
    %c3_877 = arith.constant 3 : index
    %c29_878 = arith.constant 29 : index
    %2108 = memref.load %arg8[%c3_877, %c29_878] : memref<4x98xf32, #tpu.memory_space<smem>>
    %c3_879 = arith.constant 3 : index
    %c78_880 = arith.constant 78 : index
    %2109 = memref.load %arg8[%c3_879, %c78_880] : memref<4x98xf32, #tpu.memory_space<smem>>
    %2110 = vector.broadcast %2108 : f32 to vector<2x1xf32>
    %2111 = vector.broadcast %2109 : f32 to vector<2x1xf32>
    %2112 = arith.select %112, %2110, %2111 : vector<2x1xi1>, vector<2x1xf32>
    %2113 = vector.broadcast %2112 : vector<2x1xf32> to vector<2x256xf32>
    %2114 = arith.mulf %2113, %1842 : vector<2x256xf32>
    %2115 = arith.addf %2107, %2114 : vector<2x256xf32>
    %c3_881 = arith.constant 3 : index
    %c30_882 = arith.constant 30 : index
    %2116 = memref.load %arg8[%c3_881, %c30_882] : memref<4x98xf32, #tpu.memory_space<smem>>
    %c3_883 = arith.constant 3 : index
    %c79_884 = arith.constant 79 : index
    %2117 = memref.load %arg8[%c3_883, %c79_884] : memref<4x98xf32, #tpu.memory_space<smem>>
    %2118 = vector.broadcast %2116 : f32 to vector<2x1xf32>
    %2119 = vector.broadcast %2117 : f32 to vector<2x1xf32>
    %2120 = arith.select %112, %2118, %2119 : vector<2x1xi1>, vector<2x1xf32>
    %2121 = vector.broadcast %2120 : vector<2x1xf32> to vector<2x256xf32>
    %2122 = arith.mulf %2121, %1847 : vector<2x256xf32>
    %2123 = arith.addf %2115, %2122 : vector<2x256xf32>
    %c3_885 = arith.constant 3 : index
    %c31_886 = arith.constant 31 : index
    %2124 = memref.load %arg8[%c3_885, %c31_886] : memref<4x98xf32, #tpu.memory_space<smem>>
    %c3_887 = arith.constant 3 : index
    %c80_888 = arith.constant 80 : index
    %2125 = memref.load %arg8[%c3_887, %c80_888] : memref<4x98xf32, #tpu.memory_space<smem>>
    %2126 = vector.broadcast %2124 : f32 to vector<2x1xf32>
    %2127 = vector.broadcast %2125 : f32 to vector<2x1xf32>
    %2128 = arith.select %112, %2126, %2127 : vector<2x1xi1>, vector<2x1xf32>
    %2129 = vector.broadcast %2128 : vector<2x1xf32> to vector<2x256xf32>
    %2130 = arith.mulf %2129, %1832 : vector<2x256xf32>
    %2131 = arith.addf %2123, %2130 : vector<2x256xf32>
    %c3_889 = arith.constant 3 : index
    %c32_890 = arith.constant 32 : index
    %2132 = memref.load %arg8[%c3_889, %c32_890] : memref<4x98xf32, #tpu.memory_space<smem>>
    %c3_891 = arith.constant 3 : index
    %c81_892 = arith.constant 81 : index
    %2133 = memref.load %arg8[%c3_891, %c81_892] : memref<4x98xf32, #tpu.memory_space<smem>>
    %2134 = vector.broadcast %2132 : f32 to vector<2x1xf32>
    %2135 = vector.broadcast %2133 : f32 to vector<2x1xf32>
    %2136 = arith.select %112, %2134, %2135 : vector<2x1xi1>, vector<2x1xf32>
    %2137 = vector.broadcast %2136 : vector<2x1xf32> to vector<2x256xf32>
    %2138 = arith.mulf %2137, %1852 : vector<2x256xf32>
    %2139 = arith.addf %2131, %2138 : vector<2x256xf32>
    %c3_893 = arith.constant 3 : index
    %c33_894 = arith.constant 33 : index
    %2140 = memref.load %arg8[%c3_893, %c33_894] : memref<4x98xf32, #tpu.memory_space<smem>>
    %c3_895 = arith.constant 3 : index
    %c82_896 = arith.constant 82 : index
    %2141 = memref.load %arg8[%c3_895, %c82_896] : memref<4x98xf32, #tpu.memory_space<smem>>
    %2142 = vector.broadcast %2140 : f32 to vector<2x1xf32>
    %2143 = vector.broadcast %2141 : f32 to vector<2x1xf32>
    %2144 = arith.select %112, %2142, %2143 : vector<2x1xi1>, vector<2x1xf32>
    %2145 = vector.broadcast %2144 : vector<2x1xf32> to vector<2x256xf32>
    %2146 = arith.mulf %2145, %1857 : vector<2x256xf32>
    %2147 = arith.addf %2139, %2146 : vector<2x256xf32>
    %c3_897 = arith.constant 3 : index
    %c34_898 = arith.constant 34 : index
    %2148 = memref.load %arg8[%c3_897, %c34_898] : memref<4x98xf32, #tpu.memory_space<smem>>
    %c3_899 = arith.constant 3 : index
    %c83_900 = arith.constant 83 : index
    %2149 = memref.load %arg8[%c3_899, %c83_900] : memref<4x98xf32, #tpu.memory_space<smem>>
    %2150 = vector.broadcast %2148 : f32 to vector<2x1xf32>
    %2151 = vector.broadcast %2149 : f32 to vector<2x1xf32>
    %2152 = arith.select %112, %2150, %2151 : vector<2x1xi1>, vector<2x1xf32>
    %2153 = vector.broadcast %2152 : vector<2x1xf32> to vector<2x256xf32>
    %2154 = arith.mulf %2153, %1862 : vector<2x256xf32>
    %2155 = arith.addf %2147, %2154 : vector<2x256xf32>
    %c240_i32_901 = arith.constant 240 : i32
    %2156 = tpu.dynamic_rotate %2155 by %c240_i32_901 dim 1 : vector<2x256xf32>, i32 -> vector<2x256xf32>
    %cst_902 = arith.constant 0.000000e+00 : f32
    %2157 = vector.shape_cast %37 : vector<1x256xi1> to vector<1x256xi1>
    %2158 = vector.broadcast %2157 : vector<1x256xi1> to vector<2x256xi1>
    %2159 = vector.broadcast %cst_902 : f32 to vector<2x256xf32>
    %2160 = arith.select %2158, %2156, %2159 : vector<2x256xi1>, vector<2x256xf32>
    %2161 = arith.addf %2100, %2160 : vector<2x256xf32>
    %c3_903 = arith.constant 3 : index
    %c35_904 = arith.constant 35 : index
    %2162 = memref.load %arg8[%c3_903, %c35_904] : memref<4x98xf32, #tpu.memory_space<smem>>
    %c3_905 = arith.constant 3 : index
    %c84_906 = arith.constant 84 : index
    %2163 = memref.load %arg8[%c3_905, %c84_906] : memref<4x98xf32, #tpu.memory_space<smem>>
    %2164 = vector.broadcast %2162 : f32 to vector<2x1xf32>
    %2165 = vector.broadcast %2163 : f32 to vector<2x1xf32>
    %2166 = arith.select %112, %2164, %2165 : vector<2x1xi1>, vector<2x1xf32>
    %2167 = vector.broadcast %2166 : vector<2x1xf32> to vector<2x256xf32>
    %2168 = arith.mulf %2167, %1837 : vector<2x256xf32>
    %c3_907 = arith.constant 3 : index
    %c36_908 = arith.constant 36 : index
    %2169 = memref.load %arg8[%c3_907, %c36_908] : memref<4x98xf32, #tpu.memory_space<smem>>
    %c3_909 = arith.constant 3 : index
    %c85_910 = arith.constant 85 : index
    %2170 = memref.load %arg8[%c3_909, %c85_910] : memref<4x98xf32, #tpu.memory_space<smem>>
    %2171 = vector.broadcast %2169 : f32 to vector<2x1xf32>
    %2172 = vector.broadcast %2170 : f32 to vector<2x1xf32>
    %2173 = arith.select %112, %2171, %2172 : vector<2x1xi1>, vector<2x1xf32>
    %2174 = vector.broadcast %2173 : vector<2x1xf32> to vector<2x256xf32>
    %2175 = arith.mulf %2174, %1842 : vector<2x256xf32>
    %2176 = arith.addf %2168, %2175 : vector<2x256xf32>
    %c3_911 = arith.constant 3 : index
    %c37_912 = arith.constant 37 : index
    %2177 = memref.load %arg8[%c3_911, %c37_912] : memref<4x98xf32, #tpu.memory_space<smem>>
    %c3_913 = arith.constant 3 : index
    %c86_914 = arith.constant 86 : index
    %2178 = memref.load %arg8[%c3_913, %c86_914] : memref<4x98xf32, #tpu.memory_space<smem>>
    %2179 = vector.broadcast %2177 : f32 to vector<2x1xf32>
    %2180 = vector.broadcast %2178 : f32 to vector<2x1xf32>
    %2181 = arith.select %112, %2179, %2180 : vector<2x1xi1>, vector<2x1xf32>
    %2182 = vector.broadcast %2181 : vector<2x1xf32> to vector<2x256xf32>
    %2183 = arith.mulf %2182, %1847 : vector<2x256xf32>
    %2184 = arith.addf %2176, %2183 : vector<2x256xf32>
    %c3_915 = arith.constant 3 : index
    %c38_916 = arith.constant 38 : index
    %2185 = memref.load %arg8[%c3_915, %c38_916] : memref<4x98xf32, #tpu.memory_space<smem>>
    %c3_917 = arith.constant 3 : index
    %c87_918 = arith.constant 87 : index
    %2186 = memref.load %arg8[%c3_917, %c87_918] : memref<4x98xf32, #tpu.memory_space<smem>>
    %2187 = vector.broadcast %2185 : f32 to vector<2x1xf32>
    %2188 = vector.broadcast %2186 : f32 to vector<2x1xf32>
    %2189 = arith.select %112, %2187, %2188 : vector<2x1xi1>, vector<2x1xf32>
    %2190 = vector.broadcast %2189 : vector<2x1xf32> to vector<2x256xf32>
    %2191 = arith.mulf %2190, %1832 : vector<2x256xf32>
    %2192 = arith.addf %2184, %2191 : vector<2x256xf32>
    %c3_919 = arith.constant 3 : index
    %c39_920 = arith.constant 39 : index
    %2193 = memref.load %arg8[%c3_919, %c39_920] : memref<4x98xf32, #tpu.memory_space<smem>>
    %c3_921 = arith.constant 3 : index
    %c88_922 = arith.constant 88 : index
    %2194 = memref.load %arg8[%c3_921, %c88_922] : memref<4x98xf32, #tpu.memory_space<smem>>
    %2195 = vector.broadcast %2193 : f32 to vector<2x1xf32>
    %2196 = vector.broadcast %2194 : f32 to vector<2x1xf32>
    %2197 = arith.select %112, %2195, %2196 : vector<2x1xi1>, vector<2x1xf32>
    %2198 = vector.broadcast %2197 : vector<2x1xf32> to vector<2x256xf32>
    %2199 = arith.mulf %2198, %1852 : vector<2x256xf32>
    %2200 = arith.addf %2192, %2199 : vector<2x256xf32>
    %c3_923 = arith.constant 3 : index
    %c40_924 = arith.constant 40 : index
    %2201 = memref.load %arg8[%c3_923, %c40_924] : memref<4x98xf32, #tpu.memory_space<smem>>
    %c3_925 = arith.constant 3 : index
    %c89_926 = arith.constant 89 : index
    %2202 = memref.load %arg8[%c3_925, %c89_926] : memref<4x98xf32, #tpu.memory_space<smem>>
    %2203 = vector.broadcast %2201 : f32 to vector<2x1xf32>
    %2204 = vector.broadcast %2202 : f32 to vector<2x1xf32>
    %2205 = arith.select %112, %2203, %2204 : vector<2x1xi1>, vector<2x1xf32>
    %2206 = vector.broadcast %2205 : vector<2x1xf32> to vector<2x256xf32>
    %2207 = arith.mulf %2206, %1857 : vector<2x256xf32>
    %2208 = arith.addf %2200, %2207 : vector<2x256xf32>
    %c3_927 = arith.constant 3 : index
    %c41_928 = arith.constant 41 : index
    %2209 = memref.load %arg8[%c3_927, %c41_928] : memref<4x98xf32, #tpu.memory_space<smem>>
    %c3_929 = arith.constant 3 : index
    %c90_930 = arith.constant 90 : index
    %2210 = memref.load %arg8[%c3_929, %c90_930] : memref<4x98xf32, #tpu.memory_space<smem>>
    %2211 = vector.broadcast %2209 : f32 to vector<2x1xf32>
    %2212 = vector.broadcast %2210 : f32 to vector<2x1xf32>
    %2213 = arith.select %112, %2211, %2212 : vector<2x1xi1>, vector<2x1xf32>
    %2214 = vector.broadcast %2213 : vector<2x1xf32> to vector<2x256xf32>
    %2215 = arith.mulf %2214, %1862 : vector<2x256xf32>
    %2216 = arith.addf %2208, %2215 : vector<2x256xf32>
    %c224_i32_931 = arith.constant 224 : i32
    %2217 = tpu.dynamic_rotate %2216 by %c224_i32_931 dim 1 : vector<2x256xf32>, i32 -> vector<2x256xf32>
    %cst_932 = arith.constant 0.000000e+00 : f32
    %2218 = vector.shape_cast %46 : vector<1x256xi1> to vector<1x256xi1>
    %2219 = vector.broadcast %2218 : vector<1x256xi1> to vector<2x256xi1>
    %2220 = vector.broadcast %cst_932 : f32 to vector<2x256xf32>
    %2221 = arith.select %2219, %2217, %2220 : vector<2x256xi1>, vector<2x256xf32>
    %2222 = arith.addf %2161, %2221 : vector<2x256xf32>
    %c3_933 = arith.constant 3 : index
    %c42_934 = arith.constant 42 : index
    %2223 = memref.load %arg8[%c3_933, %c42_934] : memref<4x98xf32, #tpu.memory_space<smem>>
    %c3_935 = arith.constant 3 : index
    %c91_936 = arith.constant 91 : index
    %2224 = memref.load %arg8[%c3_935, %c91_936] : memref<4x98xf32, #tpu.memory_space<smem>>
    %2225 = vector.broadcast %2223 : f32 to vector<2x1xf32>
    %2226 = vector.broadcast %2224 : f32 to vector<2x1xf32>
    %2227 = arith.select %112, %2225, %2226 : vector<2x1xi1>, vector<2x1xf32>
    %2228 = vector.broadcast %2227 : vector<2x1xf32> to vector<2x256xf32>
    %2229 = arith.mulf %2228, %1837 : vector<2x256xf32>
    %c3_937 = arith.constant 3 : index
    %c43_938 = arith.constant 43 : index
    %2230 = memref.load %arg8[%c3_937, %c43_938] : memref<4x98xf32, #tpu.memory_space<smem>>
    %c3_939 = arith.constant 3 : index
    %c92_940 = arith.constant 92 : index
    %2231 = memref.load %arg8[%c3_939, %c92_940] : memref<4x98xf32, #tpu.memory_space<smem>>
    %2232 = vector.broadcast %2230 : f32 to vector<2x1xf32>
    %2233 = vector.broadcast %2231 : f32 to vector<2x1xf32>
    %2234 = arith.select %112, %2232, %2233 : vector<2x1xi1>, vector<2x1xf32>
    %2235 = vector.broadcast %2234 : vector<2x1xf32> to vector<2x256xf32>
    %2236 = arith.mulf %2235, %1842 : vector<2x256xf32>
    %2237 = arith.addf %2229, %2236 : vector<2x256xf32>
    %c3_941 = arith.constant 3 : index
    %c44_942 = arith.constant 44 : index
    %2238 = memref.load %arg8[%c3_941, %c44_942] : memref<4x98xf32, #tpu.memory_space<smem>>
    %c3_943 = arith.constant 3 : index
    %c93_944 = arith.constant 93 : index
    %2239 = memref.load %arg8[%c3_943, %c93_944] : memref<4x98xf32, #tpu.memory_space<smem>>
    %2240 = vector.broadcast %2238 : f32 to vector<2x1xf32>
    %2241 = vector.broadcast %2239 : f32 to vector<2x1xf32>
    %2242 = arith.select %112, %2240, %2241 : vector<2x1xi1>, vector<2x1xf32>
    %2243 = vector.broadcast %2242 : vector<2x1xf32> to vector<2x256xf32>
    %2244 = arith.mulf %2243, %1847 : vector<2x256xf32>
    %2245 = arith.addf %2237, %2244 : vector<2x256xf32>
    %c3_945 = arith.constant 3 : index
    %c45_946 = arith.constant 45 : index
    %2246 = memref.load %arg8[%c3_945, %c45_946] : memref<4x98xf32, #tpu.memory_space<smem>>
    %c3_947 = arith.constant 3 : index
    %c94_948 = arith.constant 94 : index
    %2247 = memref.load %arg8[%c3_947, %c94_948] : memref<4x98xf32, #tpu.memory_space<smem>>
    %2248 = vector.broadcast %2246 : f32 to vector<2x1xf32>
    %2249 = vector.broadcast %2247 : f32 to vector<2x1xf32>
    %2250 = arith.select %112, %2248, %2249 : vector<2x1xi1>, vector<2x1xf32>
    %2251 = vector.broadcast %2250 : vector<2x1xf32> to vector<2x256xf32>
    %2252 = arith.mulf %2251, %1832 : vector<2x256xf32>
    %2253 = arith.addf %2245, %2252 : vector<2x256xf32>
    %c3_949 = arith.constant 3 : index
    %c46_950 = arith.constant 46 : index
    %2254 = memref.load %arg8[%c3_949, %c46_950] : memref<4x98xf32, #tpu.memory_space<smem>>
    %c3_951 = arith.constant 3 : index
    %c95_952 = arith.constant 95 : index
    %2255 = memref.load %arg8[%c3_951, %c95_952] : memref<4x98xf32, #tpu.memory_space<smem>>
    %2256 = vector.broadcast %2254 : f32 to vector<2x1xf32>
    %2257 = vector.broadcast %2255 : f32 to vector<2x1xf32>
    %2258 = arith.select %112, %2256, %2257 : vector<2x1xi1>, vector<2x1xf32>
    %2259 = vector.broadcast %2258 : vector<2x1xf32> to vector<2x256xf32>
    %2260 = arith.mulf %2259, %1852 : vector<2x256xf32>
    %2261 = arith.addf %2253, %2260 : vector<2x256xf32>
    %c3_953 = arith.constant 3 : index
    %c47_954 = arith.constant 47 : index
    %2262 = memref.load %arg8[%c3_953, %c47_954] : memref<4x98xf32, #tpu.memory_space<smem>>
    %c3_955 = arith.constant 3 : index
    %c96_956 = arith.constant 96 : index
    %2263 = memref.load %arg8[%c3_955, %c96_956] : memref<4x98xf32, #tpu.memory_space<smem>>
    %2264 = vector.broadcast %2262 : f32 to vector<2x1xf32>
    %2265 = vector.broadcast %2263 : f32 to vector<2x1xf32>
    %2266 = arith.select %112, %2264, %2265 : vector<2x1xi1>, vector<2x1xf32>
    %2267 = vector.broadcast %2266 : vector<2x1xf32> to vector<2x256xf32>
    %2268 = arith.mulf %2267, %1857 : vector<2x256xf32>
    %2269 = arith.addf %2261, %2268 : vector<2x256xf32>
    %c3_957 = arith.constant 3 : index
    %c48_958 = arith.constant 48 : index
    %2270 = memref.load %arg8[%c3_957, %c48_958] : memref<4x98xf32, #tpu.memory_space<smem>>
    %c3_959 = arith.constant 3 : index
    %c97_960 = arith.constant 97 : index
    %2271 = memref.load %arg8[%c3_959, %c97_960] : memref<4x98xf32, #tpu.memory_space<smem>>
    %2272 = vector.broadcast %2270 : f32 to vector<2x1xf32>
    %2273 = vector.broadcast %2271 : f32 to vector<2x1xf32>
    %2274 = arith.select %112, %2272, %2273 : vector<2x1xi1>, vector<2x1xf32>
    %2275 = vector.broadcast %2274 : vector<2x1xf32> to vector<2x256xf32>
    %2276 = arith.mulf %2275, %1862 : vector<2x256xf32>
    %2277 = arith.addf %2269, %2276 : vector<2x256xf32>
    %c208_i32_961 = arith.constant 208 : i32
    %2278 = tpu.dynamic_rotate %2277 by %c208_i32_961 dim 1 : vector<2x256xf32>, i32 -> vector<2x256xf32>
    %cst_962 = arith.constant 0.000000e+00 : f32
    %2279 = vector.shape_cast %55 : vector<1x256xi1> to vector<1x256xi1>
    %2280 = vector.broadcast %2279 : vector<1x256xi1> to vector<2x256xi1>
    %2281 = vector.broadcast %cst_962 : f32 to vector<2x256xf32>
    %2282 = arith.select %2280, %2278, %2281 : vector<2x256xi1>, vector<2x256xf32>
    %2283 = arith.addf %2222, %2282 : vector<2x256xf32>
    %cst_963 = arith.constant dense<0.000000e+00> : vector<256xf32>
    %2284 = vector.multi_reduction <add>, %2283, %cst_963 [0] : vector<2x256xf32> to vector<256xf32>
    %2285 = vector.shape_cast %2284 : vector<256xf32> to vector<1x256xf32>
    %cst_964 = arith.constant 0.000000e+00 : f32
    %2286 = vector.broadcast %cst_964 : f32 to vector<1x256xf32>
    %2287 = arith.subf %2286, %2285 : vector<1x256xf32>
    %2288 = math.exp %2287 : vector<1x256xf32>
    %cst_965 = arith.constant 1.000000e+00 : f32
    %2289 = vector.broadcast %cst_965 : f32 to vector<1x256xf32>
    %2290 = arith.addf %2289, %2288 : vector<1x256xf32>
    %2291 = tpu.reciprocal %2290 : vector<1x256xf32> -> vector<1x256xf32>
    %2292 = vector.broadcast %2291 : vector<1x256xf32> to vector<8x256xf32>
    %2293 = arith.mulf %1819, %2292 : vector<8x256xf32>
    %c24_966 = arith.constant 24 : index
    %c0_967 = arith.constant 0 : index
    %2294 = vector.load %arg12[%c24_966, %c0_967] : memref<32x256xf32, #tpu.memory_space<vmem>>, vector<8x256xf32>
    tpu.vector_store %arg12[%c24_966, %c0_967], %2293 {strides = array<i32>} : memref<32x256xf32, #tpu.memory_space<vmem>>, vector<8x256xf32>,
    %c0_968 = arith.constant 0 : index
    %c0_969 = arith.constant 0 : index
    %2295 = vector.load %arg9[%c0_968, %c0_969] : memref<16x32xf32, #tpu.memory_space<vmem>>, vector<16x32xf32>
    %c0_970 = arith.constant 0 : index
    %c0_971 = arith.constant 0 : index
    %2296 = vector.load %arg12[%c0_970, %c0_971] : memref<32x256xf32, #tpu.memory_space<vmem>>, vector<32x256xf32>
    %cst_972 = arith.constant dense<0.000000e+00> : vector<16x256xf32>
    %2297 = tpu.matmul %2295, %2296, %cst_972 {dimension_numbers = #tpu.dot_dimension_numbers<[1], [0], [0], [1], [0, 0, 1, 1], [], []>} : vector<16x32xf32>, vector<32x256xf32>, vector<16x256xf32> -> vector<16x256xf32>
    %c0_973 = arith.constant 0 : index
    %c0_974 = arith.constant 0 : index
    %2298 = vector.load %arg10[%c0_973, %c0_974] : memref<16x1xf32, #tpu.memory_space<vmem>>, vector<16x1xf32>
    %2299 = vector.broadcast %2298 : vector<16x1xf32> to vector<16x256xf32>
    %2300 = arith.addf %2297, %2299 : vector<16x256xf32>
    %cst_975 = arith.constant 0.000000e+00 : f32
    %2301 = vector.broadcast %cst_975 : f32 to vector<16x256xf32>
    %2302 = arith.subf %2301, %2300 : vector<16x256xf32>
    %2303 = math.exp %2302 : vector<16x256xf32>
    %cst_976 = arith.constant 1.000000e+00 : f32
    %2304 = vector.broadcast %cst_976 : f32 to vector<16x256xf32>
    %2305 = arith.addf %2304, %2303 : vector<16x256xf32>
    %2306 = tpu.reciprocal %2305 : vector<16x256xf32> -> vector<16x256xf32>
    %2307 = arith.mulf %2300, %2306 : vector<16x256xf32>
    %c0_977 = arith.constant 0 : index
    %c0_978 = arith.constant 0 : index
    %c0_979 = arith.constant 0 : index
    %2308 = vector.load %arg11[%c0_977, %c0_978, %c0_979] : memref<1x16x256xf32, #tpu.memory_space<vmem>>, vector<1x16x256xf32>
    %2309 = vector.shape_cast %2308 : vector<1x16x256xf32> to vector<16x256xf32>
    %2310 = vector.shape_cast %2307 : vector<16x256xf32> to vector<1x16x256xf32>
    tpu.vector_store %arg11[%c0_977, %c0_978, %c0_979], %2310 {strides = array<i32>} : memref<1x16x256xf32, #tpu.memory_space<vmem>>, vector<1x16x256xf32>,
    return
  }
  func.func @transform_0(%arg0: i32) -> (i32, i32, i32) {
    %c0_i32 = arith.constant 0 : i32
    %c0_i32_0 = arith.constant 0 : i32
    %c0_i32_1 = arith.constant 0 : i32
    return %arg0, %c0_i32, %c0_i32_0 : i32, i32, i32
  }
  func.func @transform_1(%arg0: i32) -> (i32, i32) {
    %c0_i32 = arith.constant 0 : i32
    %c0_i32_0 = arith.constant 0 : i32
    %c0_i32_1 = arith.constant 0 : i32
    return %c0_i32, %c0_i32_0 : i32, i32
  }
  func.func @transform_2(%arg0: i32) -> (i32, i32) {
    %c0_i32 = arith.constant 0 : i32
    %c0_i32_0 = arith.constant 0 : i32
    %c0_i32_1 = arith.constant 0 : i32
    return %c0_i32, %c0_i32_0 : i32, i32
  }
  func.func @transform_3(%arg0: i32) -> (i32, i32) {
    %c0_i32 = arith.constant 0 : i32
    %c0_i32_0 = arith.constant 0 : i32
    %c0_i32_1 = arith.constant 0 : i32
    return %c0_i32, %c0_i32_0 : i32, i32
  }
  func.func @transform_4(%arg0: i32) -> (i32, i32) {
    %c0_i32 = arith.constant 0 : i32
    %c0_i32_0 = arith.constant 0 : i32
    %c0_i32_1 = arith.constant 0 : i32
    return %c0_i32, %c0_i32_0 : i32, i32
  }
  func.func @transform_5(%arg0: i32) -> (i32, i32, i32) {
    %c0_i32 = arith.constant 0 : i32
    %c0_i32_0 = arith.constant 0 : i32
    %c0_i32_1 = arith.constant 0 : i32
    %c0_i32_2 = arith.constant 0 : i32
    return %c0_i32, %c0_i32_0, %c0_i32_1 : i32, i32, i32
  }
  func.func @transform_6(%arg0: i32) -> (i32, i32, i32) {
    %c0_i32 = arith.constant 0 : i32
    %c0_i32_0 = arith.constant 0 : i32
    %c0_i32_1 = arith.constant 0 : i32
    %c0_i32_2 = arith.constant 0 : i32
    return %c0_i32, %c0_i32_0, %c0_i32_1 : i32, i32, i32
  }
  func.func @transform_7(%arg0: i32) -> (i32, i32) {
    %c0_i32 = arith.constant 0 : i32
    %c0_i32_0 = arith.constant 0 : i32
    %c0_i32_1 = arith.constant 0 : i32
    return %c0_i32, %c0_i32_0 : i32, i32
  }
  func.func @transform_8(%arg0: i32) -> (i32, i32) {
    %c0_i32 = arith.constant 0 : i32
    %c0_i32_0 = arith.constant 0 : i32
    %c0_i32_1 = arith.constant 0 : i32
    return %c0_i32, %c0_i32_0 : i32, i32
  }
  func.func @transform_9(%arg0: i32) -> (i32, i32) {
    %c0_i32 = arith.constant 0 : i32
    %c0_i32_0 = arith.constant 0 : i32
    %c0_i32_1 = arith.constant 0 : i32
    return %c0_i32, %c0_i32_0 : i32, i32
  }
  func.func @transform_10(%arg0: i32) -> (i32, i32, i32) {
    %c0_i32 = arith.constant 0 : i32
    %c0_i32_0 = arith.constant 0 : i32
    %c0_i32_1 = arith.constant 0 : i32
    return %arg0, %c0_i32, %c0_i32_0 : i32, i32, i32
  }
}

</mosaic_0001>

<llo_original>
// kernel: tpu_custom_call.1
$region0: #{tpu_custom_call.1}
  #allocation0 [shape = 'u32[]', space=smem, size = 0x4, offset = 0x4, fixed_abs, tag = 'smem constant byte address 0x4 - core index']
  #allocation1 [shape = 'u32[144,128]{1,0:T(1,128)}', space=vmem, size = 0x12000, scoped, tag = 'internal scratch']
  #allocation2 [shape = 'f32[32,256]{1,0:T(8,128)}', space=vmem, size = 0x8000, scoped, tag = 'scratch operand']
  %s0 = inlined_call_operand.vmem [shape: f32[2,16,256], index: 0, kind: input, shape index: {}]
  %s1 = inlined_call_operand.hbm [shape: s32[1,256], index: 1, kind: input, shape index: {}]
  %s2 = inlined_call_operand.vmem [shape: s32[1,256], index: 2, kind: input, shape index: {}]
  %s3 = inlined_call_operand.vmem [shape: f32[8,16], index: 3, kind: input, shape index: {}]
  %s4 = inlined_call_operand.vmem [shape: f32[8,1], index: 4, kind: input, shape index: {}]
  %s5 = inlined_call_operand.vmem [shape: f32[4,8,1], index: 5, kind: input, shape index: {}]
  %s6 = inlined_call_operand.vmem [shape: f32[4,8,1], index: 6, kind: input, shape index: {}]
  %s7 = inlined_call_operand.vmem [shape: f32[4,98], index: 7, kind: input, shape index: {}]
  %s8 = inlined_call_operand.vmem [shape: f32[16,32], index: 8, kind: input, shape index: {}]
  %s9 = inlined_call_operand.vmem [shape: f32[16,1], index: 9, kind: input, shape index: {}]
  %s10 = inlined_call_operand.hbm [shape: f32[2,16,256], index: 10, kind: output, shape index: {}]
  %s11 = sld [smem:[#allocation0]]
  $region81: #{tpu_custom_call.1} parent=0
    _
  %s13 = ssub.s32 1, %s11
  %s14 = scalar_select 0, %s13, %s11
  $region1: #{tpu_custom_call.1} parent=0
    #allocation3 [shape = 'u8[1024]{0}', space=vmem, size = 0x400, scoped, tag = 'input window, operand 1, single buffered']
    #allocation4 [shape = 's32[2]{0}', space=sflag, size = 0x8, scoped, tag = 'scoped memory for tpu_custom_call.1']
    #allocation5 [shape = 's32[2]{0}', space=sflag, size = 0x8, scoped, tag = 'scoped memory for tpu_custom_call.1']
    #allocation6 [shape = 's32[2]{0}', space=sflag, size = 0x8, scoped, tag = 'scoped memory for tpu_custom_call.1']
    #allocation7 [shape = 'u8[2048]{0}', space=smem, size = 0x800, scoped, tag = 'input window, operand 7, single buffered']
    #allocation8 [shape = 'u8[32768]{0}', space=vmem, size = 0x8000, scoped, tag = 'output window, operand 0']
    %15 = vsyncpa [#allocation4], 0
    %16 = vsyncpa [#allocation6], 0
    %17 = vsyncpa [#allocation5], 0
    %s18 = scalar_lea.sflag [#allocation5], 1
    %19 = vsyncpa %s18, 0
    loop: start=0, step=1, limit=4
    $region2: #{tpu_custom_call.1} parent=1 // loop_pre_header
      _
    $region3: #{tpu_custom_call.1} parent=1 // loop_header
      %s21 = sphi 0, %s25
      %p22 = scmp.ge.s32.totalorder %s21, 4
      %s31 = sphi 0, %s33
      %s34 = sphi 0, %s31
      %s35 = sphi 0, %s34
      %s51 = sphi 0, %s35
      %s55 = sphi 0, %s55
      %s57 = sphi 0, %s55
      %s58 = sphi 0, %s57
      %s72 = sphi 0, %s58
      %s76 = sphi 0, %s76
      %s78 = sphi 0, %s76
      %s79 = sphi 0, %s78
      %s93 = sphi 0, %s79
      %s97 = sphi 0, %s97
      %s99 = sphi 0, %s97
      %s100 = sphi 0, %s99
      %s114 = sphi 0, %s100
      %s118 = sphi 0, %s118
      %s120 = sphi 0, %s118
      %s121 = sphi 0, %s120
      %s135 = sphi 0, %s121
      %s139 = sphi 0, %s139
      %s141 = sphi 0, %s139
      %s142 = sphi 0, %s141
      %s156 = sphi 0, %s142
      %s160 = sphi 0, %s160
      %s162 = sphi 0, %s160
      %s163 = sphi 0, %s162
      %s177 = sphi 0, %s163
      %s181 = sphi 0, %s181
      %s183 = sphi 0, %s181
      %s184 = sphi 0, %s183
      %s198 = sphi 0, %s184
      %s202 = sphi 0, %s202
      %s204 = sphi 0, %s202
      %s205 = sphi 0, %s204
      %s219 = sphi 0, %s205
      %s223 = sphi 0, %s223
      %s225 = sphi 0, %s223
      %s226 = sphi 0, %s225
      %s240 = sphi 0, %s226
      %s246 = sphi 0, %s248
      %s249 = sphi 0, %s246
      %s250 = sphi 0, %s249
      %s266 = sphi 0, %s250
    $region4: #{tpu_custom_call.1} parent=1 // loop_header_branch
      %24 = sbr.rel (%p22) target = $region8
    $region5: #{tpu_custom_call.1} parent=1 // loop_body
      %s26 = ssub.s32 %s21, 1
      %s27 = ssub.s32 %s21, 2
      %s28 = sadd.s32 %s21, 1
      %s29 = ssub.s32 %s21, %s28
      %p30 = scmp.eq.s32.totalorder %s29, 0
      %s32 = sadd.s32 %s31, 1
      %s33 = scalar_select %p30, %s31, %s32
      %p36 = pneg %p30
      %p37 = scmp.eq.s32.totalorder %s21, 1
      %p38 = por %p36, %p37
      %p39 = scmp.ne.s32.totalorder %s31, %s34
      %p40 = scmp.eq.s32.totalorder %s21, 0
      %p41 = por %p39, %p40
      %p42 = scmp.ne.s32.totalorder %s31, %s34
      %p43 = scmp.eq.s32.totalorder %s26, 1
      %p44 = por %p42, %p43
      %p45 = scmp.ne.s32.totalorder %s34, %s35
      %p46 = scmp.eq.s32.totalorder %s26, 0
      %p47 = por %p45, %p46
      %p48 = scmp.ne.s32.totalorder %s34, %s35
      %p49 = scmp.eq.s32.totalorder %s27, 1
      %p50 = por %p48, %p49
      %p52 = scmp.ne.s32.totalorder %s35, %s51
      %p53 = scmp.eq.s32.totalorder %s27, 0
      %p54 = por %p52, %p53
      %s56 = sadd.s32 %s55, 1
      %p59 = scmp.eq.s32.totalorder %s21, 1
      %p60 = scmp.ne.s32.totalorder %s55, %s57
      %p61 = scmp.eq.s32.totalorder %s21, 0
      %p62 = por %p60, %p61
      %p63 = scmp.ne.s32.totalorder %s55, %s57
      %p64 = scmp.eq.s32.totalorder %s26, 1
      %p65 = por %p63, %p64
      %p66 = scmp.ne.s32.totalorder %s57, %s58
      %p67 = scmp.eq.s32.totalorder %s26, 0
      %p68 = por %p66, %p67
      %p69 = scmp.ne.s32.totalorder %s57, %s58
      %p70 = scmp.eq.s32.totalorder %s27, 1
      %p71 = por %p69, %p70
      %p73 = scmp.ne.s32.totalorder %s58, %s72
      %p74 = scmp.eq.s32.totalorder %s27, 0
      %p75 = por %p73, %p74
      %s77 = sadd.s32 %s76, 1
      %p80 = scmp.eq.s32.totalorder %s21, 1
      %p81 = scmp.ne.s32.totalorder %s76, %s78
      %p82 = scmp.eq.s32.totalorder %s21, 0
      %p83 = por %p81, %p82
      %p84 = scmp.ne.s32.totalorder %s76, %s78
      %p85 = scmp.eq.s32.totalorder %s26, 1
      %p86 = por %p84, %p85
      %p87 = scmp.ne.s32.totalorder %s78, %s79
      %p88 = scmp.eq.s32.totalorder %s26, 0
      %p89 = por %p87, %p88
      %p90 = scmp.ne.s32.totalorder %s78, %s79
      %p91 = scmp.eq.s32.totalorder %s27, 1
      %p92 = por %p90, %p91
      %p94 = scmp.ne.s32.totalorder %s79, %s93
      %p95 = scmp.eq.s32.totalorder %s27, 0
      %p96 = por %p94, %p95
      %s98 = sadd.s32 %s97, 1
      %p101 = scmp.eq.s32.totalorder %s21, 1
      %p102 = scmp.ne.s32.totalorder %s97, %s99
      %p103 = scmp.eq.s32.totalorder %s21, 0
      %p104 = por %p102, %p103
      %p105 = scmp.ne.s32.totalorder %s97, %s99
      %p106 = scmp.eq.s32.totalorder %s26, 1
      %p107 = por %p105, %p106
      %p108 = scmp.ne.s32.totalorder %s99, %s100
      %p109 = scmp.eq.s32.totalorder %s26, 0
      %p110 = por %p108, %p109
      %p111 = scmp.ne.s32.totalorder %s99, %s100
      %p112 = scmp.eq.s32.totalorder %s27, 1
      %p113 = por %p111, %p112
      %p115 = scmp.ne.s32.totalorder %s100, %s114
      %p116 = scmp.eq.s32.totalorder %s27, 0
      %p117 = por %p115, %p116
      %s119 = sadd.s32 %s118, 1
      %p122 = scmp.eq.s32.totalorder %s21, 1
      %p123 = scmp.ne.s32.totalorder %s118, %s120
      %p124 = scmp.eq.s32.totalorder %s21, 0
      %p125 = por %p123, %p124
      %p126 = scmp.ne.s32.totalorder %s118, %s120
      %p127 = scmp.eq.s32.totalorder %s26, 1
      %p128 = por %p126, %p127
      %p129 = scmp.ne.s32.totalorder %s120, %s121
      %p130 = scmp.eq.s32.totalorder %s26, 0
      %p131 = por %p129, %p130
      %p132 = scmp.ne.s32.totalorder %s120, %s121
      %p133 = scmp.eq.s32.totalorder %s27, 1
      %p134 = por %p132, %p133
      %p136 = scmp.ne.s32.totalorder %s121, %s135
      %p137 = scmp.eq.s32.totalorder %s27, 0
      %p138 = por %p136, %p137
      %s140 = sadd.s32 %s139, 1
      %p143 = scmp.eq.s32.totalorder %s21, 1
      %p144 = scmp.ne.s32.totalorder %s139, %s141
      %p145 = scmp.eq.s32.totalorder %s21, 0
      %p146 = por %p144, %p145
      %p147 = scmp.ne.s32.totalorder %s139, %s141
      %p148 = scmp.eq.s32.totalorder %s26, 1
      %p149 = por %p147, %p148
      %p150 = scmp.ne.s32.totalorder %s141, %s142
      %p151 = scmp.eq.s32.totalorder %s26, 0
      %p152 = por %p150, %p151
      %p153 = scmp.ne.s32.totalorder %s141, %s142
      %p154 = scmp.eq.s32.totalorder %s27, 1
      %p155 = por %p153, %p154
      %p157 = scmp.ne.s32.totalorder %s142, %s156
      %p158 = scmp.eq.s32.totalorder %s27, 0
      %p159 = por %p157, %p158
      %s161 = sadd.s32 %s160, 1
      %p164 = scmp.eq.s32.totalorder %s21, 1
      %p165 = scmp.ne.s32.totalorder %s160, %s162
      %p166 = scmp.eq.s32.totalorder %s21, 0
      %p167 = por %p165, %p166
      %p168 = scmp.ne.s32.totalorder %s160, %s162
      %p169 = scmp.eq.s32.totalorder %s26, 1
      %p170 = por %p168, %p169
      %p171 = scmp.ne.s32.totalorder %s162, %s163
      %p172 = scmp.eq.s32.totalorder %s26, 0
      %p173 = por %p171, %p172
      %p174 = scmp.ne.s32.totalorder %s162, %s163
      %p175 = scmp.eq.s32.totalorder %s27, 1
      %p176 = por %p174, %p175
      %p178 = scmp.ne.s32.totalorder %s163, %s177
      %p179 = scmp.eq.s32.totalorder %s27, 0
      %p180 = por %p178, %p179
      %s182 = sadd.s32 %s181, 1
      %p185 = scmp.eq.s32.totalorder %s21, 1
      %p186 = scmp.ne.s32.totalorder %s181, %s183
      %p187 = scmp.eq.s32.totalorder %s21, 0
      %p188 = por %p186, %p187
      %p189 = scmp.ne.s32.totalorder %s181, %s183
      %p190 = scmp.eq.s32.totalorder %s26, 1
      %p191 = por %p189, %p190
      %p192 = scmp.ne.s32.totalorder %s183, %s184
      %p193 = scmp.eq.s32.totalorder %s26, 0
      %p194 = por %p192, %p193
      %p195 = scmp.ne.s32.totalorder %s183, %s184
      %p196 = scmp.eq.s32.totalorder %s27, 1
      %p197 = por %p195, %p196
      %p199 = scmp.ne.s32.totalorder %s184, %s198
      %p200 = scmp.eq.s32.totalorder %s27, 0
      %p201 = por %p199, %p200
      %s203 = sadd.s32 %s202, 1
      %p206 = scmp.eq.s32.totalorder %s21, 1
      %p207 = scmp.ne.s32.totalorder %s202, %s204
      %p208 = scmp.eq.s32.totalorder %s21, 0
      %p209 = por %p207, %p208
      %p210 = scmp.ne.s32.totalorder %s202, %s204
      %p211 = scmp.eq.s32.totalorder %s26, 1
      %p212 = por %p210, %p211
      %p213 = scmp.ne.s32.totalorder %s204, %s205
      %p214 = scmp.eq.s32.totalorder %s26, 0
      %p215 = por %p213, %p214
      %p216 = scmp.ne.s32.totalorder %s204, %s205
      %p217 = scmp.eq.s32.totalorder %s27, 1
      %p218 = por %p216, %p217
      %p220 = scmp.ne.s32.totalorder %s205, %s219
      %p221 = scmp.eq.s32.totalorder %s27, 0
      %p222 = por %p220, %p221
      %s224 = sadd.s32 %s223, 1
      %p227 = scmp.eq.s32.totalorder %s21, 1
      %p228 = scmp.ne.s32.totalorder %s223, %s225
      %p229 = scmp.eq.s32.totalorder %s21, 0
      %p230 = por %p228, %p229
      %p231 = scmp.ne.s32.totalorder %s223, %s225
      %p232 = scmp.eq.s32.totalorder %s26, 1
      %p233 = por %p231, %p232
      %p234 = scmp.ne.s32.totalorder %s225, %s226
      %p235 = scmp.eq.s32.totalorder %s26, 0
      %p236 = por %p234, %p235
      %p237 = scmp.ne.s32.totalorder %s225, %s226
      %p238 = scmp.eq.s32.totalorder %s27, 1
      %p239 = por %p237, %p238
      %p241 = scmp.ne.s32.totalorder %s226, %s240
      %p242 = scmp.eq.s32.totalorder %s27, 0
      %p243 = por %p241, %p242
      %s244 = ssub.s32 %s21, %s28
      %p245 = scmp.eq.s32.totalorder %s244, 0
      %s247 = sadd.s32 %s246, 1
      %s248 = scalar_select %p245, %s246, %s247
      %p251 = pneg %p245
      %p252 = scmp.eq.s32.totalorder %s21, 1
      %p253 = por %p251, %p252
      %p254 = scmp.ne.s32.totalorder %s246, %s249
      %p255 = scmp.eq.s32.totalorder %s21, 0
      %p256 = por %p254, %p255
      %p257 = scmp.ne.s32.totalorder %s246, %s249
      %p258 = scmp.eq.s32.totalorder %s26, 1
      %p259 = por %p257, %p258
      %p260 = scmp.ne.s32.totalorder %s249, %s250
      %p261 = scmp.eq.s32.totalorder %s26, 0
      %p262 = por %p260, %p261
      %p263 = scmp.ne.s32.totalorder %s249, %s250
      %p264 = scmp.eq.s32.totalorder %s27, 1
      %p265 = por %p263, %p264
      %p267 = scmp.ne.s32.totalorder %s250, %s266
      %p268 = scmp.eq.s32.totalorder %s27, 0
      %p269 = por %p267, %p268
      %p270 = scmp.le.s32.totalorder 1, %s21
      %p271 = scmp.lt.s32.totalorder %s21, 3
      %p272 = pnand %p270, %p271
      %p273 = pneg %p272
      // Predicated region
      $region9: #{tpu_custom_call.1} parent=5 // pred_check
        _
      $region10: #{tpu_custom_call.1} parent=5 // pred_check_branch
        %275 = sbr.rel (%p272) target = $region12
      $region11: #{tpu_custom_call.1} parent=5 // pred_region
        %s276 = ssub.s32 %s21, 1
        // Predicated region
        $region13: #{tpu_custom_call.1} parent=11 // pred_check
          %p277 = pneg %p68
        $region14: #{tpu_custom_call.1} parent=11 // pred_check_branch
          %279 = sbr.rel (%p277) target = $region16
        $region15: #{tpu_custom_call.1} parent=11 // pred_region
          %s281 = ssub.s32 32, 32
          %282 = vsyncadd [#allocation4], %s281
          %s284 = sshll.u32 [#allocation3], 4
          %s285 = int_to_ptr.vmem [resolvable:$true] %s284
          %287 = dma.hbm_to_vmem [thread:$0]  %s1, 32, %s285, [#allocation4]
        $region16: #{tpu_custom_call.1} parent=11 // pred_fallthru
          _
        // Predicated region
        $region17: #{tpu_custom_call.1} parent=11 // pred_check
          %p288 = pneg %p89
        $region18: #{tpu_custom_call.1} parent=11 // pred_check_branch
          %290 = sbr.rel (%p288) target = $region20
        $region19: #{tpu_custom_call.1} parent=11 // pred_region
          _
        $region20: #{tpu_custom_call.1} parent=11 // pred_fallthru
          _
        // Predicated region
        $region21: #{tpu_custom_call.1} parent=11 // pred_check
          %p291 = pneg %p110
        $region22: #{tpu_custom_call.1} parent=11 // pred_check_branch
          %293 = sbr.rel (%p291) target = $region24
        $region23: #{tpu_custom_call.1} parent=11 // pred_region
          _
        $region24: #{tpu_custom_call.1} parent=11 // pred_fallthru
          _
        // Predicated region
        $region25: #{tpu_custom_call.1} parent=11 // pred_check
          %p294 = pneg %p131
        $region26: #{tpu_custom_call.1} parent=11 // pred_check_branch
          %296 = sbr.rel (%p294) target = $region28
        $region27: #{tpu_custom_call.1} parent=11 // pred_region
          _
        $region28: #{tpu_custom_call.1} parent=11 // pred_fallthru
          _
        // Predicated region
        $region29: #{tpu_custom_call.1} parent=11 // pred_check
          %p297 = pneg %p152
        $region30: #{tpu_custom_call.1} parent=11 // pred_check_branch
          %299 = sbr.rel (%p297) target = $region32
        $region31: #{tpu_custom_call.1} parent=11 // pred_region
          _
        $region32: #{tpu_custom_call.1} parent=11 // pred_fallthru
          _
        // Predicated region
        $region33: #{tpu_custom_call.1} parent=11 // pred_check
          %p300 = pneg %p173
        $region34: #{tpu_custom_call.1} parent=11 // pred_check_branch
          %302 = sbr.rel (%p300) target = $region36
        $region35: #{tpu_custom_call.1} parent=11 // pred_region
          _
        $region36: #{tpu_custom_call.1} parent=11 // pred_fallthru
          _
        // Predicated region
        $region37: #{tpu_custom_call.1} parent=11 // pred_check
          %p303 = pneg %p194
        $region38: #{tpu_custom_call.1} parent=11 // pred_check_branch
          %305 = sbr.rel (%p303) target = $region40
        $region39: #{tpu_custom_call.1} parent=11 // pred_region
          %s307 = ssub.s32 64, 64
          %308 = vsyncadd [#allocation6], %s307
          %s310 = sshll.u32 %s7, 4
          %s311 = int_to_ptr.vmem [resolvable:$true] %s310
          %313 = dma.vmem_to_smem %s311, 64, [#allocation7], [#allocation6]
        $region40: #{tpu_custom_call.1} parent=11 // pred_fallthru
          _
        // Predicated region
        $region41: #{tpu_custom_call.1} parent=11 // pred_check
          %p314 = pneg %p215
        $region42: #{tpu_custom_call.1} parent=11 // pred_check_branch
          %316 = sbr.rel (%p314) target = $region44
        $region43: #{tpu_custom_call.1} parent=11 // pred_region
          _
        $region44: #{tpu_custom_call.1} parent=11 // pred_fallthru
          _
        // Predicated region
        $region45: #{tpu_custom_call.1} parent=11 // pred_check
          %p317 = pneg %p236
        $region46: #{tpu_custom_call.1} parent=11 // pred_check_branch
          %319 = sbr.rel (%p317) target = $region48
        $region47: #{tpu_custom_call.1} parent=11 // pred_region
          _
        $region48: #{tpu_custom_call.1} parent=11 // pred_fallthru
          _
      $region12: #{tpu_custom_call.1} parent=5 // pred_fallthru
        _
      %p320 = scmp.lt.s32.totalorder %s21, 2
      // Predicated region
      $region49: #{tpu_custom_call.1} parent=5 // pred_check
        %p321 = pneg %p320
      $region50: #{tpu_custom_call.1} parent=5 // pred_check_branch
        %323 = sbr.rel (%p321) target = $region52
      $region51: #{tpu_custom_call.1} parent=5 // pred_region
        // Predicated region
        $region53: #{tpu_custom_call.1} parent=51 // pred_check
          %p324 = pneg %p41
        $region54: #{tpu_custom_call.1} parent=51 // pred_check_branch
          %326 = sbr.rel (%p324) target = $region56
        $region55: #{tpu_custom_call.1} parent=51 // pred_region
          %p327 = scmp.lt.s32.totalorder %s21, 1
          %s328 = scalar_select %p327, %s21, 1
          %s329 = smul.addr %s328, 4
          %s330 = smul.addr %s329, 8
          %s331 = scalar_lea.vmem %s0, %s330
        $region56: #{tpu_custom_call.1} parent=51 // pred_fallthru
          _
      $region52: #{tpu_custom_call.1} parent=5 // pred_fallthru
        _
      %p332 = scmp.le.s32.totalorder 1, %s21
      %p333 = scmp.lt.s32.totalorder %s21, 3
      %p334 = pnand %p332, %p333
      %p335 = pneg %p334
      // Predicated region
      $region57: #{tpu_custom_call.1} parent=5 // pred_check
        _
      $region58: #{tpu_custom_call.1} parent=5 // pred_check_branch
        %337 = sbr.rel (%p334) target = $region60
      $region59: #{tpu_custom_call.1} parent=5 // pred_region
        %s338 = ssub.s32 %s21, 1
        // Predicated region
        $region61: #{tpu_custom_call.1} parent=59 // pred_check
          %p339 = pneg %p68
        $region62: #{tpu_custom_call.1} parent=59 // pred_check_branch
          %341 = sbr.rel (%p339) target = $region64
        $region63: #{tpu_custom_call.1} parent=59 // pred_region
          %342 = dma.done [#allocation4], 32
        $region64: #{tpu_custom_call.1} parent=59 // pred_fallthru
          _
        // Predicated region
        $region65: #{tpu_custom_call.1} parent=59 // pred_check
          %p343 = pneg %p194
        $region66: #{tpu_custom_call.1} parent=59 // pred_check_branch
          %345 = sbr.rel (%p343) target = $region68
        $region67: #{tpu_custom_call.1} parent=59 // pred_region
          %346 = dma.done [#allocation6], 64
        $region68: #{tpu_custom_call.1} parent=59 // pred_fallthru
          _
        %347 = sfence
        %p348 = scmp.lt.s32.totalorder %s26, 1
        %s349 = scalar_select %p348, %s26, 1
        %s350 = smul.addr %s349, 4
        %s351 = smul.addr %s350, 8
        %s352 = scalar_lea.vmem %s0, %s351
        %p353 = pneg %p47
        %p354 = pneg %p44
        %p355 = pneg %p68
        %p356 = pneg %p65
        %p357 = pneg %p89
        %p358 = pneg %p86
        %p359 = pneg %p110
        %p360 = pneg %p107
        %p361 = pneg %p131
        %p362 = pneg %p128
        %p363 = pneg %p152
        %p364 = pneg %p149
        %p365 = pneg %p173
        %p366 = pneg %p170
        %p367 = pneg %p194
        %p368 = pneg %p191
        %p369 = pneg %p215
        %p370 = pneg %p212
        %p371 = pneg %p236
        %p372 = pneg %p233
        %p373 = pneg %p262
        %p374 = pneg %p259
        %s375 = sand.u32 %s249, 1
        %s376 = scalar_lea.sflag [#allocation5], %s375
        %s377 = sand.u32 %s249, 1
        %s378 = smul.addr %s377, 32
        %s379 = scalar_lea.vmem [#allocation8], %s378
        %p380 = scmp.lt.s32.totalorder %s26, 1
        %s381 = scalar_select %p380, %s26, 1
        %s382 = smul.addr %s381, 4
        %s383 = smul.addr %s382, 8
        %s384 = scalar_lea.vmem %s0, %s383
        %v385 = vld [vmem:[#allocation3] sm:$0x3]
        %v386 = vld [vmem:[%s2] sm:$0x3]
        %v387 = vadd.s32 %v385, 4294967293
        %vm388 = vcmp.ge.s32.totalorder %v387, 0
        %vm389 = vcmp.lt.s32.totalorder %v387, 16
        %vm390 = vmand %vm388, %vm389
        %v391 = vadd.s32 %v385, 4294967294
        %vm392 = vcmp.ge.s32.totalorder %v391, 0
        %vm393 = vcmp.lt.s32.totalorder %v391, 16
        %vm394 = vmand %vm392, %vm393
        %v395 = vadd.s32 %v385, 4294967295
        %vm396 = vcmp.ge.s32.totalorder %v395, 0
        %vm397 = vcmp.lt.s32.totalorder %v395, 16
        %vm398 = vmand %vm396, %vm397
        %v399 = vadd.s32 %v385, 1
        %vm400 = vcmp.ge.s32.totalorder %v399, 0
        %vm401 = vcmp.lt.s32.totalorder %v399, 16
        %vm402 = vmand %vm400, %vm401
        %v403 = vadd.s32 %v385, 2
        %vm404 = vcmp.ge.s32.totalorder %v403, 0
        %vm405 = vcmp.lt.s32.totalorder %v403, 16
        %vm406 = vmand %vm404, %vm405
        %v407 = vadd.s32 %v385, 3
        %vm408 = vcmp.ge.s32.totalorder %v407, 0
        %vm409 = vcmp.lt.s32.totalorder %v407, 16
        %vm410 = vmand %vm408, %vm409
        %v411 = vadd.s32 %v386, 4294967293
        %vm412 = vcmp.ge.s32.totalorder %v411, 0
        %vm413 = vcmp.lt.s32.totalorder %v411, 16
        %vm414 = vmand %vm412, %vm413
        %v415 = vadd.s32 %v386, 4294967294
        %vm416 = vcmp.ge.s32.totalorder %v415, 0
        %vm417 = vcmp.lt.s32.totalorder %v415, 16
        %vm418 = vmand %vm416, %vm417
        %v419 = vadd.s32 %v386, 4294967295
        %vm420 = vcmp.ge.s32.totalorder %v419, 0
        %vm421 = vcmp.lt.s32.totalorder %v419, 16
        %vm422 = vmand %vm420, %vm421
        %v423 = vadd.s32 %v386, 1
        %vm424 = vcmp.ge.s32.totalorder %v423, 0
        %vm425 = vcmp.lt.s32.totalorder %v423, 16
        %vm426 = vmand %vm424, %vm425
        %v427 = vadd.s32 %v386, 2
        %vm428 = vcmp.ge.s32.totalorder %v427, 0
        %vm429 = vcmp.lt.s32.totalorder %v427, 16
        %vm430 = vmand %vm428, %vm429
        %v431 = vadd.s32 %v386, 3
        %vm432 = vcmp.ge.s32.totalorder %v431, 0
        %vm433 = vcmp.lt.s32.totalorder %v431, 16
        %vm434 = vmand %vm432, %vm433
        %v435 = vlaneseq
        %v436 = vshrl.u32 %v435, 7
        %vm437 = vcmp.eq.s32.totalorder %v436, 0
        %v438 = vld [vmem:[%s384] sm:$0xff]
        %v439 = vld [vmem:[%s384 + $0x8] sm:$0xff]
        %v440 = vld [vmem:[%s384 + $0x10] sm:$0xff]
        %v441 = vld [vmem:[%s384 + $0x18] sm:$0xff]
        %v442 = vld [vmem:[%s3] sm:$0xff]
        %v443 = vld [vmem:[%s4] sm:$0xff]
        %445 = vset.pattern.permute.xlu0 0
        %446 = vperm.xlu0 %445, %v443
        %v447 = vpop.permute.xlu0 %446
        %vm449 = vcmask 130048
        %v451 = vsel %vm449, %v442, 0
        %453 = vmatprep.subr.mxu0 %v439
        %454 = vmatpush1.msra.mxu0 %v438
        %455 = vmatprep.subr.mxu0 %v441
        %456 = vmatpush1.msra.mxu0 %v440
        %457 = vmatprep.subr.mxu0 0.0
        %458 = vmatpush1.msra.mxu0 0.0
        %459 = vmatprep.subr.mxu0 0.0
        %460 = vmatpush1.msra.mxu0 0.0
        %461 = vmatprep.subr.mxu0 0.0
        %462 = vmatpush1.msra.mxu0 0.0
        %463 = vmatprep.subr.mxu0 0.0
        %464 = vmatpush1.msra.mxu0 0.0
        %465 = vmatprep.subr.mxu0 0.0
        %466 = vmatpush1.msra.mxu0 0.0
        %467 = vmatprep.subr.mxu0 0.0
        %468 = vmatpush1.msra.mxu0 0.0
        %469 = vmatprep.subr.mxu0 0.0
        %470 = vmatpush1.msra.mxu0 0.0
        %471 = vmatprep.subr.mxu0 0.0
        %472 = vmatpush1.msra.mxu0 0.0
        %473 = vmatprep.subr.mxu0 0.0
        %474 = vmatpush1.msra.mxu0 0.0
        %475 = vmatprep.subr.mxu0 0.0
        %476 = vmatpush1.msra.mxu0 0.0
        %477 = vmatprep.subr.mxu0 0.0
        %478 = vmatpush1.msra.mxu0 0.0
        %479 = vmatprep.subr.mxu0 0.0
        %480 = vmatpush1.msra.mxu0 0.0
        %481 = vmatprep.subr.mxu0 0.0
        %482 = vmatpush1.msra.mxu0 0.0
        %483 = vmatprep.subr.mxu0 0.0
        %484 = vmatpush1.msra.mxu0 0.0
        %485 = vmatprep.subr.mxu0 0.0
        %486 = vmatpush1.msra.mxu0 0.0
        %487 = vmatprep.subr.mxu0 0.0
        %488 = vmatpush1.msra.mxu0 0.0
        %489 = vmatprep.subr.mxu0 0.0
        %490 = vmatpush1.msra.mxu0 0.0
        %491 = vmatprep.subr.mxu0 0.0
        %492 = vmatpush1.msra.mxu0 0.0
        %493 = vmatprep.subr.mxu0 0.0
        %494 = vmatpush1.msra.mxu0 0.0
        %495 = vmatprep.subr.mxu0 0.0
        %496 = vmatpush1.msra.mxu0 0.0
        %497 = vmatprep.subr.mxu0 0.0
        %498 = vmatpush1.msra.mxu0 0.0
        %499 = vmatprep.subr.mxu0 0.0
        %500 = vmatpush1.msra.mxu0 0.0
        %501 = vmatprep.subr.mxu0 0.0
        %502 = vmatpush1.msra.mxu0 0.0
        %503 = vmatprep.subr.mxu0 0.0
        %504 = vmatpush1.msra.mxu0 0.0
        %505 = vmatprep.subr.mxu0 0.0
        %506 = vmatpush1.msra.mxu0 0.0
        %507 = vmatprep.subr.mxu0 0.0
        %508 = vmatpush1.msra.mxu0 0.0
        %509 = vmatprep.subr.mxu0 0.0
        %510 = vmatpush1.msra.mxu0 0.0
        %511 = vmatprep.subr.mxu0 0.0
        %512 = vmatpush1.msra.mxu0 0.0
        %513 = vmatprep.subr.mxu0 0.0
        %514 = vmatpush1.msra.mxu0 0.0
        %515 = vmatprep.subr.mxu0 0.0
        %516 = vmatpush1.msra.mxu0 0.0
        %517 = vmatprep.mubr.f32.mxu0 0.0
        %518 = vmatmul.mubr.f32.gmra.mrb[0].mxu0 %v451
        %v519 = vpop.f32.mrb[0].mxu0
        %v520 = vadd.f32 %v447, %v519
        %v521 = vpop.f32.mrb[0].mxu0
        %v522 = vadd.f32 %v447, %v521
        %523 = vdwg.mxu0
        %v524 = vsub.f32 0.0, %v520
        %v525 = vsub.f32 0.0, %v522
        %v526 = vmul.f32 %v524, 1.442695
        %v527 = vpow.pop %v526
        %v528 = vmul.f32 %v525, 1.442695
        %v529 = vpow.pop %v528
        %v530 = vadd.f32 %v527, 1.0
        %v531 = vadd.f32 %v529, 1.0
        %v532 = vrcp.pop %v530
        %v533 = vrcp.pop %v531
        %v534 = vmul.f32 %v520, %v532
        %v535 = vmul.f32 %v522, %v533
        %v536 = vld [vmem:[%s5] sm:$0xff]
        %v537 = vld [vmem:[%s6] sm:$0xff]
        %v538 = vadd.f32 %v534, %v535
        %539 = vadd.xlane.f32.xlu0 %v538
        %v540 = vpop.xlane.xlu0 %539
        %v541 = vmul.f32 %v540, 0.00390625
        %v542 = vmax.f32 %v534, %v535
        %543 = vmax.xlane.f32.xlu0 %v542
        %v544 = vpop.xlane.xlu0 %543
        %v545 = vmul.f32 %v541, %v536
        %vm546 = vcmask 7168
        %v547 = vsel %vm546, %v545, 0.0
        %v548 = vrot.slane %v547, 4
        %v549 = vadd.f32 %v547, %v548
        %v550 = vrot.slane %v549, 2
        %v551 = vadd.f32 %v549, %v550
        %v552 = vrot.slane %v551, 1
        %v553 = vadd.f32 %v551, %v552
        %v554 = vmax.f32 %v553, 0.0
        %v555 = vmul.f32 %v544, %v536
        %v556 = vsel %vm546, %v555, 0.0
        %v557 = vrot.slane %v556, 4
        %v558 = vadd.f32 %v556, %v557
        %v559 = vrot.slane %v558, 2
        %v560 = vadd.f32 %v558, %v559
        %v561 = vrot.slane %v560, 1
        %v562 = vadd.f32 %v560, %v561
        %v563 = vmax.f32 %v562, 0.0
        %v564 = vadd.f32 %v554, %v563
        %v565 = vmul.f32 %v537, %v564
        %v566 = vsub.f32 0.0, %v565
        %v567 = vmul.f32 %v566, 1.442695
        %v568 = vpow.pop %v567
        %v569 = vadd.f32 %v568, 1.0
        %v570 = vrcp.pop %v569
        %572 = vset.pattern.permute.xlu0 0
        %573 = vperm.xlu0 %572, %v570
        %v574 = vpop.permute.xlu0 %573
        %v576 = vmul.f32 %v534, %v574
        %v577 = vmul.f32 %v535, %v574
        %v578 = vrot.slane %v576, 4
        %v579 = vadd.f32 %v576, %v578
        %v580 = vrot.slane %v579, 2
        %v581 = vadd.f32 %v579, %v580
        %v582 = vrot.slane %v581, 1
        %v583 = vadd.f32 %v581, %v582
        %v584 = vrot.slane %v577, 4
        %v585 = vadd.f32 %v577, %v584
        %v586 = vrot.slane %v585, 2
        %v587 = vadd.f32 %v585, %v586
        %v588 = vrot.slane %v587, 1
        %v589 = vadd.f32 %v587, %v588
        %v590 = vmul.f32 %v583, 0.125
        %v591 = vmul.f32 %v589, 0.125
        %v592 = vrot.slane %v576, 4
        %v593 = vmax.f32 %v576, %v592
        %v594 = vrot.slane %v593, 2
        %v595 = vmax.f32 %v593, %v594
        %v596 = vrot.slane %v595, 1
        %v597 = vmax.f32 %v595, %v596
        %v598 = vrot.slane %v577, 4
        %v599 = vmax.f32 %v577, %v598
        %v600 = vrot.slane %v599, 2
        %v601 = vmax.f32 %v599, %v600
        %v602 = vrot.slane %v601, 1
        %v603 = vmax.f32 %v601, %v602
        %v604 = vsel %vm437, 1, 0
        %vm605 = vcmp.eq.s32.totalorder %v604, 1
        %v606 = vsel %vm605, %v590, %v597
        %v607 = vsel %vm605, %v591, %v603
        %608 = vrot.lane.b32.xlu0 %v606, 3
        %v609 = vpop.permute.xlu0 %608
        %610 = vrot.lane.b32.xlu0 %v607, 3
        %v611 = vpop.permute.xlu0 %610
        %v612 = vlaneseq
        %v613 = vand.u32 %v612, 127
        %vm614 = vcmp.lt.s32.totalorder %v613, 3
        %v615 = vsel %vm614, %v609, %v611
        %v616 = vsel %vm614, %v611, %v609
        %v617 = vsel %vm414, 1, 0
        %v618 = vlaneseq
        %v619 = vshrl.u32 %v618, 7
        %v620 = vsub.s32 0, %v619
        %v621 = vrot.slane %v617, %v620
        %v622 = vlaneseq
        %v623 = vshrl.u32 %v622, 7
        %v624 = vsub.s32 1, %v623
        %v625 = vrot.slane %v617, %v624
        %vm626 = vcmp.eq.s32.totalorder %v621, 1
        %vm627 = vcmp.eq.s32.totalorder %v625, 1
        %v628 = vsel %vm626, %v616, 0.0
        %v629 = vsel %vm627, %v615, 0.0
        %630 = vrot.lane.b32.xlu0 %v606, 2
        %v631 = vpop.permute.xlu0 %630
        %632 = vrot.lane.b32.xlu0 %v607, 2
        %v633 = vpop.permute.xlu0 %632
        %vm634 = vcmp.lt.s32.totalorder %v613, 2
        %v635 = vsel %vm634, %v631, %v633
        %v636 = vsel %vm634, %v633, %v631
        %v637 = vsel %vm418, 1, 0
        %v638 = vlaneseq
        %v639 = vshrl.u32 %v638, 7
        %v640 = vsub.s32 0, %v639
        %v641 = vrot.slane %v637, %v640
        %v642 = vlaneseq
        %v643 = vshrl.u32 %v642, 7
        %v644 = vsub.s32 1, %v643
        %v645 = vrot.slane %v637, %v644
        %vm646 = vcmp.eq.s32.totalorder %v641, 1
        %vm647 = vcmp.eq.s32.totalorder %v645, 1
        %v648 = vsel %vm646, %v636, 0.0
        %v649 = vsel %vm647, %v635, 0.0
        %650 = vrot.lane.b32.xlu0 %v606, 1
        %v651 = vpop.permute.xlu0 %650
        %652 = vrot.lane.b32.xlu0 %v607, 1
        %v653 = vpop.permute.xlu0 %652
        %vm654 = vcmp.lt.s32.totalorder %v613, 1
        %v655 = vsel %vm654, %v651, %v653
        %v656 = vsel %vm654, %v653, %v651
        %v657 = vsel %vm422, 1, 0
        %v658 = vlaneseq
        %v659 = vshrl.u32 %v658, 7
        %v660 = vsub.s32 0, %v659
        %v661 = vrot.slane %v657, %v660
        %v662 = vlaneseq
        %v663 = vshrl.u32 %v662, 7
        %v664 = vsub.s32 1, %v663
        %v665 = vrot.slane %v657, %v664
        %vm666 = vcmp.eq.s32.totalorder %v661, 1
        %vm667 = vcmp.eq.s32.totalorder %v665, 1
        %v668 = vsel %vm666, %v656, 0.0
        %v669 = vsel %vm667, %v655, 0.0
        %670 = vrot.lane.b32.xlu0 %v606, 127
        %v671 = vpop.permute.xlu0 %670
        %672 = vrot.lane.b32.xlu0 %v607, 127
        %v673 = vpop.permute.xlu0 %672
        %vm674 = vcmp.lt.s32.totalorder %v613, 127
        %v675 = vsel %vm674, %v671, %v673
        %v676 = vsel %vm674, %v673, %v671
        %v677 = vsel %vm426, 1, 0
        %v678 = vlaneseq
        %v679 = vshrl.u32 %v678, 7
        %v680 = vsub.s32 0, %v679
        %v681 = vrot.slane %v677, %v680
        %v682 = vlaneseq
        %v683 = vshrl.u32 %v682, 7
        %v684 = vsub.s32 1, %v683
        %v685 = vrot.slane %v677, %v684
        %vm686 = vcmp.eq.s32.totalorder %v681, 1
        %vm687 = vcmp.eq.s32.totalorder %v685, 1
        %v688 = vsel %vm686, %v675, 0.0
        %v689 = vsel %vm687, %v676, 0.0
        %690 = vrot.lane.b32.xlu0 %v606, 126
        %v691 = vpop.permute.xlu0 %690
        %692 = vrot.lane.b32.xlu0 %v607, 126
        %v693 = vpop.permute.xlu0 %692
        %vm694 = vcmp.lt.s32.totalorder %v613, 126
        %v695 = vsel %vm694, %v691, %v693
        %v696 = vsel %vm694, %v693, %v691
        %v697 = vsel %vm430, 1, 0
        %v698 = vlaneseq
        %v699 = vshrl.u32 %v698, 7
        %v700 = vsub.s32 0, %v699
        %v701 = vrot.slane %v697, %v700
        %v702 = vlaneseq
        %v703 = vshrl.u32 %v702, 7
        %v704 = vsub.s32 1, %v703
        %v705 = vrot.slane %v697, %v704
        %vm706 = vcmp.eq.s32.totalorder %v701, 1
        %vm707 = vcmp.eq.s32.totalorder %v705, 1
        %v708 = vsel %vm706, %v695, 0.0
        %v709 = vsel %vm707, %v696, 0.0
        %710 = vrot.lane.b32.xlu0 %v606, 125
        %v711 = vpop.permute.xlu0 %710
        %712 = vrot.lane.b32.xlu0 %v607, 125
        %v713 = vpop.permute.xlu0 %712
        %vm714 = vcmp.lt.s32.totalorder %v613, 125
        %v715 = vsel %vm714, %v711, %v713
        %v716 = vsel %vm714, %v713, %v711
        %v717 = vsel %vm434, 1, 0
        %v718 = vlaneseq
        %v719 = vshrl.u32 %v718, 7
        %v720 = vsub.s32 0, %v719
        %v721 = vrot.slane %v717, %v720
        %v722 = vlaneseq
        %v723 = vshrl.u32 %v722, 7
        %v724 = vsub.s32 1, %v723
        %v725 = vrot.slane %v717, %v724
        %vm726 = vcmp.eq.s32.totalorder %v721, 1
        %vm727 = vcmp.eq.s32.totalorder %v725, 1
        %v728 = vsel %vm726, %v715, 0.0
        %v729 = vsel %vm727, %v716, 0.0
        %s730 = sld [smem:[#allocation7]]
        %s731 = sld [smem:[#allocation7 + $0x31]]
        %v732 = vstv %s730
        %v733 = vstv %s731
        %v734 = vsel %vm437, %v732, %v733
        %v735 = vmul.f32 %v734, %v628
        %v736 = vmul.f32 %v734, %v629
        %s737 = sld [smem:[#allocation7 + $0x1]]
        %s738 = sld [smem:[#allocation7 + $0x32]]
        %v739 = vstv %s737
        %v740 = vstv %s738
        %v741 = vsel %vm437, %v739, %v740
        %v742 = vmul.f32 %v741, %v648
        %v743 = vmul.f32 %v741, %v649
        %v744 = vadd.f32 %v735, %v742
        %v745 = vadd.f32 %v736, %v743
        %s746 = sld [smem:[#allocation7 + $0x2]]
        %s747 = sld [smem:[#allocation7 + $0x33]]
        %v748 = vstv %s746
        %v749 = vstv %s747
        %v750 = vsel %vm437, %v748, %v749
        %v751 = vmul.f32 %v750, %v668
        %v752 = vmul.f32 %v750, %v669
        %v753 = vadd.f32 %v744, %v751
        %v754 = vadd.f32 %v745, %v752
        %s755 = sld [smem:[#allocation7 + $0x3]]
        %s756 = sld [smem:[#allocation7 + $0x34]]
        %v757 = vstv %s755
        %v758 = vstv %s756
        %v759 = vsel %vm437, %v757, %v758
        %v760 = vmul.f32 %v759, %v606
        %v761 = vmul.f32 %v759, %v607
        %v762 = vadd.f32 %v753, %v760
        %v763 = vadd.f32 %v754, %v761
        %s764 = sld [smem:[#allocation7 + $0x4]]
        %s765 = sld [smem:[#allocation7 + $0x35]]
        %v766 = vstv %s764
        %v767 = vstv %s765
        %v768 = vsel %vm437, %v766, %v767
        %v769 = vmul.f32 %v768, %v688
        %v770 = vmul.f32 %v768, %v689
        %v771 = vadd.f32 %v762, %v769
        %v772 = vadd.f32 %v763, %v770
        %s773 = sld [smem:[#allocation7 + $0x5]]
        %s774 = sld [smem:[#allocation7 + $0x36]]
        %v775 = vstv %s773
        %v776 = vstv %s774
        %v777 = vsel %vm437, %v775, %v776
        %v778 = vmul.f32 %v777, %v708
        %v779 = vmul.f32 %v777, %v709
        %v780 = vadd.f32 %v771, %v778
        %v781 = vadd.f32 %v772, %v779
        %s782 = sld [smem:[#allocation7 + $0x6]]
        %s783 = sld [smem:[#allocation7 + $0x37]]
        %v784 = vstv %s782
        %v785 = vstv %s783
        %v786 = vsel %vm437, %v784, %v785
        %v787 = vmul.f32 %v786, %v728
        %v788 = vmul.f32 %v786, %v729
        %v789 = vadd.f32 %v780, %v787
        %v790 = vadd.f32 %v781, %v788
        %791 = vrot.lane.b32.xlu0 %v789, 48
        %v792 = vpop.permute.xlu0 %791
        %793 = vrot.lane.b32.xlu0 %v790, 48
        %v794 = vpop.permute.xlu0 %793
        %vm795 = vcmp.lt.s32.totalorder %v613, 48
        %v796 = vsel %vm795, %v792, %v794
        %v797 = vsel %vm795, %v794, %v792
        %v798 = vsel %vm390, 1, 0
        %v799 = vlaneseq
        %v800 = vshrl.u32 %v799, 7
        %v801 = vsub.s32 0, %v800
        %v802 = vrot.slane %v798, %v801
        %v803 = vlaneseq
        %v804 = vshrl.u32 %v803, 7
        %v805 = vsub.s32 1, %v804
        %v806 = vrot.slane %v798, %v805
        %vm807 = vcmp.eq.s32.totalorder %v802, 1
        %vm808 = vcmp.eq.s32.totalorder %v806, 1
        %v809 = vsel %vm807, %v797, 0.0
        %v810 = vsel %vm808, %v796, 0.0
        %s811 = sld [smem:[#allocation7 + $0x7]]
        %s812 = sld [smem:[#allocation7 + $0x38]]
        %v813 = vstv %s811
        %v814 = vstv %s812
        %v815 = vsel %vm437, %v813, %v814
        %v816 = vmul.f32 %v815, %v628
        %v817 = vmul.f32 %v815, %v629
        %s818 = sld [smem:[#allocation7 + $0x8]]
        %s819 = sld [smem:[#allocation7 + $0x39]]
        %v820 = vstv %s818
        %v821 = vstv %s819
        %v822 = vsel %vm437, %v820, %v821
        %v823 = vmul.f32 %v822, %v648
        %v824 = vmul.f32 %v822, %v649
        %v825 = vadd.f32 %v816, %v823
        %v826 = vadd.f32 %v817, %v824
        %s827 = sld [smem:[#allocation7 + $0x9]]
        %s828 = sld [smem:[#allocation7 + $0x3a]]
        %v829 = vstv %s827
        %v830 = vstv %s828
        %v831 = vsel %vm437, %v829, %v830
        %v832 = vmul.f32 %v831, %v668
        %v833 = vmul.f32 %v831, %v669
        %v834 = vadd.f32 %v825, %v832
        %v835 = vadd.f32 %v826, %v833
        %s836 = sld [smem:[#allocation7 + $0xa]]
        %s837 = sld [smem:[#allocation7 + $0x3b]]
        %v838 = vstv %s836
        %v839 = vstv %s837
        %v840 = vsel %vm437, %v838, %v839
        %v841 = vmul.f32 %v840, %v606
        %v842 = vmul.f32 %v840, %v607
        %v843 = vadd.f32 %v834, %v841
        %v844 = vadd.f32 %v835, %v842
        %s845 = sld [smem:[#allocation7 + $0xb]]
        %s846 = sld [smem:[#allocation7 + $0x3c]]
        %v847 = vstv %s845
        %v848 = vstv %s846
        %v849 = vsel %vm437, %v847, %v848
        %v850 = vmul.f32 %v849, %v688
        %v851 = vmul.f32 %v849, %v689
        %v852 = vadd.f32 %v843, %v850
        %v853 = vadd.f32 %v844, %v851
        %s854 = sld [smem:[#allocation7 + $0xc]]
        %s855 = sld [smem:[#allocation7 + $0x3d]]
        %v856 = vstv %s854
        %v857 = vstv %s855
        %v858 = vsel %vm437, %v856, %v857
        %v859 = vmul.f32 %v858, %v708
        %v860 = vmul.f32 %v858, %v709
        %v861 = vadd.f32 %v852, %v859
        %v862 = vadd.f32 %v853, %v860
        %s863 = sld [smem:[#allocation7 + $0xd]]
        %s864 = sld [smem:[#allocation7 + $0x3e]]
        %v865 = vstv %s863
        %v866 = vstv %s864
        %v867 = vsel %vm437, %v865, %v866
        %v868 = vmul.f32 %v867, %v728
        %v869 = vmul.f32 %v867, %v729
        %v870 = vadd.f32 %v861, %v868
        %v871 = vadd.f32 %v862, %v869
        %872 = vrot.lane.b32.xlu0 %v870, 32
        %v873 = vpop.permute.xlu0 %872
        %874 = vrot.lane.b32.xlu0 %v871, 32
        %v875 = vpop.permute.xlu0 %874
        %vm876 = vcmp.lt.s32.totalorder %v613, 32
        %v877 = vsel %vm876, %v873, %v875
        %v878 = vsel %vm876, %v875, %v873
        %v879 = vsel %vm394, 1, 0
        %v880 = vlaneseq
        %v881 = vshrl.u32 %v880, 7
        %v882 = vsub.s32 0, %v881
        %v883 = vrot.slane %v879, %v882
        %v884 = vlaneseq
        %v885 = vshrl.u32 %v884, 7
        %v886 = vsub.s32 1, %v885
        %v887 = vrot.slane %v879, %v886
        %vm888 = vcmp.eq.s32.totalorder %v883, 1
        %vm889 = vcmp.eq.s32.totalorder %v887, 1
        %v890 = vsel %vm888, %v878, 0.0
        %v891 = vsel %vm889, %v877, 0.0
        %v892 = vadd.f32 %v809, %v890
        %v893 = vadd.f32 %v810, %v891
        %s894 = sld [smem:[#allocation7 + $0xe]]
        %s895 = sld [smem:[#allocation7 + $0x3f]]
        %v896 = vstv %s894
        %v897 = vstv %s895
        %v898 = vsel %vm437, %v896, %v897
        %v899 = vmul.f32 %v898, %v628
        %v900 = vmul.f32 %v898, %v629
        %s901 = sld [smem:[#allocation7 + $0xf]]
        %s902 = sld [smem:[#allocation7 + $0x40]]
        %v903 = vstv %s901
        %v904 = vstv %s902
        %v905 = vsel %vm437, %v903, %v904
        %v906 = vmul.f32 %v905, %v648
        %v907 = vmul.f32 %v905, %v649
        %v908 = vadd.f32 %v899, %v906
        %v909 = vadd.f32 %v900, %v907
        %s910 = sld [smem:[#allocation7 + $0x10]]
        %s911 = sld [smem:[#allocation7 + $0x41]]
        %v912 = vstv %s910
        %v913 = vstv %s911
        %v914 = vsel %vm437, %v912, %v913
        %v915 = vmul.f32 %v914, %v668
        %v916 = vmul.f32 %v914, %v669
        %v917 = vadd.f32 %v908, %v915
        %v918 = vadd.f32 %v909, %v916
        %s919 = sld [smem:[#allocation7 + $0x11]]
        %s920 = sld [smem:[#allocation7 + $0x42]]
        %v921 = vstv %s919
        %v922 = vstv %s920
        %v923 = vsel %vm437, %v921, %v922
        %v924 = vmul.f32 %v923, %v606
        %v925 = vmul.f32 %v923, %v607
        %v926 = vadd.f32 %v917, %v924
        %v927 = vadd.f32 %v918, %v925
        %s928 = sld [smem:[#allocation7 + $0x12]]
        %s929 = sld [smem:[#allocation7 + $0x43]]
        %v930 = vstv %s928
        %v931 = vstv %s929
        %v932 = vsel %vm437, %v930, %v931
        %v933 = vmul.f32 %v932, %v688
        %v934 = vmul.f32 %v932, %v689
        %v935 = vadd.f32 %v926, %v933
        %v936 = vadd.f32 %v927, %v934
        %s937 = sld [smem:[#allocation7 + $0x13]]
        %s938 = sld [smem:[#allocation7 + $0x44]]
        %v939 = vstv %s937
        %v940 = vstv %s938
        %v941 = vsel %vm437, %v939, %v940
        %v942 = vmul.f32 %v941, %v708
        %v943 = vmul.f32 %v941, %v709
        %v944 = vadd.f32 %v935, %v942
        %v945 = vadd.f32 %v936, %v943
        %s946 = sld [smem:[#allocation7 + $0x14]]
        %s947 = sld [smem:[#allocation7 + $0x45]]
        %v948 = vstv %s946
        %v949 = vstv %s947
        %v950 = vsel %vm437, %v948, %v949
        %v951 = vmul.f32 %v950, %v728
        %v952 = vmul.f32 %v950, %v729
        %v953 = vadd.f32 %v944, %v951
        %v954 = vadd.f32 %v945, %v952
        %955 = vrot.lane.b32.xlu0 %v953, 16
        %v956 = vpop.permute.xlu0 %955
        %957 = vrot.lane.b32.xlu0 %v954, 16
        %v958 = vpop.permute.xlu0 %957
        %vm959 = vcmp.lt.s32.totalorder %v613, 16
        %v960 = vsel %vm959, %v956, %v958
        %v961 = vsel %vm959, %v958, %v956
        %v962 = vsel %vm398, 1, 0
        %v963 = vlaneseq
        %v964 = vshrl.u32 %v963, 7
        %v965 = vsub.s32 0, %v964
        %v966 = vrot.slane %v962, %v965
        %v967 = vlaneseq
        %v968 = vshrl.u32 %v967, 7
        %v969 = vsub.s32 1, %v968
        %v970 = vrot.slane %v962, %v969
        %vm971 = vcmp.eq.s32.totalorder %v966, 1
        %vm972 = vcmp.eq.s32.totalorder %v970, 1
        %v973 = vsel %vm971, %v961, 0.0
        %v974 = vsel %vm972, %v960, 0.0
        %v975 = vadd.f32 %v892, %v973
        %v976 = vadd.f32 %v893, %v974
        %s977 = sld [smem:[#allocation7 + $0x15]]
        %s978 = sld [smem:[#allocation7 + $0x46]]
        %v979 = vstv %s977
        %v980 = vstv %s978
        %v981 = vsel %vm437, %v979, %v980
        %v982 = vmul.f32 %v981, %v628
        %v983 = vmul.f32 %v981, %v629
        %s984 = sld [smem:[#allocation7 + $0x16]]
        %s985 = sld [smem:[#allocation7 + $0x47]]
        %v986 = vstv %s984
        %v987 = vstv %s985
        %v988 = vsel %vm437, %v986, %v987
        %v989 = vmul.f32 %v988, %v648
        %v990 = vmul.f32 %v988, %v649
        %v991 = vadd.f32 %v982, %v989
        %v992 = vadd.f32 %v983, %v990
        %s993 = sld [smem:[#allocation7 + $0x17]]
        %s994 = sld [smem:[#allocation7 + $0x48]]
        %v995 = vstv %s993
        %v996 = vstv %s994
        %v997 = vsel %vm437, %v995, %v996
        %v998 = vmul.f32 %v997, %v668
        %v999 = vmul.f32 %v997, %v669
        %v1000 = vadd.f32 %v991, %v998
        %v1001 = vadd.f32 %v992, %v999
        %s1002 = sld [smem:[#allocation7 + $0x18]]
        %s1003 = sld [smem:[#allocation7 + $0x49]]
        %v1004 = vstv %s1002
        %v1005 = vstv %s1003
        %v1006 = vsel %vm437, %v1004, %v1005
        %v1007 = vmul.f32 %v1006, %v606
        %v1008 = vmul.f32 %v1006, %v607
        %v1009 = vadd.f32 %v1000, %v1007
        %v1010 = vadd.f32 %v1001, %v1008
        %s1011 = sld [smem:[#allocation7 + $0x19]]
        %s1012 = sld [smem:[#allocation7 + $0x4a]]
        %v1013 = vstv %s1011
        %v1014 = vstv %s1012
        %v1015 = vsel %vm437, %v1013, %v1014
        %v1016 = vmul.f32 %v1015, %v688
        %v1017 = vmul.f32 %v1015, %v689
        %v1018 = vadd.f32 %v1009, %v1016
        %v1019 = vadd.f32 %v1010, %v1017
        %s1020 = sld [smem:[#allocation7 + $0x1a]]
        %s1021 = sld [smem:[#allocation7 + $0x4b]]
        %v1022 = vstv %s1020
        %v1023 = vstv %s1021
        %v1024 = vsel %vm437, %v1022, %v1023
        %v1025 = vmul.f32 %v1024, %v708
        %v1026 = vmul.f32 %v1024, %v709
        %v1027 = vadd.f32 %v1018, %v1025
        %v1028 = vadd.f32 %v1019, %v1026
        %s1029 = sld [smem:[#allocation7 + $0x1b]]
        %s1030 = sld [smem:[#allocation7 + $0x4c]]
        %v1031 = vstv %s1029
        %v1032 = vstv %s1030
        %v1033 = vsel %vm437, %v1031, %v1032
        %v1034 = vmul.f32 %v1033, %v728
        %v1035 = vmul.f32 %v1033, %v729
        %v1036 = vadd.f32 %v1027, %v1034
        %v1037 = vadd.f32 %v1028, %v1035
        %v1038 = vadd.f32 %v975, %v1036
        %v1039 = vadd.f32 %v976, %v1037
        %s1040 = sld [smem:[#allocation7 + $0x1c]]
        %s1041 = sld [smem:[#allocation7 + $0x4d]]
        %v1042 = vstv %s1040
        %v1043 = vstv %s1041
        %v1044 = vsel %vm437, %v1042, %v1043
        %v1045 = vmul.f32 %v1044, %v628
        %v1046 = vmul.f32 %v1044, %v629
        %s1047 = sld [smem:[#allocation7 + $0x1d]]
        %s1048 = sld [smem:[#allocation7 + $0x4e]]
        %v1049 = vstv %s1047
        %v1050 = vstv %s1048
        %v1051 = vsel %vm437, %v1049, %v1050
        %v1052 = vmul.f32 %v1051, %v648
        %v1053 = vmul.f32 %v1051, %v649
        %v1054 = vadd.f32 %v1045, %v1052
        %v1055 = vadd.f32 %v1046, %v1053
        %s1056 = sld [smem:[#allocation7 + $0x1e]]
        %s1057 = sld [smem:[#allocation7 + $0x4f]]
        %v1058 = vstv %s1056
        %v1059 = vstv %s1057
        %v1060 = vsel %vm437, %v1058, %v1059
        %v1061 = vmul.f32 %v1060, %v668
        %v1062 = vmul.f32 %v1060, %v669
        %v1063 = vadd.f32 %v1054, %v1061
        %v1064 = vadd.f32 %v1055, %v1062
        %s1065 = sld [smem:[#allocation7 + $0x1f]]
        %s1066 = sld [smem:[#allocation7 + $0x50]]
        %v1067 = vstv %s1065
        %v1068 = vstv %s1066
        %v1069 = vsel %vm437, %v1067, %v1068
        %v1070 = vmul.f32 %v1069, %v606
        %v1071 = vmul.f32 %v1069, %v607
        %v1072 = vadd.f32 %v1063, %v1070
        %v1073 = vadd.f32 %v1064, %v1071
        %s1074 = sld [smem:[#allocation7 + $0x20]]
        %s1075 = sld [smem:[#allocation7 + $0x51]]
        %v1076 = vstv %s1074
        %v1077 = vstv %s1075
        %v1078 = vsel %vm437, %v1076, %v1077
        %v1079 = vmul.f32 %v1078, %v688
        %v1080 = vmul.f32 %v1078, %v689
        %v1081 = vadd.f32 %v1072, %v1079
        %v1082 = vadd.f32 %v1073, %v1080
        %s1083 = sld [smem:[#allocation7 + $0x21]]
        %s1084 = sld [smem:[#allocation7 + $0x52]]
        %v1085 = vstv %s1083
        %v1086 = vstv %s1084
        %v1087 = vsel %vm437, %v1085, %v1086
        %v1088 = vmul.f32 %v1087, %v708
        %v1089 = vmul.f32 %v1087, %v709
        %v1090 = vadd.f32 %v1081, %v1088
        %v1091 = vadd.f32 %v1082, %v1089
        %s1092 = sld [smem:[#allocation7 + $0x22]]
        %s1093 = sld [smem:[#allocation7 + $0x53]]
        %v1094 = vstv %s1092
        %v1095 = vstv %s1093
        %v1096 = vsel %vm437, %v1094, %v1095
        %v1097 = vmul.f32 %v1096, %v728
        %v1098 = vmul.f32 %v1096, %v729
        %v1099 = vadd.f32 %v1090, %v1097
        %v1100 = vadd.f32 %v1091, %v1098
        %1101 = vrot.lane.b32.xlu0 %v1099, 112
        %v1102 = vpop.permute.xlu0 %1101
        %1103 = vrot.lane.b32.xlu0 %v1100, 112
        %v1104 = vpop.permute.xlu0 %1103
        %vm1105 = vcmp.lt.s32.totalorder %v613, 112
        %v1106 = vsel %vm1105, %v1102, %v1104
        %v1107 = vsel %vm1105, %v1104, %v1102
        %v1108 = vsel %vm402, 1, 0
        %v1109 = vlaneseq
        %v1110 = vshrl.u32 %v1109, 7
        %v1111 = vsub.s32 0, %v1110
        %v1112 = vrot.slane %v1108, %v1111
        %v1113 = vlaneseq
        %v1114 = vshrl.u32 %v1113, 7
        %v1115 = vsub.s32 1, %v1114
        %v1116 = vrot.slane %v1108, %v1115
        %vm1117 = vcmp.eq.s32.totalorder %v1112, 1
        %vm1118 = vcmp.eq.s32.totalorder %v1116, 1
        %v1119 = vsel %vm1117, %v1106, 0.0
        %v1120 = vsel %vm1118, %v1107, 0.0
        %v1121 = vadd.f32 %v1038, %v1119
        %v1122 = vadd.f32 %v1039, %v1120
        %s1123 = sld [smem:[#allocation7 + $0x23]]
        %s1124 = sld [smem:[#allocation7 + $0x54]]
        %v1125 = vstv %s1123
        %v1126 = vstv %s1124
        %v1127 = vsel %vm437, %v1125, %v1126
        %v1128 = vmul.f32 %v1127, %v628
        %v1129 = vmul.f32 %v1127, %v629
        %s1130 = sld [smem:[#allocation7 + $0x24]]
        %s1131 = sld [smem:[#allocation7 + $0x55]]
        %v1132 = vstv %s1130
        %v1133 = vstv %s1131
        %v1134 = vsel %vm437, %v1132, %v1133
        %v1135 = vmul.f32 %v1134, %v648
        %v1136 = vmul.f32 %v1134, %v649
        %v1137 = vadd.f32 %v1128, %v1135
        %v1138 = vadd.f32 %v1129, %v1136
        %s1139 = sld [smem:[#allocation7 + $0x25]]
        %s1140 = sld [smem:[#allocation7 + $0x56]]
        %v1141 = vstv %s1139
        %v1142 = vstv %s1140
        %v1143 = vsel %vm437, %v1141, %v1142
        %v1144 = vmul.f32 %v1143, %v668
        %v1145 = vmul.f32 %v1143, %v669
        %v1146 = vadd.f32 %v1137, %v1144
        %v1147 = vadd.f32 %v1138, %v1145
        %s1148 = sld [smem:[#allocation7 + $0x26]]
        %s1149 = sld [smem:[#allocation7 + $0x57]]
        %v1150 = vstv %s1148
        %v1151 = vstv %s1149
        %v1152 = vsel %vm437, %v1150, %v1151
        %v1153 = vmul.f32 %v1152, %v606
        %v1154 = vmul.f32 %v1152, %v607
        %v1155 = vadd.f32 %v1146, %v1153
        %v1156 = vadd.f32 %v1147, %v1154
        %s1157 = sld [smem:[#allocation7 + $0x27]]
        %s1158 = sld [smem:[#allocation7 + $0x58]]
        %v1159 = vstv %s1157
        %v1160 = vstv %s1158
        %v1161 = vsel %vm437, %v1159, %v1160
        %v1162 = vmul.f32 %v1161, %v688
        %v1163 = vmul.f32 %v1161, %v689
        %v1164 = vadd.f32 %v1155, %v1162
        %v1165 = vadd.f32 %v1156, %v1163
        %s1166 = sld [smem:[#allocation7 + $0x28]]
        %s1167 = sld [smem:[#allocation7 + $0x59]]
        %v1168 = vstv %s1166
        %v1169 = vstv %s1167
        %v1170 = vsel %vm437, %v1168, %v1169
        %v1171 = vmul.f32 %v1170, %v708
        %v1172 = vmul.f32 %v1170, %v709
        %v1173 = vadd.f32 %v1164, %v1171
        %v1174 = vadd.f32 %v1165, %v1172
        %s1175 = sld [smem:[#allocation7 + $0x29]]
        %s1176 = sld [smem:[#allocation7 + $0x5a]]
        %v1177 = vstv %s1175
        %v1178 = vstv %s1176
        %v1179 = vsel %vm437, %v1177, %v1178
        %v1180 = vmul.f32 %v1179, %v728
        %v1181 = vmul.f32 %v1179, %v729
        %v1182 = vadd.f32 %v1173, %v1180
        %v1183 = vadd.f32 %v1174, %v1181
        %1184 = vrot.lane.b32.xlu0 %v1182, 96
        %v1185 = vpop.permute.xlu0 %1184
        %1186 = vrot.lane.b32.xlu0 %v1183, 96
        %v1187 = vpop.permute.xlu0 %1186
        %vm1188 = vcmp.lt.s32.totalorder %v613, 96
        %v1189 = vsel %vm1188, %v1185, %v1187
        %v1190 = vsel %vm1188, %v1187, %v1185
        %v1191 = vsel %vm406, 1, 0
        %v1192 = vlaneseq
        %v1193 = vshrl.u32 %v1192, 7
        %v1194 = vsub.s32 0, %v1193
        %v1195 = vrot.slane %v1191, %v1194
        %v1196 = vlaneseq
        %v1197 = vshrl.u32 %v1196, 7
        %v1198 = vsub.s32 1, %v1197
        %v1199 = vrot.slane %v1191, %v1198
        %vm1200 = vcmp.eq.s32.totalorder %v1195, 1
        %vm1201 = vcmp.eq.s32.totalorder %v1199, 1
        %v1202 = vsel %vm1200, %v1189, 0.0
        %v1203 = vsel %vm1201, %v1190, 0.0
        %v1204 = vadd.f32 %v1121, %v1202
        %v1205 = vadd.f32 %v1122, %v1203
        %s1206 = sld [smem:[#allocation7 + $0x2a]]
        %s1207 = sld [smem:[#allocation7 + $0x5b]]
        %v1208 = vstv %s1206
        %v1209 = vstv %s1207
        %v1210 = vsel %vm437, %v1208, %v1209
        %v1211 = vmul.f32 %v1210, %v628
        %v1212 = vmul.f32 %v1210, %v629
        %s1213 = sld [smem:[#allocation7 + $0x2b]]
        %s1214 = sld [smem:[#allocation7 + $0x5c]]
        %v1215 = vstv %s1213
        %v1216 = vstv %s1214
        %v1217 = vsel %vm437, %v1215, %v1216
        %v1218 = vmul.f32 %v1217, %v648
        %v1219 = vmul.f32 %v1217, %v649
        %v1220 = vadd.f32 %v1211, %v1218
        %v1221 = vadd.f32 %v1212, %v1219
        %s1222 = sld [smem:[#allocation7 + $0x2c]]
        %s1223 = sld [smem:[#allocation7 + $0x5d]]
        %v1224 = vstv %s1222
        %v1225 = vstv %s1223
        %v1226 = vsel %vm437, %v1224, %v1225
        %v1227 = vmul.f32 %v1226, %v668
        %v1228 = vmul.f32 %v1226, %v669
        %v1229 = vadd.f32 %v1220, %v1227
        %v1230 = vadd.f32 %v1221, %v1228
        %s1231 = sld [smem:[#allocation7 + $0x2d]]
        %s1232 = sld [smem:[#allocation7 + $0x5e]]
        %v1233 = vstv %s1231
        %v1234 = vstv %s1232
        %v1235 = vsel %vm437, %v1233, %v1234
        %v1236 = vmul.f32 %v1235, %v606
        %v1237 = vmul.f32 %v1235, %v607
        %v1238 = vadd.f32 %v1229, %v1236
        %v1239 = vadd.f32 %v1230, %v1237
        %s1240 = sld [smem:[#allocation7 + $0x2e]]
        %s1241 = sld [smem:[#allocation7 + $0x5f]]
        %v1242 = vstv %s1240
        %v1243 = vstv %s1241
        %v1244 = vsel %vm437, %v1242, %v1243
        %v1245 = vmul.f32 %v1244, %v688
        %v1246 = vmul.f32 %v1244, %v689
        %v1247 = vadd.f32 %v1238, %v1245
        %v1248 = vadd.f32 %v1239, %v1246
        %s1249 = sld [smem:[#allocation7 + $0x2f]]
        %s1250 = sld [smem:[#allocation7 + $0x60]]
        %v1251 = vstv %s1249
        %v1252 = vstv %s1250
        %v1253 = vsel %vm437, %v1251, %v1252
        %v1254 = vmul.f32 %v1253, %v708
        %v1255 = vmul.f32 %v1253, %v709
        %v1256 = vadd.f32 %v1247, %v1254
        %v1257 = vadd.f32 %v1248, %v1255
        %s1258 = sld [smem:[#allocation7 + $0x30]]
        %s1259 = sld [smem:[#allocation7 + $0x61]]
        %v1260 = vstv %s1258
        %v1261 = vstv %s1259
        %v1262 = vsel %vm437, %v1260, %v1261
        %v1263 = vmul.f32 %v1262, %v728
        %v1264 = vmul.f32 %v1262, %v729
        %v1265 = vadd.f32 %v1256, %v1263
        %v1266 = vadd.f32 %v1257, %v1264
        %1267 = vrot.lane.b32.xlu0 %v1265, 80
        %v1268 = vpop.permute.xlu0 %1267
        %1269 = vrot.lane.b32.xlu0 %v1266, 80
        %v1270 = vpop.permute.xlu0 %1269
        %vm1271 = vcmp.lt.s32.totalorder %v613, 80
        %v1272 = vsel %vm1271, %v1268, %v1270
        %v1273 = vsel %vm1271, %v1270, %v1268
        %v1274 = vsel %vm410, 1, 0
        %v1275 = vlaneseq
        %v1276 = vshrl.u32 %v1275, 7
        %v1277 = vsub.s32 0, %v1276
        %v1278 = vrot.slane %v1274, %v1277
        %v1279 = vlaneseq
        %v1280 = vshrl.u32 %v1279, 7
        %v1281 = vsub.s32 1, %v1280
        %v1282 = vrot.slane %v1274, %v1281
        %vm1283 = vcmp.eq.s32.totalorder %v1278, 1
        %vm1284 = vcmp.eq.s32.totalorder %v1282, 1
        %v1285 = vsel %vm1283, %v1272, 0.0
        %v1286 = vsel %vm1284, %v1273, 0.0
        %v1287 = vadd.f32 %v1204, %v1285
        %v1288 = vadd.f32 %v1205, %v1286
        %vm1289 = vcmask 1041408
        %v1290 = vsel %vm1289, %v1287, 0.0
        %v1291 = vrot.slane %v1290, 4
        %v1292 = vadd.f32 %v1290, %v1291
        %v1293 = vrot.slane %v1292, 2
        %v1294 = vadd.f32 %v1292, %v1293
        %v1295 = vrot.slane %v1294, 1
        %v1296 = vadd.f32 %v1294, %v1295
        %v1297 = vsel %vm1289, %v1288, 0.0
        %v1298 = vrot.slane %v1297, 4
        %v1299 = vadd.f32 %v1297, %v1298
        %v1300 = vrot.slane %v1299, 2
        %v1301 = vadd.f32 %v1299, %v1300
        %v1302 = vrot.slane %v1301, 1
        %v1303 = vadd.f32 %v1301, %v1302
        %v1304 = vsub.f32 0.0, %v1296
        %v1305 = vsub.f32 0.0, %v1303
        %v1306 = vmul.f32 %v1304, 1.442695
        %v1307 = vpow.pop %v1306
        %v1308 = vmul.f32 %v1305, 1.442695
        %v1309 = vpow.pop %v1308
        %v1310 = vadd.f32 %v1307, 1.0
        %v1311 = vadd.f32 %v1309, 1.0
        %v1312 = vrcp.pop %v1310
        %v1313 = vrcp.pop %v1311
        %v1314 = vmul.f32 %v576, %v1312
        %v1315 = vmul.f32 %v577, %v1313
        %1316 = vst [vmem:[#allocation2] sm:$0xff] %v1314
        %1317 = vst [vmem:[#allocation2 + $0x8] sm:$0xff] %v1315
        %1318 = vrot.lane.b32.xlu0 %v1314, 2
        %v1319 = vpop.permute.xlu0 %1318
        %1320 = vrot.lane.b32.xlu0 %v1315, 2
        %v1321 = vpop.permute.xlu0 %1320
        %v1322 = vsel %vm634, %v1319, %v1321
        %v1323 = vsel %vm634, %v1321, %v1319
        %v1324 = vsel %vm646, %v1323, -inf
        %v1325 = vsel %vm647, %v1322, -inf
        %v1326 = vmax.f32 %v1314, %v1324
        %v1327 = vmax.f32 %v1315, %v1325
        %1328 = vrot.lane.b32.xlu0 %v1314, 1
        %v1329 = vpop.permute.xlu0 %1328
        %1330 = vrot.lane.b32.xlu0 %v1315, 1
        %v1331 = vpop.permute.xlu0 %1330
        %v1332 = vsel %vm654, %v1329, %v1331
        %v1333 = vsel %vm654, %v1331, %v1329
        %v1334 = vsel %vm666, %v1333, -inf
        %v1335 = vsel %vm667, %v1332, -inf
        %v1336 = vmax.f32 %v1326, %v1334
        %v1337 = vmax.f32 %v1327, %v1335
        %1338 = vrot.lane.b32.xlu0 %v1314, 127
        %v1339 = vpop.permute.xlu0 %1338
        %1340 = vrot.lane.b32.xlu0 %v1315, 127
        %v1341 = vpop.permute.xlu0 %1340
        %v1342 = vsel %vm674, %v1339, %v1341
        %v1343 = vsel %vm674, %v1341, %v1339
        %v1344 = vsel %vm686, %v1342, -inf
        %v1345 = vsel %vm687, %v1343, -inf
        %v1346 = vmax.f32 %v1336, %v1344
        %v1347 = vmax.f32 %v1337, %v1345
        %1348 = vrot.lane.b32.xlu0 %v1314, 126
        %v1349 = vpop.permute.xlu0 %1348
        %1350 = vrot.lane.b32.xlu0 %v1315, 126
        %v1351 = vpop.permute.xlu0 %1350
        %v1352 = vsel %vm694, %v1349, %v1351
        %v1353 = vsel %vm694, %v1351, %v1349
        %v1354 = vsel %vm706, %v1352, -inf
        %v1355 = vsel %vm707, %v1353, -inf
        %v1356 = vmax.f32 %v1346, %v1354
        %v1357 = vmax.f32 %v1347, %v1355
        %1358 = vrot.lane.b32.xlu0 %v1356, 32
        %v1359 = vpop.permute.xlu0 %1358
        %1360 = vrot.lane.b32.xlu0 %v1357, 32
        %v1361 = vpop.permute.xlu0 %1360
        %v1362 = vsel %vm876, %v1359, %v1361
        %v1363 = vsel %vm876, %v1361, %v1359
        %v1364 = vsel %vm888, %v1363, -inf
        %v1365 = vsel %vm889, %v1362, -inf
        %v1366 = vmax.f32 %v1356, %v1364
        %v1367 = vmax.f32 %v1357, %v1365
        %1368 = vrot.lane.b32.xlu0 %v1356, 16
        %v1369 = vpop.permute.xlu0 %1368
        %1370 = vrot.lane.b32.xlu0 %v1357, 16
        %v1371 = vpop.permute.xlu0 %1370
        %v1372 = vsel %vm959, %v1369, %v1371
        %v1373 = vsel %vm959, %v1371, %v1369
        %v1374 = vsel %vm971, %v1373, -inf
        %v1375 = vsel %vm972, %v1372, -inf
        %v1376 = vmax.f32 %v1366, %v1374
        %v1377 = vmax.f32 %v1367, %v1375
        %1378 = vrot.lane.b32.xlu0 %v1356, 112
        %v1379 = vpop.permute.xlu0 %1378
        %1380 = vrot.lane.b32.xlu0 %v1357, 112
        %v1381 = vpop.permute.xlu0 %1380
        %v1382 = vsel %vm1105, %v1379, %v1381
        %v1383 = vsel %vm1105, %v1381, %v1379
        %v1384 = vsel %vm1117, %v1382, -inf
        %v1385 = vsel %vm1118, %v1383, -inf
        %v1386 = vmax.f32 %v1376, %v1384
        %v1387 = vmax.f32 %v1377, %v1385
        %1388 = vrot.lane.b32.xlu0 %v1356, 96
        %v1389 = vpop.permute.xlu0 %1388
        %1390 = vrot.lane.b32.xlu0 %v1357, 96
        %v1391 = vpop.permute.xlu0 %1390
        %v1392 = vsel %vm1188, %v1389, %v1391
        %v1393 = vsel %vm1188, %v1391, %v1389
        %v1394 = vsel %vm1200, %v1392, -inf
        %v1395 = vsel %vm1201, %v1393, -inf
        %v1396 = vmax.f32 %v1386, %v1394
        %v1397 = vmax.f32 %v1387, %v1395
        %s1398 = scalar_lea.vmem %s5, 8
        %v1399 = vld [vmem:[%s1398] sm:$0xff]
        %s1400 = scalar_lea.vmem %s6, 8
        %v1401 = vld [vmem:[%s1400] sm:$0xff]
        %v1402 = vadd.f32 %v1396, %v1397
        %1403 = vadd.xlane.f32.xlu0 %v1402
        %v1404 = vpop.xlane.xlu0 %1403
        %v1405 = vmul.f32 %v1404, 0.00390625
        %v1406 = vmax.f32 %v1396, %v1397
        %1407 = vmax.xlane.f32.xlu0 %v1406
        %v1408 = vpop.xlane.xlu0 %1407
        %v1409 = vmul.f32 %v1405, %v1399
        %v1410 = vsel %vm546, %v1409, 0.0
        %v1411 = vrot.slane %v1410, 4
        %v1412 = vadd.f32 %v1410, %v1411
        %v1413 = vrot.slane %v1412, 2
        %v1414 = vadd.f32 %v1412, %v1413
        %v1415 = vrot.slane %v1414, 1
        %v1416 = vadd.f32 %v1414, %v1415
        %v1417 = vmax.f32 %v1416, 0.0
        %v1418 = vmul.f32 %v1408, %v1399
        %v1419 = vsel %vm546, %v1418, 0.0
        %v1420 = vrot.slane %v1419, 4
        %v1421 = vadd.f32 %v1419, %v1420
        %v1422 = vrot.slane %v1421, 2
        %v1423 = vadd.f32 %v1421, %v1422
        %v1424 = vrot.slane %v1423, 1
        %v1425 = vadd.f32 %v1423, %v1424
        %v1426 = vmax.f32 %v1425, 0.0
        %v1427 = vadd.f32 %v1417, %v1426
        %v1428 = vmul.f32 %v1401, %v1427
        %v1429 = vsub.f32 0.0, %v1428
        %v1430 = vmul.f32 %v1429, 1.442695
        %v1431 = vpow.pop %v1430
        %v1432 = vadd.f32 %v1431, 1.0
        %v1433 = vrcp.pop %v1432
        %1435 = vset.pattern.permute.xlu0 0
        %1436 = vperm.xlu0 %1435, %v1433
        %v1437 = vpop.permute.xlu0 %1436
        %v1439 = vmul.f32 %v1396, %v1437
        %v1440 = vmul.f32 %v1397, %v1437
        %v1441 = vrot.slane %v1439, 4
        %v1442 = vadd.f32 %v1439, %v1441
        %v1443 = vrot.slane %v1442, 2
        %v1444 = vadd.f32 %v1442, %v1443
        %v1445 = vrot.slane %v1444, 1
        %v1446 = vadd.f32 %v1444, %v1445
        %v1447 = vrot.slane %v1440, 4
        %v1448 = vadd.f32 %v1440, %v1447
        %v1449 = vrot.slane %v1448, 2
        %v1450 = vadd.f32 %v1448, %v1449
        %v1451 = vrot.slane %v1450, 1
        %v1452 = vadd.f32 %v1450, %v1451
        %v1453 = vmul.f32 %v1446, 0.125
        %v1454 = vmul.f32 %v1452, 0.125
        %v1455 = vrot.slane %v1439, 4
        %v1456 = vmax.f32 %v1439, %v1455
        %v1457 = vrot.slane %v1456, 2
        %v1458 = vmax.f32 %v1456, %v1457
        %v1459 = vrot.slane %v1458, 1
        %v1460 = vmax.f32 %v1458, %v1459
        %v1461 = vrot.slane %v1440, 4
        %v1462 = vmax.f32 %v1440, %v1461
        %v1463 = vrot.slane %v1462, 2
        %v1464 = vmax.f32 %v1462, %v1463
        %v1465 = vrot.slane %v1464, 1
        %v1466 = vmax.f32 %v1464, %v1465
        %v1467 = vsel %vm605, %v1453, %v1460
        %v1468 = vsel %vm605, %v1454, %v1466
        %1469 = vrot.lane.b32.xlu0 %v1467, 3
        %v1470 = vpop.permute.xlu0 %1469
        %1471 = vrot.lane.b32.xlu0 %v1468, 3
        %v1472 = vpop.permute.xlu0 %1471
        %v1473 = vsel %vm614, %v1470, %v1472
        %v1474 = vsel %vm614, %v1472, %v1470
        %v1475 = vsel %vm626, %v1474, 0.0
        %v1476 = vsel %vm627, %v1473, 0.0
        %1477 = vrot.lane.b32.xlu0 %v1467, 2
        %v1478 = vpop.permute.xlu0 %1477
        %1479 = vrot.lane.b32.xlu0 %v1468, 2
        %v1480 = vpop.permute.xlu0 %1479
        %v1481 = vsel %vm634, %v1478, %v1480
        %v1482 = vsel %vm634, %v1480, %v1478
        %v1483 = vsel %vm646, %v1482, 0.0
        %v1484 = vsel %vm647, %v1481, 0.0
        %1485 = vrot.lane.b32.xlu0 %v1467, 1
        %v1486 = vpop.permute.xlu0 %1485
        %1487 = vrot.lane.b32.xlu0 %v1468, 1
        %v1488 = vpop.permute.xlu0 %1487
        %v1489 = vsel %vm654, %v1486, %v1488
        %v1490 = vsel %vm654, %v1488, %v1486
        %v1491 = vsel %vm666, %v1490, 0.0
        %v1492 = vsel %vm667, %v1489, 0.0
        %1493 = vrot.lane.b32.xlu0 %v1467, 127
        %v1494 = vpop.permute.xlu0 %1493
        %1495 = vrot.lane.b32.xlu0 %v1468, 127
        %v1496 = vpop.permute.xlu0 %1495
        %v1497 = vsel %vm674, %v1494, %v1496
        %v1498 = vsel %vm674, %v1496, %v1494
        %v1499 = vsel %vm686, %v1497, 0.0
        %v1500 = vsel %vm687, %v1498, 0.0
        %1501 = vrot.lane.b32.xlu0 %v1467, 126
        %v1502 = vpop.permute.xlu0 %1501
        %1503 = vrot.lane.b32.xlu0 %v1468, 126
        %v1504 = vpop.permute.xlu0 %1503
        %v1505 = vsel %vm694, %v1502, %v1504
        %v1506 = vsel %vm694, %v1504, %v1502
        %v1507 = vsel %vm706, %v1505, 0.0
        %v1508 = vsel %vm707, %v1506, 0.0
        %1509 = vrot.lane.b32.xlu0 %v1467, 125
        %v1510 = vpop.permute.xlu0 %1509
        %1511 = vrot.lane.b32.xlu0 %v1468, 125
        %v1512 = vpop.permute.xlu0 %1511
        %v1513 = vsel %vm714, %v1510, %v1512
        %v1514 = vsel %vm714, %v1512, %v1510
        %v1515 = vsel %vm726, %v1513, 0.0
        %v1516 = vsel %vm727, %v1514, 0.0
        %s1517 = sld [smem:[#allocation7 + $0x80]]
        %s1518 = sld [smem:[#allocation7 + $0xb1]]
        %v1519 = vstv %s1517
        %v1520 = vstv %s1518
        %v1521 = vsel %vm437, %v1519, %v1520
        %v1522 = vmul.f32 %v1521, %v1475
        %v1523 = vmul.f32 %v1521, %v1476
        %s1524 = sld [smem:[#allocation7 + $0x81]]
        %s1525 = sld [smem:[#allocation7 + $0xb2]]
        %v1526 = vstv %s1524
        %v1527 = vstv %s1525
        %v1528 = vsel %vm437, %v1526, %v1527
        %v1529 = vmul.f32 %v1528, %v1483
        %v1530 = vmul.f32 %v1528, %v1484
        %v1531 = vadd.f32 %v1522, %v1529
        %v1532 = vadd.f32 %v1523, %v1530
        %s1533 = sld [smem:[#allocation7 + $0x82]]
        %s1534 = sld [smem:[#allocation7 + $0xb3]]
        %v1535 = vstv %s1533
        %v1536 = vstv %s1534
        %v1537 = vsel %vm437, %v1535, %v1536
        %v1538 = vmul.f32 %v1537, %v1491
        %v1539 = vmul.f32 %v1537, %v1492
        %v1540 = vadd.f32 %v1531, %v1538
        %v1541 = vadd.f32 %v1532, %v1539
        %s1542 = sld [smem:[#allocation7 + $0x83]]
        %s1543 = sld [smem:[#allocation7 + $0xb4]]
        %v1544 = vstv %s1542
        %v1545 = vstv %s1543
        %v1546 = vsel %vm437, %v1544, %v1545
        %v1547 = vmul.f32 %v1546, %v1467
        %v1548 = vmul.f32 %v1546, %v1468
        %v1549 = vadd.f32 %v1540, %v1547
        %v1550 = vadd.f32 %v1541, %v1548
        %s1551 = sld [smem:[#allocation7 + $0x84]]
        %s1552 = sld [smem:[#allocation7 + $0xb5]]
        %v1553 = vstv %s1551
        %v1554 = vstv %s1552
        %v1555 = vsel %vm437, %v1553, %v1554
        %v1556 = vmul.f32 %v1555, %v1499
        %v1557 = vmul.f32 %v1555, %v1500
        %v1558 = vadd.f32 %v1549, %v1556
        %v1559 = vadd.f32 %v1550, %v1557
        %s1560 = sld [smem:[#allocation7 + $0x85]]
        %s1561 = sld [smem:[#allocation7 + $0xb6]]
        %v1562 = vstv %s1560
        %v1563 = vstv %s1561
        %v1564 = vsel %vm437, %v1562, %v1563
        %v1565 = vmul.f32 %v1564, %v1507
        %v1566 = vmul.f32 %v1564, %v1508
        %v1567 = vadd.f32 %v1558, %v1565
        %v1568 = vadd.f32 %v1559, %v1566
        %s1569 = sld [smem:[#allocation7 + $0x86]]
        %s1570 = sld [smem:[#allocation7 + $0xb7]]
        %v1571 = vstv %s1569
        %v1572 = vstv %s1570
        %v1573 = vsel %vm437, %v1571, %v1572
        %v1574 = vmul.f32 %v1573, %v1515
        %v1575 = vmul.f32 %v1573, %v1516
        %v1576 = vadd.f32 %v1567, %v1574
        %v1577 = vadd.f32 %v1568, %v1575
        %1578 = vrot.lane.b32.xlu0 %v1576, 48
        %v1579 = vpop.permute.xlu0 %1578
        %1580 = vrot.lane.b32.xlu0 %v1577, 48
        %v1581 = vpop.permute.xlu0 %1580
        %v1582 = vsel %vm795, %v1579, %v1581
        %v1583 = vsel %vm795, %v1581, %v1579
        %v1584 = vsel %vm807, %v1583, 0.0
        %v1585 = vsel %vm808, %v1582, 0.0
        %s1586 = sld [smem:[#allocation7 + $0x87]]
        %s1587 = sld [smem:[#allocation7 + $0xb8]]
        %v1588 = vstv %s1586
        %v1589 = vstv %s1587
        %v1590 = vsel %vm437, %v1588, %v1589
        %v1591 = vmul.f32 %v1590, %v1475
        %v1592 = vmul.f32 %v1590, %v1476
        %s1593 = sld [smem:[#allocation7 + $0x88]]
        %s1594 = sld [smem:[#allocation7 + $0xb9]]
        %v1595 = vstv %s1593
        %v1596 = vstv %s1594
        %v1597 = vsel %vm437, %v1595, %v1596
        %v1598 = vmul.f32 %v1597, %v1483
        %v1599 = vmul.f32 %v1597, %v1484
        %v1600 = vadd.f32 %v1591, %v1598
        %v1601 = vadd.f32 %v1592, %v1599
        %s1602 = sld [smem:[#allocation7 + $0x89]]
        %s1603 = sld [smem:[#allocation7 + $0xba]]
        %v1604 = vstv %s1602
        %v1605 = vstv %s1603
        %v1606 = vsel %vm437, %v1604, %v1605
        %v1607 = vmul.f32 %v1606, %v1491
        %v1608 = vmul.f32 %v1606, %v1492
        %v1609 = vadd.f32 %v1600, %v1607
        %v1610 = vadd.f32 %v1601, %v1608
        %s1611 = sld [smem:[#allocation7 + $0x8a]]
        %s1612 = sld [smem:[#allocation7 + $0xbb]]
        %v1613 = vstv %s1611
        %v1614 = vstv %s1612
        %v1615 = vsel %vm437, %v1613, %v1614
        %v1616 = vmul.f32 %v1615, %v1467
        %v1617 = vmul.f32 %v1615, %v1468
        %v1618 = vadd.f32 %v1609, %v1616
        %v1619 = vadd.f32 %v1610, %v1617
        %s1620 = sld [smem:[#allocation7 + $0x8b]]
        %s1621 = sld [smem:[#allocation7 + $0xbc]]
        %v1622 = vstv %s1620
        %v1623 = vstv %s1621
        %v1624 = vsel %vm437, %v1622, %v1623
        %v1625 = vmul.f32 %v1624, %v1499
        %v1626 = vmul.f32 %v1624, %v1500
        %v1627 = vadd.f32 %v1618, %v1625
        %v1628 = vadd.f32 %v1619, %v1626
        %s1629 = sld [smem:[#allocation7 + $0x8c]]
        %s1630 = sld [smem:[#allocation7 + $0xbd]]
        %v1631 = vstv %s1629
        %v1632 = vstv %s1630
        %v1633 = vsel %vm437, %v1631, %v1632
        %v1634 = vmul.f32 %v1633, %v1507
        %v1635 = vmul.f32 %v1633, %v1508
        %v1636 = vadd.f32 %v1627, %v1634
        %v1637 = vadd.f32 %v1628, %v1635
        %s1638 = sld [smem:[#allocation7 + $0x8d]]
        %s1639 = sld [smem:[#allocation7 + $0xbe]]
        %v1640 = vstv %s1638
        %v1641 = vstv %s1639
        %v1642 = vsel %vm437, %v1640, %v1641
        %v1643 = vmul.f32 %v1642, %v1515
        %v1644 = vmul.f32 %v1642, %v1516
        %v1645 = vadd.f32 %v1636, %v1643
        %v1646 = vadd.f32 %v1637, %v1644
        %1647 = vrot.lane.b32.xlu0 %v1645, 32
        %v1648 = vpop.permute.xlu0 %1647
        %1649 = vrot.lane.b32.xlu0 %v1646, 32
        %v1650 = vpop.permute.xlu0 %1649
        %v1651 = vsel %vm876, %v1648, %v1650
        %v1652 = vsel %vm876, %v1650, %v1648
        %v1653 = vsel %vm888, %v1652, 0.0
        %v1654 = vsel %vm889, %v1651, 0.0
        %v1655 = vadd.f32 %v1584, %v1653
        %v1656 = vadd.f32 %v1585, %v1654
        %s1657 = sld [smem:[#allocation7 + $0x8e]]
        %s1658 = sld [smem:[#allocation7 + $0xbf]]
        %v1659 = vstv %s1657
        %v1660 = vstv %s1658
        %v1661 = vsel %vm437, %v1659, %v1660
        %v1662 = vmul.f32 %v1661, %v1475
        %v1663 = vmul.f32 %v1661, %v1476
        %s1664 = sld [smem:[#allocation7 + $0x8f]]
        %s1665 = sld [smem:[#allocation7 + $0xc0]]
        %v1666 = vstv %s1664
        %v1667 = vstv %s1665
        %v1668 = vsel %vm437, %v1666, %v1667
        %v1669 = vmul.f32 %v1668, %v1483
        %v1670 = vmul.f32 %v1668, %v1484
        %v1671 = vadd.f32 %v1662, %v1669
        %v1672 = vadd.f32 %v1663, %v1670
        %s1673 = sld [smem:[#allocation7 + $0x90]]
        %s1674 = sld [smem:[#allocation7 + $0xc1]]
        %v1675 = vstv %s1673
        %v1676 = vstv %s1674
        %v1677 = vsel %vm437, %v1675, %v1676
        %v1678 = vmul.f32 %v1677, %v1491
        %v1679 = vmul.f32 %v1677, %v1492
        %v1680 = vadd.f32 %v1671, %v1678
        %v1681 = vadd.f32 %v1672, %v1679
        %s1682 = sld [smem:[#allocation7 + $0x91]]
        %s1683 = sld [smem:[#allocation7 + $0xc2]]
        %v1684 = vstv %s1682
        %v1685 = vstv %s1683
        %v1686 = vsel %vm437, %v1684, %v1685
        %v1687 = vmul.f32 %v1686, %v1467
        %v1688 = vmul.f32 %v1686, %v1468
        %v1689 = vadd.f32 %v1680, %v1687
        %v1690 = vadd.f32 %v1681, %v1688
        %s1691 = sld [smem:[#allocation7 + $0x92]]
        %s1692 = sld [smem:[#allocation7 + $0xc3]]
        %v1693 = vstv %s1691
        %v1694 = vstv %s1692
        %v1695 = vsel %vm437, %v1693, %v1694
        %v1696 = vmul.f32 %v1695, %v1499
        %v1697 = vmul.f32 %v1695, %v1500
        %v1698 = vadd.f32 %v1689, %v1696
        %v1699 = vadd.f32 %v1690, %v1697
        %s1700 = sld [smem:[#allocation7 + $0x93]]
        %s1701 = sld [smem:[#allocation7 + $0xc4]]
        %v1702 = vstv %s1700
        %v1703 = vstv %s1701
        %v1704 = vsel %vm437, %v1702, %v1703
        %v1705 = vmul.f32 %v1704, %v1507
        %v1706 = vmul.f32 %v1704, %v1508
        %v1707 = vadd.f32 %v1698, %v1705
        %v1708 = vadd.f32 %v1699, %v1706
        %s1709 = sld [smem:[#allocation7 + $0x94]]
        %s1710 = sld [smem:[#allocation7 + $0xc5]]
        %v1711 = vstv %s1709
        %v1712 = vstv %s1710
        %v1713 = vsel %vm437, %v1711, %v1712
        %v1714 = vmul.f32 %v1713, %v1515
        %v1715 = vmul.f32 %v1713, %v1516
        %v1716 = vadd.f32 %v1707, %v1714
        %v1717 = vadd.f32 %v1708, %v1715
        %1718 = vrot.lane.b32.xlu0 %v1716, 16
        %v1719 = vpop.permute.xlu0 %1718
        %1720 = vrot.lane.b32.xlu0 %v1717, 16
        %v1721 = vpop.permute.xlu0 %1720
        %v1722 = vsel %vm959, %v1719, %v1721
        %v1723 = vsel %vm959, %v1721, %v1719
        %v1724 = vsel %vm971, %v1723, 0.0
        %v1725 = vsel %vm972, %v1722, 0.0
        %v1726 = vadd.f32 %v1655, %v1724
        %v1727 = vadd.f32 %v1656, %v1725
        %s1728 = sld [smem:[#allocation7 + $0x95]]
        %s1729 = sld [smem:[#allocation7 + $0xc6]]
        %v1730 = vstv %s1728
        %v1731 = vstv %s1729
        %v1732 = vsel %vm437, %v1730, %v1731
        %v1733 = vmul.f32 %v1732, %v1475
        %v1734 = vmul.f32 %v1732, %v1476
        %s1735 = sld [smem:[#allocation7 + $0x96]]
        %s1736 = sld [smem:[#allocation7 + $0xc7]]
        %v1737 = vstv %s1735
        %v1738 = vstv %s1736
        %v1739 = vsel %vm437, %v1737, %v1738
        %v1740 = vmul.f32 %v1739, %v1483
        %v1741 = vmul.f32 %v1739, %v1484
        %v1742 = vadd.f32 %v1733, %v1740
        %v1743 = vadd.f32 %v1734, %v1741
        %s1744 = sld [smem:[#allocation7 + $0x97]]
        %s1745 = sld [smem:[#allocation7 + $0xc8]]
        %v1746 = vstv %s1744
        %v1747 = vstv %s1745
        %v1748 = vsel %vm437, %v1746, %v1747
        %v1749 = vmul.f32 %v1748, %v1491
        %v1750 = vmul.f32 %v1748, %v1492
        %v1751 = vadd.f32 %v1742, %v1749
        %v1752 = vadd.f32 %v1743, %v1750
        %s1753 = sld [smem:[#allocation7 + $0x98]]
        %s1754 = sld [smem:[#allocation7 + $0xc9]]
        %v1755 = vstv %s1753
        %v1756 = vstv %s1754
        %v1757 = vsel %vm437, %v1755, %v1756
        %v1758 = vmul.f32 %v1757, %v1467
        %v1759 = vmul.f32 %v1757, %v1468
        %v1760 = vadd.f32 %v1751, %v1758
        %v1761 = vadd.f32 %v1752, %v1759
        %s1762 = sld [smem:[#allocation7 + $0x99]]
        %s1763 = sld [smem:[#allocation7 + $0xca]]
        %v1764 = vstv %s1762
        %v1765 = vstv %s1763
        %v1766 = vsel %vm437, %v1764, %v1765
        %v1767 = vmul.f32 %v1766, %v1499
        %v1768 = vmul.f32 %v1766, %v1500
        %v1769 = vadd.f32 %v1760, %v1767
        %v1770 = vadd.f32 %v1761, %v1768
        %s1771 = sld [smem:[#allocation7 + $0x9a]]
        %s1772 = sld [smem:[#allocation7 + $0xcb]]
        %v1773 = vstv %s1771
        %v1774 = vstv %s1772
        %v1775 = vsel %vm437, %v1773, %v1774
        %v1776 = vmul.f32 %v1775, %v1507
        %v1777 = vmul.f32 %v1775, %v1508
        %v1778 = vadd.f32 %v1769, %v1776
        %v1779 = vadd.f32 %v1770, %v1777
        %s1780 = sld [smem:[#allocation7 + $0x9b]]
        %s1781 = sld [smem:[#allocation7 + $0xcc]]
        %v1782 = vstv %s1780
        %v1783 = vstv %s1781
        %v1784 = vsel %vm437, %v1782, %v1783
        %v1785 = vmul.f32 %v1784, %v1515
        %v1786 = vmul.f32 %v1784, %v1516
        %v1787 = vadd.f32 %v1778, %v1785
        %v1788 = vadd.f32 %v1779, %v1786
        %v1789 = vadd.f32 %v1726, %v1787
        %v1790 = vadd.f32 %v1727, %v1788
        %s1791 = sld [smem:[#allocation7 + $0x9c]]
        %s1792 = sld [smem:[#allocation7 + $0xcd]]
        %v1793 = vstv %s1791
        %v1794 = vstv %s1792
        %v1795 = vsel %vm437, %v1793, %v1794
        %v1796 = vmul.f32 %v1795, %v1475
        %v1797 = vmul.f32 %v1795, %v1476
        %s1798 = sld [smem:[#allocation7 + $0x9d]]
        %s1799 = sld [smem:[#allocation7 + $0xce]]
        %v1800 = vstv %s1798
        %v1801 = vstv %s1799
        %v1802 = vsel %vm437, %v1800, %v1801
        %v1803 = vmul.f32 %v1802, %v1483
        %v1804 = vmul.f32 %v1802, %v1484
        %v1805 = vadd.f32 %v1796, %v1803
        %v1806 = vadd.f32 %v1797, %v1804
        %s1807 = sld [smem:[#allocation7 + $0x9e]]
        %s1808 = sld [smem:[#allocation7 + $0xcf]]
        %v1809 = vstv %s1807
        %v1810 = vstv %s1808
        %v1811 = vsel %vm437, %v1809, %v1810
        %v1812 = vmul.f32 %v1811, %v1491
        %v1813 = vmul.f32 %v1811, %v1492
        %v1814 = vadd.f32 %v1805, %v1812
        %v1815 = vadd.f32 %v1806, %v1813
        %s1816 = sld [smem:[#allocation7 + $0x9f]]
        %s1817 = sld [smem:[#allocation7 + $0xd0]]
        %v1818 = vstv %s1816
        %v1819 = vstv %s1817
        %v1820 = vsel %vm437, %v1818, %v1819
        %v1821 = vmul.f32 %v1820, %v1467
        %v1822 = vmul.f32 %v1820, %v1468
        %v1823 = vadd.f32 %v1814, %v1821
        %v1824 = vadd.f32 %v1815, %v1822
        %s1825 = sld [smem:[#allocation7 + $0xa0]]
        %s1826 = sld [smem:[#allocation7 + $0xd1]]
        %v1827 = vstv %s1825
        %v1828 = vstv %s1826
        %v1829 = vsel %vm437, %v1827, %v1828
        %v1830 = vmul.f32 %v1829, %v1499
        %v1831 = vmul.f32 %v1829, %v1500
        %v1832 = vadd.f32 %v1823, %v1830
        %v1833 = vadd.f32 %v1824, %v1831
        %s1834 = sld [smem:[#allocation7 + $0xa1]]
        %s1835 = sld [smem:[#allocation7 + $0xd2]]
        %v1836 = vstv %s1834
        %v1837 = vstv %s1835
        %v1838 = vsel %vm437, %v1836, %v1837
        %v1839 = vmul.f32 %v1838, %v1507
        %v1840 = vmul.f32 %v1838, %v1508
        %v1841 = vadd.f32 %v1832, %v1839
        %v1842 = vadd.f32 %v1833, %v1840
        %s1843 = sld [smem:[#allocation7 + $0xa2]]
        %s1844 = sld [smem:[#allocation7 + $0xd3]]
        %v1845 = vstv %s1843
        %v1846 = vstv %s1844
        %v1847 = vsel %vm437, %v1845, %v1846
        %v1848 = vmul.f32 %v1847, %v1515
        %v1849 = vmul.f32 %v1847, %v1516
        %v1850 = vadd.f32 %v1841, %v1848
        %v1851 = vadd.f32 %v1842, %v1849
        %1852 = vrot.lane.b32.xlu0 %v1850, 112
        %v1853 = vpop.permute.xlu0 %1852
        %1854 = vrot.lane.b32.xlu0 %v1851, 112
        %v1855 = vpop.permute.xlu0 %1854
        %v1856 = vsel %vm1105, %v1853, %v1855
        %v1857 = vsel %vm1105, %v1855, %v1853
        %v1858 = vsel %vm1117, %v1856, 0.0
        %v1859 = vsel %vm1118, %v1857, 0.0
        %v1860 = vadd.f32 %v1789, %v1858
        %v1861 = vadd.f32 %v1790, %v1859
        %s1862 = sld [smem:[#allocation7 + $0xa3]]
        %s1863 = sld [smem:[#allocation7 + $0xd4]]
        %v1864 = vstv %s1862
        %v1865 = vstv %s1863
        %v1866 = vsel %vm437, %v1864, %v1865
        %v1867 = vmul.f32 %v1866, %v1475
        %v1868 = vmul.f32 %v1866, %v1476
        %s1869 = sld [smem:[#allocation7 + $0xa4]]
        %s1870 = sld [smem:[#allocation7 + $0xd5]]
        %v1871 = vstv %s1869
        %v1872 = vstv %s1870
        %v1873 = vsel %vm437, %v1871, %v1872
        %v1874 = vmul.f32 %v1873, %v1483
        %v1875 = vmul.f32 %v1873, %v1484
        %v1876 = vadd.f32 %v1867, %v1874
        %v1877 = vadd.f32 %v1868, %v1875
        %s1878 = sld [smem:[#allocation7 + $0xa5]]
        %s1879 = sld [smem:[#allocation7 + $0xd6]]
        %v1880 = vstv %s1878
        %v1881 = vstv %s1879
        %v1882 = vsel %vm437, %v1880, %v1881
        %v1883 = vmul.f32 %v1882, %v1491
        %v1884 = vmul.f32 %v1882, %v1492
        %v1885 = vadd.f32 %v1876, %v1883
        %v1886 = vadd.f32 %v1877, %v1884
        %s1887 = sld [smem:[#allocation7 + $0xa6]]
        %s1888 = sld [smem:[#allocation7 + $0xd7]]
        %v1889 = vstv %s1887
        %v1890 = vstv %s1888
        %v1891 = vsel %vm437, %v1889, %v1890
        %v1892 = vmul.f32 %v1891, %v1467
        %v1893 = vmul.f32 %v1891, %v1468
        %v1894 = vadd.f32 %v1885, %v1892
        %v1895 = vadd.f32 %v1886, %v1893
        %s1896 = sld [smem:[#allocation7 + $0xa7]]
        %s1897 = sld [smem:[#allocation7 + $0xd8]]
        %v1898 = vstv %s1896
        %v1899 = vstv %s1897
        %v1900 = vsel %vm437, %v1898, %v1899
        %v1901 = vmul.f32 %v1900, %v1499
        %v1902 = vmul.f32 %v1900, %v1500
        %v1903 = vadd.f32 %v1894, %v1901
        %v1904 = vadd.f32 %v1895, %v1902
        %s1905 = sld [smem:[#allocation7 + $0xa8]]
        %s1906 = sld [smem:[#allocation7 + $0xd9]]
        %v1907 = vstv %s1905
        %v1908 = vstv %s1906
        %v1909 = vsel %vm437, %v1907, %v1908
        %v1910 = vmul.f32 %v1909, %v1507
        %v1911 = vmul.f32 %v1909, %v1508
        %v1912 = vadd.f32 %v1903, %v1910
        %v1913 = vadd.f32 %v1904, %v1911
        %s1914 = sld [smem:[#allocation7 + $0xa9]]
        %s1915 = sld [smem:[#allocation7 + $0xda]]
        %v1916 = vstv %s1914
        %v1917 = vstv %s1915
        %v1918 = vsel %vm437, %v1916, %v1917
        %v1919 = vmul.f32 %v1918, %v1515
        %v1920 = vmul.f32 %v1918, %v1516
        %v1921 = vadd.f32 %v1912, %v1919
        %v1922 = vadd.f32 %v1913, %v1920
        %1923 = vrot.lane.b32.xlu0 %v1921, 96
        %v1924 = vpop.permute.xlu0 %1923
        %1925 = vrot.lane.b32.xlu0 %v1922, 96
        %v1926 = vpop.permute.xlu0 %1925
        %v1927 = vsel %vm1188, %v1924, %v1926
        %v1928 = vsel %vm1188, %v1926, %v1924
        %v1929 = vsel %vm1200, %v1927, 0.0
        %v1930 = vsel %vm1201, %v1928, 0.0
        %v1931 = vadd.f32 %v1860, %v1929
        %v1932 = vadd.f32 %v1861, %v1930
        %s1933 = sld [smem:[#allocation7 + $0xaa]]
        %s1934 = sld [smem:[#allocation7 + $0xdb]]
        %v1935 = vstv %s1933
        %v1936 = vstv %s1934
        %v1937 = vsel %vm437, %v1935, %v1936
        %v1938 = vmul.f32 %v1937, %v1475
        %v1939 = vmul.f32 %v1937, %v1476
        %s1940 = sld [smem:[#allocation7 + $0xab]]
        %s1941 = sld [smem:[#allocation7 + $0xdc]]
        %v1942 = vstv %s1940
        %v1943 = vstv %s1941
        %v1944 = vsel %vm437, %v1942, %v1943
        %v1945 = vmul.f32 %v1944, %v1483
        %v1946 = vmul.f32 %v1944, %v1484
        %v1947 = vadd.f32 %v1938, %v1945
        %v1948 = vadd.f32 %v1939, %v1946
        %s1949 = sld [smem:[#allocation7 + $0xac]]
        %s1950 = sld [smem:[#allocation7 + $0xdd]]
        %v1951 = vstv %s1949
        %v1952 = vstv %s1950
        %v1953 = vsel %vm437, %v1951, %v1952
        %v1954 = vmul.f32 %v1953, %v1491
        %v1955 = vmul.f32 %v1953, %v1492
        %v1956 = vadd.f32 %v1947, %v1954
        %v1957 = vadd.f32 %v1948, %v1955
        %s1958 = sld [smem:[#allocation7 + $0xad]]
        %s1959 = sld [smem:[#allocation7 + $0xde]]
        %v1960 = vstv %s1958
        %v1961 = vstv %s1959
        %v1962 = vsel %vm437, %v1960, %v1961
        %v1963 = vmul.f32 %v1962, %v1467
        %v1964 = vmul.f32 %v1962, %v1468
        %v1965 = vadd.f32 %v1956, %v1963
        %v1966 = vadd.f32 %v1957, %v1964
        %s1967 = sld [smem:[#allocation7 + $0xae]]
        %s1968 = sld [smem:[#allocation7 + $0xdf]]
        %v1969 = vstv %s1967
        %v1970 = vstv %s1968
        %v1971 = vsel %vm437, %v1969, %v1970
        %v1972 = vmul.f32 %v1971, %v1499
        %v1973 = vmul.f32 %v1971, %v1500
        %v1974 = vadd.f32 %v1965, %v1972
        %v1975 = vadd.f32 %v1966, %v1973
        %s1976 = sld [smem:[#allocation7 + $0xaf]]
        %s1977 = sld [smem:[#allocation7 + $0xe0]]
        %v1978 = vstv %s1976
        %v1979 = vstv %s1977
        %v1980 = vsel %vm437, %v1978, %v1979
        %v1981 = vmul.f32 %v1980, %v1507
        %v1982 = vmul.f32 %v1980, %v1508
        %v1983 = vadd.f32 %v1974, %v1981
        %v1984 = vadd.f32 %v1975, %v1982
        %s1985 = sld [smem:[#allocation7 + $0xb0]]
        %s1986 = sld [smem:[#allocation7 + $0xe1]]
        %v1987 = vstv %s1985
        %v1988 = vstv %s1986
        %v1989 = vsel %vm437, %v1987, %v1988
        %v1990 = vmul.f32 %v1989, %v1515
        %v1991 = vmul.f32 %v1989, %v1516
        %v1992 = vadd.f32 %v1983, %v1990
        %v1993 = vadd.f32 %v1984, %v1991
        %1994 = vrot.lane.b32.xlu0 %v1992, 80
        %v1995 = vpop.permute.xlu0 %1994
        %1996 = vrot.lane.b32.xlu0 %v1993, 80
        %v1997 = vpop.permute.xlu0 %1996
        %v1998 = vsel %vm1271, %v1995, %v1997
        %v1999 = vsel %vm1271, %v1997, %v1995
        %v2000 = vsel %vm1283, %v1998, 0.0
        %v2001 = vsel %vm1284, %v1999, 0.0
        %v2002 = vadd.f32 %v1931, %v2000
        %v2003 = vadd.f32 %v1932, %v2001
        %v2004 = vsel %vm1289, %v2002, 0.0
        %v2005 = vrot.slane %v2004, 4
        %v2006 = vadd.f32 %v2004, %v2005
        %v2007 = vrot.slane %v2006, 2
        %v2008 = vadd.f32 %v2006, %v2007
        %v2009 = vrot.slane %v2008, 1
        %v2010 = vadd.f32 %v2008, %v2009
        %v2011 = vsel %vm1289, %v2003, 0.0
        %v2012 = vrot.slane %v2011, 4
        %v2013 = vadd.f32 %v2011, %v2012
        %v2014 = vrot.slane %v2013, 2
        %v2015 = vadd.f32 %v2013, %v2014
        %v2016 = vrot.slane %v2015, 1
        %v2017 = vadd.f32 %v2015, %v2016
        %v2018 = vsub.f32 0.0, %v2010
        %v2019 = vsub.f32 0.0, %v2017
        %v2020 = vmul.f32 %v2018, 1.442695
        %v2021 = vpow.pop %v2020
        %v2022 = vmul.f32 %v2019, 1.442695
        %v2023 = vpow.pop %v2022
        %v2024 = vadd.f32 %v2021, 1.0
        %v2025 = vadd.f32 %v2023, 1.0
        %v2026 = vrcp.pop %v2024
        %v2027 = vrcp.pop %v2025
        %v2028 = vmul.f32 %v1439, %v2026
        %v2029 = vmul.f32 %v1440, %v2027
        %2030 = vst [vmem:[#allocation2 + $0x10] sm:$0xff] %v2028
        %2031 = vst [vmem:[#allocation2 + $0x18] sm:$0xff] %v2029
        %2032 = vrot.lane.b32.xlu0 %v2028, 2
        %v2033 = vpop.permute.xlu0 %2032
        %2034 = vrot.lane.b32.xlu0 %v2029, 2
        %v2035 = vpop.permute.xlu0 %2034
        %v2036 = vsel %vm634, %v2033, %v2035
        %v2037 = vsel %vm634, %v2035, %v2033
        %v2038 = vsel %vm646, %v2037, -inf
        %v2039 = vsel %vm647, %v2036, -inf
        %v2040 = vmax.f32 %v2028, %v2038
        %v2041 = vmax.f32 %v2029, %v2039
        %2042 = vrot.lane.b32.xlu0 %v2028, 1
        %v2043 = vpop.permute.xlu0 %2042
        %2044 = vrot.lane.b32.xlu0 %v2029, 1
        %v2045 = vpop.permute.xlu0 %2044
        %v2046 = vsel %vm654, %v2043, %v2045
        %v2047 = vsel %vm654, %v2045, %v2043
        %v2048 = vsel %vm666, %v2047, -inf
        %v2049 = vsel %vm667, %v2046, -inf
        %v2050 = vmax.f32 %v2040, %v2048
        %v2051 = vmax.f32 %v2041, %v2049
        %2052 = vrot.lane.b32.xlu0 %v2028, 127
        %v2053 = vpop.permute.xlu0 %2052
        %2054 = vrot.lane.b32.xlu0 %v2029, 127
        %v2055 = vpop.permute.xlu0 %2054
        %v2056 = vsel %vm674, %v2053, %v2055
        %v2057 = vsel %vm674, %v2055, %v2053
        %v2058 = vsel %vm686, %v2056, -inf
        %v2059 = vsel %vm687, %v2057, -inf
        %v2060 = vmax.f32 %v2050, %v2058
        %v2061 = vmax.f32 %v2051, %v2059
        %2062 = vrot.lane.b32.xlu0 %v2028, 126
        %v2063 = vpop.permute.xlu0 %2062
        %2064 = vrot.lane.b32.xlu0 %v2029, 126
        %v2065 = vpop.permute.xlu0 %2064
        %v2066 = vsel %vm694, %v2063, %v2065
        %v2067 = vsel %vm694, %v2065, %v2063
        %v2068 = vsel %vm706, %v2066, -inf
        %v2069 = vsel %vm707, %v2067, -inf
        %v2070 = vmax.f32 %v2060, %v2068
        %v2071 = vmax.f32 %v2061, %v2069
        %2072 = vrot.lane.b32.xlu0 %v2070, 32
        %v2073 = vpop.permute.xlu0 %2072
        %2074 = vrot.lane.b32.xlu0 %v2071, 32
        %v2075 = vpop.permute.xlu0 %2074
        %v2076 = vsel %vm876, %v2073, %v2075
        %v2077 = vsel %vm876, %v2075, %v2073
        %v2078 = vsel %vm888, %v2077, -inf
        %v2079 = vsel %vm889, %v2076, -inf
        %v2080 = vmax.f32 %v2070, %v2078
        %v2081 = vmax.f32 %v2071, %v2079
        %2082 = vrot.lane.b32.xlu0 %v2070, 16
        %v2083 = vpop.permute.xlu0 %2082
        %2084 = vrot.lane.b32.xlu0 %v2071, 16
        %v2085 = vpop.permute.xlu0 %2084
        %v2086 = vsel %vm959, %v2083, %v2085
        %v2087 = vsel %vm959, %v2085, %v2083
        %v2088 = vsel %vm971, %v2087, -inf
        %v2089 = vsel %vm972, %v2086, -inf
        %v2090 = vmax.f32 %v2080, %v2088
        %v2091 = vmax.f32 %v2081, %v2089
        %2092 = vrot.lane.b32.xlu0 %v2070, 112
        %v2093 = vpop.permute.xlu0 %2092
        %2094 = vrot.lane.b32.xlu0 %v2071, 112
        %v2095 = vpop.permute.xlu0 %2094
        %v2096 = vsel %vm1105, %v2093, %v2095
        %v2097 = vsel %vm1105, %v2095, %v2093
        %v2098 = vsel %vm1117, %v2096, -inf
        %v2099 = vsel %vm1118, %v2097, -inf
        %v2100 = vmax.f32 %v2090, %v2098
        %v2101 = vmax.f32 %v2091, %v2099
        %2102 = vrot.lane.b32.xlu0 %v2070, 96
        %v2103 = vpop.permute.xlu0 %2102
        %2104 = vrot.lane.b32.xlu0 %v2071, 96
        %v2105 = vpop.permute.xlu0 %2104
        %v2106 = vsel %vm1188, %v2103, %v2105
        %v2107 = vsel %vm1188, %v2105, %v2103
        %v2108 = vsel %vm1200, %v2106, -inf
        %v2109 = vsel %vm1201, %v2107, -inf
        %v2110 = vmax.f32 %v2100, %v2108
        %v2111 = vmax.f32 %v2101, %v2109
        %s2112 = scalar_lea.vmem %s5, 16
        %v2113 = vld [vmem:[%s2112] sm:$0xff]
        %s2114 = scalar_lea.vmem %s6, 16
        %v2115 = vld [vmem:[%s2114] sm:$0xff]
        %v2116 = vadd.f32 %v2110, %v2111
        %2117 = vadd.xlane.f32.xlu0 %v2116
        %v2118 = vpop.xlane.xlu0 %2117
        %v2119 = vmul.f32 %v2118, 0.00390625
        %v2120 = vmax.f32 %v2110, %v2111
        %2121 = vmax.xlane.f32.xlu0 %v2120
        %v2122 = vpop.xlane.xlu0 %2121
        %v2123 = vmul.f32 %v2119, %v2113
        %v2124 = vsel %vm546, %v2123, 0.0
        %v2125 = vrot.slane %v2124, 4
        %v2126 = vadd.f32 %v2124, %v2125
        %v2127 = vrot.slane %v2126, 2
        %v2128 = vadd.f32 %v2126, %v2127
        %v2129 = vrot.slane %v2128, 1
        %v2130 = vadd.f32 %v2128, %v2129
        %v2131 = vmax.f32 %v2130, 0.0
        %v2132 = vmul.f32 %v2122, %v2113
        %v2133 = vsel %vm546, %v2132, 0.0
        %v2134 = vrot.slane %v2133, 4
        %v2135 = vadd.f32 %v2133, %v2134
        %v2136 = vrot.slane %v2135, 2
        %v2137 = vadd.f32 %v2135, %v2136
        %v2138 = vrot.slane %v2137, 1
        %v2139 = vadd.f32 %v2137, %v2138
        %v2140 = vmax.f32 %v2139, 0.0
        %v2141 = vadd.f32 %v2131, %v2140
        %v2142 = vmul.f32 %v2115, %v2141
        %v2143 = vsub.f32 0.0, %v2142
        %v2144 = vmul.f32 %v2143, 1.442695
        %v2145 = vpow.pop %v2144
        %v2146 = vadd.f32 %v2145, 1.0
        %v2147 = vrcp.pop %v2146
        %2149 = vset.pattern.permute.xlu0 0
        %2150 = vperm.xlu0 %2149, %v2147
        %v2151 = vpop.permute.xlu0 %2150
        %v2153 = vmul.f32 %v2110, %v2151
        %v2154 = vmul.f32 %v2111, %v2151
        %v2155 = vrot.slane %v2153, 4
        %v2156 = vadd.f32 %v2153, %v2155
        %v2157 = vrot.slane %v2156, 2
        %v2158 = vadd.f32 %v2156, %v2157
        %v2159 = vrot.slane %v2158, 1
        %v2160 = vadd.f32 %v2158, %v2159
        %v2161 = vrot.slane %v2154, 4
        %v2162 = vadd.f32 %v2154, %v2161
        %v2163 = vrot.slane %v2162, 2
        %v2164 = vadd.f32 %v2162, %v2163
        %v2165 = vrot.slane %v2164, 1
        %v2166 = vadd.f32 %v2164, %v2165
        %v2167 = vmul.f32 %v2160, 0.125
        %v2168 = vmul.f32 %v2166, 0.125
        %v2169 = vrot.slane %v2153, 4
        %v2170 = vmax.f32 %v2153, %v2169
        %v2171 = vrot.slane %v2170, 2
        %v2172 = vmax.f32 %v2170, %v2171
        %v2173 = vrot.slane %v2172, 1
        %v2174 = vmax.f32 %v2172, %v2173
        %v2175 = vrot.slane %v2154, 4
        %v2176 = vmax.f32 %v2154, %v2175
        %v2177 = vrot.slane %v2176, 2
        %v2178 = vmax.f32 %v2176, %v2177
        %v2179 = vrot.slane %v2178, 1
        %v2180 = vmax.f32 %v2178, %v2179
        %v2181 = vsel %vm605, %v2167, %v2174
        %v2182 = vsel %vm605, %v2168, %v2180
        %2183 = vrot.lane.b32.xlu0 %v2181, 3
        %v2184 = vpop.permute.xlu0 %2183
        %2185 = vrot.lane.b32.xlu0 %v2182, 3
        %v2186 = vpop.permute.xlu0 %2185
        %v2187 = vsel %vm614, %v2184, %v2186
        %v2188 = vsel %vm614, %v2186, %v2184
        %v2189 = vsel %vm626, %v2188, 0.0
        %v2190 = vsel %vm627, %v2187, 0.0
        %2191 = vrot.lane.b32.xlu0 %v2181, 2
        %v2192 = vpop.permute.xlu0 %2191
        %2193 = vrot.lane.b32.xlu0 %v2182, 2
        %v2194 = vpop.permute.xlu0 %2193
        %v2195 = vsel %vm634, %v2192, %v2194
        %v2196 = vsel %vm634, %v2194, %v2192
        %v2197 = vsel %vm646, %v2196, 0.0
        %v2198 = vsel %vm647, %v2195, 0.0
        %2199 = vrot.lane.b32.xlu0 %v2181, 1
        %v2200 = vpop.permute.xlu0 %2199
        %2201 = vrot.lane.b32.xlu0 %v2182, 1
        %v2202 = vpop.permute.xlu0 %2201
        %v2203 = vsel %vm654, %v2200, %v2202
        %v2204 = vsel %vm654, %v2202, %v2200
        %v2205 = vsel %vm666, %v2204, 0.0
        %v2206 = vsel %vm667, %v2203, 0.0
        %2207 = vrot.lane.b32.xlu0 %v2181, 127
        %v2208 = vpop.permute.xlu0 %2207
        %2209 = vrot.lane.b32.xlu0 %v2182, 127
        %v2210 = vpop.permute.xlu0 %2209
        %v2211 = vsel %vm674, %v2208, %v2210
        %v2212 = vsel %vm674, %v2210, %v2208
        %v2213 = vsel %vm686, %v2211, 0.0
        %v2214 = vsel %vm687, %v2212, 0.0
        %2215 = vrot.lane.b32.xlu0 %v2181, 126
        %v2216 = vpop.permute.xlu0 %2215
        %2217 = vrot.lane.b32.xlu0 %v2182, 126
        %v2218 = vpop.permute.xlu0 %2217
        %v2219 = vsel %vm694, %v2216, %v2218
        %v2220 = vsel %vm694, %v2218, %v2216
        %v2221 = vsel %vm706, %v2219, 0.0
        %v2222 = vsel %vm707, %v2220, 0.0
        %2223 = vrot.lane.b32.xlu0 %v2181, 125
        %v2224 = vpop.permute.xlu0 %2223
        %2225 = vrot.lane.b32.xlu0 %v2182, 125
        %v2226 = vpop.permute.xlu0 %2225
        %v2227 = vsel %vm714, %v2224, %v2226
        %v2228 = vsel %vm714, %v2226, %v2224
        %v2229 = vsel %vm726, %v2227, 0.0
        %v2230 = vsel %vm727, %v2228, 0.0
        %s2231 = sld [smem:[#allocation7 + $0x100]]
        %s2232 = sld [smem:[#allocation7 + $0x131]]
        %v2233 = vstv %s2231
        %v2234 = vstv %s2232
        %v2235 = vsel %vm437, %v2233, %v2234
        %v2236 = vmul.f32 %v2235, %v2189
        %v2237 = vmul.f32 %v2235, %v2190
        %s2238 = sld [smem:[#allocation7 + $0x101]]
        %s2239 = sld [smem:[#allocation7 + $0x132]]
        %v2240 = vstv %s2238
        %v2241 = vstv %s2239
        %v2242 = vsel %vm437, %v2240, %v2241
        %v2243 = vmul.f32 %v2242, %v2197
        %v2244 = vmul.f32 %v2242, %v2198
        %v2245 = vadd.f32 %v2236, %v2243
        %v2246 = vadd.f32 %v2237, %v2244
        %s2247 = sld [smem:[#allocation7 + $0x102]]
        %s2248 = sld [smem:[#allocation7 + $0x133]]
        %v2249 = vstv %s2247
        %v2250 = vstv %s2248
        %v2251 = vsel %vm437, %v2249, %v2250
        %v2252 = vmul.f32 %v2251, %v2205
        %v2253 = vmul.f32 %v2251, %v2206
        %v2254 = vadd.f32 %v2245, %v2252
        %v2255 = vadd.f32 %v2246, %v2253
        %s2256 = sld [smem:[#allocation7 + $0x103]]
        %s2257 = sld [smem:[#allocation7 + $0x134]]
        %v2258 = vstv %s2256
        %v2259 = vstv %s2257
        %v2260 = vsel %vm437, %v2258, %v2259
        %v2261 = vmul.f32 %v2260, %v2181
        %v2262 = vmul.f32 %v2260, %v2182
        %v2263 = vadd.f32 %v2254, %v2261
        %v2264 = vadd.f32 %v2255, %v2262
        %s2265 = sld [smem:[#allocation7 + $0x104]]
        %s2266 = sld [smem:[#allocation7 + $0x135]]
        %v2267 = vstv %s2265
        %v2268 = vstv %s2266
        %v2269 = vsel %vm437, %v2267, %v2268
        %v2270 = vmul.f32 %v2269, %v2213
        %v2271 = vmul.f32 %v2269, %v2214
        %v2272 = vadd.f32 %v2263, %v2270
        %v2273 = vadd.f32 %v2264, %v2271
        %s2274 = sld [smem:[#allocation7 + $0x105]]
        %s2275 = sld [smem:[#allocation7 + $0x136]]
        %v2276 = vstv %s2274
        %v2277 = vstv %s2275
        %v2278 = vsel %vm437, %v2276, %v2277
        %v2279 = vmul.f32 %v2278, %v2221
        %v2280 = vmul.f32 %v2278, %v2222
        %v2281 = vadd.f32 %v2272, %v2279
        %v2282 = vadd.f32 %v2273, %v2280
        %s2283 = sld [smem:[#allocation7 + $0x106]]
        %s2284 = sld [smem:[#allocation7 + $0x137]]
        %v2285 = vstv %s2283
        %v2286 = vstv %s2284
        %v2287 = vsel %vm437, %v2285, %v2286
        %v2288 = vmul.f32 %v2287, %v2229
        %v2289 = vmul.f32 %v2287, %v2230
        %v2290 = vadd.f32 %v2281, %v2288
        %v2291 = vadd.f32 %v2282, %v2289
        %2292 = vrot.lane.b32.xlu0 %v2290, 48
        %v2293 = vpop.permute.xlu0 %2292
        %2294 = vrot.lane.b32.xlu0 %v2291, 48
        %v2295 = vpop.permute.xlu0 %2294
        %v2296 = vsel %vm795, %v2293, %v2295
        %v2297 = vsel %vm795, %v2295, %v2293
        %v2298 = vsel %vm807, %v2297, 0.0
        %v2299 = vsel %vm808, %v2296, 0.0
        %s2300 = sld [smem:[#allocation7 + $0x107]]
        %s2301 = sld [smem:[#allocation7 + $0x138]]
        %v2302 = vstv %s2300
        %v2303 = vstv %s2301
        %v2304 = vsel %vm437, %v2302, %v2303
        %v2305 = vmul.f32 %v2304, %v2189
        %v2306 = vmul.f32 %v2304, %v2190
        %s2307 = sld [smem:[#allocation7 + $0x108]]
        %s2308 = sld [smem:[#allocation7 + $0x139]]
        %v2309 = vstv %s2307
        %v2310 = vstv %s2308
        %v2311 = vsel %vm437, %v2309, %v2310
        %v2312 = vmul.f32 %v2311, %v2197
        %v2313 = vmul.f32 %v2311, %v2198
        %v2314 = vadd.f32 %v2305, %v2312
        %v2315 = vadd.f32 %v2306, %v2313
        %s2316 = sld [smem:[#allocation7 + $0x109]]
        %s2317 = sld [smem:[#allocation7 + $0x13a]]
        %v2318 = vstv %s2316
        %v2319 = vstv %s2317
        %v2320 = vsel %vm437, %v2318, %v2319
        %v2321 = vmul.f32 %v2320, %v2205
        %v2322 = vmul.f32 %v2320, %v2206
        %v2323 = vadd.f32 %v2314, %v2321
        %v2324 = vadd.f32 %v2315, %v2322
        %s2325 = sld [smem:[#allocation7 + $0x10a]]
        %s2326 = sld [smem:[#allocation7 + $0x13b]]
        %v2327 = vstv %s2325
        %v2328 = vstv %s2326
        %v2329 = vsel %vm437, %v2327, %v2328
        %v2330 = vmul.f32 %v2329, %v2181
        %v2331 = vmul.f32 %v2329, %v2182
        %v2332 = vadd.f32 %v2323, %v2330
        %v2333 = vadd.f32 %v2324, %v2331
        %s2334 = sld [smem:[#allocation7 + $0x10b]]
        %s2335 = sld [smem:[#allocation7 + $0x13c]]
        %v2336 = vstv %s2334
        %v2337 = vstv %s2335
        %v2338 = vsel %vm437, %v2336, %v2337
        %v2339 = vmul.f32 %v2338, %v2213
        %v2340 = vmul.f32 %v2338, %v2214
        %v2341 = vadd.f32 %v2332, %v2339
        %v2342 = vadd.f32 %v2333, %v2340
        %s2343 = sld [smem:[#allocation7 + $0x10c]]
        %s2344 = sld [smem:[#allocation7 + $0x13d]]
        %v2345 = vstv %s2343
        %v2346 = vstv %s2344
        %v2347 = vsel %vm437, %v2345, %v2346
        %v2348 = vmul.f32 %v2347, %v2221
        %v2349 = vmul.f32 %v2347, %v2222
        %v2350 = vadd.f32 %v2341, %v2348
        %v2351 = vadd.f32 %v2342, %v2349
        %s2352 = sld [smem:[#allocation7 + $0x10d]]
        %s2353 = sld [smem:[#allocation7 + $0x13e]]
        %v2354 = vstv %s2352
        %v2355 = vstv %s2353
        %v2356 = vsel %vm437, %v2354, %v2355
        %v2357 = vmul.f32 %v2356, %v2229
        %v2358 = vmul.f32 %v2356, %v2230
        %v2359 = vadd.f32 %v2350, %v2357
        %v2360 = vadd.f32 %v2351, %v2358
        %2361 = vrot.lane.b32.xlu0 %v2359, 32
        %v2362 = vpop.permute.xlu0 %2361
        %2363 = vrot.lane.b32.xlu0 %v2360, 32
        %v2364 = vpop.permute.xlu0 %2363
        %v2365 = vsel %vm876, %v2362, %v2364
        %v2366 = vsel %vm876, %v2364, %v2362
        %v2367 = vsel %vm888, %v2366, 0.0
        %v2368 = vsel %vm889, %v2365, 0.0
        %v2369 = vadd.f32 %v2298, %v2367
        %v2370 = vadd.f32 %v2299, %v2368
        %s2371 = sld [smem:[#allocation7 + $0x10e]]
        %s2372 = sld [smem:[#allocation7 + $0x13f]]
        %v2373 = vstv %s2371
        %v2374 = vstv %s2372
        %v2375 = vsel %vm437, %v2373, %v2374
        %v2376 = vmul.f32 %v2375, %v2189
        %v2377 = vmul.f32 %v2375, %v2190
        %s2378 = sld [smem:[#allocation7 + $0x10f]]
        %s2379 = sld [smem:[#allocation7 + $0x140]]
        %v2380 = vstv %s2378
        %v2381 = vstv %s2379
        %v2382 = vsel %vm437, %v2380, %v2381
        %v2383 = vmul.f32 %v2382, %v2197
        %v2384 = vmul.f32 %v2382, %v2198
        %v2385 = vadd.f32 %v2376, %v2383
        %v2386 = vadd.f32 %v2377, %v2384
        %s2387 = sld [smem:[#allocation7 + $0x110]]
        %s2388 = sld [smem:[#allocation7 + $0x141]]
        %v2389 = vstv %s2387
        %v2390 = vstv %s2388
        %v2391 = vsel %vm437, %v2389, %v2390
        %v2392 = vmul.f32 %v2391, %v2205
        %v2393 = vmul.f32 %v2391, %v2206
        %v2394 = vadd.f32 %v2385, %v2392
        %v2395 = vadd.f32 %v2386, %v2393
        %s2396 = sld [smem:[#allocation7 + $0x111]]
        %s2397 = sld [smem:[#allocation7 + $0x142]]
        %v2398 = vstv %s2396
        %v2399 = vstv %s2397
        %v2400 = vsel %vm437, %v2398, %v2399
        %v2401 = vmul.f32 %v2400, %v2181
        %v2402 = vmul.f32 %v2400, %v2182
        %v2403 = vadd.f32 %v2394, %v2401
        %v2404 = vadd.f32 %v2395, %v2402
        %s2405 = sld [smem:[#allocation7 + $0x112]]
        %s2406 = sld [smem:[#allocation7 + $0x143]]
        %v2407 = vstv %s2405
        %v2408 = vstv %s2406
        %v2409 = vsel %vm437, %v2407, %v2408
        %v2410 = vmul.f32 %v2409, %v2213
        %v2411 = vmul.f32 %v2409, %v2214
        %v2412 = vadd.f32 %v2403, %v2410
        %v2413 = vadd.f32 %v2404, %v2411
        %s2414 = sld [smem:[#allocation7 + $0x113]]
        %s2415 = sld [smem:[#allocation7 + $0x144]]
        %v2416 = vstv %s2414
        %v2417 = vstv %s2415
        %v2418 = vsel %vm437, %v2416, %v2417
        %v2419 = vmul.f32 %v2418, %v2221
        %v2420 = vmul.f32 %v2418, %v2222
        %v2421 = vadd.f32 %v2412, %v2419
        %v2422 = vadd.f32 %v2413, %v2420
        %s2423 = sld [smem:[#allocation7 + $0x114]]
        %s2424 = sld [smem:[#allocation7 + $0x145]]
        %v2425 = vstv %s2423
        %v2426 = vstv %s2424
        %v2427 = vsel %vm437, %v2425, %v2426
        %v2428 = vmul.f32 %v2427, %v2229
        %v2429 = vmul.f32 %v2427, %v2230
        %v2430 = vadd.f32 %v2421, %v2428
        %v2431 = vadd.f32 %v2422, %v2429
        %2432 = vrot.lane.b32.xlu0 %v2430, 16
        %v2433 = vpop.permute.xlu0 %2432
        %2434 = vrot.lane.b32.xlu0 %v2431, 16
        %v2435 = vpop.permute.xlu0 %2434
        %v2436 = vsel %vm959, %v2433, %v2435
        %v2437 = vsel %vm959, %v2435, %v2433
        %v2438 = vsel %vm971, %v2437, 0.0
        %v2439 = vsel %vm972, %v2436, 0.0
        %v2440 = vadd.f32 %v2369, %v2438
        %v2441 = vadd.f32 %v2370, %v2439
        %s2442 = sld [smem:[#allocation7 + $0x115]]
        %s2443 = sld [smem:[#allocation7 + $0x146]]
        %v2444 = vstv %s2442
        %v2445 = vstv %s2443
        %v2446 = vsel %vm437, %v2444, %v2445
        %v2447 = vmul.f32 %v2446, %v2189
        %v2448 = vmul.f32 %v2446, %v2190
        %s2449 = sld [smem:[#allocation7 + $0x116]]
        %s2450 = sld [smem:[#allocation7 + $0x147]]
        %v2451 = vstv %s2449
        %v2452 = vstv %s2450
        %v2453 = vsel %vm437, %v2451, %v2452
        %v2454 = vmul.f32 %v2453, %v2197
        %v2455 = vmul.f32 %v2453, %v2198
        %v2456 = vadd.f32 %v2447, %v2454
        %v2457 = vadd.f32 %v2448, %v2455
        %s2458 = sld [smem:[#allocation7 + $0x117]]
        %s2459 = sld [smem:[#allocation7 + $0x148]]
        %v2460 = vstv %s2458
        %v2461 = vstv %s2459
        %v2462 = vsel %vm437, %v2460, %v2461
        %v2463 = vmul.f32 %v2462, %v2205
        %v2464 = vmul.f32 %v2462, %v2206
        %v2465 = vadd.f32 %v2456, %v2463
        %v2466 = vadd.f32 %v2457, %v2464
        %s2467 = sld [smem:[#allocation7 + $0x118]]
        %s2468 = sld [smem:[#allocation7 + $0x149]]
        %v2469 = vstv %s2467
        %v2470 = vstv %s2468
        %v2471 = vsel %vm437, %v2469, %v2470
        %v2472 = vmul.f32 %v2471, %v2181
        %v2473 = vmul.f32 %v2471, %v2182
        %v2474 = vadd.f32 %v2465, %v2472
        %v2475 = vadd.f32 %v2466, %v2473
        %s2476 = sld [smem:[#allocation7 + $0x119]]
        %s2477 = sld [smem:[#allocation7 + $0x14a]]
        %v2478 = vstv %s2476
        %v2479 = vstv %s2477
        %v2480 = vsel %vm437, %v2478, %v2479
        %v2481 = vmul.f32 %v2480, %v2213
        %v2482 = vmul.f32 %v2480, %v2214
        %v2483 = vadd.f32 %v2474, %v2481
        %v2484 = vadd.f32 %v2475, %v2482
        %s2485 = sld [smem:[#allocation7 + $0x11a]]
        %s2486 = sld [smem:[#allocation7 + $0x14b]]
        %v2487 = vstv %s2485
        %v2488 = vstv %s2486
        %v2489 = vsel %vm437, %v2487, %v2488
        %v2490 = vmul.f32 %v2489, %v2221
        %v2491 = vmul.f32 %v2489, %v2222
        %v2492 = vadd.f32 %v2483, %v2490
        %v2493 = vadd.f32 %v2484, %v2491
        %s2494 = sld [smem:[#allocation7 + $0x11b]]
        %s2495 = sld [smem:[#allocation7 + $0x14c]]
        %v2496 = vstv %s2494
        %v2497 = vstv %s2495
        %v2498 = vsel %vm437, %v2496, %v2497
        %v2499 = vmul.f32 %v2498, %v2229
        %v2500 = vmul.f32 %v2498, %v2230
        %v2501 = vadd.f32 %v2492, %v2499
        %v2502 = vadd.f32 %v2493, %v2500
        %v2503 = vadd.f32 %v2440, %v2501
        %v2504 = vadd.f32 %v2441, %v2502
        %s2505 = sld [smem:[#allocation7 + $0x11c]]
        %s2506 = sld [smem:[#allocation7 + $0x14d]]
        %v2507 = vstv %s2505
        %v2508 = vstv %s2506
        %v2509 = vsel %vm437, %v2507, %v2508
        %v2510 = vmul.f32 %v2509, %v2189
        %v2511 = vmul.f32 %v2509, %v2190
        %s2512 = sld [smem:[#allocation7 + $0x11d]]
        %s2513 = sld [smem:[#allocation7 + $0x14e]]
        %v2514 = vstv %s2512
        %v2515 = vstv %s2513
        %v2516 = vsel %vm437, %v2514, %v2515
        %v2517 = vmul.f32 %v2516, %v2197
        %v2518 = vmul.f32 %v2516, %v2198
        %v2519 = vadd.f32 %v2510, %v2517
        %v2520 = vadd.f32 %v2511, %v2518
        %s2521 = sld [smem:[#allocation7 + $0x11e]]
        %s2522 = sld [smem:[#allocation7 + $0x14f]]
        %v2523 = vstv %s2521
        %v2524 = vstv %s2522
        %v2525 = vsel %vm437, %v2523, %v2524
        %v2526 = vmul.f32 %v2525, %v2205
        %v2527 = vmul.f32 %v2525, %v2206
        %v2528 = vadd.f32 %v2519, %v2526
        %v2529 = vadd.f32 %v2520, %v2527
        %s2530 = sld [smem:[#allocation7 + $0x11f]]
        %s2531 = sld [smem:[#allocation7 + $0x150]]
        %v2532 = vstv %s2530
        %v2533 = vstv %s2531
        %v2534 = vsel %vm437, %v2532, %v2533
        %v2535 = vmul.f32 %v2534, %v2181
        %v2536 = vmul.f32 %v2534, %v2182
        %v2537 = vadd.f32 %v2528, %v2535
        %v2538 = vadd.f32 %v2529, %v2536
        %s2539 = sld [smem:[#allocation7 + $0x120]]
        %s2540 = sld [smem:[#allocation7 + $0x151]]
        %v2541 = vstv %s2539
        %v2542 = vstv %s2540
        %v2543 = vsel %vm437, %v2541, %v2542
        %v2544 = vmul.f32 %v2543, %v2213
        %v2545 = vmul.f32 %v2543, %v2214
        %v2546 = vadd.f32 %v2537, %v2544
        %v2547 = vadd.f32 %v2538, %v2545
        %s2548 = sld [smem:[#allocation7 + $0x121]]
        %s2549 = sld [smem:[#allocation7 + $0x152]]
        %v2550 = vstv %s2548
        %v2551 = vstv %s2549
        %v2552 = vsel %vm437, %v2550, %v2551
        %v2553 = vmul.f32 %v2552, %v2221
        %v2554 = vmul.f32 %v2552, %v2222
        %v2555 = vadd.f32 %v2546, %v2553
        %v2556 = vadd.f32 %v2547, %v2554
        %s2557 = sld [smem:[#allocation7 + $0x122]]
        %s2558 = sld [smem:[#allocation7 + $0x153]]
        %v2559 = vstv %s2557
        %v2560 = vstv %s2558
        %v2561 = vsel %vm437, %v2559, %v2560
        %v2562 = vmul.f32 %v2561, %v2229
        %v2563 = vmul.f32 %v2561, %v2230
        %v2564 = vadd.f32 %v2555, %v2562
        %v2565 = vadd.f32 %v2556, %v2563
        %2566 = vrot.lane.b32.xlu0 %v2564, 112
        %v2567 = vpop.permute.xlu0 %2566
        %2568 = vrot.lane.b32.xlu0 %v2565, 112
        %v2569 = vpop.permute.xlu0 %2568
        %v2570 = vsel %vm1105, %v2567, %v2569
        %v2571 = vsel %vm1105, %v2569, %v2567
        %v2572 = vsel %vm1117, %v2570, 0.0
        %v2573 = vsel %vm1118, %v2571, 0.0
        %v2574 = vadd.f32 %v2503, %v2572
        %v2575 = vadd.f32 %v2504, %v2573
        %s2576 = sld [smem:[#allocation7 + $0x123]]
        %s2577 = sld [smem:[#allocation7 + $0x154]]
        %v2578 = vstv %s2576
        %v2579 = vstv %s2577
        %v2580 = vsel %vm437, %v2578, %v2579
        %v2581 = vmul.f32 %v2580, %v2189
        %v2582 = vmul.f32 %v2580, %v2190
        %s2583 = sld [smem:[#allocation7 + $0x124]]
        %s2584 = sld [smem:[#allocation7 + $0x155]]
        %v2585 = vstv %s2583
        %v2586 = vstv %s2584
        %v2587 = vsel %vm437, %v2585, %v2586
        %v2588 = vmul.f32 %v2587, %v2197
        %v2589 = vmul.f32 %v2587, %v2198
        %v2590 = vadd.f32 %v2581, %v2588
        %v2591 = vadd.f32 %v2582, %v2589
        %s2592 = sld [smem:[#allocation7 + $0x125]]
        %s2593 = sld [smem:[#allocation7 + $0x156]]
        %v2594 = vstv %s2592
        %v2595 = vstv %s2593
        %v2596 = vsel %vm437, %v2594, %v2595
        %v2597 = vmul.f32 %v2596, %v2205
        %v2598 = vmul.f32 %v2596, %v2206
        %v2599 = vadd.f32 %v2590, %v2597
        %v2600 = vadd.f32 %v2591, %v2598
        %s2601 = sld [smem:[#allocation7 + $0x126]]
        %s2602 = sld [smem:[#allocation7 + $0x157]]
        %v2603 = vstv %s2601
        %v2604 = vstv %s2602
        %v2605 = vsel %vm437, %v2603, %v2604
        %v2606 = vmul.f32 %v2605, %v2181
        %v2607 = vmul.f32 %v2605, %v2182
        %v2608 = vadd.f32 %v2599, %v2606
        %v2609 = vadd.f32 %v2600, %v2607
        %s2610 = sld [smem:[#allocation7 + $0x127]]
        %s2611 = sld [smem:[#allocation7 + $0x158]]
        %v2612 = vstv %s2610
        %v2613 = vstv %s2611
        %v2614 = vsel %vm437, %v2612, %v2613
        %v2615 = vmul.f32 %v2614, %v2213
        %v2616 = vmul.f32 %v2614, %v2214
        %v2617 = vadd.f32 %v2608, %v2615
        %v2618 = vadd.f32 %v2609, %v2616
        %s2619 = sld [smem:[#allocation7 + $0x128]]
        %s2620 = sld [smem:[#allocation7 + $0x159]]
        %v2621 = vstv %s2619
        %v2622 = vstv %s2620
        %v2623 = vsel %vm437, %v2621, %v2622
        %v2624 = vmul.f32 %v2623, %v2221
        %v2625 = vmul.f32 %v2623, %v2222
        %v2626 = vadd.f32 %v2617, %v2624
        %v2627 = vadd.f32 %v2618, %v2625
        %s2628 = sld [smem:[#allocation7 + $0x129]]
        %s2629 = sld [smem:[#allocation7 + $0x15a]]
        %v2630 = vstv %s2628
        %v2631 = vstv %s2629
        %v2632 = vsel %vm437, %v2630, %v2631
        %v2633 = vmul.f32 %v2632, %v2229
        %v2634 = vmul.f32 %v2632, %v2230
        %v2635 = vadd.f32 %v2626, %v2633
        %v2636 = vadd.f32 %v2627, %v2634
        %2637 = vrot.lane.b32.xlu0 %v2635, 96
        %v2638 = vpop.permute.xlu0 %2637
        %2639 = vrot.lane.b32.xlu0 %v2636, 96
        %v2640 = vpop.permute.xlu0 %2639
        %v2641 = vsel %vm1188, %v2638, %v2640
        %v2642 = vsel %vm1188, %v2640, %v2638
        %v2643 = vsel %vm1200, %v2641, 0.0
        %v2644 = vsel %vm1201, %v2642, 0.0
        %v2645 = vadd.f32 %v2574, %v2643
        %v2646 = vadd.f32 %v2575, %v2644
        %s2647 = sld [smem:[#allocation7 + $0x12a]]
        %s2648 = sld [smem:[#allocation7 + $0x15b]]
        %v2649 = vstv %s2647
        %v2650 = vstv %s2648
        %v2651 = vsel %vm437, %v2649, %v2650
        %v2652 = vmul.f32 %v2651, %v2189
        %v2653 = vmul.f32 %v2651, %v2190
        %s2654 = sld [smem:[#allocation7 + $0x12b]]
        %s2655 = sld [smem:[#allocation7 + $0x15c]]
        %v2656 = vstv %s2654
        %v2657 = vstv %s2655
        %v2658 = vsel %vm437, %v2656, %v2657
        %v2659 = vmul.f32 %v2658, %v2197
        %v2660 = vmul.f32 %v2658, %v2198
        %v2661 = vadd.f32 %v2652, %v2659
        %v2662 = vadd.f32 %v2653, %v2660
        %s2663 = sld [smem:[#allocation7 + $0x12c]]
        %s2664 = sld [smem:[#allocation7 + $0x15d]]
        %v2665 = vstv %s2663
        %v2666 = vstv %s2664
        %v2667 = vsel %vm437, %v2665, %v2666
        %v2668 = vmul.f32 %v2667, %v2205
        %v2669 = vmul.f32 %v2667, %v2206
        %v2670 = vadd.f32 %v2661, %v2668
        %v2671 = vadd.f32 %v2662, %v2669
        %s2672 = sld [smem:[#allocation7 + $0x12d]]
        %s2673 = sld [smem:[#allocation7 + $0x15e]]
        %v2674 = vstv %s2672
        %v2675 = vstv %s2673
        %v2676 = vsel %vm437, %v2674, %v2675
        %v2677 = vmul.f32 %v2676, %v2181
        %v2678 = vmul.f32 %v2676, %v2182
        %v2679 = vadd.f32 %v2670, %v2677
        %v2680 = vadd.f32 %v2671, %v2678
        %s2681 = sld [smem:[#allocation7 + $0x12e]]
        %s2682 = sld [smem:[#allocation7 + $0x15f]]
        %v2683 = vstv %s2681
        %v2684 = vstv %s2682
        %v2685 = vsel %vm437, %v2683, %v2684
        %v2686 = vmul.f32 %v2685, %v2213
        %v2687 = vmul.f32 %v2685, %v2214
        %v2688 = vadd.f32 %v2679, %v2686
        %v2689 = vadd.f32 %v2680, %v2687
        %s2690 = sld [smem:[#allocation7 + $0x12f]]
        %s2691 = sld [smem:[#allocation7 + $0x160]]
        %v2692 = vstv %s2690
        %v2693 = vstv %s2691
        %v2694 = vsel %vm437, %v2692, %v2693
        %v2695 = vmul.f32 %v2694, %v2221
        %v2696 = vmul.f32 %v2694, %v2222
        %v2697 = vadd.f32 %v2688, %v2695
        %v2698 = vadd.f32 %v2689, %v2696
        %s2699 = sld [smem:[#allocation7 + $0x130]]
        %s2700 = sld [smem:[#allocation7 + $0x161]]
        %v2701 = vstv %s2699
        %v2702 = vstv %s2700
        %v2703 = vsel %vm437, %v2701, %v2702
        %v2704 = vmul.f32 %v2703, %v2229
        %v2705 = vmul.f32 %v2703, %v2230
        %v2706 = vadd.f32 %v2697, %v2704
        %v2707 = vadd.f32 %v2698, %v2705
        %2708 = vrot.lane.b32.xlu0 %v2706, 80
        %v2709 = vpop.permute.xlu0 %2708
        %2710 = vrot.lane.b32.xlu0 %v2707, 80
        %v2711 = vpop.permute.xlu0 %2710
        %v2712 = vsel %vm1271, %v2709, %v2711
        %v2713 = vsel %vm1271, %v2711, %v2709
        %v2714 = vsel %vm1283, %v2712, 0.0
        %v2715 = vsel %vm1284, %v2713, 0.0
        %v2716 = vadd.f32 %v2645, %v2714
        %v2717 = vadd.f32 %v2646, %v2715
        %v2718 = vsel %vm1289, %v2716, 0.0
        %v2719 = vrot.slane %v2718, 4
        %v2720 = vadd.f32 %v2718, %v2719
        %v2721 = vrot.slane %v2720, 2
        %v2722 = vadd.f32 %v2720, %v2721
        %v2723 = vrot.slane %v2722, 1
        %v2724 = vadd.f32 %v2722, %v2723
        %v2725 = vsel %vm1289, %v2717, 0.0
        %v2726 = vrot.slane %v2725, 4
        %v2727 = vadd.f32 %v2725, %v2726
        %v2728 = vrot.slane %v2727, 2
        %v2729 = vadd.f32 %v2727, %v2728
        %v2730 = vrot.slane %v2729, 1
        %v2731 = vadd.f32 %v2729, %v2730
        %v2732 = vsub.f32 0.0, %v2724
        %v2733 = vsub.f32 0.0, %v2731
        %v2734 = vmul.f32 %v2732, 1.442695
        %v2735 = vpow.pop %v2734
        %v2736 = vmul.f32 %v2733, 1.442695
        %v2737 = vpow.pop %v2736
        %v2738 = vadd.f32 %v2735, 1.0
        %v2739 = vadd.f32 %v2737, 1.0
        %v2740 = vrcp.pop %v2738
        %v2741 = vrcp.pop %v2739
        %v2742 = vmul.f32 %v2153, %v2740
        %v2743 = vmul.f32 %v2154, %v2741
        %2744 = vst [vmem:[#allocation2 + $0x20] sm:$0xff] %v2742
        %2745 = vst [vmem:[#allocation2 + $0x28] sm:$0xff] %v2743
        %2746 = vrot.lane.b32.xlu0 %v2742, 2
        %v2747 = vpop.permute.xlu0 %2746
        %2748 = vrot.lane.b32.xlu0 %v2743, 2
        %v2749 = vpop.permute.xlu0 %2748
        %v2750 = vsel %vm634, %v2747, %v2749
        %v2751 = vsel %vm634, %v2749, %v2747
        %v2752 = vsel %vm646, %v2751, -inf
        %v2753 = vsel %vm647, %v2750, -inf
        %v2754 = vmax.f32 %v2742, %v2752
        %v2755 = vmax.f32 %v2743, %v2753
        %2756 = vrot.lane.b32.xlu0 %v2742, 1
        %v2757 = vpop.permute.xlu0 %2756
        %2758 = vrot.lane.b32.xlu0 %v2743, 1
        %v2759 = vpop.permute.xlu0 %2758
        %v2760 = vsel %vm654, %v2757, %v2759
        %v2761 = vsel %vm654, %v2759, %v2757
        %v2762 = vsel %vm666, %v2761, -inf
        %v2763 = vsel %vm667, %v2760, -inf
        %v2764 = vmax.f32 %v2754, %v2762
        %v2765 = vmax.f32 %v2755, %v2763
        %2766 = vrot.lane.b32.xlu0 %v2742, 127
        %v2767 = vpop.permute.xlu0 %2766
        %2768 = vrot.lane.b32.xlu0 %v2743, 127
        %v2769 = vpop.permute.xlu0 %2768
        %v2770 = vsel %vm674, %v2767, %v2769
        %v2771 = vsel %vm674, %v2769, %v2767
        %v2772 = vsel %vm686, %v2770, -inf
        %v2773 = vsel %vm687, %v2771, -inf
        %v2774 = vmax.f32 %v2764, %v2772
        %v2775 = vmax.f32 %v2765, %v2773
        %2776 = vrot.lane.b32.xlu0 %v2742, 126
        %v2777 = vpop.permute.xlu0 %2776
        %2778 = vrot.lane.b32.xlu0 %v2743, 126
        %v2779 = vpop.permute.xlu0 %2778
        %v2780 = vsel %vm694, %v2777, %v2779
        %v2781 = vsel %vm694, %v2779, %v2777
        %v2782 = vsel %vm706, %v2780, -inf
        %v2783 = vsel %vm707, %v2781, -inf
        %v2784 = vmax.f32 %v2774, %v2782
        %v2785 = vmax.f32 %v2775, %v2783
        %2786 = vrot.lane.b32.xlu0 %v2784, 32
        %v2787 = vpop.permute.xlu0 %2786
        %2788 = vrot.lane.b32.xlu0 %v2785, 32
        %v2789 = vpop.permute.xlu0 %2788
        %v2790 = vsel %vm876, %v2787, %v2789
        %v2791 = vsel %vm876, %v2789, %v2787
        %v2792 = vsel %vm888, %v2791, -inf
        %v2793 = vsel %vm889, %v2790, -inf
        %v2794 = vmax.f32 %v2784, %v2792
        %v2795 = vmax.f32 %v2785, %v2793
        %2796 = vrot.lane.b32.xlu0 %v2784, 16
        %v2797 = vpop.permute.xlu0 %2796
        %2798 = vrot.lane.b32.xlu0 %v2785, 16
        %v2799 = vpop.permute.xlu0 %2798
        %v2800 = vsel %vm959, %v2797, %v2799
        %v2801 = vsel %vm959, %v2799, %v2797
        %v2802 = vsel %vm971, %v2801, -inf
        %v2803 = vsel %vm972, %v2800, -inf
        %v2804 = vmax.f32 %v2794, %v2802
        %v2805 = vmax.f32 %v2795, %v2803
        %2806 = vrot.lane.b32.xlu0 %v2784, 112
        %v2807 = vpop.permute.xlu0 %2806
        %2808 = vrot.lane.b32.xlu0 %v2785, 112
        %v2809 = vpop.permute.xlu0 %2808
        %v2810 = vsel %vm1105, %v2807, %v2809
        %v2811 = vsel %vm1105, %v2809, %v2807
        %v2812 = vsel %vm1117, %v2810, -inf
        %v2813 = vsel %vm1118, %v2811, -inf
        %v2814 = vmax.f32 %v2804, %v2812
        %v2815 = vmax.f32 %v2805, %v2813
        %2816 = vrot.lane.b32.xlu0 %v2784, 96
        %v2817 = vpop.permute.xlu0 %2816
        %2818 = vrot.lane.b32.xlu0 %v2785, 96
        %v2819 = vpop.permute.xlu0 %2818
        %v2820 = vsel %vm1188, %v2817, %v2819
        %v2821 = vsel %vm1188, %v2819, %v2817
        %v2822 = vsel %vm1200, %v2820, -inf
        %v2823 = vsel %vm1201, %v2821, -inf
        %v2824 = vmax.f32 %v2814, %v2822
        %v2825 = vmax.f32 %v2815, %v2823
        %s2826 = scalar_lea.vmem %s5, 24
        %v2827 = vld [vmem:[%s2826] sm:$0xff]
        %s2828 = scalar_lea.vmem %s6, 24
        %v2829 = vld [vmem:[%s2828] sm:$0xff]
        %v2830 = vadd.f32 %v2824, %v2825
        %2831 = vadd.xlane.f32.xlu0 %v2830
        %v2832 = vpop.xlane.xlu0 %2831
        %v2833 = vmul.f32 %v2832, 0.00390625
        %v2834 = vmax.f32 %v2824, %v2825
        %2835 = vmax.xlane.f32.xlu0 %v2834
        %v2836 = vpop.xlane.xlu0 %2835
        %v2837 = vmul.f32 %v2833, %v2827
        %v2838 = vsel %vm546, %v2837, 0.0
        %v2839 = vrot.slane %v2838, 4
        %v2840 = vadd.f32 %v2838, %v2839
        %v2841 = vrot.slane %v2840, 2
        %v2842 = vadd.f32 %v2840, %v2841
        %v2843 = vrot.slane %v2842, 1
        %v2844 = vadd.f32 %v2842, %v2843
        %v2845 = vmax.f32 %v2844, 0.0
        %v2846 = vmul.f32 %v2836, %v2827
        %v2847 = vsel %vm546, %v2846, 0.0
        %v2848 = vrot.slane %v2847, 4
        %v2849 = vadd.f32 %v2847, %v2848
        %v2850 = vrot.slane %v2849, 2
        %v2851 = vadd.f32 %v2849, %v2850
        %v2852 = vrot.slane %v2851, 1
        %v2853 = vadd.f32 %v2851, %v2852
        %v2854 = vmax.f32 %v2853, 0.0
        %v2855 = vadd.f32 %v2845, %v2854
        %v2856 = vmul.f32 %v2829, %v2855
        %v2857 = vsub.f32 0.0, %v2856
        %v2858 = vmul.f32 %v2857, 1.442695
        %v2859 = vpow.pop %v2858
        %v2860 = vadd.f32 %v2859, 1.0
        %v2861 = vrcp.pop %v2860
        %2863 = vset.pattern.permute.xlu0 0
        %2864 = vperm.xlu0 %2863, %v2861
        %v2865 = vpop.permute.xlu0 %2864
        %v2867 = vmul.f32 %v2824, %v2865
        %v2868 = vmul.f32 %v2825, %v2865
        %v2869 = vrot.slane %v2867, 4
        %v2870 = vadd.f32 %v2867, %v2869
        %v2871 = vrot.slane %v2870, 2
        %v2872 = vadd.f32 %v2870, %v2871
        %v2873 = vrot.slane %v2872, 1
        %v2874 = vadd.f32 %v2872, %v2873
        %v2875 = vrot.slane %v2868, 4
        %v2876 = vadd.f32 %v2868, %v2875
        %v2877 = vrot.slane %v2876, 2
        %v2878 = vadd.f32 %v2876, %v2877
        %v2879 = vrot.slane %v2878, 1
        %v2880 = vadd.f32 %v2878, %v2879
        %v2881 = vmul.f32 %v2874, 0.125
        %v2882 = vmul.f32 %v2880, 0.125
        %v2883 = vrot.slane %v2867, 4
        %v2884 = vmax.f32 %v2867, %v2883
        %v2885 = vrot.slane %v2884, 2
        %v2886 = vmax.f32 %v2884, %v2885
        %v2887 = vrot.slane %v2886, 1
        %v2888 = vmax.f32 %v2886, %v2887
        %v2889 = vrot.slane %v2868, 4
        %v2890 = vmax.f32 %v2868, %v2889
        %v2891 = vrot.slane %v2890, 2
        %v2892 = vmax.f32 %v2890, %v2891
        %v2893 = vrot.slane %v2892, 1
        %v2894 = vmax.f32 %v2892, %v2893
        %v2895 = vsel %vm605, %v2881, %v2888
        %v2896 = vsel %vm605, %v2882, %v2894
        %2897 = vrot.lane.b32.xlu0 %v2895, 3
        %v2898 = vpop.permute.xlu0 %2897
        %2899 = vrot.lane.b32.xlu0 %v2896, 3
        %v2900 = vpop.permute.xlu0 %2899
        %v2901 = vsel %vm614, %v2898, %v2900
        %v2902 = vsel %vm614, %v2900, %v2898
        %v2903 = vsel %vm626, %v2902, 0.0
        %v2904 = vsel %vm627, %v2901, 0.0
        %2905 = vrot.lane.b32.xlu0 %v2895, 2
        %v2906 = vpop.permute.xlu0 %2905
        %2907 = vrot.lane.b32.xlu0 %v2896, 2
        %v2908 = vpop.permute.xlu0 %2907
        %v2909 = vsel %vm634, %v2906, %v2908
        %v2910 = vsel %vm634, %v2908, %v2906
        %v2911 = vsel %vm646, %v2910, 0.0
        %v2912 = vsel %vm647, %v2909, 0.0
        %2913 = vrot.lane.b32.xlu0 %v2895, 1
        %v2914 = vpop.permute.xlu0 %2913
        %2915 = vrot.lane.b32.xlu0 %v2896, 1
        %v2916 = vpop.permute.xlu0 %2915
        %v2917 = vsel %vm654, %v2914, %v2916
        %v2918 = vsel %vm654, %v2916, %v2914
        %v2919 = vsel %vm666, %v2918, 0.0
        %v2920 = vsel %vm667, %v2917, 0.0
        %2921 = vrot.lane.b32.xlu0 %v2895, 127
        %v2922 = vpop.permute.xlu0 %2921
        %2923 = vrot.lane.b32.xlu0 %v2896, 127
        %v2924 = vpop.permute.xlu0 %2923
        %v2925 = vsel %vm674, %v2922, %v2924
        %v2926 = vsel %vm674, %v2924, %v2922
        %v2927 = vsel %vm686, %v2925, 0.0
        %v2928 = vsel %vm687, %v2926, 0.0
        %2929 = vrot.lane.b32.xlu0 %v2895, 126
        %v2930 = vpop.permute.xlu0 %2929
        %2931 = vrot.lane.b32.xlu0 %v2896, 126
        %v2932 = vpop.permute.xlu0 %2931
        %v2933 = vsel %vm694, %v2930, %v2932
        %v2934 = vsel %vm694, %v2932, %v2930
        %v2935 = vsel %vm706, %v2933, 0.0
        %v2936 = vsel %vm707, %v2934, 0.0
        %2937 = vrot.lane.b32.xlu0 %v2895, 125
        %v2938 = vpop.permute.xlu0 %2937
        %2939 = vrot.lane.b32.xlu0 %v2896, 125
        %v2940 = vpop.permute.xlu0 %2939
        %v2941 = vsel %vm714, %v2938, %v2940
        %v2942 = vsel %vm714, %v2940, %v2938
        %v2943 = vsel %vm726, %v2941, 0.0
        %v2944 = vsel %vm727, %v2942, 0.0
        %s2945 = sld [smem:[#allocation7 + $0x180]]
        %s2946 = sld [smem:[#allocation7 + $0x1b1]]
        %v2947 = vstv %s2945
        %v2948 = vstv %s2946
        %v2949 = vsel %vm437, %v2947, %v2948
        %v2950 = vmul.f32 %v2949, %v2903
        %v2951 = vmul.f32 %v2949, %v2904
        %s2952 = sld [smem:[#allocation7 + $0x181]]
        %s2953 = sld [smem:[#allocation7 + $0x1b2]]
        %v2954 = vstv %s2952
        %v2955 = vstv %s2953
        %v2956 = vsel %vm437, %v2954, %v2955
        %v2957 = vmul.f32 %v2956, %v2911
        %v2958 = vmul.f32 %v2956, %v2912
        %v2959 = vadd.f32 %v2950, %v2957
        %v2960 = vadd.f32 %v2951, %v2958
        %s2961 = sld [smem:[#allocation7 + $0x182]]
        %s2962 = sld [smem:[#allocation7 + $0x1b3]]
        %v2963 = vstv %s2961
        %v2964 = vstv %s2962
        %v2965 = vsel %vm437, %v2963, %v2964
        %v2966 = vmul.f32 %v2965, %v2919
        %v2967 = vmul.f32 %v2965, %v2920
        %v2968 = vadd.f32 %v2959, %v2966
        %v2969 = vadd.f32 %v2960, %v2967
        %s2970 = sld [smem:[#allocation7 + $0x183]]
        %s2971 = sld [smem:[#allocation7 + $0x1b4]]
        %v2972 = vstv %s2970
        %v2973 = vstv %s2971
        %v2974 = vsel %vm437, %v2972, %v2973
        %v2975 = vmul.f32 %v2974, %v2895
        %v2976 = vmul.f32 %v2974, %v2896
        %v2977 = vadd.f32 %v2968, %v2975
        %v2978 = vadd.f32 %v2969, %v2976
        %s2979 = sld [smem:[#allocation7 + $0x184]]
        %s2980 = sld [smem:[#allocation7 + $0x1b5]]
        %v2981 = vstv %s2979
        %v2982 = vstv %s2980
        %v2983 = vsel %vm437, %v2981, %v2982
        %v2984 = vmul.f32 %v2983, %v2927
        %v2985 = vmul.f32 %v2983, %v2928
        %v2986 = vadd.f32 %v2977, %v2984
        %v2987 = vadd.f32 %v2978, %v2985
        %s2988 = sld [smem:[#allocation7 + $0x185]]
        %s2989 = sld [smem:[#allocation7 + $0x1b6]]
        %v2990 = vstv %s2988
        %v2991 = vstv %s2989
        %v2992 = vsel %vm437, %v2990, %v2991
        %v2993 = vmul.f32 %v2992, %v2935
        %v2994 = vmul.f32 %v2992, %v2936
        %v2995 = vadd.f32 %v2986, %v2993
        %v2996 = vadd.f32 %v2987, %v2994
        %s2997 = sld [smem:[#allocation7 + $0x186]]
        %s2998 = sld [smem:[#allocation7 + $0x1b7]]
        %v2999 = vstv %s2997
        %v3000 = vstv %s2998
        %v3001 = vsel %vm437, %v2999, %v3000
        %v3002 = vmul.f32 %v3001, %v2943
        %v3003 = vmul.f32 %v3001, %v2944
        %v3004 = vadd.f32 %v2995, %v3002
        %v3005 = vadd.f32 %v2996, %v3003
        %3006 = vrot.lane.b32.xlu0 %v3004, 48
        %v3007 = vpop.permute.xlu0 %3006
        %3008 = vrot.lane.b32.xlu0 %v3005, 48
        %v3009 = vpop.permute.xlu0 %3008
        %v3010 = vsel %vm795, %v3007, %v3009
        %v3011 = vsel %vm795, %v3009, %v3007
        %v3012 = vsel %vm807, %v3011, 0.0
        %v3013 = vsel %vm808, %v3010, 0.0
        %s3014 = sld [smem:[#allocation7 + $0x187]]
        %s3015 = sld [smem:[#allocation7 + $0x1b8]]
        %v3016 = vstv %s3014
        %v3017 = vstv %s3015
        %v3018 = vsel %vm437, %v3016, %v3017
        %v3019 = vmul.f32 %v3018, %v2903
        %v3020 = vmul.f32 %v3018, %v2904
        %s3021 = sld [smem:[#allocation7 + $0x188]]
        %s3022 = sld [smem:[#allocation7 + $0x1b9]]
        %v3023 = vstv %s3021
        %v3024 = vstv %s3022
        %v3025 = vsel %vm437, %v3023, %v3024
        %v3026 = vmul.f32 %v3025, %v2911
        %v3027 = vmul.f32 %v3025, %v2912
        %v3028 = vadd.f32 %v3019, %v3026
        %v3029 = vadd.f32 %v3020, %v3027
        %s3030 = sld [smem:[#allocation7 + $0x189]]
        %s3031 = sld [smem:[#allocation7 + $0x1ba]]
        %v3032 = vstv %s3030
        %v3033 = vstv %s3031
        %v3034 = vsel %vm437, %v3032, %v3033
        %v3035 = vmul.f32 %v3034, %v2919
        %v3036 = vmul.f32 %v3034, %v2920
        %v3037 = vadd.f32 %v3028, %v3035
        %v3038 = vadd.f32 %v3029, %v3036
        %s3039 = sld [smem:[#allocation7 + $0x18a]]
        %s3040 = sld [smem:[#allocation7 + $0x1bb]]
        %v3041 = vstv %s3039
        %v3042 = vstv %s3040
        %v3043 = vsel %vm437, %v3041, %v3042
        %v3044 = vmul.f32 %v3043, %v2895
        %v3045 = vmul.f32 %v3043, %v2896
        %v3046 = vadd.f32 %v3037, %v3044
        %v3047 = vadd.f32 %v3038, %v3045
        %s3048 = sld [smem:[#allocation7 + $0x18b]]
        %s3049 = sld [smem:[#allocation7 + $0x1bc]]
        %v3050 = vstv %s3048
        %v3051 = vstv %s3049
        %v3052 = vsel %vm437, %v3050, %v3051
        %v3053 = vmul.f32 %v3052, %v2927
        %v3054 = vmul.f32 %v3052, %v2928
        %v3055 = vadd.f32 %v3046, %v3053
        %v3056 = vadd.f32 %v3047, %v3054
        %s3057 = sld [smem:[#allocation7 + $0x18c]]
        %s3058 = sld [smem:[#allocation7 + $0x1bd]]
        %v3059 = vstv %s3057
        %v3060 = vstv %s3058
        %v3061 = vsel %vm437, %v3059, %v3060
        %v3062 = vmul.f32 %v3061, %v2935
        %v3063 = vmul.f32 %v3061, %v2936
        %v3064 = vadd.f32 %v3055, %v3062
        %v3065 = vadd.f32 %v3056, %v3063
        %s3066 = sld [smem:[#allocation7 + $0x18d]]
        %s3067 = sld [smem:[#allocation7 + $0x1be]]
        %v3068 = vstv %s3066
        %v3069 = vstv %s3067
        %v3070 = vsel %vm437, %v3068, %v3069
        %v3071 = vmul.f32 %v3070, %v2943
        %v3072 = vmul.f32 %v3070, %v2944
        %v3073 = vadd.f32 %v3064, %v3071
        %v3074 = vadd.f32 %v3065, %v3072
        %3075 = vrot.lane.b32.xlu0 %v3073, 32
        %v3076 = vpop.permute.xlu0 %3075
        %3077 = vrot.lane.b32.xlu0 %v3074, 32
        %v3078 = vpop.permute.xlu0 %3077
        %v3079 = vsel %vm876, %v3076, %v3078
        %v3080 = vsel %vm876, %v3078, %v3076
        %v3081 = vsel %vm888, %v3080, 0.0
        %v3082 = vsel %vm889, %v3079, 0.0
        %v3083 = vadd.f32 %v3012, %v3081
        %v3084 = vadd.f32 %v3013, %v3082
        %s3085 = sld [smem:[#allocation7 + $0x18e]]
        %s3086 = sld [smem:[#allocation7 + $0x1bf]]
        %v3087 = vstv %s3085
        %v3088 = vstv %s3086
        %v3089 = vsel %vm437, %v3087, %v3088
        %v3090 = vmul.f32 %v3089, %v2903
        %v3091 = vmul.f32 %v3089, %v2904
        %s3092 = sld [smem:[#allocation7 + $0x18f]]
        %s3093 = sld [smem:[#allocation7 + $0x1c0]]
        %v3094 = vstv %s3092
        %v3095 = vstv %s3093
        %v3096 = vsel %vm437, %v3094, %v3095
        %v3097 = vmul.f32 %v3096, %v2911
        %v3098 = vmul.f32 %v3096, %v2912
        %v3099 = vadd.f32 %v3090, %v3097
        %v3100 = vadd.f32 %v3091, %v3098
        %s3101 = sld [smem:[#allocation7 + $0x190]]
        %s3102 = sld [smem:[#allocation7 + $0x1c1]]
        %v3103 = vstv %s3101
        %v3104 = vstv %s3102
        %v3105 = vsel %vm437, %v3103, %v3104
        %v3106 = vmul.f32 %v3105, %v2919
        %v3107 = vmul.f32 %v3105, %v2920
        %v3108 = vadd.f32 %v3099, %v3106
        %v3109 = vadd.f32 %v3100, %v3107
        %s3110 = sld [smem:[#allocation7 + $0x191]]
        %s3111 = sld [smem:[#allocation7 + $0x1c2]]
        %v3112 = vstv %s3110
        %v3113 = vstv %s3111
        %v3114 = vsel %vm437, %v3112, %v3113
        %v3115 = vmul.f32 %v3114, %v2895
        %v3116 = vmul.f32 %v3114, %v2896
        %v3117 = vadd.f32 %v3108, %v3115
        %v3118 = vadd.f32 %v3109, %v3116
        %s3119 = sld [smem:[#allocation7 + $0x192]]
        %s3120 = sld [smem:[#allocation7 + $0x1c3]]
        %v3121 = vstv %s3119
        %v3122 = vstv %s3120
        %v3123 = vsel %vm437, %v3121, %v3122
        %v3124 = vmul.f32 %v3123, %v2927
        %v3125 = vmul.f32 %v3123, %v2928
        %v3126 = vadd.f32 %v3117, %v3124
        %v3127 = vadd.f32 %v3118, %v3125
        %s3128 = sld [smem:[#allocation7 + $0x193]]
        %s3129 = sld [smem:[#allocation7 + $0x1c4]]
        %v3130 = vstv %s3128
        %v3131 = vstv %s3129
        %v3132 = vsel %vm437, %v3130, %v3131
        %v3133 = vmul.f32 %v3132, %v2935
        %v3134 = vmul.f32 %v3132, %v2936
        %v3135 = vadd.f32 %v3126, %v3133
        %v3136 = vadd.f32 %v3127, %v3134
        %s3137 = sld [smem:[#allocation7 + $0x194]]
        %s3138 = sld [smem:[#allocation7 + $0x1c5]]
        %v3139 = vstv %s3137
        %v3140 = vstv %s3138
        %v3141 = vsel %vm437, %v3139, %v3140
        %v3142 = vmul.f32 %v3141, %v2943
        %v3143 = vmul.f32 %v3141, %v2944
        %v3144 = vadd.f32 %v3135, %v3142
        %v3145 = vadd.f32 %v3136, %v3143
        %3146 = vrot.lane.b32.xlu0 %v3144, 16
        %v3147 = vpop.permute.xlu0 %3146
        %3148 = vrot.lane.b32.xlu0 %v3145, 16
        %v3149 = vpop.permute.xlu0 %3148
        %v3150 = vsel %vm959, %v3147, %v3149
        %v3151 = vsel %vm959, %v3149, %v3147
        %v3152 = vsel %vm971, %v3151, 0.0
        %v3153 = vsel %vm972, %v3150, 0.0
        %v3154 = vadd.f32 %v3083, %v3152
        %v3155 = vadd.f32 %v3084, %v3153
        %s3156 = sld [smem:[#allocation7 + $0x195]]
        %s3157 = sld [smem:[#allocation7 + $0x1c6]]
        %v3158 = vstv %s3156
        %v3159 = vstv %s3157
        %v3160 = vsel %vm437, %v3158, %v3159
        %v3161 = vmul.f32 %v3160, %v2903
        %v3162 = vmul.f32 %v3160, %v2904
        %s3163 = sld [smem:[#allocation7 + $0x196]]
        %s3164 = sld [smem:[#allocation7 + $0x1c7]]
        %v3165 = vstv %s3163
        %v3166 = vstv %s3164
        %v3167 = vsel %vm437, %v3165, %v3166
        %v3168 = vmul.f32 %v3167, %v2911
        %v3169 = vmul.f32 %v3167, %v2912
        %v3170 = vadd.f32 %v3161, %v3168
        %v3171 = vadd.f32 %v3162, %v3169
        %s3172 = sld [smem:[#allocation7 + $0x197]]
        %s3173 = sld [smem:[#allocation7 + $0x1c8]]
        %v3174 = vstv %s3172
        %v3175 = vstv %s3173
        %v3176 = vsel %vm437, %v3174, %v3175
        %v3177 = vmul.f32 %v3176, %v2919
        %v3178 = vmul.f32 %v3176, %v2920
        %v3179 = vadd.f32 %v3170, %v3177
        %v3180 = vadd.f32 %v3171, %v3178
        %s3181 = sld [smem:[#allocation7 + $0x198]]
        %s3182 = sld [smem:[#allocation7 + $0x1c9]]
        %v3183 = vstv %s3181
        %v3184 = vstv %s3182
        %v3185 = vsel %vm437, %v3183, %v3184
        %v3186 = vmul.f32 %v3185, %v2895
        %v3187 = vmul.f32 %v3185, %v2896
        %v3188 = vadd.f32 %v3179, %v3186
        %v3189 = vadd.f32 %v3180, %v3187
        %s3190 = sld [smem:[#allocation7 + $0x199]]
        %s3191 = sld [smem:[#allocation7 + $0x1ca]]
        %v3192 = vstv %s3190
        %v3193 = vstv %s3191
        %v3194 = vsel %vm437, %v3192, %v3193
        %v3195 = vmul.f32 %v3194, %v2927
        %v3196 = vmul.f32 %v3194, %v2928
        %v3197 = vadd.f32 %v3188, %v3195
        %v3198 = vadd.f32 %v3189, %v3196
        %s3199 = sld [smem:[#allocation7 + $0x19a]]
        %s3200 = sld [smem:[#allocation7 + $0x1cb]]
        %v3201 = vstv %s3199
        %v3202 = vstv %s3200
        %v3203 = vsel %vm437, %v3201, %v3202
        %v3204 = vmul.f32 %v3203, %v2935
        %v3205 = vmul.f32 %v3203, %v2936
        %v3206 = vadd.f32 %v3197, %v3204
        %v3207 = vadd.f32 %v3198, %v3205
        %s3208 = sld [smem:[#allocation7 + $0x19b]]
        %s3209 = sld [smem:[#allocation7 + $0x1cc]]
        %v3210 = vstv %s3208
        %v3211 = vstv %s3209
        %v3212 = vsel %vm437, %v3210, %v3211
        %v3213 = vmul.f32 %v3212, %v2943
        %v3214 = vmul.f32 %v3212, %v2944
        %v3215 = vadd.f32 %v3206, %v3213
        %v3216 = vadd.f32 %v3207, %v3214
        %v3217 = vadd.f32 %v3154, %v3215
        %v3218 = vadd.f32 %v3155, %v3216
        %s3219 = sld [smem:[#allocation7 + $0x19c]]
        %s3220 = sld [smem:[#allocation7 + $0x1cd]]
        %v3221 = vstv %s3219
        %v3222 = vstv %s3220
        %v3223 = vsel %vm437, %v3221, %v3222
        %v3224 = vmul.f32 %v3223, %v2903
        %v3225 = vmul.f32 %v3223, %v2904
        %s3226 = sld [smem:[#allocation7 + $0x19d]]
        %s3227 = sld [smem:[#allocation7 + $0x1ce]]
        %v3228 = vstv %s3226
        %v3229 = vstv %s3227
        %v3230 = vsel %vm437, %v3228, %v3229
        %v3231 = vmul.f32 %v3230, %v2911
        %v3232 = vmul.f32 %v3230, %v2912
        %v3233 = vadd.f32 %v3224, %v3231
        %v3234 = vadd.f32 %v3225, %v3232
        %s3235 = sld [smem:[#allocation7 + $0x19e]]
        %s3236 = sld [smem:[#allocation7 + $0x1cf]]
        %v3237 = vstv %s3235
        %v3238 = vstv %s3236
        %v3239 = vsel %vm437, %v3237, %v3238
        %v3240 = vmul.f32 %v3239, %v2919
        %v3241 = vmul.f32 %v3239, %v2920
        %v3242 = vadd.f32 %v3233, %v3240
        %v3243 = vadd.f32 %v3234, %v3241
        %s3244 = sld [smem:[#allocation7 + $0x19f]]
        %s3245 = sld [smem:[#allocation7 + $0x1d0]]
        %v3246 = vstv %s3244
        %v3247 = vstv %s3245
        %v3248 = vsel %vm437, %v3246, %v3247
        %v3249 = vmul.f32 %v3248, %v2895
        %v3250 = vmul.f32 %v3248, %v2896
        %v3251 = vadd.f32 %v3242, %v3249
        %v3252 = vadd.f32 %v3243, %v3250
        %s3253 = sld [smem:[#allocation7 + $0x1a0]]
        %s3254 = sld [smem:[#allocation7 + $0x1d1]]
        %v3255 = vstv %s3253
        %v3256 = vstv %s3254
        %v3257 = vsel %vm437, %v3255, %v3256
        %v3258 = vmul.f32 %v3257, %v2927
        %v3259 = vmul.f32 %v3257, %v2928
        %v3260 = vadd.f32 %v3251, %v3258
        %v3261 = vadd.f32 %v3252, %v3259
        %s3262 = sld [smem:[#allocation7 + $0x1a1]]
        %s3263 = sld [smem:[#allocation7 + $0x1d2]]
        %v3264 = vstv %s3262
        %v3265 = vstv %s3263
        %v3266 = vsel %vm437, %v3264, %v3265
        %v3267 = vmul.f32 %v3266, %v2935
        %v3268 = vmul.f32 %v3266, %v2936
        %v3269 = vadd.f32 %v3260, %v3267
        %v3270 = vadd.f32 %v3261, %v3268
        %s3271 = sld [smem:[#allocation7 + $0x1a2]]
        %s3272 = sld [smem:[#allocation7 + $0x1d3]]
        %v3273 = vstv %s3271
        %v3274 = vstv %s3272
        %v3275 = vsel %vm437, %v3273, %v3274
        %v3276 = vmul.f32 %v3275, %v2943
        %v3277 = vmul.f32 %v3275, %v2944
        %v3278 = vadd.f32 %v3269, %v3276
        %v3279 = vadd.f32 %v3270, %v3277
        %3280 = vrot.lane.b32.xlu0 %v3278, 112
        %v3281 = vpop.permute.xlu0 %3280
        %3282 = vrot.lane.b32.xlu0 %v3279, 112
        %v3283 = vpop.permute.xlu0 %3282
        %v3284 = vsel %vm1105, %v3281, %v3283
        %v3285 = vsel %vm1105, %v3283, %v3281
        %v3286 = vsel %vm1117, %v3284, 0.0
        %v3287 = vsel %vm1118, %v3285, 0.0
        %v3288 = vadd.f32 %v3217, %v3286
        %v3289 = vadd.f32 %v3218, %v3287
        %s3290 = sld [smem:[#allocation7 + $0x1a3]]
        %s3291 = sld [smem:[#allocation7 + $0x1d4]]
        %v3292 = vstv %s3290
        %v3293 = vstv %s3291
        %v3294 = vsel %vm437, %v3292, %v3293
        %v3295 = vmul.f32 %v3294, %v2903
        %v3296 = vmul.f32 %v3294, %v2904
        %s3297 = sld [smem:[#allocation7 + $0x1a4]]
        %s3298 = sld [smem:[#allocation7 + $0x1d5]]
        %v3299 = vstv %s3297
        %v3300 = vstv %s3298
        %v3301 = vsel %vm437, %v3299, %v3300
        %v3302 = vmul.f32 %v3301, %v2911
        %v3303 = vmul.f32 %v3301, %v2912
        %v3304 = vadd.f32 %v3295, %v3302
        %v3305 = vadd.f32 %v3296, %v3303
        %s3306 = sld [smem:[#allocation7 + $0x1a5]]
        %s3307 = sld [smem:[#allocation7 + $0x1d6]]
        %v3308 = vstv %s3306
        %v3309 = vstv %s3307
        %v3310 = vsel %vm437, %v3308, %v3309
        %v3311 = vmul.f32 %v3310, %v2919
        %v3312 = vmul.f32 %v3310, %v2920
        %v3313 = vadd.f32 %v3304, %v3311
        %v3314 = vadd.f32 %v3305, %v3312
        %s3315 = sld [smem:[#allocation7 + $0x1a6]]
        %s3316 = sld [smem:[#allocation7 + $0x1d7]]
        %v3317 = vstv %s3315
        %v3318 = vstv %s3316
        %v3319 = vsel %vm437, %v3317, %v3318
        %v3320 = vmul.f32 %v3319, %v2895
        %v3321 = vmul.f32 %v3319, %v2896
        %v3322 = vadd.f32 %v3313, %v3320
        %v3323 = vadd.f32 %v3314, %v3321
        %s3324 = sld [smem:[#allocation7 + $0x1a7]]
        %s3325 = sld [smem:[#allocation7 + $0x1d8]]
        %v3326 = vstv %s3324
        %v3327 = vstv %s3325
        %v3328 = vsel %vm437, %v3326, %v3327
        %v3329 = vmul.f32 %v3328, %v2927
        %v3330 = vmul.f32 %v3328, %v2928
        %v3331 = vadd.f32 %v3322, %v3329
        %v3332 = vadd.f32 %v3323, %v3330
        %s3333 = sld [smem:[#allocation7 + $0x1a8]]
        %s3334 = sld [smem:[#allocation7 + $0x1d9]]
        %v3335 = vstv %s3333
        %v3336 = vstv %s3334
        %v3337 = vsel %vm437, %v3335, %v3336
        %v3338 = vmul.f32 %v3337, %v2935
        %v3339 = vmul.f32 %v3337, %v2936
        %v3340 = vadd.f32 %v3331, %v3338
        %v3341 = vadd.f32 %v3332, %v3339
        %s3342 = sld [smem:[#allocation7 + $0x1a9]]
        %s3343 = sld [smem:[#allocation7 + $0x1da]]
        %v3344 = vstv %s3342
        %v3345 = vstv %s3343
        %v3346 = vsel %vm437, %v3344, %v3345
        %v3347 = vmul.f32 %v3346, %v2943
        %v3348 = vmul.f32 %v3346, %v2944
        %v3349 = vadd.f32 %v3340, %v3347
        %v3350 = vadd.f32 %v3341, %v3348
        %3351 = vrot.lane.b32.xlu0 %v3349, 96
        %v3352 = vpop.permute.xlu0 %3351
        %3353 = vrot.lane.b32.xlu0 %v3350, 96
        %v3354 = vpop.permute.xlu0 %3353
        %v3355 = vsel %vm1188, %v3352, %v3354
        %v3356 = vsel %vm1188, %v3354, %v3352
        %v3357 = vsel %vm1200, %v3355, 0.0
        %v3358 = vsel %vm1201, %v3356, 0.0
        %v3359 = vadd.f32 %v3288, %v3357
        %v3360 = vadd.f32 %v3289, %v3358
        %s3361 = sld [smem:[#allocation7 + $0x1aa]]
        %s3362 = sld [smem:[#allocation7 + $0x1db]]
        %v3363 = vstv %s3361
        %v3364 = vstv %s3362
        %v3365 = vsel %vm437, %v3363, %v3364
        %v3366 = vmul.f32 %v3365, %v2903
        %v3367 = vmul.f32 %v3365, %v2904
        %s3368 = sld [smem:[#allocation7 + $0x1ab]]
        %s3369 = sld [smem:[#allocation7 + $0x1dc]]
        %v3370 = vstv %s3368
        %v3371 = vstv %s3369
        %v3372 = vsel %vm437, %v3370, %v3371
        %v3373 = vmul.f32 %v3372, %v2911
        %v3374 = vmul.f32 %v3372, %v2912
        %v3375 = vadd.f32 %v3366, %v3373
        %v3376 = vadd.f32 %v3367, %v3374
        %s3377 = sld [smem:[#allocation7 + $0x1ac]]
        %s3378 = sld [smem:[#allocation7 + $0x1dd]]
        %v3379 = vstv %s3377
        %v3380 = vstv %s3378
        %v3381 = vsel %vm437, %v3379, %v3380
        %v3382 = vmul.f32 %v3381, %v2919
        %v3383 = vmul.f32 %v3381, %v2920
        %v3384 = vadd.f32 %v3375, %v3382
        %v3385 = vadd.f32 %v3376, %v3383
        %s3386 = sld [smem:[#allocation7 + $0x1ad]]
        %s3387 = sld [smem:[#allocation7 + $0x1de]]
        %v3388 = vstv %s3386
        %v3389 = vstv %s3387
        %v3390 = vsel %vm437, %v3388, %v3389
        %v3391 = vmul.f32 %v3390, %v2895
        %v3392 = vmul.f32 %v3390, %v2896
        %v3393 = vadd.f32 %v3384, %v3391
        %v3394 = vadd.f32 %v3385, %v3392
        %s3395 = sld [smem:[#allocation7 + $0x1ae]]
        %s3396 = sld [smem:[#allocation7 + $0x1df]]
        %v3397 = vstv %s3395
        %v3398 = vstv %s3396
        %v3399 = vsel %vm437, %v3397, %v3398
        %v3400 = vmul.f32 %v3399, %v2927
        %v3401 = vmul.f32 %v3399, %v2928
        %v3402 = vadd.f32 %v3393, %v3400
        %v3403 = vadd.f32 %v3394, %v3401
        %s3404 = sld [smem:[#allocation7 + $0x1af]]
        %s3405 = sld [smem:[#allocation7 + $0x1e0]]
        %v3406 = vstv %s3404
        %v3407 = vstv %s3405
        %v3408 = vsel %vm437, %v3406, %v3407
        %v3409 = vmul.f32 %v3408, %v2935
        %v3410 = vmul.f32 %v3408, %v2936
        %v3411 = vadd.f32 %v3402, %v3409
        %v3412 = vadd.f32 %v3403, %v3410
        %s3413 = sld [smem:[#allocation7 + $0x1b0]]
        %s3414 = sld [smem:[#allocation7 + $0x1e1]]
        %v3415 = vstv %s3413
        %v3416 = vstv %s3414
        %v3417 = vsel %vm437, %v3415, %v3416
        %v3418 = vmul.f32 %v3417, %v2943
        %v3419 = vmul.f32 %v3417, %v2944
        %v3420 = vadd.f32 %v3411, %v3418
        %v3421 = vadd.f32 %v3412, %v3419
        %3422 = vrot.lane.b32.xlu0 %v3420, 80
        %v3423 = vpop.permute.xlu0 %3422
        %3424 = vrot.lane.b32.xlu0 %v3421, 80
        %v3425 = vpop.permute.xlu0 %3424
        %v3426 = vsel %vm1271, %v3423, %v3425
        %v3427 = vsel %vm1271, %v3425, %v3423
        %v3428 = vsel %vm1283, %v3426, 0.0
        %v3429 = vsel %vm1284, %v3427, 0.0
        %v3430 = vadd.f32 %v3359, %v3428
        %v3431 = vadd.f32 %v3360, %v3429
        %v3432 = vsel %vm1289, %v3430, 0.0
        %v3433 = vrot.slane %v3432, 4
        %v3434 = vadd.f32 %v3432, %v3433
        %v3435 = vrot.slane %v3434, 2
        %v3436 = vadd.f32 %v3434, %v3435
        %v3437 = vrot.slane %v3436, 1
        %v3438 = vadd.f32 %v3436, %v3437
        %v3439 = vsel %vm1289, %v3431, 0.0
        %v3440 = vrot.slane %v3439, 4
        %v3441 = vadd.f32 %v3439, %v3440
        %v3442 = vrot.slane %v3441, 2
        %v3443 = vadd.f32 %v3441, %v3442
        %v3444 = vrot.slane %v3443, 1
        %v3445 = vadd.f32 %v3443, %v3444
        %v3446 = vsub.f32 0.0, %v3438
        %v3447 = vsub.f32 0.0, %v3445
        %v3448 = vmul.f32 %v3446, 1.442695
        %v3449 = vpow.pop %v3448
        %v3450 = vmul.f32 %v3447, 1.442695
        %v3451 = vpow.pop %v3450
        %v3452 = vadd.f32 %v3449, 1.0
        %v3453 = vadd.f32 %v3451, 1.0
        %v3454 = vrcp.pop %v3452
        %v3455 = vrcp.pop %v3453
        %v3456 = vmul.f32 %v2867, %v3454
        %v3457 = vmul.f32 %v2868, %v3455
        %3458 = vst [vmem:[#allocation2 + $0x30] sm:$0xff] %v3456
        %3459 = vst [vmem:[#allocation2 + $0x38] sm:$0xff] %v3457
        %v3460 = vld [vmem:[%s8] sm:$0xff]
        %v3461 = vld [vmem:[%s8 + $0x8] sm:$0xff]
        %v3462 = vld [vmem:[#allocation2] sm:$0xff]
        %v3463 = vld [vmem:[#allocation2 + $0x8] sm:$0xff]
        %v3464 = vld [vmem:[#allocation2 + $0x10] sm:$0xff]
        %v3465 = vld [vmem:[#allocation2 + $0x18] sm:$0xff]
        %v3466 = vld [vmem:[#allocation2 + $0x20] sm:$0xff]
        %v3467 = vld [vmem:[#allocation2 + $0x28] sm:$0xff]
        %v3468 = vld [vmem:[#allocation2 + $0x30] sm:$0xff]
        %v3469 = vld [vmem:[#allocation2 + $0x38] sm:$0xff]
        %v3470 = vld [vmem:[%s9] sm:$0xff]
        %v3471 = vld [vmem:[%s9 + $0x8] sm:$0xff]
        %3473 = vset.pattern.permute.xlu0 0
        %3474 = vperm.xlu0 %3473, %v3470
        %v3475 = vpop.permute.xlu0 %3474
        %3478 = vset.pattern.permute.xlu0 0
        %3479 = vperm.xlu0 %3478, %v3471
        %v3480 = vpop.permute.xlu0 %3479
        %vm3482 = vcmask 261120
        %v3484 = vsel %vm3482, %v3460, 0
        %v3487 = vsel %vm3482, %v3461, 0
        %3489 = vmatprep.subr.mxu0 %v3463
        %3490 = vmatpush1.msra.mxu0 %v3462
        %3491 = vmatprep.subr.mxu0 %v3465
        %3492 = vmatpush1.msra.mxu0 %v3464
        %3493 = vmatprep.subr.mxu0 %v3467
        %3494 = vmatpush1.msra.mxu0 %v3466
        %3495 = vmatprep.subr.mxu0 %v3469
        %3496 = vmatpush1.msra.mxu0 %v3468
        %3497 = vmatprep.subr.mxu0 0.0
        %3498 = vmatpush1.msra.mxu0 0.0
        %3499 = vmatprep.subr.mxu0 0.0
        %3500 = vmatpush1.msra.mxu0 0.0
        %3501 = vmatprep.subr.mxu0 0.0
        %3502 = vmatpush1.msra.mxu0 0.0
        %3503 = vmatprep.subr.mxu0 0.0
        %3504 = vmatpush1.msra.mxu0 0.0
        %3505 = vmatprep.subr.mxu0 0.0
        %3506 = vmatpush1.msra.mxu0 0.0
        %3507 = vmatprep.subr.mxu0 0.0
        %3508 = vmatpush1.msra.mxu0 0.0
        %3509 = vmatprep.subr.mxu0 0.0
        %3510 = vmatpush1.msra.mxu0 0.0
        %3511 = vmatprep.subr.mxu0 0.0
        %3512 = vmatpush1.msra.mxu0 0.0
        %3513 = vmatprep.subr.mxu0 0.0
        %3514 = vmatpush1.msra.mxu0 0.0
        %3515 = vmatprep.subr.mxu0 0.0
        %3516 = vmatpush1.msra.mxu0 0.0
        %3517 = vmatprep.subr.mxu0 0.0
        %3518 = vmatpush1.msra.mxu0 0.0
        %3519 = vmatprep.subr.mxu0 0.0
        %3520 = vmatpush1.msra.mxu0 0.0
        %3521 = vmatprep.subr.mxu0 0.0
        %3522 = vmatpush1.msra.mxu0 0.0
        %3523 = vmatprep.subr.mxu0 0.0
        %3524 = vmatpush1.msra.mxu0 0.0
        %3525 = vmatprep.subr.mxu0 0.0
        %3526 = vmatpush1.msra.mxu0 0.0
        %3527 = vmatprep.subr.mxu0 0.0
        %3528 = vmatpush1.msra.mxu0 0.0
        %3529 = vmatprep.subr.mxu0 0.0
        %3530 = vmatpush1.msra.mxu0 0.0
        %3531 = vmatprep.subr.mxu0 0.0
        %3532 = vmatpush1.msra.mxu0 0.0
        %3533 = vmatprep.subr.mxu0 0.0
        %3534 = vmatpush1.msra.mxu0 0.0
        %3535 = vmatprep.subr.mxu0 0.0
        %3536 = vmatpush1.msra.mxu0 0.0
        %3537 = vmatprep.subr.mxu0 0.0
        %3538 = vmatpush1.msra.mxu0 0.0
        %3539 = vmatprep.subr.mxu0 0.0
        %3540 = vmatpush1.msra.mxu0 0.0
        %3541 = vmatprep.subr.mxu0 0.0
        %3542 = vmatpush1.msra.mxu0 0.0
        %3543 = vmatprep.subr.mxu0 0.0
        %3544 = vmatpush1.msra.mxu0 0.0
        %3545 = vmatprep.subr.mxu0 0.0
        %3546 = vmatpush1.msra.mxu0 0.0
        %3547 = vmatprep.subr.mxu0 0.0
        %3548 = vmatpush1.msra.mxu0 0.0
        %3549 = vmatprep.subr.mxu0 0.0
        %3550 = vmatpush1.msra.mxu0 0.0
        %3551 = vmatprep.subr.mxu0 0.0
        %3552 = vmatpush1.msra.mxu0 0.0
        %3553 = vmatprep.mubr.f32.mxu0 0.0
        %3554 = vmatmul.mubr.f32.gmra.mrb[0].mxu0 %v3484
        %v3555 = vpop.f32.mrb[0].mxu0
        %v3556 = vadd.f32 %v3475, %v3555
        %v3557 = vpop.f32.mrb[0].mxu0
        %v3558 = vadd.f32 %v3475, %v3557
        %3559 = vmatprep.mubr.f32.mxu0 0.0
        %3560 = vmatmul.mubr.f32.gmra.mrb[0].mxu0 %v3487
        %v3561 = vpop.f32.mrb[0].mxu0
        %v3562 = vadd.f32 %v3480, %v3561
        %v3563 = vpop.f32.mrb[0].mxu0
        %v3564 = vadd.f32 %v3480, %v3563
        %3565 = vdwg.mxu0
        %v3566 = vsub.f32 0.0, %v3556
        %v3567 = vsub.f32 0.0, %v3558
        %v3568 = vsub.f32 0.0, %v3562
        %v3569 = vsub.f32 0.0, %v3564
        %v3570 = vmul.f32 %v3566, 1.442695
        %v3571 = vpow.pop %v3570
        %v3572 = vmul.f32 %v3567, 1.442695
        %v3573 = vpow.pop %v3572
        %v3574 = vmul.f32 %v3568, 1.442695
        %v3575 = vpow.pop %v3574
        %v3576 = vmul.f32 %v3569, 1.442695
        %v3577 = vpow.pop %v3576
        %v3578 = vadd.f32 %v3571, 1.0
        %v3579 = vadd.f32 %v3573, 1.0
        %v3580 = vadd.f32 %v3575, 1.0
        %v3581 = vadd.f32 %v3577, 1.0
        %v3582 = vrcp.pop %v3578
        %v3583 = vrcp.pop %v3579
        %v3584 = vrcp.pop %v3580
        %v3585 = vrcp.pop %v3581
        %v3586 = vmul.f32 %v3556, %v3582
        %v3587 = vmul.f32 %v3558, %v3583
        %v3588 = vmul.f32 %v3562, %v3584
        %v3589 = vmul.f32 %v3564, %v3585
        %3590 = vst [vmem:[%s379] sm:$0xff] %v3586
        %3591 = vst [vmem:[%s379 + $0x8] sm:$0xff] %v3587
        %3592 = vst [vmem:[%s379 + $0x10] sm:$0xff] %v3588
        %3593 = vst [vmem:[%s379 + $0x18] sm:$0xff] %v3589
        %s3594 = sand.u32 %s249, 1
        %s3595 = scalar_lea.sflag [#allocation5], %s3594
        %s3596 = sand.u32 %s249, 1
        %s3597 = smul.addr %s3596, 32
        %s3598 = scalar_lea.vmem [#allocation8], %s3597
        // Predicated region
        $region69: #{tpu_custom_call.1} parent=59 // pred_check
          %p3599 = pneg %p259
        $region70: #{tpu_custom_call.1} parent=59 // pred_check_branch
          %3601 = sbr.rel (%p3599) target = $region72
        $region71: #{tpu_custom_call.1} parent=59 // pred_region
          %s3603 = ssub.s32 512, 512
          %3604 = vsyncadd %s3595, %s3603
          %s3605 = smul.addr %s26, 4
          %s3606 = smul.addr %s3605, 128
          %s3607 = scalar_lea.hbm %s10, %s3606
          %s3608 = sshll.u32 %s3598, 4
          %s3609 = int_to_ptr.vmem [resolvable:$true] %s3608
          %3614 = dma.vmem_to_hbm [thread:$0]  %s3609, 512, %s3607, %s3595, 256, 256, 16
        $region72: #{tpu_custom_call.1} parent=59 // pred_fallthru
          _
      $region60: #{tpu_custom_call.1} parent=5 // pred_fallthru
        _
      %p3615 = scmp.le.s32.totalorder 2, %s21
      // Predicated region
      $region73: #{tpu_custom_call.1} parent=5 // pred_check
        %p3616 = pneg %p3615
      $region74: #{tpu_custom_call.1} parent=5 // pred_check_branch
        %3618 = sbr.rel (%p3616) target = $region76
      $region75: #{tpu_custom_call.1} parent=5 // pred_region
        %s3619 = ssub.s32 %s21, 2
        // Predicated region
        $region77: #{tpu_custom_call.1} parent=75 // pred_check
          %p3620 = pneg %p265
        $region78: #{tpu_custom_call.1} parent=75 // pred_check_branch
          %3622 = sbr.rel (%p3620) target = $region80
        $region79: #{tpu_custom_call.1} parent=75 // pred_region
          %s3623 = sand.u32 %s250, 1
          %s3624 = scalar_lea.sflag [#allocation5], %s3623
          %s3625 = sand.u32 %s250, 1
          %s3626 = smul.addr %s3625, 32
          %s3627 = scalar_lea.vmem [#allocation8], %s3626
          %3628 = dma.done %s3624, 512
        $region80: #{tpu_custom_call.1} parent=75 // pred_fallthru
          _
      $region76: #{tpu_custom_call.1} parent=5 // pred_fallthru
        _
    $region6: #{tpu_custom_call.1} parent=1 // loop_footer
      %s25 = sadd.s32 1, %s21
    $region7: #{tpu_custom_call.1} parent=1 // loop_footer_branch
      %20 = sbr.rel target = $region3
    $region8: #{tpu_custom_call.1} parent=1 // loop_exit
      _
    %3629 = vsyncpa [#allocation4], 1
    %s3630 = scalar_lea.sflag [#allocation4], 1
    %3631 = vsyncpa %s3630, 1
    %3632 = vsyncpa [#allocation5], 1
    %s3633 = scalar_lea.sflag [#allocation5], 1
    %3634 = vsyncpa %s3633, 1
    %3635 = vsyncpa [#allocation6], 1
    %s3636 = scalar_lea.sflag [#allocation6], 1
    %3637 = vsyncpa %s3636, 1

</llo_original>
